<compile_context>
chip_gen: v7x
topology: tpu7x:2x2x1
jax: 0.10.0
libtpu: 0.0.40
codegen_flags: <defaults>
</compile_context>

<pallas_src>
import functools

import numpy as np
import jax
import jax.numpy as jnp
from jax.experimental import pallas as pl
from jax.experimental.pallas import tpu as pltpu

LANE = 128                      # conv1 out-channels zero-padded 64->128 (in-VMEM only)
VMEM_LIMIT = 32 * 1024 * 1024   # actual use ~5-10 MB; safe on v5e/v6e/v7x


# --------------------------------------------------------------------------- #
# Fused kernel: conv1 + conv2 + conv3 + residual stack (one invocation).       #
# --------------------------------------------------------------------------- #
def _encoder_kernel(p1_ref, w1_ref, b1_ref, w2_ref, b2_ref, mask_ref,
                    w3_ref, b3_ref, rw3_ref, rw1_ref, o_ref,
                    *, num_res_layers, m_rows, w_sp):
    """Activations at the 4x4 output resolution are (m_rows, C) with
    m_rows = batch*h*w, rows ordered (image, y, x).  A conv tap at spatial
    offset (a, b) is the activation rolled by -(a*w_sp + b) rows
    (pltpu.roll == jnp.roll semantics: out[p] = in[p + s]) with rows whose
    source falls outside the image zeroed by a 0/1 mask.  Taps are
    concatenated along K and contracted with the (K, Cout) weight in a single
    MXU matmul (bf16 operands, f32 accumulation)."""

    def tap(act, a, b):
        s = a * w_sp + b
        if s == 0:                                    # centre tap: no roll, mask all-ones
            return act
        rolled = pltpu.roll(act, (-s) % m_rows, axis=0)       # out[p] = act[p + s]
        return rolled * mask_ref[(a + 1) * 3 + (b + 1)]       # (m_rows, 1) boundary mask

    def conv_from_taps(taps, w_bf16):
        patches = jnp.concatenate(taps, axis=-1).astype(jnp.bfloat16)
        return jnp.dot(patches, w_bf16, preferred_element_type=jnp.float32)

    # conv1 (4x4,s2,p1) + ReLU: one matmul on pre-gathered, parity-ordered patches.
    # Rows of p1 = [G00; G01; G10; G11]; G_pq holds conv1 outputs at (2u+p, 2v+q).
    a1 = jnp.dot(p1_ref[...], w1_ref[...], preferred_element_type=jnp.float32)
    a1 = jnp.maximum(a1 + b1_ref[...], 0.0)                   # (4*m_rows, 128) f32

    # conv2 (4x4,s2,p1) + ReLU via parity decomposition:
    #   out(y,x) = sum_{di,dj} conv1(2y+di-1, 2x+dj-1) @ W2[di,dj]
    #            = sum_{di,dj} G[p(di),q(dj)](y+a(di), x+b(dj)) @ W2[di,dj]
    taps2 = []
    for di in range(4):
        p_par, a = 1 - di % 2, (di - 1) // 2                  # 2y+di-1 = 2*(y+a)+p_par
        for dj in range(4):
            q_par, b = 1 - dj % 2, (dj - 1) // 2
            c = p_par * 2 + q_par
            g = a1[c * m_rows:(c + 1) * m_rows, :]            # sublane-aligned slice
            taps2.append(tap(g, a, b))
    x = conv_from_taps(taps2, w2_ref[...])
    x = jnp.maximum(x + b2_ref[...], 0.0)                     # (m_rows, 128) f32

    def conv3x3(act, w_bf16):
        return conv_from_taps(
            [tap(act, a, b) for a in (-1, 0, 1) for b in (-1, 0, 1)], w_bf16)

    # conv3 (3x3,s1,p1): 128 -> 256, bias, no ReLU (ReLU lives inside the blocks).
    x = conv3x3(x, w3_ref[...]) + b3_ref[...]

    # TODO(synk): ResidualStack source not provided; canonical VQ-VAE block assumed:
    #   x = x + Conv1x1(ReLU(Conv3x3(ReLU(x)))) (bias=False), trailing ReLU after stack.
    for l in range(num_res_layers):
        h = jnp.maximum(x, 0.0)
        h = jnp.maximum(conv3x3(h, rw3_ref[l]), 0.0)
        x = x + jnp.dot(h.astype(jnp.bfloat16), rw1_ref[l],
                        preferred_element_type=jnp.float32)
    o_ref[...] = jnp.maximum(x, 0.0).astype(o_ref.dtype)


def _full_spec(shape):
    nd = len(shape)
    return pl.BlockSpec(tuple(shape), lambda i, _nd=nd: (0,) * _nd)


def fused_encoder(p1, masks, packed, *, m_rows, w_sp):
    assert m_rows % 8 == 0
    num_res_layers = packed["rw1"].shape[0]
    cout = packed["w3"].shape[-1]
    kernel = functools.partial(_encoder_kernel, num_res_layers=num_res_layers,
                               m_rows=m_rows, w_sp=w_sp)
    operands = (p1, packed["w1"], packed["b1"], packed["w2"], packed["b2"], masks,
                packed["w3"], packed["b3"], packed["rw3"], packed["rw1"])
    return pl.pallas_call(
        kernel,
        out_shape=jax.ShapeDtypeStruct((m_rows, cout), jnp.float32),
        grid=(1,),                       # whole batch in one step: M = batch*16 rows,
        in_specs=[_full_spec(a.shape) for a in operands],   # weights loaded once (~5 MB bf16)
        out_specs=_full_spec((m_rows, cout)),
        compiler_params=pltpu.CompilerParams(
            # Single step -> nothing to pipeline; fits far under every VMEM budget.
            # TODO(synk): for large batches tile m_rows on a grid axis and mark it
            # CORE_PARALLEL to engage v7x's second TensorCore.
            dimension_semantics=("arbitrary",),
            vmem_limit_bytes=VMEM_LIMIT),
    )(*operands)


# ----------------------------- XLA glue (conv1 im2col) ---------------------- #
def im2col_nhwc(x, kh, kw, stride, pad):
    n, h, w, c = x.shape
    xp = jnp.pad(x, ((0, 0), (pad, pad), (pad, pad), (0, 0)))
    ho = (h + 2 * pad - kh) // stride + 1
    wo = (w + 2 * pad - kw) // stride + 1
    cols = []
    for i in range(kh):
        for j in range(kw):
            cols.append(xp[:, i:i + stride * ho:stride, j:j + stride * wo:stride, :])
    return jnp.concatenate(cols, axis=-1), (n, ho, wo)        # (n, ho, wo, kh*kw*c)


def conv1_parity_patches(x_nhwc):
    """conv1 im2col with rows reordered parity-class-major: class c = p*2+q blocks
    of (n * (h1//2) * (w1//2)) rows each, ordered (image, u, v) inside a block."""
    patches, (n, h1, w1) = im2col_nhwc(x_nhwc, 4, 4, 2, 1)    # (n, 8, 8, 16*Cin)
    k1 = patches.shape[-1]
    p = patches.reshape(n, h1 // 2, 2, w1 // 2, 2, k1)        # i=(u,p), j=(v,q)
    p = jnp.transpose(p, (2, 4, 0, 1, 3, 5))                  # (p, q, n, u, v, k1)
    return p.reshape(4 * n * (h1 // 2) * (w1 // 2), k1), (h1 // 2, w1 // 2)


def make_tap_masks(h, w, batch):
    """0/1 validity mask per 3x3 offset (a, b) on the (h, w) grid, tiled over batch."""
    m = np.zeros((9, h * w, 1), np.float32)
    for a in (-1, 0, 1):
        for b in (-1, 0, 1):
            k = (a + 1) * 3 + (b + 1)
            for i in range(h):
                for j in range(w):
                    if 0 <= i + a < h and 0 <= j + b < w:
                        m[k, i * w + j, 0] = 1.0
    return jnp.asarray(np.tile(m, (1, batch, 1)))             # (9, batch*h*w, 1)


# ------------------------------ parameters ---------------------------------- #
def init_conv(key, cin, cout, kh, kw, bias=True):
    # PyTorch default conv init: U(-1/sqrt(fan_in), 1/sqrt(fan_in)).
    # Weight stored as (kh*kw*cin, cout), matching the tap/im2col row ordering
    # (== torch weight (cout,cin,kh,kw) transposed to (kh,kw,cin,cout)).
    fan_in = cin * kh * kw
    bound = 1.0 / (fan_in ** 0.5)
    k1, k2 = jax.random.split(key)
    w = jax.random.uniform(k1, (kh * kw * cin, cout), jnp.float32, -bound, bound)
    b = (jax.random.uniform(k2, (cout,), jnp.float32, -bound, bound)
         if bias else jnp.zeros((cout,), jnp.float32))
    return w, b


def make_params(key, image_channels):
    keys = jax.random.split(key, 9)
    params = {
        "conv1": init_conv(keys[0], image_channels, 64, 4, 4),
        "conv2": init_conv(keys[1], 64, 128, 4, 4),
        "conv3": init_conv(keys[2], 128, 256, 3, 3),
        "res": [],
    }
    for i in range(3):
        w3, _ = init_conv(keys[3 + 2 * i], 256, 256, 3, 3, bias=False)
        w1, _ = init_conv(keys[4 + 2 * i], 256, 256, 1, 1, bias=False)
        params["res"].append((w3, w1))
    return params


def pack_params(params):
    """One-time weight packing/casting, hoisted out of the per-call forward.

    conv1's 64 output channels are zero-padded to 128 so every lane-dim concat in
    the fused kernel stays 128-aligned; conv2's matching weight rows are zero too,
    so the math is unchanged.  The pad lives only in VMEM (never hits HBM patches)."""
    w1, b1 = params["conv1"]
    w2, b2 = params["conv2"]
    w3, b3 = params["conv3"]
    c1, c2 = w1.shape[1], w2.shape[1]
    w1p = jnp.zeros((w1.shape[0], LANE), w1.dtype).at[:, :c1].set(w1)
    b1p = jnp.zeros((LANE,), b1.dtype).at[:c1].set(b1)
    w2p = (jnp.zeros((16, LANE, c2), w2.dtype)
           .at[:, :c1, :].set(w2.reshape(16, c1, c2))
           .reshape(16 * LANE, c2))
    return {
        "w1": w1p.astype(jnp.bfloat16), "b1": b1p.reshape(1, -1).astype(jnp.float32),
        "w2": w2p.astype(jnp.bfloat16), "b2": b2.reshape(1, -1).astype(jnp.float32),
        "w3": w3.astype(jnp.bfloat16),  "b3": b3.reshape(1, -1).astype(jnp.float32),
        "rw3": jnp.stack([p[0] for p in params["res"]]).astype(jnp.bfloat16),  # (3,2304,256)
        "rw1": jnp.stack([p[1] for p in params["res"]]).astype(jnp.bfloat16),  # (3,256,256)
    }


# ------------------------------ forward pass --------------------------------- #
def simpler_encoder(packed, x_nchw):
    n = x_nchw.shape[0]
    x = jnp.transpose(x_nchw, (0, 2, 3, 1)).astype(jnp.bfloat16)      # NCHW -> NHWC
    p1, (h2, w2) = conv1_parity_patches(x)                            # (4*n*h2*w2, 16*Cin)
    m_rows = n * h2 * w2
    masks = make_tap_masks(h2, w2, n)                                 # constant-folded by jit
    out = fused_encoder(p1, masks, packed, m_rows=m_rows, w_sp=w2)    # (m_rows, 256) f32
    out = out.reshape(n, h2, w2, -1)
    return jnp.transpose(out, (0, 3, 1, 2))                           # NHWC -> NCHW


if __name__ == "__main__":
    image_channels = 4
    x = jax.random.normal(jax.random.PRNGKey(0), (2, image_channels, 16, 16), jnp.float32)
    params = make_params(jax.random.PRNGKey(42), image_channels)

    packed = pack_params(params)          # hoisted: runs once, outside the forward
    jax.block_until_ready(packed)

    fwd = jax.jit(simpler_encoder)
    out = fwd(packed, x)
    jax.block_until_ready(out)

    assert out.shape == (2, 256, 4, 4), out.shape
    assert out.dtype == jnp.float32
    print("KERNEL_OK")
</pallas_src>

<mosaic_0001>
module attributes {stable_mosaic.version = 11 : i64} {
  func.func @_encoder_kernel(%arg0: i32, %arg1: memref<128x64xbf16, #tpu.memory_space<vmem>>, %arg2: memref<64x128xbf16, #tpu.memory_space<vmem>>, %arg3: memref<1x128xf32, #tpu.memory_space<vmem>>, %arg4: memref<2048x128xbf16, #tpu.memory_space<vmem>>, %arg5: memref<1x128xf32, #tpu.memory_space<vmem>>, %arg6: memref<9x32x1xf32, #tpu.memory_space<vmem>>, %arg7: memref<1152x256xbf16, #tpu.memory_space<vmem>>, %arg8: memref<1x256xf32, #tpu.memory_space<vmem>>, %arg9: memref<3x2304x256xbf16, #tpu.memory_space<vmem>>, %arg10: memref<3x256x256xbf16, #tpu.memory_space<vmem>>, %arg11: memref<32x256xf32, #tpu.memory_space<vmem>>) attributes {dimension_semantics = [#tpu.dimension_semantics<arbitrary>], iteration_bounds = array<i64: 1>, scalar_prefetch = 0 : i64, scratch_operands = 0 : i64, tpu.core_type = #tpu.core_type<tc>, window_params = [{pipeline_mode = #tpu.pipeline_mode<synchronous>, transform_indices = @transform_0, window_bounds = array<i64: 128, 64>}, {pipeline_mode = #tpu.pipeline_mode<synchronous>, transform_indices = @transform_1, window_bounds = array<i64: 64, 128>}, {pipeline_mode = #tpu.pipeline_mode<synchronous>, transform_indices = @transform_2, window_bounds = array<i64: 1, 128>}, {pipeline_mode = #tpu.pipeline_mode<synchronous>, transform_indices = @transform_3, window_bounds = array<i64: 2048, 128>}, {pipeline_mode = #tpu.pipeline_mode<synchronous>, transform_indices = @transform_4, window_bounds = array<i64: 1, 128>}, {pipeline_mode = #tpu.pipeline_mode<synchronous>, transform_indices = @transform_5, window_bounds = array<i64: 9, 32, 1>}, {pipeline_mode = #tpu.pipeline_mode<synchronous>, transform_indices = @transform_6, window_bounds = array<i64: 1152, 256>}, {pipeline_mode = #tpu.pipeline_mode<synchronous>, transform_indices = @transform_7, window_bounds = array<i64: 1, 256>}, {pipeline_mode = #tpu.pipeline_mode<synchronous>, transform_indices = @transform_8, window_bounds = array<i64: 3, 2304, 256>}, {pipeline_mode = #tpu.pipeline_mode<synchronous>, transform_indices = @transform_9, window_bounds = array<i64: 3, 256, 256>}, {pipeline_mode = #tpu.pipeline_mode<synchronous>, transform_indices = @transform_10, window_bounds = array<i64: 32, 256>}]} {
    %c0 = arith.constant 0 : index
    %c0_0 = arith.constant 0 : index
    %0 = vector.load %arg1[%c0, %c0_0] : memref<128x64xbf16, #tpu.memory_space<vmem>>, vector<128x64xbf16>
    %c0_1 = arith.constant 0 : index
    %c0_2 = arith.constant 0 : index
    %1 = vector.load %arg2[%c0_1, %c0_2] : memref<64x128xbf16, #tpu.memory_space<vmem>>, vector<64x128xbf16>
    %cst = arith.constant dense<0.000000e+00> : vector<128x128xf32>
    %2 = tpu.matmul %0, %1, %cst {dimension_numbers = #tpu.dot_dimension_numbers<[1], [0], [0], [1], [0, 0, 1, 1], [], []>} : vector<128x64xbf16>, vector<64x128xbf16>, vector<128x128xf32> -> vector<128x128xf32>
    %c0_3 = arith.constant 0 : index
    %c0_4 = arith.constant 0 : index
    %3 = vector.load %arg3[%c0_3, %c0_4] : memref<1x128xf32, #tpu.memory_space<vmem>>, vector<1x128xf32>
    %4 = vector.broadcast %3 : vector<1x128xf32> to vector<128x128xf32>
    %5 = arith.addf %2, %4 : vector<128x128xf32>
    %cst_5 = arith.constant 0.000000e+00 : f32
    %6 = vector.broadcast %cst_5 : f32 to vector<128x128xf32>
    %7 = arith.maximumf %5, %6 : vector<128x128xf32>
    %8 = vector.extract_strided_slice %7 {offsets = [96, 0], sizes = [32, 128], strides = [1, 1]} : vector<128x128xf32> to vector<32x128xf32>
    %c5_i32 = arith.constant 5 : i32
    %9 = tpu.dynamic_rotate %8 by %c5_i32 dim 0 : vector<32x128xf32>, i32 -> vector<32x128xf32>
    %c0_6 = arith.constant 0 : index
    %c0_7 = arith.constant 0 : index
    %c0_8 = arith.constant 0 : index
    %10 = vector.load %arg6[%c0_6, %c0_7, %c0_8] : memref<9x32x1xf32, #tpu.memory_space<vmem>>, vector<1x32x1xf32>
    %11 = vector.shape_cast %10 : vector<1x32x1xf32> to vector<32x1xf32>
    %12 = vector.broadcast %11 : vector<32x1xf32> to vector<32x128xf32>
    %13 = arith.mulf %9, %12 : vector<32x128xf32>
    %14 = vector.extract_strided_slice %7 {offsets = [64, 0], sizes = [32, 128], strides = [1, 1]} : vector<128x128xf32> to vector<32x128xf32>
    %c4_i32 = arith.constant 4 : i32
    %15 = tpu.dynamic_rotate %14 by %c4_i32 dim 0 : vector<32x128xf32>, i32 -> vector<32x128xf32>
    %c1 = arith.constant 1 : index
    %c0_9 = arith.constant 0 : index
    %c0_10 = arith.constant 0 : index
    %16 = vector.load %arg6[%c1, %c0_9, %c0_10] : memref<9x32x1xf32, #tpu.memory_space<vmem>>, vector<1x32x1xf32>
    %17 = vector.shape_cast %16 : vector<1x32x1xf32> to vector<32x1xf32>
    %18 = vector.broadcast %17 : vector<32x1xf32> to vector<32x128xf32>
    %19 = arith.mulf %15, %18 : vector<32x128xf32>
    %20 = vector.extract_strided_slice %7 {offsets = [96, 0], sizes = [32, 128], strides = [1, 1]} : vector<128x128xf32> to vector<32x128xf32>
    %c4_i32_11 = arith.constant 4 : i32
    %21 = tpu.dynamic_rotate %20 by %c4_i32_11 dim 0 : vector<32x128xf32>, i32 -> vector<32x128xf32>
    %c1_12 = arith.constant 1 : index
    %c0_13 = arith.constant 0 : index
    %c0_14 = arith.constant 0 : index
    %22 = vector.load %arg6[%c1_12, %c0_13, %c0_14] : memref<9x32x1xf32, #tpu.memory_space<vmem>>, vector<1x32x1xf32>
    %23 = vector.shape_cast %22 : vector<1x32x1xf32> to vector<32x1xf32>
    %24 = vector.broadcast %23 : vector<32x1xf32> to vector<32x128xf32>
    %25 = arith.mulf %21, %24 : vector<32x128xf32>
    %26 = vector.extract_strided_slice %7 {offsets = [64, 0], sizes = [32, 128], strides = [1, 1]} : vector<128x128xf32> to vector<32x128xf32>
    %c3_i32 = arith.constant 3 : i32
    %27 = tpu.dynamic_rotate %26 by %c3_i32 dim 0 : vector<32x128xf32>, i32 -> vector<32x128xf32>
    %c2 = arith.constant 2 : index
    %c0_15 = arith.constant 0 : index
    %c0_16 = arith.constant 0 : index
    %28 = vector.load %arg6[%c2, %c0_15, %c0_16] : memref<9x32x1xf32, #tpu.memory_space<vmem>>, vector<1x32x1xf32>
    %29 = vector.shape_cast %28 : vector<1x32x1xf32> to vector<32x1xf32>
    %30 = vector.broadcast %29 : vector<32x1xf32> to vector<32x128xf32>
    %31 = arith.mulf %27, %30 : vector<32x128xf32>
    %32 = vector.extract_strided_slice %7 {offsets = [32, 0], sizes = [32, 128], strides = [1, 1]} : vector<128x128xf32> to vector<32x128xf32>
    %c1_i32 = arith.constant 1 : i32
    %33 = tpu.dynamic_rotate %32 by %c1_i32 dim 0 : vector<32x128xf32>, i32 -> vector<32x128xf32>
    %c3 = arith.constant 3 : index
    %c0_17 = arith.constant 0 : index
    %c0_18 = arith.constant 0 : index
    %34 = vector.load %arg6[%c3, %c0_17, %c0_18] : memref<9x32x1xf32, #tpu.memory_space<vmem>>, vector<1x32x1xf32>
    %35 = vector.shape_cast %34 : vector<1x32x1xf32> to vector<32x1xf32>
    %36 = vector.broadcast %35 : vector<32x1xf32> to vector<32x128xf32>
    %37 = arith.mulf %33, %36 : vector<32x128xf32>
    %38 = vector.extract_strided_slice %7 {offsets = [0, 0], sizes = [32, 128], strides = [1, 1]} : vector<128x128xf32> to vector<32x128xf32>
    %39 = vector.extract_strided_slice %7 {offsets = [32, 0], sizes = [32, 128], strides = [1, 1]} : vector<128x128xf32> to vector<32x128xf32>
    %40 = vector.extract_strided_slice %7 {offsets = [0, 0], sizes = [32, 128], strides = [1, 1]} : vector<128x128xf32> to vector<32x128xf32>
    %c31_i32 = arith.constant 31 : i32
    %41 = tpu.dynamic_rotate %40 by %c31_i32 dim 0 : vector<32x128xf32>, i32 -> vector<32x128xf32>
    %c5 = arith.constant 5 : index
    %c0_19 = arith.constant 0 : index
    %c0_20 = arith.constant 0 : index
    %42 = vector.load %arg6[%c5, %c0_19, %c0_20] : memref<9x32x1xf32, #tpu.memory_space<vmem>>, vector<1x32x1xf32>
    %43 = vector.shape_cast %42 : vector<1x32x1xf32> to vector<32x1xf32>
    %44 = vector.broadcast %43 : vector<32x1xf32> to vector<32x128xf32>
    %45 = arith.mulf %41, %44 : vector<32x128xf32>
    %46 = vector.extract_strided_slice %7 {offsets = [96, 0], sizes = [32, 128], strides = [1, 1]} : vector<128x128xf32> to vector<32x128xf32>
    %c1_i32_21 = arith.constant 1 : i32
    %47 = tpu.dynamic_rotate %46 by %c1_i32_21 dim 0 : vector<32x128xf32>, i32 -> vector<32x128xf32>
    %c3_22 = arith.constant 3 : index
    %c0_23 = arith.constant 0 : index
    %c0_24 = arith.constant 0 : index
    %48 = vector.load %arg6[%c3_22, %c0_23, %c0_24] : memref<9x32x1xf32, #tpu.memory_space<vmem>>, vector<1x32x1xf32>
    %49 = vector.shape_cast %48 : vector<1x32x1xf32> to vector<32x1xf32>
    %50 = vector.broadcast %49 : vector<32x1xf32> to vector<32x128xf32>
    %51 = arith.mulf %47, %50 : vector<32x128xf32>
    %52 = vector.extract_strided_slice %7 {offsets = [64, 0], sizes = [32, 128], strides = [1, 1]} : vector<128x128xf32> to vector<32x128xf32>
    %53 = vector.extract_strided_slice %7 {offsets = [96, 0], sizes = [32, 128], strides = [1, 1]} : vector<128x128xf32> to vector<32x128xf32>
    %54 = vector.extract_strided_slice %7 {offsets = [64, 0], sizes = [32, 128], strides = [1, 1]} : vector<128x128xf32> to vector<32x128xf32>
    %c31_i32_25 = arith.constant 31 : i32
    %55 = tpu.dynamic_rotate %54 by %c31_i32_25 dim 0 : vector<32x128xf32>, i32 -> vector<32x128xf32>
    %c5_26 = arith.constant 5 : index
    %c0_27 = arith.constant 0 : index
    %c0_28 = arith.constant 0 : index
    %56 = vector.load %arg6[%c5_26, %c0_27, %c0_28] : memref<9x32x1xf32, #tpu.memory_space<vmem>>, vector<1x32x1xf32>
    %57 = vector.shape_cast %56 : vector<1x32x1xf32> to vector<32x1xf32>
    %58 = vector.broadcast %57 : vector<32x1xf32> to vector<32x128xf32>
    %59 = arith.mulf %55, %58 : vector<32x128xf32>
    %60 = vector.extract_strided_slice %7 {offsets = [32, 0], sizes = [32, 128], strides = [1, 1]} : vector<128x128xf32> to vector<32x128xf32>
    %c29_i32 = arith.constant 29 : i32
    %61 = tpu.dynamic_rotate %60 by %c29_i32 dim 0 : vector<32x128xf32>, i32 -> vector<32x128xf32>
    %c6 = arith.constant 6 : index
    %c0_29 = arith.constant 0 : index
    %c0_30 = arith.constant 0 : index
    %62 = vector.load %arg6[%c6, %c0_29, %c0_30] : memref<9x32x1xf32, #tpu.memory_space<vmem>>, vector<1x32x1xf32>
    %63 = vector.shape_cast %62 : vector<1x32x1xf32> to vector<32x1xf32>
    %64 = vector.broadcast %63 : vector<32x1xf32> to vector<32x128xf32>
    %65 = arith.mulf %61, %64 : vector<32x128xf32>
    %66 = vector.extract_strided_slice %7 {offsets = [0, 0], sizes = [32, 128], strides = [1, 1]} : vector<128x128xf32> to vector<32x128xf32>
    %c28_i32 = arith.constant 28 : i32
    %67 = tpu.dynamic_rotate %66 by %c28_i32 dim 0 : vector<32x128xf32>, i32 -> vector<32x128xf32>
    %c7 = arith.constant 7 : index
    %c0_31 = arith.constant 0 : index
    %c0_32 = arith.constant 0 : index
    %68 = vector.load %arg6[%c7, %c0_31, %c0_32] : memref<9x32x1xf32, #tpu.memory_space<vmem>>, vector<1x32x1xf32>
    %69 = vector.shape_cast %68 : vector<1x32x1xf32> to vector<32x1xf32>
    %70 = vector.broadcast %69 : vector<32x1xf32> to vector<32x128xf32>
    %71 = arith.mulf %67, %70 : vector<32x128xf32>
    %72 = vector.extract_strided_slice %7 {offsets = [32, 0], sizes = [32, 128], strides = [1, 1]} : vector<128x128xf32> to vector<32x128xf32>
    %c28_i32_33 = arith.constant 28 : i32
    %73 = tpu.dynamic_rotate %72 by %c28_i32_33 dim 0 : vector<32x128xf32>, i32 -> vector<32x128xf32>
    %c7_34 = arith.constant 7 : index
    %c0_35 = arith.constant 0 : index
    %c0_36 = arith.constant 0 : index
    %74 = vector.load %arg6[%c7_34, %c0_35, %c0_36] : memref<9x32x1xf32, #tpu.memory_space<vmem>>, vector<1x32x1xf32>
    %75 = vector.shape_cast %74 : vector<1x32x1xf32> to vector<32x1xf32>
    %76 = vector.broadcast %75 : vector<32x1xf32> to vector<32x128xf32>
    %77 = arith.mulf %73, %76 : vector<32x128xf32>
    %78 = vector.extract_strided_slice %7 {offsets = [0, 0], sizes = [32, 128], strides = [1, 1]} : vector<128x128xf32> to vector<32x128xf32>
    %c27_i32 = arith.constant 27 : i32
    %79 = tpu.dynamic_rotate %78 by %c27_i32 dim 0 : vector<32x128xf32>, i32 -> vector<32x128xf32>
    %c8 = arith.constant 8 : index
    %c0_37 = arith.constant 0 : index
    %c0_38 = arith.constant 0 : index
    %80 = vector.load %arg6[%c8, %c0_37, %c0_38] : memref<9x32x1xf32, #tpu.memory_space<vmem>>, vector<1x32x1xf32>
    %81 = vector.shape_cast %80 : vector<1x32x1xf32> to vector<32x1xf32>
    %82 = vector.broadcast %81 : vector<32x1xf32> to vector<32x128xf32>
    %83 = arith.mulf %79, %82 : vector<32x128xf32>
    %c0_39 = arith.constant 0 : index
    %c0_40 = arith.constant 0 : index
    %84 = vector.load %arg4[%c0_39, %c0_40] : memref<2048x128xbf16, #tpu.memory_space<vmem>>, vector<2048x128xbf16>
    %85 = tpu.concatenate %13, %19, %25, %31, %37, %38, %39, %45, %51, %52, %53, %59, %65, %71, %77, %83 in 1 : vector<32x128xf32>, vector<32x128xf32>, vector<32x128xf32>, vector<32x128xf32>, vector<32x128xf32>, vector<32x128xf32>, vector<32x128xf32>, vector<32x128xf32>, vector<32x128xf32>, vector<32x128xf32>, vector<32x128xf32>, vector<32x128xf32>, vector<32x128xf32>, vector<32x128xf32>, vector<32x128xf32>, vector<32x128xf32> -> vector<32x2048xf32>
    %86 = arith.truncf %85 : vector<32x2048xf32> to vector<32x2048xbf16>
    %cst_41 = arith.constant dense<0.000000e+00> : vector<32x128xf32>
    %87 = tpu.matmul %86, %84, %cst_41 {dimension_numbers = #tpu.dot_dimension_numbers<[1], [0], [0], [1], [0, 0, 1, 1], [], []>} : vector<32x2048xbf16>, vector<2048x128xbf16>, vector<32x128xf32> -> vector<32x128xf32>
    %c0_42 = arith.constant 0 : index
    %c0_43 = arith.constant 0 : index
    %88 = vector.load %arg5[%c0_42, %c0_43] : memref<1x128xf32, #tpu.memory_space<vmem>>, vector<1x128xf32>
    %89 = vector.broadcast %88 : vector<1x128xf32> to vector<32x128xf32>
    %90 = arith.addf %87, %89 : vector<32x128xf32>
    %cst_44 = arith.constant 0.000000e+00 : f32
    %91 = vector.broadcast %cst_44 : f32 to vector<32x128xf32>
    %92 = arith.maximumf %90, %91 : vector<32x128xf32>
    %c0_45 = arith.constant 0 : index
    %c0_46 = arith.constant 0 : index
    %93 = vector.load %arg7[%c0_45, %c0_46] : memref<1152x256xbf16, #tpu.memory_space<vmem>>, vector<1152x256xbf16>
    %c5_i32_47 = arith.constant 5 : i32
    %94 = tpu.dynamic_rotate %92 by %c5_i32_47 dim 0 : vector<32x128xf32>, i32 -> vector<32x128xf32>
    %c0_48 = arith.constant 0 : index
    %c0_49 = arith.constant 0 : index
    %c0_50 = arith.constant 0 : index
    %95 = vector.load %arg6[%c0_48, %c0_49, %c0_50] : memref<9x32x1xf32, #tpu.memory_space<vmem>>, vector<1x32x1xf32>
    %96 = vector.shape_cast %95 : vector<1x32x1xf32> to vector<32x1xf32>
    %97 = vector.broadcast %96 : vector<32x1xf32> to vector<32x128xf32>
    %98 = arith.mulf %94, %97 : vector<32x128xf32>
    %c4_i32_51 = arith.constant 4 : i32
    %99 = tpu.dynamic_rotate %92 by %c4_i32_51 dim 0 : vector<32x128xf32>, i32 -> vector<32x128xf32>
    %c1_52 = arith.constant 1 : index
    %c0_53 = arith.constant 0 : index
    %c0_54 = arith.constant 0 : index
    %100 = vector.load %arg6[%c1_52, %c0_53, %c0_54] : memref<9x32x1xf32, #tpu.memory_space<vmem>>, vector<1x32x1xf32>
    %101 = vector.shape_cast %100 : vector<1x32x1xf32> to vector<32x1xf32>
    %102 = vector.broadcast %101 : vector<32x1xf32> to vector<32x128xf32>
    %103 = arith.mulf %99, %102 : vector<32x128xf32>
    %c3_i32_55 = arith.constant 3 : i32
    %104 = tpu.dynamic_rotate %92 by %c3_i32_55 dim 0 : vector<32x128xf32>, i32 -> vector<32x128xf32>
    %c2_56 = arith.constant 2 : index
    %c0_57 = arith.constant 0 : index
    %c0_58 = arith.constant 0 : index
    %105 = vector.load %arg6[%c2_56, %c0_57, %c0_58] : memref<9x32x1xf32, #tpu.memory_space<vmem>>, vector<1x32x1xf32>
    %106 = vector.shape_cast %105 : vector<1x32x1xf32> to vector<32x1xf32>
    %107 = vector.broadcast %106 : vector<32x1xf32> to vector<32x128xf32>
    %108 = arith.mulf %104, %107 : vector<32x128xf32>
    %c1_i32_59 = arith.constant 1 : i32
    %109 = tpu.dynamic_rotate %92 by %c1_i32_59 dim 0 : vector<32x128xf32>, i32 -> vector<32x128xf32>
    %c3_60 = arith.constant 3 : index
    %c0_61 = arith.constant 0 : index
    %c0_62 = arith.constant 0 : index
    %110 = vector.load %arg6[%c3_60, %c0_61, %c0_62] : memref<9x32x1xf32, #tpu.memory_space<vmem>>, vector<1x32x1xf32>
    %111 = vector.shape_cast %110 : vector<1x32x1xf32> to vector<32x1xf32>
    %112 = vector.broadcast %111 : vector<32x1xf32> to vector<32x128xf32>
    %113 = arith.mulf %109, %112 : vector<32x128xf32>
    %c31_i32_63 = arith.constant 31 : i32
    %114 = tpu.dynamic_rotate %92 by %c31_i32_63 dim 0 : vector<32x128xf32>, i32 -> vector<32x128xf32>
    %c5_64 = arith.constant 5 : index
    %c0_65 = arith.constant 0 : index
    %c0_66 = arith.constant 0 : index
    %115 = vector.load %arg6[%c5_64, %c0_65, %c0_66] : memref<9x32x1xf32, #tpu.memory_space<vmem>>, vector<1x32x1xf32>
    %116 = vector.shape_cast %115 : vector<1x32x1xf32> to vector<32x1xf32>
    %117 = vector.broadcast %116 : vector<32x1xf32> to vector<32x128xf32>
    %118 = arith.mulf %114, %117 : vector<32x128xf32>
    %c29_i32_67 = arith.constant 29 : i32
    %119 = tpu.dynamic_rotate %92 by %c29_i32_67 dim 0 : vector<32x128xf32>, i32 -> vector<32x128xf32>
    %c6_68 = arith.constant 6 : index
    %c0_69 = arith.constant 0 : index
    %c0_70 = arith.constant 0 : index
    %120 = vector.load %arg6[%c6_68, %c0_69, %c0_70] : memref<9x32x1xf32, #tpu.memory_space<vmem>>, vector<1x32x1xf32>
    %121 = vector.shape_cast %120 : vector<1x32x1xf32> to vector<32x1xf32>
    %122 = vector.broadcast %121 : vector<32x1xf32> to vector<32x128xf32>
    %123 = arith.mulf %119, %122 : vector<32x128xf32>
    %c28_i32_71 = arith.constant 28 : i32
    %124 = tpu.dynamic_rotate %92 by %c28_i32_71 dim 0 : vector<32x128xf32>, i32 -> vector<32x128xf32>
    %c7_72 = arith.constant 7 : index
    %c0_73 = arith.constant 0 : index
    %c0_74 = arith.constant 0 : index
    %125 = vector.load %arg6[%c7_72, %c0_73, %c0_74] : memref<9x32x1xf32, #tpu.memory_space<vmem>>, vector<1x32x1xf32>
    %126 = vector.shape_cast %125 : vector<1x32x1xf32> to vector<32x1xf32>
    %127 = vector.broadcast %126 : vector<32x1xf32> to vector<32x128xf32>
    %128 = arith.mulf %124, %127 : vector<32x128xf32>
    %c27_i32_75 = arith.constant 27 : i32
    %129 = tpu.dynamic_rotate %92 by %c27_i32_75 dim 0 : vector<32x128xf32>, i32 -> vector<32x128xf32>
    %c8_76 = arith.constant 8 : index
    %c0_77 = arith.constant 0 : index
    %c0_78 = arith.constant 0 : index
    %130 = vector.load %arg6[%c8_76, %c0_77, %c0_78] : memref<9x32x1xf32, #tpu.memory_space<vmem>>, vector<1x32x1xf32>
    %131 = vector.shape_cast %130 : vector<1x32x1xf32> to vector<32x1xf32>
    %132 = vector.broadcast %131 : vector<32x1xf32> to vector<32x128xf32>
    %133 = arith.mulf %129, %132 : vector<32x128xf32>
    %134 = tpu.concatenate %98, %103, %108, %113, %92, %118, %123, %128, %133 in 1 : vector<32x128xf32>, vector<32x128xf32>, vector<32x128xf32>, vector<32x128xf32>, vector<32x128xf32>, vector<32x128xf32>, vector<32x128xf32>, vector<32x128xf32>, vector<32x128xf32> -> vector<32x1152xf32>
    %135 = arith.truncf %134 : vector<32x1152xf32> to vector<32x1152xbf16>
    %cst_79 = arith.constant dense<0.000000e+00> : vector<32x256xf32>
    %136 = tpu.matmul %135, %93, %cst_79 {dimension_numbers = #tpu.dot_dimension_numbers<[1], [0], [0], [1], [0, 0, 1, 1], [], []>} : vector<32x1152xbf16>, vector<1152x256xbf16>, vector<32x256xf32> -> vector<32x256xf32>
    %c0_80 = arith.constant 0 : index
    %c0_81 = arith.constant 0 : index
    %137 = vector.load %arg8[%c0_80, %c0_81] : memref<1x256xf32, #tpu.memory_space<vmem>>, vector<1x256xf32>
    %138 = vector.broadcast %137 : vector<1x256xf32> to vector<32x256xf32>
    %139 = arith.addf %136, %138 : vector<32x256xf32>
    %cst_82 = arith.constant 0.000000e+00 : f32
    %140 = vector.broadcast %cst_82 : f32 to vector<32x256xf32>
    %141 = arith.maximumf %139, %140 : vector<32x256xf32>
    %c0_83 = arith.constant 0 : index
    %c0_84 = arith.constant 0 : index
    %c0_85 = arith.constant 0 : index
    %142 = vector.load %arg9[%c0_83, %c0_84, %c0_85] : memref<3x2304x256xbf16, #tpu.memory_space<vmem>>, vector<1x2304x256xbf16>
    %143 = vector.shape_cast %142 : vector<1x2304x256xbf16> to vector<2304x256xbf16>
    %c5_i32_86 = arith.constant 5 : i32
    %144 = tpu.dynamic_rotate %141 by %c5_i32_86 dim 0 : vector<32x256xf32>, i32 -> vector<32x256xf32>
    %c0_87 = arith.constant 0 : index
    %c0_88 = arith.constant 0 : index
    %c0_89 = arith.constant 0 : index
    %145 = vector.load %arg6[%c0_87, %c0_88, %c0_89] : memref<9x32x1xf32, #tpu.memory_space<vmem>>, vector<1x32x1xf32>
    %146 = vector.shape_cast %145 : vector<1x32x1xf32> to vector<32x1xf32>
    %147 = vector.broadcast %146 : vector<32x1xf32> to vector<32x256xf32>
    %148 = arith.mulf %144, %147 : vector<32x256xf32>
    %c4_i32_90 = arith.constant 4 : i32
    %149 = tpu.dynamic_rotate %141 by %c4_i32_90 dim 0 : vector<32x256xf32>, i32 -> vector<32x256xf32>
    %c1_91 = arith.constant 1 : index
    %c0_92 = arith.constant 0 : index
    %c0_93 = arith.constant 0 : index
    %150 = vector.load %arg6[%c1_91, %c0_92, %c0_93] : memref<9x32x1xf32, #tpu.memory_space<vmem>>, vector<1x32x1xf32>
    %151 = vector.shape_cast %150 : vector<1x32x1xf32> to vector<32x1xf32>
    %152 = vector.broadcast %151 : vector<32x1xf32> to vector<32x256xf32>
    %153 = arith.mulf %149, %152 : vector<32x256xf32>
    %c3_i32_94 = arith.constant 3 : i32
    %154 = tpu.dynamic_rotate %141 by %c3_i32_94 dim 0 : vector<32x256xf32>, i32 -> vector<32x256xf32>
    %c2_95 = arith.constant 2 : index
    %c0_96 = arith.constant 0 : index
    %c0_97 = arith.constant 0 : index
    %155 = vector.load %arg6[%c2_95, %c0_96, %c0_97] : memref<9x32x1xf32, #tpu.memory_space<vmem>>, vector<1x32x1xf32>
    %156 = vector.shape_cast %155 : vector<1x32x1xf32> to vector<32x1xf32>
    %157 = vector.broadcast %156 : vector<32x1xf32> to vector<32x256xf32>
    %158 = arith.mulf %154, %157 : vector<32x256xf32>
    %c1_i32_98 = arith.constant 1 : i32
    %159 = tpu.dynamic_rotate %141 by %c1_i32_98 dim 0 : vector<32x256xf32>, i32 -> vector<32x256xf32>
    %c3_99 = arith.constant 3 : index
    %c0_100 = arith.constant 0 : index
    %c0_101 = arith.constant 0 : index
    %160 = vector.load %arg6[%c3_99, %c0_100, %c0_101] : memref<9x32x1xf32, #tpu.memory_space<vmem>>, vector<1x32x1xf32>
    %161 = vector.shape_cast %160 : vector<1x32x1xf32> to vector<32x1xf32>
    %162 = vector.broadcast %161 : vector<32x1xf32> to vector<32x256xf32>
    %163 = arith.mulf %159, %162 : vector<32x256xf32>
    %c31_i32_102 = arith.constant 31 : i32
    %164 = tpu.dynamic_rotate %141 by %c31_i32_102 dim 0 : vector<32x256xf32>, i32 -> vector<32x256xf32>
    %c5_103 = arith.constant 5 : index
    %c0_104 = arith.constant 0 : index
    %c0_105 = arith.constant 0 : index
    %165 = vector.load %arg6[%c5_103, %c0_104, %c0_105] : memref<9x32x1xf32, #tpu.memory_space<vmem>>, vector<1x32x1xf32>
    %166 = vector.shape_cast %165 : vector<1x32x1xf32> to vector<32x1xf32>
    %167 = vector.broadcast %166 : vector<32x1xf32> to vector<32x256xf32>
    %168 = arith.mulf %164, %167 : vector<32x256xf32>
    %c29_i32_106 = arith.constant 29 : i32
    %169 = tpu.dynamic_rotate %141 by %c29_i32_106 dim 0 : vector<32x256xf32>, i32 -> vector<32x256xf32>
    %c6_107 = arith.constant 6 : index
    %c0_108 = arith.constant 0 : index
    %c0_109 = arith.constant 0 : index
    %170 = vector.load %arg6[%c6_107, %c0_108, %c0_109] : memref<9x32x1xf32, #tpu.memory_space<vmem>>, vector<1x32x1xf32>
    %171 = vector.shape_cast %170 : vector<1x32x1xf32> to vector<32x1xf32>
    %172 = vector.broadcast %171 : vector<32x1xf32> to vector<32x256xf32>
    %173 = arith.mulf %169, %172 : vector<32x256xf32>
    %c28_i32_110 = arith.constant 28 : i32
    %174 = tpu.dynamic_rotate %141 by %c28_i32_110 dim 0 : vector<32x256xf32>, i32 -> vector<32x256xf32>
    %c7_111 = arith.constant 7 : index
    %c0_112 = arith.constant 0 : index
    %c0_113 = arith.constant 0 : index
    %175 = vector.load %arg6[%c7_111, %c0_112, %c0_113] : memref<9x32x1xf32, #tpu.memory_space<vmem>>, vector<1x32x1xf32>
    %176 = vector.shape_cast %175 : vector<1x32x1xf32> to vector<32x1xf32>
    %177 = vector.broadcast %176 : vector<32x1xf32> to vector<32x256xf32>
    %178 = arith.mulf %174, %177 : vector<32x256xf32>
    %c27_i32_114 = arith.constant 27 : i32
    %179 = tpu.dynamic_rotate %141 by %c27_i32_114 dim 0 : vector<32x256xf32>, i32 -> vector<32x256xf32>
    %c8_115 = arith.constant 8 : index
    %c0_116 = arith.constant 0 : index
    %c0_117 = arith.constant 0 : index
    %180 = vector.load %arg6[%c8_115, %c0_116, %c0_117] : memref<9x32x1xf32, #tpu.memory_space<vmem>>, vector<1x32x1xf32>
    %181 = vector.shape_cast %180 : vector<1x32x1xf32> to vector<32x1xf32>
    %182 = vector.broadcast %181 : vector<32x1xf32> to vector<32x256xf32>
    %183 = arith.mulf %179, %182 : vector<32x256xf32>
    %184 = tpu.concatenate %148, %153, %158, %163, %141, %168, %173, %178, %183 in 1 : vector<32x256xf32>, vector<32x256xf32>, vector<32x256xf32>, vector<32x256xf32>, vector<32x256xf32>, vector<32x256xf32>, vector<32x256xf32>, vector<32x256xf32>, vector<32x256xf32> -> vector<32x2304xf32>
    %185 = arith.truncf %184 : vector<32x2304xf32> to vector<32x2304xbf16>
    %cst_118 = arith.constant dense<0.000000e+00> : vector<32x256xf32>
    %186 = tpu.matmul %185, %143, %cst_118 {dimension_numbers = #tpu.dot_dimension_numbers<[1], [0], [0], [1], [0, 0, 1, 1], [], []>} : vector<32x2304xbf16>, vector<2304x256xbf16>, vector<32x256xf32> -> vector<32x256xf32>
    %cst_119 = arith.constant 0.000000e+00 : f32
    %187 = vector.broadcast %cst_119 : f32 to vector<32x256xf32>
    %188 = arith.maximumf %186, %187 : vector<32x256xf32>
    %189 = arith.truncf %188 : vector<32x256xf32> to vector<32x256xbf16>
    %c0_120 = arith.constant 0 : index
    %c0_121 = arith.constant 0 : index
    %c0_122 = arith.constant 0 : index
    %190 = vector.load %arg10[%c0_120, %c0_121, %c0_122] : memref<3x256x256xbf16, #tpu.memory_space<vmem>>, vector<1x256x256xbf16>
    %191 = vector.shape_cast %190 : vector<1x256x256xbf16> to vector<256x256xbf16>
    %cst_123 = arith.constant dense<0.000000e+00> : vector<32x256xf32>
    %192 = tpu.matmul %189, %191, %cst_123 {dimension_numbers = #tpu.dot_dimension_numbers<[1], [0], [0], [1], [0, 0, 1, 1], [], []>} : vector<32x256xbf16>, vector<256x256xbf16>, vector<32x256xf32> -> vector<32x256xf32>
    %193 = arith.addf %139, %192 : vector<32x256xf32>
    %cst_124 = arith.constant 0.000000e+00 : f32
    %194 = vector.broadcast %cst_124 : f32 to vector<32x256xf32>
    %195 = arith.maximumf %193, %194 : vector<32x256xf32>
    %c1_125 = arith.constant 1 : index
    %c0_126 = arith.constant 0 : index
    %c0_127 = arith.constant 0 : index
    %196 = vector.load %arg9[%c1_125, %c0_126, %c0_127] : memref<3x2304x256xbf16, #tpu.memory_space<vmem>>, vector<1x2304x256xbf16>
    %197 = vector.shape_cast %196 : vector<1x2304x256xbf16> to vector<2304x256xbf16>
    %c5_i32_128 = arith.constant 5 : i32
    %198 = tpu.dynamic_rotate %195 by %c5_i32_128 dim 0 : vector<32x256xf32>, i32 -> vector<32x256xf32>
    %c0_129 = arith.constant 0 : index
    %c0_130 = arith.constant 0 : index
    %c0_131 = arith.constant 0 : index
    %199 = vector.load %arg6[%c0_129, %c0_130, %c0_131] : memref<9x32x1xf32, #tpu.memory_space<vmem>>, vector<1x32x1xf32>
    %200 = vector.shape_cast %199 : vector<1x32x1xf32> to vector<32x1xf32>
    %201 = vector.broadcast %200 : vector<32x1xf32> to vector<32x256xf32>
    %202 = arith.mulf %198, %201 : vector<32x256xf32>
    %c4_i32_132 = arith.constant 4 : i32
    %203 = tpu.dynamic_rotate %195 by %c4_i32_132 dim 0 : vector<32x256xf32>, i32 -> vector<32x256xf32>
    %c1_133 = arith.constant 1 : index
    %c0_134 = arith.constant 0 : index
    %c0_135 = arith.constant 0 : index
    %204 = vector.load %arg6[%c1_133, %c0_134, %c0_135] : memref<9x32x1xf32, #tpu.memory_space<vmem>>, vector<1x32x1xf32>
    %205 = vector.shape_cast %204 : vector<1x32x1xf32> to vector<32x1xf32>
    %206 = vector.broadcast %205 : vector<32x1xf32> to vector<32x256xf32>
    %207 = arith.mulf %203, %206 : vector<32x256xf32>
    %c3_i32_136 = arith.constant 3 : i32
    %208 = tpu.dynamic_rotate %195 by %c3_i32_136 dim 0 : vector<32x256xf32>, i32 -> vector<32x256xf32>
    %c2_137 = arith.constant 2 : index
    %c0_138 = arith.constant 0 : index
    %c0_139 = arith.constant 0 : index
    %209 = vector.load %arg6[%c2_137, %c0_138, %c0_139] : memref<9x32x1xf32, #tpu.memory_space<vmem>>, vector<1x32x1xf32>
    %210 = vector.shape_cast %209 : vector<1x32x1xf32> to vector<32x1xf32>
    %211 = vector.broadcast %210 : vector<32x1xf32> to vector<32x256xf32>
    %212 = arith.mulf %208, %211 : vector<32x256xf32>
    %c1_i32_140 = arith.constant 1 : i32
    %213 = tpu.dynamic_rotate %195 by %c1_i32_140 dim 0 : vector<32x256xf32>, i32 -> vector<32x256xf32>
    %c3_141 = arith.constant 3 : index
    %c0_142 = arith.constant 0 : index
    %c0_143 = arith.constant 0 : index
    %214 = vector.load %arg6[%c3_141, %c0_142, %c0_143] : memref<9x32x1xf32, #tpu.memory_space<vmem>>, vector<1x32x1xf32>
    %215 = vector.shape_cast %214 : vector<1x32x1xf32> to vector<32x1xf32>
    %216 = vector.broadcast %215 : vector<32x1xf32> to vector<32x256xf32>
    %217 = arith.mulf %213, %216 : vector<32x256xf32>
    %c31_i32_144 = arith.constant 31 : i32
    %218 = tpu.dynamic_rotate %195 by %c31_i32_144 dim 0 : vector<32x256xf32>, i32 -> vector<32x256xf32>
    %c5_145 = arith.constant 5 : index
    %c0_146 = arith.constant 0 : index
    %c0_147 = arith.constant 0 : index
    %219 = vector.load %arg6[%c5_145, %c0_146, %c0_147] : memref<9x32x1xf32, #tpu.memory_space<vmem>>, vector<1x32x1xf32>
    %220 = vector.shape_cast %219 : vector<1x32x1xf32> to vector<32x1xf32>
    %221 = vector.broadcast %220 : vector<32x1xf32> to vector<32x256xf32>
    %222 = arith.mulf %218, %221 : vector<32x256xf32>
    %c29_i32_148 = arith.constant 29 : i32
    %223 = tpu.dynamic_rotate %195 by %c29_i32_148 dim 0 : vector<32x256xf32>, i32 -> vector<32x256xf32>
    %c6_149 = arith.constant 6 : index
    %c0_150 = arith.constant 0 : index
    %c0_151 = arith.constant 0 : index
    %224 = vector.load %arg6[%c6_149, %c0_150, %c0_151] : memref<9x32x1xf32, #tpu.memory_space<vmem>>, vector<1x32x1xf32>
    %225 = vector.shape_cast %224 : vector<1x32x1xf32> to vector<32x1xf32>
    %226 = vector.broadcast %225 : vector<32x1xf32> to vector<32x256xf32>
    %227 = arith.mulf %223, %226 : vector<32x256xf32>
    %c28_i32_152 = arith.constant 28 : i32
    %228 = tpu.dynamic_rotate %195 by %c28_i32_152 dim 0 : vector<32x256xf32>, i32 -> vector<32x256xf32>
    %c7_153 = arith.constant 7 : index
    %c0_154 = arith.constant 0 : index
    %c0_155 = arith.constant 0 : index
    %229 = vector.load %arg6[%c7_153, %c0_154, %c0_155] : memref<9x32x1xf32, #tpu.memory_space<vmem>>, vector<1x32x1xf32>
    %230 = vector.shape_cast %229 : vector<1x32x1xf32> to vector<32x1xf32>
    %231 = vector.broadcast %230 : vector<32x1xf32> to vector<32x256xf32>
    %232 = arith.mulf %228, %231 : vector<32x256xf32>
    %c27_i32_156 = arith.constant 27 : i32
    %233 = tpu.dynamic_rotate %195 by %c27_i32_156 dim 0 : vector<32x256xf32>, i32 -> vector<32x256xf32>
    %c8_157 = arith.constant 8 : index
    %c0_158 = arith.constant 0 : index
    %c0_159 = arith.constant 0 : index
    %234 = vector.load %arg6[%c8_157, %c0_158, %c0_159] : memref<9x32x1xf32, #tpu.memory_space<vmem>>, vector<1x32x1xf32>
    %235 = vector.shape_cast %234 : vector<1x32x1xf32> to vector<32x1xf32>
    %236 = vector.broadcast %235 : vector<32x1xf32> to vector<32x256xf32>
    %237 = arith.mulf %233, %236 : vector<32x256xf32>
    %238 = tpu.concatenate %202, %207, %212, %217, %195, %222, %227, %232, %237 in 1 : vector<32x256xf32>, vector<32x256xf32>, vector<32x256xf32>, vector<32x256xf32>, vector<32x256xf32>, vector<32x256xf32>, vector<32x256xf32>, vector<32x256xf32>, vector<32x256xf32> -> vector<32x2304xf32>
    %239 = arith.truncf %238 : vector<32x2304xf32> to vector<32x2304xbf16>
    %cst_160 = arith.constant dense<0.000000e+00> : vector<32x256xf32>
    %240 = tpu.matmul %239, %197, %cst_160 {dimension_numbers = #tpu.dot_dimension_numbers<[1], [0], [0], [1], [0, 0, 1, 1], [], []>} : vector<32x2304xbf16>, vector<2304x256xbf16>, vector<32x256xf32> -> vector<32x256xf32>
    %cst_161 = arith.constant 0.000000e+00 : f32
    %241 = vector.broadcast %cst_161 : f32 to vector<32x256xf32>
    %242 = arith.maximumf %240, %241 : vector<32x256xf32>
    %243 = arith.truncf %242 : vector<32x256xf32> to vector<32x256xbf16>
    %c1_162 = arith.constant 1 : index
    %c0_163 = arith.constant 0 : index
    %c0_164 = arith.constant 0 : index
    %244 = vector.load %arg10[%c1_162, %c0_163, %c0_164] : memref<3x256x256xbf16, #tpu.memory_space<vmem>>, vector<1x256x256xbf16>
    %245 = vector.shape_cast %244 : vector<1x256x256xbf16> to vector<256x256xbf16>
    %cst_165 = arith.constant dense<0.000000e+00> : vector<32x256xf32>
    %246 = tpu.matmul %243, %245, %cst_165 {dimension_numbers = #tpu.dot_dimension_numbers<[1], [0], [0], [1], [0, 0, 1, 1], [], []>} : vector<32x256xbf16>, vector<256x256xbf16>, vector<32x256xf32> -> vector<32x256xf32>
    %247 = arith.addf %193, %246 : vector<32x256xf32>
    %cst_166 = arith.constant 0.000000e+00 : f32
    %248 = vector.broadcast %cst_166 : f32 to vector<32x256xf32>
    %249 = arith.maximumf %247, %248 : vector<32x256xf32>
    %c2_167 = arith.constant 2 : index
    %c0_168 = arith.constant 0 : index
    %c0_169 = arith.constant 0 : index
    %250 = vector.load %arg9[%c2_167, %c0_168, %c0_169] : memref<3x2304x256xbf16, #tpu.memory_space<vmem>>, vector<1x2304x256xbf16>
    %251 = vector.shape_cast %250 : vector<1x2304x256xbf16> to vector<2304x256xbf16>
    %c5_i32_170 = arith.constant 5 : i32
    %252 = tpu.dynamic_rotate %249 by %c5_i32_170 dim 0 : vector<32x256xf32>, i32 -> vector<32x256xf32>
    %c0_171 = arith.constant 0 : index
    %c0_172 = arith.constant 0 : index
    %c0_173 = arith.constant 0 : index
    %253 = vector.load %arg6[%c0_171, %c0_172, %c0_173] : memref<9x32x1xf32, #tpu.memory_space<vmem>>, vector<1x32x1xf32>
    %254 = vector.shape_cast %253 : vector<1x32x1xf32> to vector<32x1xf32>
    %255 = vector.broadcast %254 : vector<32x1xf32> to vector<32x256xf32>
    %256 = arith.mulf %252, %255 : vector<32x256xf32>
    %c4_i32_174 = arith.constant 4 : i32
    %257 = tpu.dynamic_rotate %249 by %c4_i32_174 dim 0 : vector<32x256xf32>, i32 -> vector<32x256xf32>
    %c1_175 = arith.constant 1 : index
    %c0_176 = arith.constant 0 : index
    %c0_177 = arith.constant 0 : index
    %258 = vector.load %arg6[%c1_175, %c0_176, %c0_177] : memref<9x32x1xf32, #tpu.memory_space<vmem>>, vector<1x32x1xf32>
    %259 = vector.shape_cast %258 : vector<1x32x1xf32> to vector<32x1xf32>
    %260 = vector.broadcast %259 : vector<32x1xf32> to vector<32x256xf32>
    %261 = arith.mulf %257, %260 : vector<32x256xf32>
    %c3_i32_178 = arith.constant 3 : i32
    %262 = tpu.dynamic_rotate %249 by %c3_i32_178 dim 0 : vector<32x256xf32>, i32 -> vector<32x256xf32>
    %c2_179 = arith.constant 2 : index
    %c0_180 = arith.constant 0 : index
    %c0_181 = arith.constant 0 : index
    %263 = vector.load %arg6[%c2_179, %c0_180, %c0_181] : memref<9x32x1xf32, #tpu.memory_space<vmem>>, vector<1x32x1xf32>
    %264 = vector.shape_cast %263 : vector<1x32x1xf32> to vector<32x1xf32>
    %265 = vector.broadcast %264 : vector<32x1xf32> to vector<32x256xf32>
    %266 = arith.mulf %262, %265 : vector<32x256xf32>
    %c1_i32_182 = arith.constant 1 : i32
    %267 = tpu.dynamic_rotate %249 by %c1_i32_182 dim 0 : vector<32x256xf32>, i32 -> vector<32x256xf32>
    %c3_183 = arith.constant 3 : index
    %c0_184 = arith.constant 0 : index
    %c0_185 = arith.constant 0 : index
    %268 = vector.load %arg6[%c3_183, %c0_184, %c0_185] : memref<9x32x1xf32, #tpu.memory_space<vmem>>, vector<1x32x1xf32>
    %269 = vector.shape_cast %268 : vector<1x32x1xf32> to vector<32x1xf32>
    %270 = vector.broadcast %269 : vector<32x1xf32> to vector<32x256xf32>
    %271 = arith.mulf %267, %270 : vector<32x256xf32>
    %c31_i32_186 = arith.constant 31 : i32
    %272 = tpu.dynamic_rotate %249 by %c31_i32_186 dim 0 : vector<32x256xf32>, i32 -> vector<32x256xf32>
    %c5_187 = arith.constant 5 : index
    %c0_188 = arith.constant 0 : index
    %c0_189 = arith.constant 0 : index
    %273 = vector.load %arg6[%c5_187, %c0_188, %c0_189] : memref<9x32x1xf32, #tpu.memory_space<vmem>>, vector<1x32x1xf32>
    %274 = vector.shape_cast %273 : vector<1x32x1xf32> to vector<32x1xf32>
    %275 = vector.broadcast %274 : vector<32x1xf32> to vector<32x256xf32>
    %276 = arith.mulf %272, %275 : vector<32x256xf32>
    %c29_i32_190 = arith.constant 29 : i32
    %277 = tpu.dynamic_rotate %249 by %c29_i32_190 dim 0 : vector<32x256xf32>, i32 -> vector<32x256xf32>
    %c6_191 = arith.constant 6 : index
    %c0_192 = arith.constant 0 : index
    %c0_193 = arith.constant 0 : index
    %278 = vector.load %arg6[%c6_191, %c0_192, %c0_193] : memref<9x32x1xf32, #tpu.memory_space<vmem>>, vector<1x32x1xf32>
    %279 = vector.shape_cast %278 : vector<1x32x1xf32> to vector<32x1xf32>
    %280 = vector.broadcast %279 : vector<32x1xf32> to vector<32x256xf32>
    %281 = arith.mulf %277, %280 : vector<32x256xf32>
    %c28_i32_194 = arith.constant 28 : i32
    %282 = tpu.dynamic_rotate %249 by %c28_i32_194 dim 0 : vector<32x256xf32>, i32 -> vector<32x256xf32>
    %c7_195 = arith.constant 7 : index
    %c0_196 = arith.constant 0 : index
    %c0_197 = arith.constant 0 : index
    %283 = vector.load %arg6[%c7_195, %c0_196, %c0_197] : memref<9x32x1xf32, #tpu.memory_space<vmem>>, vector<1x32x1xf32>
    %284 = vector.shape_cast %283 : vector<1x32x1xf32> to vector<32x1xf32>
    %285 = vector.broadcast %284 : vector<32x1xf32> to vector<32x256xf32>
    %286 = arith.mulf %282, %285 : vector<32x256xf32>
    %c27_i32_198 = arith.constant 27 : i32
    %287 = tpu.dynamic_rotate %249 by %c27_i32_198 dim 0 : vector<32x256xf32>, i32 -> vector<32x256xf32>
    %c8_199 = arith.constant 8 : index
    %c0_200 = arith.constant 0 : index
    %c0_201 = arith.constant 0 : index
    %288 = vector.load %arg6[%c8_199, %c0_200, %c0_201] : memref<9x32x1xf32, #tpu.memory_space<vmem>>, vector<1x32x1xf32>
    %289 = vector.shape_cast %288 : vector<1x32x1xf32> to vector<32x1xf32>
    %290 = vector.broadcast %289 : vector<32x1xf32> to vector<32x256xf32>
    %291 = arith.mulf %287, %290 : vector<32x256xf32>
    %292 = tpu.concatenate %256, %261, %266, %271, %249, %276, %281, %286, %291 in 1 : vector<32x256xf32>, vector<32x256xf32>, vector<32x256xf32>, vector<32x256xf32>, vector<32x256xf32>, vector<32x256xf32>, vector<32x256xf32>, vector<32x256xf32>, vector<32x256xf32> -> vector<32x2304xf32>
    %293 = arith.truncf %292 : vector<32x2304xf32> to vector<32x2304xbf16>
    %cst_202 = arith.constant dense<0.000000e+00> : vector<32x256xf32>
    %294 = tpu.matmul %293, %251, %cst_202 {dimension_numbers = #tpu.dot_dimension_numbers<[1], [0], [0], [1], [0, 0, 1, 1], [], []>} : vector<32x2304xbf16>, vector<2304x256xbf16>, vector<32x256xf32> -> vector<32x256xf32>
    %cst_203 = arith.constant 0.000000e+00 : f32
    %295 = vector.broadcast %cst_203 : f32 to vector<32x256xf32>
    %296 = arith.maximumf %294, %295 : vector<32x256xf32>
    %297 = arith.truncf %296 : vector<32x256xf32> to vector<32x256xbf16>
    %c2_204 = arith.constant 2 : index
    %c0_205 = arith.constant 0 : index
    %c0_206 = arith.constant 0 : index
    %298 = vector.load %arg10[%c2_204, %c0_205, %c0_206] : memref<3x256x256xbf16, #tpu.memory_space<vmem>>, vector<1x256x256xbf16>
    %299 = vector.shape_cast %298 : vector<1x256x256xbf16> to vector<256x256xbf16>
    %cst_207 = arith.constant dense<0.000000e+00> : vector<32x256xf32>
    %300 = tpu.matmul %297, %299, %cst_207 {dimension_numbers = #tpu.dot_dimension_numbers<[1], [0], [0], [1], [0, 0, 1, 1], [], []>} : vector<32x256xbf16>, vector<256x256xbf16>, vector<32x256xf32> -> vector<32x256xf32>
    %301 = arith.addf %247, %300 : vector<32x256xf32>
    %cst_208 = arith.constant 0.000000e+00 : f32
    %302 = vector.broadcast %cst_208 : f32 to vector<32x256xf32>
    %303 = arith.maximumf %301, %302 : vector<32x256xf32>
    %c0_209 = arith.constant 0 : index
    %c0_210 = arith.constant 0 : index
    %304 = vector.load %arg11[%c0_209, %c0_210] : memref<32x256xf32, #tpu.memory_space<vmem>>, vector<32x256xf32>
    tpu.vector_store %arg11[%c0_209, %c0_210], %303 {strides = array<i32>} : memref<32x256xf32, #tpu.memory_space<vmem>>, vector<32x256xf32>,
    return
  }
  func.func @transform_0(%arg0: i32) -> (i32, i32) {
    %c0_i32 = arith.constant 0 : i32
    %c0_i32_0 = arith.constant 0 : i32
    %c0_i32_1 = arith.constant 0 : i32
    return %c0_i32, %c0_i32_0 : i32, i32
  }
  func.func @transform_1(%arg0: i32) -> (i32, i32) {
    %c0_i32 = arith.constant 0 : i32
    %c0_i32_0 = arith.constant 0 : i32
    %c0_i32_1 = arith.constant 0 : i32
    return %c0_i32, %c0_i32_0 : i32, i32
  }
  func.func @transform_2(%arg0: i32) -> (i32, i32) {
    %c0_i32 = arith.constant 0 : i32
    %c0_i32_0 = arith.constant 0 : i32
    %c0_i32_1 = arith.constant 0 : i32
    return %c0_i32, %c0_i32_0 : i32, i32
  }
  func.func @transform_3(%arg0: i32) -> (i32, i32) {
    %c0_i32 = arith.constant 0 : i32
    %c0_i32_0 = arith.constant 0 : i32
    %c0_i32_1 = arith.constant 0 : i32
    return %c0_i32, %c0_i32_0 : i32, i32
  }
  func.func @transform_4(%arg0: i32) -> (i32, i32) {
    %c0_i32 = arith.constant 0 : i32
    %c0_i32_0 = arith.constant 0 : i32
    %c0_i32_1 = arith.constant 0 : i32
    return %c0_i32, %c0_i32_0 : i32, i32
  }
  func.func @transform_5(%arg0: i32) -> (i32, i32, i32) {
    %c0_i32 = arith.constant 0 : i32
    %c0_i32_0 = arith.constant 0 : i32
    %c0_i32_1 = arith.constant 0 : i32
    %c0_i32_2 = arith.constant 0 : i32
    return %c0_i32, %c0_i32_0, %c0_i32_1 : i32, i32, i32
  }
  func.func @transform_6(%arg0: i32) -> (i32, i32) {
    %c0_i32 = arith.constant 0 : i32
    %c0_i32_0 = arith.constant 0 : i32
    %c0_i32_1 = arith.constant 0 : i32
    return %c0_i32, %c0_i32_0 : i32, i32
  }
  func.func @transform_7(%arg0: i32) -> (i32, i32) {
    %c0_i32 = arith.constant 0 : i32
    %c0_i32_0 = arith.constant 0 : i32
    %c0_i32_1 = arith.constant 0 : i32
    return %c0_i32, %c0_i32_0 : i32, i32
  }
  func.func @transform_8(%arg0: i32) -> (i32, i32, i32) {
    %c0_i32 = arith.constant 0 : i32
    %c0_i32_0 = arith.constant 0 : i32
    %c0_i32_1 = arith.constant 0 : i32
    %c0_i32_2 = arith.constant 0 : i32
    return %c0_i32, %c0_i32_0, %c0_i32_1 : i32, i32, i32
  }
  func.func @transform_9(%arg0: i32) -> (i32, i32, i32) {
    %c0_i32 = arith.constant 0 : i32
    %c0_i32_0 = arith.constant 0 : i32
    %c0_i32_1 = arith.constant 0 : i32
    %c0_i32_2 = arith.constant 0 : i32
    return %c0_i32, %c0_i32_0, %c0_i32_1 : i32, i32, i32
  }
  func.func @transform_10(%arg0: i32) -> (i32, i32) {
    %c0_i32 = arith.constant 0 : i32
    %c0_i32_0 = arith.constant 0 : i32
    %c0_i32_1 = arith.constant 0 : i32
    return %c0_i32, %c0_i32_0 : i32, i32
  }
}

</mosaic_0001>

<llo_original>
// kernel: simpler_encoder.1
$region0: #{simpler_encoder.1}
  #allocation0 [shape = 'u32[]', space=smem, size = 0x4, offset = 0x4, fixed_abs, tag = 'smem constant byte address 0x4 - core index']
  #allocation1 [shape = 'u32[144,128]{1,0:T(1,128)}', space=vmem, size = 0x12000, scoped, tag = 'internal scratch']
  %s0 = inlined_call_operand.vmem [shape: bf16[128,64], index: 0, kind: input, shape index: {}]
  %s1 = inlined_call_operand.hbm [shape: bf16[64,128], index: 1, kind: input, shape index: {}]
  %s2 = inlined_call_operand.hbm [shape: f32[1,128], index: 2, kind: input, shape index: {}]
  %s3 = inlined_call_operand.hbm [shape: bf16[2048,128], index: 3, kind: input, shape index: {}]
  %s4 = inlined_call_operand.hbm [shape: f32[1,128], index: 4, kind: input, shape index: {}]
  %s5 = inlined_call_operand.hbm [shape: f32[9,32,1], index: 5, kind: input, shape index: {}]
  %s6 = inlined_call_operand.hbm [shape: bf16[1152,256], index: 6, kind: input, shape index: {}]
  %s7 = inlined_call_operand.hbm [shape: f32[1,256], index: 7, kind: input, shape index: {}]
  %s8 = inlined_call_operand.hbm [shape: bf16[3,2304,256], index: 8, kind: input, shape index: {}]
  %s9 = inlined_call_operand.hbm [shape: bf16[3,256,256], index: 9, kind: input, shape index: {}]
  %s10 = inlined_call_operand.vmem [shape: f32[32,256], index: 10, kind: output, shape index: {}]
  %s11 = sld [smem:[#allocation0]]
  $region86: #{simpler_encoder.1} parent=0
    _
  %s13 = ssub.s32 1, %s11
  %s14 = scalar_select 0, %s13, %s11
  $region1: #{simpler_encoder.1} parent=0
    #allocation2 [shape = 'u8[16384]{0}', space=vmem, size = 0x4000, scoped, tag = 'input window, operand 1, single buffered']
    #allocation3 [shape = 's32[1]{0}', space=sflag, size = 0x4, scoped, tag = 'scoped memory for simpler_encoder.1']
    #allocation4 [shape = 'u8[512]{0}', space=vmem, size = 0x400, scoped, tag = 'input window, operand 2, single buffered']
    #allocation5 [shape = 's32[1]{0}', space=sflag, size = 0x4, scoped, tag = 'scoped memory for simpler_encoder.1']
    #allocation6 [shape = 'u8[524288]{0}', space=vmem, size = 0x80000, scoped, tag = 'input window, operand 3, single buffered']
    #allocation7 [shape = 'u8[512]{0}', space=vmem, size = 0x400, scoped, tag = 'input window, operand 4, single buffered']
    #allocation8 [shape = 's32[1]{0}', space=sflag, size = 0x4, scoped, tag = 'scoped memory for simpler_encoder.1']
    #allocation9 [shape = 'u8[147456]{0}', space=vmem, size = 0x24000, scoped, tag = 'input window, operand 5, single buffered']
    #allocation10 [shape = 'u8[589824]{0}', space=vmem, size = 0x90000, scoped, tag = 'input window, operand 6, single buffered']
    #allocation11 [shape = 's32[1]{0}', space=sflag, size = 0x4, scoped, tag = 'scoped memory for simpler_encoder.1']
    #allocation12 [shape = 'u8[1024]{0}', space=vmem, size = 0x400, scoped, tag = 'input window, operand 7, single buffered']
    #allocation13 [shape = 'u8[3538944]{0}', space=vmem, size = 0x360000, scoped, tag = 'input window, operand 8, single buffered']
    #allocation14 [shape = 's32[1]{0}', space=sflag, size = 0x4, scoped, tag = 'scoped memory for simpler_encoder.1']
    #allocation15 [shape = 'u8[393216]{0}', space=vmem, size = 0x60000, scoped, tag = 'input window, operand 9, single buffered']
    %15 = vsyncpa [#allocation3], 0
    %16 = vsyncpa [#allocation5], 0
    %17 = vsyncpa [#allocation8], 0
    %18 = vsyncpa [#allocation11], 0
    %19 = vsyncpa [#allocation14], 0
    // Predicated region
    $region2: #{simpler_encoder.1} parent=1 // pred_check
      _
    $region3: #{simpler_encoder.1} parent=1 // pred_check_branch
      %21 = sbr.rel (0) target = $region5
    $region4: #{simpler_encoder.1} parent=1 // pred_region
      _
    $region5: #{simpler_encoder.1} parent=1 // pred_fallthru
      _
    // Predicated region
    $region6: #{simpler_encoder.1} parent=1 // pred_check
      _
    $region7: #{simpler_encoder.1} parent=1 // pred_check_branch
      %23 = sbr.rel (0) target = $region9
    $region8: #{simpler_encoder.1} parent=1 // pred_region
      %s25 = ssub.s32 512, 512
      %26 = vsyncadd [#allocation3], %s25
      %s27 = sshll.u32 [#allocation2], 4
      %s28 = int_to_ptr.vmem [resolvable:$true] %s27
      %33 = dma.hbm_to_vmem [thread:$0]  %s1, 512, %s28, [#allocation3], 64, 64, 4
    $region9: #{simpler_encoder.1} parent=1 // pred_fallthru
      _
    // Predicated region
    $region10: #{simpler_encoder.1} parent=1 // pred_check
      _
    $region11: #{simpler_encoder.1} parent=1 // pred_check_branch
      %35 = sbr.rel (0) target = $region13
    $region12: #{simpler_encoder.1} parent=1 // pred_region
      %s37 = ssub.s32 16, 16
      %38 = vsyncadd [#allocation5], %s37
      %s40 = sshll.u32 [#allocation4], 4
      %s41 = int_to_ptr.vmem [resolvable:$true] %s40
      %43 = dma.hbm_to_vmem [thread:$0]  %s2, 16, %s41, [#allocation5]
    $region13: #{simpler_encoder.1} parent=1 // pred_fallthru
      _
    // Predicated region
    $region14: #{simpler_encoder.1} parent=1 // pred_check
      _
    $region15: #{simpler_encoder.1} parent=1 // pred_check_branch
      %45 = sbr.rel (0) target = $region17
    $region16: #{simpler_encoder.1} parent=1 // pred_region
      %s47 = ssub.s32 16384, 16384
      %48 = vsyncadd [#allocation5], %s47
      %s49 = sshll.u32 [#allocation6], 4
      %s50 = int_to_ptr.vmem [resolvable:$true] %s49
      %55 = dma.hbm_to_vmem [thread:$0]  %s3, 16384, %s50, [#allocation5], 64, 64, 4
    $region17: #{simpler_encoder.1} parent=1 // pred_fallthru
      _
    // Predicated region
    $region18: #{simpler_encoder.1} parent=1 // pred_check
      _
    $region19: #{simpler_encoder.1} parent=1 // pred_check_branch
      %57 = sbr.rel (0) target = $region21
    $region20: #{simpler_encoder.1} parent=1 // pred_region
      %s59 = ssub.s32 16, 16
      %60 = vsyncadd [#allocation8], %s59
      %s62 = sshll.u32 [#allocation7], 4
      %s63 = int_to_ptr.vmem [resolvable:$true] %s62
      %65 = dma.hbm_to_vmem [thread:$0]  %s4, 16, %s63, [#allocation8]
    $region21: #{simpler_encoder.1} parent=1 // pred_fallthru
      _
    // Predicated region
    $region22: #{simpler_encoder.1} parent=1 // pred_check
      _
    $region23: #{simpler_encoder.1} parent=1 // pred_check_branch
      %67 = sbr.rel (0) target = $region25
    $region24: #{simpler_encoder.1} parent=1 // pred_region
      %s69 = ssub.s32 4608, 4608
      %70 = vsyncadd [#allocation8], %s69
      %s71 = sshll.u32 [#allocation9], 4
      %s72 = int_to_ptr.vmem [resolvable:$true] %s71
      %77 = dma.hbm_to_vmem [thread:$0]  %s5, 4608, %s72, [#allocation8], 128, 128, 8
    $region25: #{simpler_encoder.1} parent=1 // pred_fallthru
      _
    // Predicated region
    $region26: #{simpler_encoder.1} parent=1 // pred_check
      _
    $region27: #{simpler_encoder.1} parent=1 // pred_check_branch
      %79 = sbr.rel (0) target = $region29
    $region28: #{simpler_encoder.1} parent=1 // pred_region
      %s81 = ssub.s32 18432, 18432
      %82 = vsyncadd [#allocation11], %s81
      %s83 = sshll.u32 [#allocation10], 4
      %s84 = int_to_ptr.vmem [resolvable:$true] %s83
      %89 = dma.hbm_to_vmem [thread:$0]  %s6, 18432, %s84, [#allocation11], 128, 128, 8
    $region29: #{simpler_encoder.1} parent=1 // pred_fallthru
      _
    // Predicated region
    $region30: #{simpler_encoder.1} parent=1 // pred_check
      _
    $region31: #{simpler_encoder.1} parent=1 // pred_check_branch
      %91 = sbr.rel (0) target = $region33
    $region32: #{simpler_encoder.1} parent=1 // pred_region
      %s93 = ssub.s32 32, 32
      %94 = vsyncadd [#allocation11], %s93
      %s96 = sshll.u32 [#allocation12], 4
      %s97 = int_to_ptr.vmem [resolvable:$true] %s96
      %99 = dma.hbm_to_vmem [thread:$0]  %s7, 32, %s97, [#allocation11]
    $region33: #{simpler_encoder.1} parent=1 // pred_fallthru
      _
    // Predicated region
    $region34: #{simpler_encoder.1} parent=1 // pred_check
      _
    $region35: #{simpler_encoder.1} parent=1 // pred_check_branch
      %101 = sbr.rel (0) target = $region37
    $region36: #{simpler_encoder.1} parent=1 // pred_region
      %s103 = ssub.s32 110592, 110592
      %104 = vsyncadd [#allocation14], %s103
      %s105 = sshll.u32 [#allocation13], 4
      %s106 = int_to_ptr.vmem [resolvable:$true] %s105
      %111 = dma.hbm_to_vmem [thread:$0]  %s8, 110592, %s106, [#allocation14], 128, 128, 8
    $region37: #{simpler_encoder.1} parent=1 // pred_fallthru
      _
    // Predicated region
    $region38: #{simpler_encoder.1} parent=1 // pred_check
      _
    $region39: #{simpler_encoder.1} parent=1 // pred_check_branch
      %113 = sbr.rel (0) target = $region41
    $region40: #{simpler_encoder.1} parent=1 // pred_region
      %s115 = ssub.s32 12288, 12288
      %116 = vsyncadd [#allocation14], %s115
      %s117 = sshll.u32 [#allocation15], 4
      %s118 = int_to_ptr.vmem [resolvable:$true] %s117
      %123 = dma.hbm_to_vmem [thread:$0]  %s9, 12288, %s118, [#allocation14], 128, 128, 8
    $region41: #{simpler_encoder.1} parent=1 // pred_fallthru
      _
    // Predicated region
    $region42: #{simpler_encoder.1} parent=1 // pred_check
      _
    $region43: #{simpler_encoder.1} parent=1 // pred_check_branch
      %125 = sbr.rel (0) target = $region45
    $region44: #{simpler_encoder.1} parent=1 // pred_region
      %126 = dma.done [#allocation3], 512
    $region45: #{simpler_encoder.1} parent=1 // pred_fallthru
      _
    // Predicated region
    $region46: #{simpler_encoder.1} parent=1 // pred_check
      _
    $region47: #{simpler_encoder.1} parent=1 // pred_check_branch
      %128 = sbr.rel (0) target = $region49
    $region48: #{simpler_encoder.1} parent=1 // pred_region
      %129 = dma.done [#allocation5], 16
    $region49: #{simpler_encoder.1} parent=1 // pred_fallthru
      _
    // Predicated region
    $region50: #{simpler_encoder.1} parent=1 // pred_check
      _
    $region51: #{simpler_encoder.1} parent=1 // pred_check_branch
      %131 = sbr.rel (0) target = $region53
    $region52: #{simpler_encoder.1} parent=1 // pred_region
      %132 = dma.done [#allocation5], 16384
    $region53: #{simpler_encoder.1} parent=1 // pred_fallthru
      _
    // Predicated region
    $region54: #{simpler_encoder.1} parent=1 // pred_check
      _
    $region55: #{simpler_encoder.1} parent=1 // pred_check_branch
      %134 = sbr.rel (0) target = $region57
    $region56: #{simpler_encoder.1} parent=1 // pred_region
      %135 = dma.done [#allocation8], 16
    $region57: #{simpler_encoder.1} parent=1 // pred_fallthru
      _
    // Predicated region
    $region58: #{simpler_encoder.1} parent=1 // pred_check
      _
    $region59: #{simpler_encoder.1} parent=1 // pred_check_branch
      %137 = sbr.rel (0) target = $region61
    $region60: #{simpler_encoder.1} parent=1 // pred_region
      %138 = dma.done [#allocation8], 4608
    $region61: #{simpler_encoder.1} parent=1 // pred_fallthru
      _
    // Predicated region
    $region62: #{simpler_encoder.1} parent=1 // pred_check
      _
    $region63: #{simpler_encoder.1} parent=1 // pred_check_branch
      %140 = sbr.rel (0) target = $region65
    $region64: #{simpler_encoder.1} parent=1 // pred_region
      %141 = dma.done [#allocation11], 18432
    $region65: #{simpler_encoder.1} parent=1 // pred_fallthru
      _
    // Predicated region
    $region66: #{simpler_encoder.1} parent=1 // pred_check
      _
    $region67: #{simpler_encoder.1} parent=1 // pred_check_branch
      %143 = sbr.rel (0) target = $region69
    $region68: #{simpler_encoder.1} parent=1 // pred_region
      %144 = dma.done [#allocation11], 32
    $region69: #{simpler_encoder.1} parent=1 // pred_fallthru
      _
    // Predicated region
    $region70: #{simpler_encoder.1} parent=1 // pred_check
      _
    $region71: #{simpler_encoder.1} parent=1 // pred_check_branch
      %146 = sbr.rel (0) target = $region73
    $region72: #{simpler_encoder.1} parent=1 // pred_region
      %147 = dma.done [#allocation14], 110592
    $region73: #{simpler_encoder.1} parent=1 // pred_fallthru
      _
    // Predicated region
    $region74: #{simpler_encoder.1} parent=1 // pred_check
      _
    $region75: #{simpler_encoder.1} parent=1 // pred_check_branch
      %149 = sbr.rel (0) target = $region77
    $region76: #{simpler_encoder.1} parent=1 // pred_region
      %150 = dma.done [#allocation14], 12288
    $region77: #{simpler_encoder.1} parent=1 // pred_fallthru
      _
    %v152 = vld [vmem:[%s0] sm:$0xf]
    %v153 = vld [vmem:[%s0 + $0x4] sm:$0xf]
    %v154 = vld [vmem:[%s0 + $0x8] sm:$0xf]
    %v155 = vld [vmem:[%s0 + $0xc] sm:$0xf]
    %v156 = vld [vmem:[%s0 + $0x10] sm:$0xf]
    %v157 = vld [vmem:[%s0 + $0x14] sm:$0xf]
    %v158 = vld [vmem:[%s0 + $0x18] sm:$0xf]
    %v159 = vld [vmem:[%s0 + $0x1c] sm:$0xf]
    %v160 = vld [vmem:[%s0 + $0x20] sm:$0xf]
    %v161 = vld [vmem:[%s0 + $0x24] sm:$0xf]
    %v162 = vld [vmem:[%s0 + $0x28] sm:$0xf]
    %v163 = vld [vmem:[%s0 + $0x2c] sm:$0xf]
    %v164 = vld [vmem:[%s0 + $0x30] sm:$0xf]
    %v165 = vld [vmem:[%s0 + $0x34] sm:$0xf]
    %v166 = vld [vmem:[%s0 + $0x38] sm:$0xf]
    %v167 = vld [vmem:[%s0 + $0x3c] sm:$0xf]
    %v168 = vld [vmem:[#allocation2] sm:$0xf]
    %v169 = vld [vmem:[#allocation2 + $0x4] sm:$0xf]
    %v170 = vld [vmem:[#allocation2 + $0x8] sm:$0xf]
    %v171 = vld [vmem:[#allocation2 + $0xc] sm:$0xf]
    %v172 = vld [vmem:[#allocation2 + $0x10] sm:$0xf]
    %v173 = vld [vmem:[#allocation2 + $0x14] sm:$0xf]
    %v174 = vld [vmem:[#allocation2 + $0x18] sm:$0xf]
    %v175 = vld [vmem:[#allocation2 + $0x1c] sm:$0xf]
    %v176 = vld [vmem:[#allocation4] sm:$0x1]
    %v178 = vlaneseq
    %v179 = vshrl.u32 %v178, 7
    %v180 = vsub.s32 0, %v179
    %v181 = vrot.slane %v176, %v180
    %v199 = vunpack.c.l.b16 %v152
    %v200 = vunpack.c.l.b16 %v153
    %v201 = vunpack.c.l.b16 %v154
    %v202 = vunpack.c.l.b16 %v155
    %v203 = vunpack.c.l.b16 %v156
    %v204 = vunpack.c.l.b16 %v157
    %v205 = vunpack.c.l.b16 %v158
    %v206 = vunpack.c.l.b16 %v159
    %v207 = vunpack.c.l.b16 %v160
    %v208 = vunpack.c.l.b16 %v161
    %v209 = vunpack.c.l.b16 %v162
    %v210 = vunpack.c.l.b16 %v163
    %v211 = vunpack.c.l.b16 %v164
    %v212 = vunpack.c.l.b16 %v165
    %v213 = vunpack.c.l.b16 %v166
    %v214 = vunpack.c.l.b16 %v167
    %v215 = vpack.c.b16 %v200, %v199
    %v216 = vpack.c.b16 %v202, %v201
    %v217 = vpack.c.b16 %v204, %v203
    %v218 = vpack.c.b16 %v206, %v205
    %v219 = vpack.c.b16 %v208, %v207
    %v220 = vpack.c.b16 %v210, %v209
    %v221 = vpack.c.b16 %v212, %v211
    %v222 = vpack.c.b16 %v214, %v213
    %v231 = vunpack.c.l.b16 %v168
    %v232 = vunpack.c.l.b16 %v169
    %v233 = vunpack.c.l.b16 %v170
    %v234 = vunpack.c.l.b16 %v171
    %v235 = vunpack.c.l.b16 %v172
    %v236 = vunpack.c.l.b16 %v173
    %v237 = vunpack.c.l.b16 %v174
    %v238 = vunpack.c.l.b16 %v175
    %v239 = vpack.c.b16 %v232, %v231
    %v240 = vpack.c.b16 %v234, %v233
    %v241 = vpack.c.b16 %v236, %v235
    %v242 = vpack.c.b16 %v238, %v237
    %vm247 = vcmask 523264
    %v249 = vsel %vm247, %v215, 0
    %v252 = vsel %vm247, %v216, 0
    %v255 = vsel %vm247, %v217, 0
    %v258 = vsel %vm247, %v218, 0
    %v261 = vsel %vm247, %v219, 0
    %v264 = vsel %vm247, %v220, 0
    %v267 = vsel %vm247, %v221, 0
    %v270 = vsel %vm247, %v222, 0
    %272 = vmatprep.subr.bf16.mxu0 0
    %273 = vmatpush1.bf16.msra.mxu0 %v239
    %274 = vmatprep.subr.bf16.mxu0 0
    %275 = vmatpush1.bf16.msra.mxu0 %v240
    %276 = vmatprep.subr.bf16.mxu0 0
    %277 = vmatpush1.bf16.msra.mxu0 %v241
    %278 = vmatprep.subr.bf16.mxu0 0
    %279 = vmatpush1.bf16.msra.mxu0 %v242
    %280 = vmatprep.subr.bf16.mxu0 0
    %281 = vmatpush1.bf16.msra.mxu0 0
    %282 = vmatprep.subr.bf16.mxu0 0
    %283 = vmatpush1.bf16.msra.mxu0 0
    %284 = vmatprep.subr.bf16.mxu0 0
    %285 = vmatpush1.bf16.msra.mxu0 0
    %286 = vmatprep.subr.bf16.mxu0 0
    %287 = vmatpush1.bf16.msra.mxu0 0
    %288 = vmatprep.subr.bf16.mxu0 0
    %289 = vmatpush1.bf16.msra.mxu0 0
    %290 = vmatprep.subr.bf16.mxu0 0
    %291 = vmatpush1.bf16.msra.mxu0 0
    %292 = vmatprep.subr.bf16.mxu0 0
    %293 = vmatpush1.bf16.msra.mxu0 0
    %294 = vmatprep.subr.bf16.mxu0 0
    %295 = vmatpush1.bf16.msra.mxu0 0
    %296 = vmatprep.subr.bf16.mxu0 0
    %297 = vmatpush1.bf16.msra.mxu0 0
    %298 = vmatprep.subr.bf16.mxu0 0
    %299 = vmatpush1.bf16.msra.mxu0 0
    %300 = vmatprep.subr.bf16.mxu0 0
    %301 = vmatpush1.bf16.msra.mxu0 0
    %302 = vmatprep.subr.bf16.mxu0 0
    %303 = vmatpush1.bf16.msra.mxu0 0
    %304 = vmatprep.mubr.bf16.mxu0 0
    %305 = vmatmul.mubr.bf16.gmra.mrb[0].mxu0 %v249
    %v306 = vpop.f32.mrb[0].mxu0
    %v307 = vadd.f32 %v181, %v306
    %v308 = vpop.f32.mrb[0].mxu0
    %v309 = vpop.f32.mrb[0].mxu0
    %v310 = vadd.f32 %v181, %v309
    %v311 = vpop.f32.mrb[0].mxu0
    %312 = vmatprep.mubr.bf16.mxu0 0
    %313 = vmatmul.mubr.bf16.gmra.mrb[0].mxu0 %v252
    %v314 = vpop.f32.mrb[0].mxu0
    %v315 = vadd.f32 %v181, %v314
    %v316 = vpop.f32.mrb[0].mxu0
    %v317 = vpop.f32.mrb[0].mxu0
    %v318 = vadd.f32 %v181, %v317
    %v319 = vpop.f32.mrb[0].mxu0
    %320 = vmatprep.mubr.bf16.mxu0 0
    %321 = vmatmul.mubr.bf16.gmra.mrb[0].mxu0 %v255
    %v322 = vpop.f32.mrb[0].mxu0
    %v323 = vadd.f32 %v181, %v322
    %v324 = vpop.f32.mrb[0].mxu0
    %v325 = vpop.f32.mrb[0].mxu0
    %v326 = vadd.f32 %v181, %v325
    %v327 = vpop.f32.mrb[0].mxu0
    %328 = vmatprep.mubr.bf16.mxu0 0
    %329 = vmatmul.mubr.bf16.gmra.mrb[0].mxu0 %v258
    %v330 = vpop.f32.mrb[0].mxu0
    %v331 = vadd.f32 %v181, %v330
    %v332 = vpop.f32.mrb[0].mxu0
    %v333 = vpop.f32.mrb[0].mxu0
    %v334 = vadd.f32 %v181, %v333
    %v335 = vpop.f32.mrb[0].mxu0
    %336 = vmatprep.mubr.bf16.mxu0 0
    %337 = vmatmul.mubr.bf16.gmra.mrb[0].mxu0 %v261
    %v338 = vpop.f32.mrb[0].mxu0
    %v339 = vadd.f32 %v181, %v338
    %v340 = vpop.f32.mrb[0].mxu0
    %v341 = vpop.f32.mrb[0].mxu0
    %v342 = vadd.f32 %v181, %v341
    %v343 = vpop.f32.mrb[0].mxu0
    %344 = vmatprep.mubr.bf16.mxu0 0
    %345 = vmatmul.mubr.bf16.gmra.mrb[0].mxu0 %v264
    %v346 = vpop.f32.mrb[0].mxu0
    %v347 = vadd.f32 %v181, %v346
    %v348 = vpop.f32.mrb[0].mxu0
    %v349 = vpop.f32.mrb[0].mxu0
    %v350 = vadd.f32 %v181, %v349
    %v351 = vpop.f32.mrb[0].mxu0
    %352 = vmatprep.mubr.bf16.mxu0 0
    %353 = vmatmul.mubr.bf16.gmra.mrb[0].mxu0 %v267
    %v354 = vpop.f32.mrb[0].mxu0
    %v355 = vadd.f32 %v181, %v354
    %v356 = vpop.f32.mrb[0].mxu0
    %v357 = vpop.f32.mrb[0].mxu0
    %v358 = vadd.f32 %v181, %v357
    %v359 = vpop.f32.mrb[0].mxu0
    %360 = vmatprep.mubr.bf16.mxu0 0
    %361 = vmatmul.mubr.bf16.gmra.mrb[0].mxu0 %v270
    %v362 = vpop.f32.mrb[0].mxu0
    %v363 = vadd.f32 %v181, %v362
    %v364 = vpop.f32.mrb[0].mxu0
    %v365 = vpop.f32.mrb[0].mxu0
    %v366 = vadd.f32 %v181, %v365
    %v367 = vpop.f32.mrb[0].mxu0
    %368 = vdwg.mxu0
    %v369 = vmax.f32 %v307, 0.0
    %v370 = vmax.f32 %v310, 0.0
    %v371 = vmax.f32 %v315, 0.0
    %v372 = vmax.f32 %v318, 0.0
    %v373 = vmax.f32 %v323, 0.0
    %v374 = vmax.f32 %v326, 0.0
    %v375 = vmax.f32 %v331, 0.0
    %v376 = vmax.f32 %v334, 0.0
    %v377 = vmax.f32 %v339, 0.0
    %v378 = vmax.f32 %v342, 0.0
    %v379 = vmax.f32 %v347, 0.0
    %v380 = vmax.f32 %v350, 0.0
    %v381 = vmax.f32 %v355, 0.0
    %v382 = vmax.f32 %v358, 0.0
    %v383 = vmax.f32 %v363, 0.0
    %v384 = vmax.f32 %v366, 0.0
    %v385 = vrot.slane %v381, 3
    %v386 = vrot.slane %v382, 3
    %v387 = vrot.slane %v383, 3
    %v388 = vrot.slane %v384, 3
    %v389 = vlaneseq
    %v390 = vshrl.u32 %v389, 7
    %vm391 = vcmp.lt.s32.totalorder %v390, 5
    %v392 = vsel %vm391, %v387, %v388
    %v393 = vsel %vm391, %v386, %v387
    %v394 = vsel %vm391, %v385, %v386
    %v395 = vsel %vm391, %v388, %v385
    %v396 = vld [vmem:[#allocation9] sm:$0xff]
    %v397 = vld [vmem:[#allocation9 + $0x8] sm:$0xff]
    %v398 = vld [vmem:[#allocation9 + $0x10] sm:$0xff]
    %v399 = vld [vmem:[#allocation9 + $0x18] sm:$0xff]
    %401 = vset.pattern.permute.xlu0 0
    %402 = vperm.xlu0 %401, %v396
    %v403 = vpop.permute.xlu0 %402
    %406 = vset.pattern.permute.xlu0 0
    %407 = vperm.xlu0 %406, %v397
    %v408 = vpop.permute.xlu0 %407
    %411 = vset.pattern.permute.xlu0 0
    %412 = vperm.xlu0 %411, %v398
    %v413 = vpop.permute.xlu0 %412
    %416 = vset.pattern.permute.xlu0 0
    %417 = vperm.xlu0 %416, %v399
    %v418 = vpop.permute.xlu0 %417
    %v420 = vmul.f32 %v395, %v403
    %v421 = vmul.f32 %v394, %v408
    %v422 = vmul.f32 %v393, %v413
    %v423 = vmul.f32 %v392, %v418
    %v424 = vrot.slane %v377, 4
    %v425 = vrot.slane %v378, 4
    %v426 = vrot.slane %v379, 4
    %v427 = vrot.slane %v380, 4
    %vm428 = vcmp.lt.s32.totalorder %v390, 4
    %v429 = vsel %vm428, %v426, %v427
    %v430 = vsel %vm428, %v425, %v426
    %v431 = vsel %vm428, %v424, %v425
    %v432 = vsel %vm428, %v427, %v424
    %s433 = scalar_lea.vmem [#allocation9], 32
    %v434 = vld [vmem:[%s433] sm:$0xff]
    %v435 = vld [vmem:[%s433 + $0x8] sm:$0xff]
    %v436 = vld [vmem:[%s433 + $0x10] sm:$0xff]
    %v437 = vld [vmem:[%s433 + $0x18] sm:$0xff]
    %439 = vset.pattern.permute.xlu0 0
    %440 = vperm.xlu0 %439, %v434
    %v441 = vpop.permute.xlu0 %440
    %444 = vset.pattern.permute.xlu0 0
    %445 = vperm.xlu0 %444, %v435
    %v446 = vpop.permute.xlu0 %445
    %449 = vset.pattern.permute.xlu0 0
    %450 = vperm.xlu0 %449, %v436
    %v451 = vpop.permute.xlu0 %450
    %454 = vset.pattern.permute.xlu0 0
    %455 = vperm.xlu0 %454, %v437
    %v456 = vpop.permute.xlu0 %455
    %v458 = vmul.f32 %v432, %v441
    %v459 = vmul.f32 %v431, %v446
    %v460 = vmul.f32 %v430, %v451
    %v461 = vmul.f32 %v429, %v456
    %v462 = vrot.slane %v381, 4
    %v463 = vrot.slane %v382, 4
    %v464 = vrot.slane %v383, 4
    %v465 = vrot.slane %v384, 4
    %v466 = vsel %vm428, %v464, %v465
    %v467 = vsel %vm428, %v463, %v464
    %v468 = vsel %vm428, %v462, %v463
    %v469 = vsel %vm428, %v465, %v462
    %v470 = vmul.f32 %v469, %v441
    %v471 = vmul.f32 %v468, %v446
    %v472 = vmul.f32 %v467, %v451
    %v473 = vmul.f32 %v466, %v456
    %v474 = vrot.slane %v377, 5
    %v475 = vrot.slane %v378, 5
    %v476 = vrot.slane %v379, 5
    %v477 = vrot.slane %v380, 5
    %vm478 = vcmp.lt.s32.totalorder %v390, 3
    %v479 = vsel %vm478, %v476, %v477
    %v480 = vsel %vm478, %v475, %v476
    %v481 = vsel %vm478, %v474, %v475
    %v482 = vsel %vm478, %v477, %v474
    %s483 = scalar_lea.vmem [#allocation9], 64
    %v484 = vld [vmem:[%s483] sm:$0xff]
    %v485 = vld [vmem:[%s483 + $0x8] sm:$0xff]
    %v486 = vld [vmem:[%s483 + $0x10] sm:$0xff]
    %v487 = vld [vmem:[%s483 + $0x18] sm:$0xff]
    %489 = vset.pattern.permute.xlu0 0
    %490 = vperm.xlu0 %489, %v484
    %v491 = vpop.permute.xlu0 %490
    %494 = vset.pattern.permute.xlu0 0
    %495 = vperm.xlu0 %494, %v485
    %v496 = vpop.permute.xlu0 %495
    %499 = vset.pattern.permute.xlu0 0
    %500 = vperm.xlu0 %499, %v486
    %v501 = vpop.permute.xlu0 %500
    %504 = vset.pattern.permute.xlu0 0
    %505 = vperm.xlu0 %504, %v487
    %v506 = vpop.permute.xlu0 %505
    %v508 = vmul.f32 %v482, %v491
    %v509 = vmul.f32 %v481, %v496
    %v510 = vmul.f32 %v480, %v501
    %v511 = vmul.f32 %v479, %v506
    %v512 = vrot.slane %v373, 7
    %v513 = vrot.slane %v374, 7
    %v514 = vrot.slane %v375, 7
    %v515 = vrot.slane %v376, 7
    %vm516 = vcmp.lt.s32.totalorder %v390, 1
    %v517 = vsel %vm516, %v514, %v515
    %v518 = vsel %vm516, %v513, %v514
    %v519 = vsel %vm516, %v512, %v513
    %v520 = vsel %vm516, %v515, %v512
    %s521 = scalar_lea.vmem [#allocation9], 96
    %v522 = vld [vmem:[%s521] sm:$0xff]
    %v523 = vld [vmem:[%s521 + $0x8] sm:$0xff]
    %v524 = vld [vmem:[%s521 + $0x10] sm:$0xff]
    %v525 = vld [vmem:[%s521 + $0x18] sm:$0xff]
    %527 = vset.pattern.permute.xlu0 0
    %528 = vperm.xlu0 %527, %v522
    %v529 = vpop.permute.xlu0 %528
    %532 = vset.pattern.permute.xlu0 0
    %533 = vperm.xlu0 %532, %v523
    %v534 = vpop.permute.xlu0 %533
    %537 = vset.pattern.permute.xlu0 0
    %538 = vperm.xlu0 %537, %v524
    %v539 = vpop.permute.xlu0 %538
    %542 = vset.pattern.permute.xlu0 0
    %543 = vperm.xlu0 %542, %v525
    %v544 = vpop.permute.xlu0 %543
    %v546 = vmul.f32 %v520, %v529
    %v547 = vmul.f32 %v519, %v534
    %v548 = vmul.f32 %v518, %v539
    %v549 = vmul.f32 %v517, %v544
    %v550 = vrot.slane %v369, 1
    %v551 = vrot.slane %v370, 1
    %v552 = vrot.slane %v371, 1
    %v553 = vrot.slane %v372, 1
    %vm554 = vcmp.lt.s32.totalorder %v390, 7
    %v555 = vsel %vm554, %v552, %v553
    %v556 = vsel %vm554, %v551, %v552
    %v557 = vsel %vm554, %v550, %v551
    %v558 = vsel %vm554, %v553, %v550
    %s559 = scalar_lea.vmem [#allocation9], 160
    %v560 = vld [vmem:[%s559] sm:$0xff]
    %v561 = vld [vmem:[%s559 + $0x8] sm:$0xff]
    %v562 = vld [vmem:[%s559 + $0x10] sm:$0xff]
    %v563 = vld [vmem:[%s559 + $0x18] sm:$0xff]
    %565 = vset.pattern.permute.xlu0 0
    %566 = vperm.xlu0 %565, %v560
    %v567 = vpop.permute.xlu0 %566
    %570 = vset.pattern.permute.xlu0 0
    %571 = vperm.xlu0 %570, %v561
    %v572 = vpop.permute.xlu0 %571
    %575 = vset.pattern.permute.xlu0 0
    %576 = vperm.xlu0 %575, %v562
    %v577 = vpop.permute.xlu0 %576
    %580 = vset.pattern.permute.xlu0 0
    %581 = vperm.xlu0 %580, %v563
    %v582 = vpop.permute.xlu0 %581
    %v584 = vmul.f32 %v557, %v567
    %v585 = vmul.f32 %v556, %v572
    %v586 = vmul.f32 %v555, %v577
    %v587 = vmul.f32 %v558, %v582
    %v588 = vrot.slane %v381, 7
    %v589 = vrot.slane %v382, 7
    %v590 = vrot.slane %v383, 7
    %v591 = vrot.slane %v384, 7
    %v592 = vsel %vm516, %v590, %v591
    %v593 = vsel %vm516, %v589, %v590
    %v594 = vsel %vm516, %v588, %v589
    %v595 = vsel %vm516, %v591, %v588
    %v596 = vmul.f32 %v595, %v529
    %v597 = vmul.f32 %v594, %v534
    %v598 = vmul.f32 %v593, %v539
    %v599 = vmul.f32 %v592, %v544
    %v600 = vrot.slane %v377, 1
    %v601 = vrot.slane %v378, 1
    %v602 = vrot.slane %v379, 1
    %v603 = vrot.slane %v380, 1
    %v604 = vsel %vm554, %v602, %v603
    %v605 = vsel %vm554, %v601, %v602
    %v606 = vsel %vm554, %v600, %v601
    %v607 = vsel %vm554, %v603, %v600
    %v608 = vmul.f32 %v606, %v567
    %v609 = vmul.f32 %v605, %v572
    %v610 = vmul.f32 %v604, %v577
    %v611 = vmul.f32 %v607, %v582
    %v612 = vrot.slane %v373, 3
    %v613 = vrot.slane %v374, 3
    %v614 = vrot.slane %v375, 3
    %v615 = vrot.slane %v376, 3
    %v616 = vsel %vm391, %v614, %v615
    %v617 = vsel %vm391, %v613, %v614
    %v618 = vsel %vm391, %v612, %v613
    %v619 = vsel %vm391, %v615, %v612
    %s620 = scalar_lea.vmem [#allocation9], 192
    %v621 = vld [vmem:[%s620] sm:$0xff]
    %v622 = vld [vmem:[%s620 + $0x8] sm:$0xff]
    %v623 = vld [vmem:[%s620 + $0x10] sm:$0xff]
    %v624 = vld [vmem:[%s620 + $0x18] sm:$0xff]
    %626 = vset.pattern.permute.xlu0 0
    %627 = vperm.xlu0 %626, %v621
    %v628 = vpop.permute.xlu0 %627
    %631 = vset.pattern.permute.xlu0 0
    %632 = vperm.xlu0 %631, %v622
    %v633 = vpop.permute.xlu0 %632
    %636 = vset.pattern.permute.xlu0 0
    %637 = vperm.xlu0 %636, %v623
    %v638 = vpop.permute.xlu0 %637
    %641 = vset.pattern.permute.xlu0 0
    %642 = vperm.xlu0 %641, %v624
    %v643 = vpop.permute.xlu0 %642
    %v645 = vmul.f32 %v618, %v628
    %v646 = vmul.f32 %v617, %v633
    %v647 = vmul.f32 %v616, %v638
    %v648 = vmul.f32 %v619, %v643
    %v649 = vrot.slane %v369, 4
    %v650 = vrot.slane %v370, 4
    %v651 = vrot.slane %v371, 4
    %v652 = vrot.slane %v372, 4
    %v653 = vsel %vm428, %v651, %v652
    %v654 = vsel %vm428, %v650, %v651
    %v655 = vsel %vm428, %v649, %v650
    %v656 = vsel %vm428, %v652, %v649
    %s657 = scalar_lea.vmem [#allocation9], 224
    %v658 = vld [vmem:[%s657] sm:$0xff]
    %v659 = vld [vmem:[%s657 + $0x8] sm:$0xff]
    %v660 = vld [vmem:[%s657 + $0x10] sm:$0xff]
    %v661 = vld [vmem:[%s657 + $0x18] sm:$0xff]
    %663 = vset.pattern.permute.xlu0 0
    %664 = vperm.xlu0 %663, %v658
    %v665 = vpop.permute.xlu0 %664
    %668 = vset.pattern.permute.xlu0 0
    %669 = vperm.xlu0 %668, %v659
    %v670 = vpop.permute.xlu0 %669
    %673 = vset.pattern.permute.xlu0 0
    %674 = vperm.xlu0 %673, %v660
    %v675 = vpop.permute.xlu0 %674
    %678 = vset.pattern.permute.xlu0 0
    %679 = vperm.xlu0 %678, %v661
    %v680 = vpop.permute.xlu0 %679
    %v682 = vmul.f32 %v655, %v665
    %v683 = vmul.f32 %v654, %v670
    %v684 = vmul.f32 %v653, %v675
    %v685 = vmul.f32 %v656, %v680
    %v686 = vrot.slane %v373, 4
    %v687 = vrot.slane %v374, 4
    %v688 = vrot.slane %v375, 4
    %v689 = vrot.slane %v376, 4
    %v690 = vsel %vm428, %v688, %v689
    %v691 = vsel %vm428, %v687, %v688
    %v692 = vsel %vm428, %v686, %v687
    %v693 = vsel %vm428, %v689, %v686
    %v694 = vmul.f32 %v692, %v665
    %v695 = vmul.f32 %v691, %v670
    %v696 = vmul.f32 %v690, %v675
    %v697 = vmul.f32 %v693, %v680
    %v698 = vrot.slane %v369, 5
    %v699 = vrot.slane %v370, 5
    %v700 = vrot.slane %v371, 5
    %v701 = vrot.slane %v372, 5
    %v702 = vsel %vm478, %v700, %v701
    %v703 = vsel %vm478, %v699, %v700
    %v704 = vsel %vm478, %v698, %v699
    %v705 = vsel %vm478, %v701, %v698
    %s706 = scalar_lea.vmem [#allocation9], 256
    %v707 = vld [vmem:[%s706] sm:$0xff]
    %v708 = vld [vmem:[%s706 + $0x8] sm:$0xff]
    %v709 = vld [vmem:[%s706 + $0x10] sm:$0xff]
    %v710 = vld [vmem:[%s706 + $0x18] sm:$0xff]
    %712 = vset.pattern.permute.xlu0 0
    %713 = vperm.xlu0 %712, %v707
    %v714 = vpop.permute.xlu0 %713
    %717 = vset.pattern.permute.xlu0 0
    %718 = vperm.xlu0 %717, %v708
    %v719 = vpop.permute.xlu0 %718
    %722 = vset.pattern.permute.xlu0 0
    %723 = vperm.xlu0 %722, %v709
    %v724 = vpop.permute.xlu0 %723
    %727 = vset.pattern.permute.xlu0 0
    %728 = vperm.xlu0 %727, %v710
    %v729 = vpop.permute.xlu0 %728
    %v731 = vmul.f32 %v704, %v714
    %v732 = vmul.f32 %v703, %v719
    %v733 = vmul.f32 %v702, %v724
    %v734 = vmul.f32 %v705, %v729
    %v735 = vld [vmem:[#allocation6] sm:$0xf]
    %v736 = vld [vmem:[#allocation6 + $0x4] sm:$0xf]
    %v737 = vld [vmem:[#allocation6 + $0x8] sm:$0xf]
    %v738 = vld [vmem:[#allocation6 + $0xc] sm:$0xf]
    %v739 = vld [vmem:[#allocation6 + $0x10] sm:$0xf]
    %v740 = vld [vmem:[#allocation6 + $0x14] sm:$0xf]
    %v741 = vld [vmem:[#allocation6 + $0x18] sm:$0xf]
    %v742 = vld [vmem:[#allocation6 + $0x1c] sm:$0xf]
    %v743 = vld [vmem:[#allocation6 + $0x20] sm:$0xf]
    %v744 = vld [vmem:[#allocation6 + $0x24] sm:$0xf]
    %v745 = vld [vmem:[#allocation6 + $0x28] sm:$0xf]
    %v746 = vld [vmem:[#allocation6 + $0x2c] sm:$0xf]
    %v747 = vld [vmem:[#allocation6 + $0x30] sm:$0xf]
    %v748 = vld [vmem:[#allocation6 + $0x34] sm:$0xf]
    %v749 = vld [vmem:[#allocation6 + $0x38] sm:$0xf]
    %v750 = vld [vmem:[#allocation6 + $0x3c] sm:$0xf]
    %v751 = vld [vmem:[#allocation6 + $0x40] sm:$0xf]
    %v752 = vld [vmem:[#allocation6 + $0x44] sm:$0xf]
    %v753 = vld [vmem:[#allocation6 + $0x48] sm:$0xf]
    %v754 = vld [vmem:[#allocation6 + $0x4c] sm:$0xf]
    %v755 = vld [vmem:[#allocation6 + $0x50] sm:$0xf]
    %v756 = vld [vmem:[#allocation6 + $0x54] sm:$0xf]
    %v757 = vld [vmem:[#allocation6 + $0x58] sm:$0xf]
    %v758 = vld [vmem:[#allocation6 + $0x5c] sm:$0xf]
    %v759 = vld [vmem:[#allocation6 + $0x60] sm:$0xf]
    %v760 = vld [vmem:[#allocation6 + $0x64] sm:$0xf]
    %v761 = vld [vmem:[#allocation6 + $0x68] sm:$0xf]
    %v762 = vld [vmem:[#allocation6 + $0x6c] sm:$0xf]
    %v763 = vld [vmem:[#allocation6 + $0x70] sm:$0xf]
    %v764 = vld [vmem:[#allocation6 + $0x74] sm:$0xf]
    %v765 = vld [vmem:[#allocation6 + $0x78] sm:$0xf]
    %v766 = vld [vmem:[#allocation6 + $0x7c] sm:$0xf]
    %v767 = vld [vmem:[#allocation6 + $0x80] sm:$0xf]
    %v768 = vld [vmem:[#allocation6 + $0x84] sm:$0xf]
    %v769 = vld [vmem:[#allocation6 + $0x88] sm:$0xf]
    %v770 = vld [vmem:[#allocation6 + $0x8c] sm:$0xf]
    %v771 = vld [vmem:[#allocation6 + $0x90] sm:$0xf]
    %v772 = vld [vmem:[#allocation6 + $0x94] sm:$0xf]
    %v773 = vld [vmem:[#allocation6 + $0x98] sm:$0xf]
    %v774 = vld [vmem:[#allocation6 + $0x9c] sm:$0xf]
    %v775 = vld [vmem:[#allocation6 + $0xa0] sm:$0xf]
    %v776 = vld [vmem:[#allocation6 + $0xa4] sm:$0xf]
    %v777 = vld [vmem:[#allocation6 + $0xa8] sm:$0xf]
    %v778 = vld [vmem:[#allocation6 + $0xac] sm:$0xf]
    %v779 = vld [vmem:[#allocation6 + $0xb0] sm:$0xf]
    %v780 = vld [vmem:[#allocation6 + $0xb4] sm:$0xf]
    %v781 = vld [vmem:[#allocation6 + $0xb8] sm:$0xf]
    %v782 = vld [vmem:[#allocation6 + $0xbc] sm:$0xf]
    %v783 = vld [vmem:[#allocation6 + $0xc0] sm:$0xf]
    %v784 = vld [vmem:[#allocation6 + $0xc4] sm:$0xf]
    %v785 = vld [vmem:[#allocation6 + $0xc8] sm:$0xf]
    %v786 = vld [vmem:[#allocation6 + $0xcc] sm:$0xf]
    %v787 = vld [vmem:[#allocation6 + $0xd0] sm:$0xf]
    %v788 = vld [vmem:[#allocation6 + $0xd4] sm:$0xf]
    %v789 = vld [vmem:[#allocation6 + $0xd8] sm:$0xf]
    %v790 = vld [vmem:[#allocation6 + $0xdc] sm:$0xf]
    %v791 = vld [vmem:[#allocation6 + $0xe0] sm:$0xf]
    %v792 = vld [vmem:[#allocation6 + $0xe4] sm:$0xf]
    %v793 = vld [vmem:[#allocation6 + $0xe8] sm:$0xf]
    %v794 = vld [vmem:[#allocation6 + $0xec] sm:$0xf]
    %v795 = vld [vmem:[#allocation6 + $0xf0] sm:$0xf]
    %v796 = vld [vmem:[#allocation6 + $0xf4] sm:$0xf]
    %v797 = vld [vmem:[#allocation6 + $0xf8] sm:$0xf]
    %v798 = vld [vmem:[#allocation6 + $0xfc] sm:$0xf]
    %v799 = vld [vmem:[#allocation6 + $0x100] sm:$0xf]
    %v800 = vld [vmem:[#allocation6 + $0x104] sm:$0xf]
    %v801 = vld [vmem:[#allocation6 + $0x108] sm:$0xf]
    %v802 = vld [vmem:[#allocation6 + $0x10c] sm:$0xf]
    %v803 = vld [vmem:[#allocation6 + $0x110] sm:$0xf]
    %v804 = vld [vmem:[#allocation6 + $0x114] sm:$0xf]
    %v805 = vld [vmem:[#allocation6 + $0x118] sm:$0xf]
    %v806 = vld [vmem:[#allocation6 + $0x11c] sm:$0xf]
    %v807 = vld [vmem:[#allocation6 + $0x120] sm:$0xf]
    %v808 = vld [vmem:[#allocation6 + $0x124] sm:$0xf]
    %v809 = vld [vmem:[#allocation6 + $0x128] sm:$0xf]
    %v810 = vld [vmem:[#allocation6 + $0x12c] sm:$0xf]
    %v811 = vld [vmem:[#allocation6 + $0x130] sm:$0xf]
    %v812 = vld [vmem:[#allocation6 + $0x134] sm:$0xf]
    %v813 = vld [vmem:[#allocation6 + $0x138] sm:$0xf]
    %v814 = vld [vmem:[#allocation6 + $0x13c] sm:$0xf]
    %v815 = vld [vmem:[#allocation6 + $0x140] sm:$0xf]
    %v816 = vld [vmem:[#allocation6 + $0x144] sm:$0xf]
    %v817 = vld [vmem:[#allocation6 + $0x148] sm:$0xf]
    %v818 = vld [vmem:[#allocation6 + $0x14c] sm:$0xf]
    %v819 = vld [vmem:[#allocation6 + $0x150] sm:$0xf]
    %v820 = vld [vmem:[#allocation6 + $0x154] sm:$0xf]
    %v821 = vld [vmem:[#allocation6 + $0x158] sm:$0xf]
    %v822 = vld [vmem:[#allocation6 + $0x15c] sm:$0xf]
    %v823 = vld [vmem:[#allocation6 + $0x160] sm:$0xf]
    %v824 = vld [vmem:[#allocation6 + $0x164] sm:$0xf]
    %v825 = vld [vmem:[#allocation6 + $0x168] sm:$0xf]
    %v826 = vld [vmem:[#allocation6 + $0x16c] sm:$0xf]
    %v827 = vld [vmem:[#allocation6 + $0x170] sm:$0xf]
    %v828 = vld [vmem:[#allocation6 + $0x174] sm:$0xf]
    %v829 = vld [vmem:[#allocation6 + $0x178] sm:$0xf]
    %v830 = vld [vmem:[#allocation6 + $0x17c] sm:$0xf]
    %v831 = vld [vmem:[#allocation6 + $0x180] sm:$0xf]
    %v832 = vld [vmem:[#allocation6 + $0x184] sm:$0xf]
    %v833 = vld [vmem:[#allocation6 + $0x188] sm:$0xf]
    %v834 = vld [vmem:[#allocation6 + $0x18c] sm:$0xf]
    %v835 = vld [vmem:[#allocation6 + $0x190] sm:$0xf]
    %v836 = vld [vmem:[#allocation6 + $0x194] sm:$0xf]
    %v837 = vld [vmem:[#allocation6 + $0x198] sm:$0xf]
    %v838 = vld [vmem:[#allocation6 + $0x19c] sm:$0xf]
    %v839 = vld [vmem:[#allocation6 + $0x1a0] sm:$0xf]
    %v840 = vld [vmem:[#allocation6 + $0x1a4] sm:$0xf]
    %v841 = vld [vmem:[#allocation6 + $0x1a8] sm:$0xf]
    %v842 = vld [vmem:[#allocation6 + $0x1ac] sm:$0xf]
    %v843 = vld [vmem:[#allocation6 + $0x1b0] sm:$0xf]
    %v844 = vld [vmem:[#allocation6 + $0x1b4] sm:$0xf]
    %v845 = vld [vmem:[#allocation6 + $0x1b8] sm:$0xf]
    %v846 = vld [vmem:[#allocation6 + $0x1bc] sm:$0xf]
    %v847 = vld [vmem:[#allocation6 + $0x1c0] sm:$0xf]
    %v848 = vld [vmem:[#allocation6 + $0x1c4] sm:$0xf]
    %v849 = vld [vmem:[#allocation6 + $0x1c8] sm:$0xf]
    %v850 = vld [vmem:[#allocation6 + $0x1cc] sm:$0xf]
    %v851 = vld [vmem:[#allocation6 + $0x1d0] sm:$0xf]
    %v852 = vld [vmem:[#allocation6 + $0x1d4] sm:$0xf]
    %v853 = vld [vmem:[#allocation6 + $0x1d8] sm:$0xf]
    %v854 = vld [vmem:[#allocation6 + $0x1dc] sm:$0xf]
    %v855 = vld [vmem:[#allocation6 + $0x1e0] sm:$0xf]
    %v856 = vld [vmem:[#allocation6 + $0x1e4] sm:$0xf]
    %v857 = vld [vmem:[#allocation6 + $0x1e8] sm:$0xf]
    %v858 = vld [vmem:[#allocation6 + $0x1ec] sm:$0xf]
    %v859 = vld [vmem:[#allocation6 + $0x1f0] sm:$0xf]
    %v860 = vld [vmem:[#allocation6 + $0x1f4] sm:$0xf]
    %v861 = vld [vmem:[#allocation6 + $0x1f8] sm:$0xf]
    %v862 = vld [vmem:[#allocation6 + $0x1fc] sm:$0xf]
    %v863 = vld [vmem:[#allocation6 + $0x200] sm:$0xf]
    %v864 = vld [vmem:[#allocation6 + $0x204] sm:$0xf]
    %v865 = vld [vmem:[#allocation6 + $0x208] sm:$0xf]
    %v866 = vld [vmem:[#allocation6 + $0x20c] sm:$0xf]
    %v867 = vld [vmem:[#allocation6 + $0x210] sm:$0xf]
    %v868 = vld [vmem:[#allocation6 + $0x214] sm:$0xf]
    %v869 = vld [vmem:[#allocation6 + $0x218] sm:$0xf]
    %v870 = vld [vmem:[#allocation6 + $0x21c] sm:$0xf]
    %v871 = vld [vmem:[#allocation6 + $0x220] sm:$0xf]
    %v872 = vld [vmem:[#allocation6 + $0x224] sm:$0xf]
    %v873 = vld [vmem:[#allocation6 + $0x228] sm:$0xf]
    %v874 = vld [vmem:[#allocation6 + $0x22c] sm:$0xf]
    %v875 = vld [vmem:[#allocation6 + $0x230] sm:$0xf]
    %v876 = vld [vmem:[#allocation6 + $0x234] sm:$0xf]
    %v877 = vld [vmem:[#allocation6 + $0x238] sm:$0xf]
    %v878 = vld [vmem:[#allocation6 + $0x23c] sm:$0xf]
    %v879 = vld [vmem:[#allocation6 + $0x240] sm:$0xf]
    %v880 = vld [vmem:[#allocation6 + $0x244] sm:$0xf]
    %v881 = vld [vmem:[#allocation6 + $0x248] sm:$0xf]
    %v882 = vld [vmem:[#allocation6 + $0x24c] sm:$0xf]
    %v883 = vld [vmem:[#allocation6 + $0x250] sm:$0xf]
    %v884 = vld [vmem:[#allocation6 + $0x254] sm:$0xf]
    %v885 = vld [vmem:[#allocation6 + $0x258] sm:$0xf]
    %v886 = vld [vmem:[#allocation6 + $0x25c] sm:$0xf]
    %v887 = vld [vmem:[#allocation6 + $0x260] sm:$0xf]
    %v888 = vld [vmem:[#allocation6 + $0x264] sm:$0xf]
    %v889 = vld [vmem:[#allocation6 + $0x268] sm:$0xf]
    %v890 = vld [vmem:[#allocation6 + $0x26c] sm:$0xf]
    %v891 = vld [vmem:[#allocation6 + $0x270] sm:$0xf]
    %v892 = vld [vmem:[#allocation6 + $0x274] sm:$0xf]
    %v893 = vld [vmem:[#allocation6 + $0x278] sm:$0xf]
    %v894 = vld [vmem:[#allocation6 + $0x27c] sm:$0xf]
    %v895 = vld [vmem:[#allocation6 + $0x280] sm:$0xf]
    %v896 = vld [vmem:[#allocation6 + $0x284] sm:$0xf]
    %v897 = vld [vmem:[#allocation6 + $0x288] sm:$0xf]
    %v898 = vld [vmem:[#allocation6 + $0x28c] sm:$0xf]
    %v899 = vld [vmem:[#allocation6 + $0x290] sm:$0xf]
    %v900 = vld [vmem:[#allocation6 + $0x294] sm:$0xf]
    %v901 = vld [vmem:[#allocation6 + $0x298] sm:$0xf]
    %v902 = vld [vmem:[#allocation6 + $0x29c] sm:$0xf]
    %v903 = vld [vmem:[#allocation6 + $0x2a0] sm:$0xf]
    %v904 = vld [vmem:[#allocation6 + $0x2a4] sm:$0xf]
    %v905 = vld [vmem:[#allocation6 + $0x2a8] sm:$0xf]
    %v906 = vld [vmem:[#allocation6 + $0x2ac] sm:$0xf]
    %v907 = vld [vmem:[#allocation6 + $0x2b0] sm:$0xf]
    %v908 = vld [vmem:[#allocation6 + $0x2b4] sm:$0xf]
    %v909 = vld [vmem:[#allocation6 + $0x2b8] sm:$0xf]
    %v910 = vld [vmem:[#allocation6 + $0x2bc] sm:$0xf]
    %v911 = vld [vmem:[#allocation6 + $0x2c0] sm:$0xf]
    %v912 = vld [vmem:[#allocation6 + $0x2c4] sm:$0xf]
    %v913 = vld [vmem:[#allocation6 + $0x2c8] sm:$0xf]
    %v914 = vld [vmem:[#allocation6 + $0x2cc] sm:$0xf]
    %v915 = vld [vmem:[#allocation6 + $0x2d0] sm:$0xf]
    %v916 = vld [vmem:[#allocation6 + $0x2d4] sm:$0xf]
    %v917 = vld [vmem:[#allocation6 + $0x2d8] sm:$0xf]
    %v918 = vld [vmem:[#allocation6 + $0x2dc] sm:$0xf]
    %v919 = vld [vmem:[#allocation6 + $0x2e0] sm:$0xf]
    %v920 = vld [vmem:[#allocation6 + $0x2e4] sm:$0xf]
    %v921 = vld [vmem:[#allocation6 + $0x2e8] sm:$0xf]
    %v922 = vld [vmem:[#allocation6 + $0x2ec] sm:$0xf]
    %v923 = vld [vmem:[#allocation6 + $0x2f0] sm:$0xf]
    %v924 = vld [vmem:[#allocation6 + $0x2f4] sm:$0xf]
    %v925 = vld [vmem:[#allocation6 + $0x2f8] sm:$0xf]
    %v926 = vld [vmem:[#allocation6 + $0x2fc] sm:$0xf]
    %v927 = vld [vmem:[#allocation6 + $0x300] sm:$0xf]
    %v928 = vld [vmem:[#allocation6 + $0x304] sm:$0xf]
    %v929 = vld [vmem:[#allocation6 + $0x308] sm:$0xf]
    %v930 = vld [vmem:[#allocation6 + $0x30c] sm:$0xf]
    %v931 = vld [vmem:[#allocation6 + $0x310] sm:$0xf]
    %v932 = vld [vmem:[#allocation6 + $0x314] sm:$0xf]
    %v933 = vld [vmem:[#allocation6 + $0x318] sm:$0xf]
    %v934 = vld [vmem:[#allocation6 + $0x31c] sm:$0xf]
    %v935 = vld [vmem:[#allocation6 + $0x320] sm:$0xf]
    %v936 = vld [vmem:[#allocation6 + $0x324] sm:$0xf]
    %v937 = vld [vmem:[#allocation6 + $0x328] sm:$0xf]
    %v938 = vld [vmem:[#allocation6 + $0x32c] sm:$0xf]
    %v939 = vld [vmem:[#allocation6 + $0x330] sm:$0xf]
    %v940 = vld [vmem:[#allocation6 + $0x334] sm:$0xf]
    %v941 = vld [vmem:[#allocation6 + $0x338] sm:$0xf]
    %v942 = vld [vmem:[#allocation6 + $0x33c] sm:$0xf]
    %v943 = vld [vmem:[#allocation6 + $0x340] sm:$0xf]
    %v944 = vld [vmem:[#allocation6 + $0x344] sm:$0xf]
    %v945 = vld [vmem:[#allocation6 + $0x348] sm:$0xf]
    %v946 = vld [vmem:[#allocation6 + $0x34c] sm:$0xf]
    %v947 = vld [vmem:[#allocation6 + $0x350] sm:$0xf]
    %v948 = vld [vmem:[#allocation6 + $0x354] sm:$0xf]
    %v949 = vld [vmem:[#allocation6 + $0x358] sm:$0xf]
    %v950 = vld [vmem:[#allocation6 + $0x35c] sm:$0xf]
    %v951 = vld [vmem:[#allocation6 + $0x360] sm:$0xf]
    %v952 = vld [vmem:[#allocation6 + $0x364] sm:$0xf]
    %v953 = vld [vmem:[#allocation6 + $0x368] sm:$0xf]
    %v954 = vld [vmem:[#allocation6 + $0x36c] sm:$0xf]
    %v955 = vld [vmem:[#allocation6 + $0x370] sm:$0xf]
    %v956 = vld [vmem:[#allocation6 + $0x374] sm:$0xf]
    %v957 = vld [vmem:[#allocation6 + $0x378] sm:$0xf]
    %v958 = vld [vmem:[#allocation6 + $0x37c] sm:$0xf]
    %v959 = vld [vmem:[#allocation6 + $0x380] sm:$0xf]
    %v960 = vld [vmem:[#allocation6 + $0x384] sm:$0xf]
    %v961 = vld [vmem:[#allocation6 + $0x388] sm:$0xf]
    %v962 = vld [vmem:[#allocation6 + $0x38c] sm:$0xf]
    %v963 = vld [vmem:[#allocation6 + $0x390] sm:$0xf]
    %v964 = vld [vmem:[#allocation6 + $0x394] sm:$0xf]
    %v965 = vld [vmem:[#allocation6 + $0x398] sm:$0xf]
    %v966 = vld [vmem:[#allocation6 + $0x39c] sm:$0xf]
    %v967 = vld [vmem:[#allocation6 + $0x3a0] sm:$0xf]
    %v968 = vld [vmem:[#allocation6 + $0x3a4] sm:$0xf]
    %v969 = vld [vmem:[#allocation6 + $0x3a8] sm:$0xf]
    %v970 = vld [vmem:[#allocation6 + $0x3ac] sm:$0xf]
    %v971 = vld [vmem:[#allocation6 + $0x3b0] sm:$0xf]
    %v972 = vld [vmem:[#allocation6 + $0x3b4] sm:$0xf]
    %v973 = vld [vmem:[#allocation6 + $0x3b8] sm:$0xf]
    %v974 = vld [vmem:[#allocation6 + $0x3bc] sm:$0xf]
    %v975 = vld [vmem:[#allocation6 + $0x3c0] sm:$0xf]
    %v976 = vld [vmem:[#allocation6 + $0x3c4] sm:$0xf]
    %v977 = vld [vmem:[#allocation6 + $0x3c8] sm:$0xf]
    %v978 = vld [vmem:[#allocation6 + $0x3cc] sm:$0xf]
    %v979 = vld [vmem:[#allocation6 + $0x3d0] sm:$0xf]
    %v980 = vld [vmem:[#allocation6 + $0x3d4] sm:$0xf]
    %v981 = vld [vmem:[#allocation6 + $0x3d8] sm:$0xf]
    %v982 = vld [vmem:[#allocation6 + $0x3dc] sm:$0xf]
    %v983 = vld [vmem:[#allocation6 + $0x3e0] sm:$0xf]
    %v984 = vld [vmem:[#allocation6 + $0x3e4] sm:$0xf]
    %v985 = vld [vmem:[#allocation6 + $0x3e8] sm:$0xf]
    %v986 = vld [vmem:[#allocation6 + $0x3ec] sm:$0xf]
    %v987 = vld [vmem:[#allocation6 + $0x3f0] sm:$0xf]
    %v988 = vld [vmem:[#allocation6 + $0x3f4] sm:$0xf]
    %v989 = vld [vmem:[#allocation6 + $0x3f8] sm:$0xf]
    %v990 = vld [vmem:[#allocation6 + $0x3fc] sm:$0xf]
    %v991 = vpack.c.bf16 %v421, %v420
    %v992 = vpack.c.bf16 %v459, %v458
    %v993 = vpack.c.bf16 %v471, %v470
    %v994 = vpack.c.bf16 %v509, %v508
    %v995 = vpack.c.bf16 %v547, %v546
    %v996 = vpack.c.bf16 %v370, %v369
    %v997 = vpack.c.bf16 %v374, %v373
    %v998 = vpack.c.bf16 %v585, %v584
    %v999 = vpack.c.bf16 %v597, %v596
    %v1000 = vpack.c.bf16 %v378, %v377
    %v1001 = vpack.c.bf16 %v382, %v381
    %v1002 = vpack.c.bf16 %v609, %v608
    %v1003 = vpack.c.bf16 %v646, %v645
    %v1004 = vpack.c.bf16 %v683, %v682
    %v1005 = vpack.c.bf16 %v695, %v694
    %v1006 = vpack.c.bf16 %v732, %v731
    %v1007 = vpack.c.bf16 %v423, %v422
    %v1008 = vpack.c.bf16 %v461, %v460
    %v1009 = vpack.c.bf16 %v473, %v472
    %v1010 = vpack.c.bf16 %v511, %v510
    %v1011 = vpack.c.bf16 %v549, %v548
    %v1012 = vpack.c.bf16 %v372, %v371
    %v1013 = vpack.c.bf16 %v376, %v375
    %v1014 = vpack.c.bf16 %v587, %v586
    %v1015 = vpack.c.bf16 %v599, %v598
    %v1016 = vpack.c.bf16 %v380, %v379
    %v1017 = vpack.c.bf16 %v384, %v383
    %v1018 = vpack.c.bf16 %v611, %v610
    %v1019 = vpack.c.bf16 %v648, %v647
    %v1020 = vpack.c.bf16 %v685, %v684
    %v1021 = vpack.c.bf16 %v697, %v696
    %v1022 = vpack.c.bf16 %v734, %v733
    %v1023 = vld [vmem:[#allocation7] sm:$0x1]
    %v1025 = vlaneseq
    %v1026 = vshrl.u32 %v1025, 7
    %v1027 = vsub.s32 0, %v1026
    %v1028 = vrot.slane %v1023, %v1027
    %v1286 = vunpack.c.l.b16 %v735
    %v1287 = vunpack.c.l.b16 %v736
    %v1288 = vunpack.c.l.b16 %v737
    %v1289 = vunpack.c.l.b16 %v738
    %v1290 = vunpack.c.l.b16 %v739
    %v1291 = vunpack.c.l.b16 %v740
    %v1292 = vunpack.c.l.b16 %v741
    %v1293 = vunpack.c.l.b16 %v742
    %v1294 = vunpack.c.l.b16 %v743
    %v1295 = vunpack.c.l.b16 %v744
    %v1296 = vunpack.c.l.b16 %v745
    %v1297 = vunpack.c.l.b16 %v746
    %v1298 = vunpack.c.l.b16 %v747
    %v1299 = vunpack.c.l.b16 %v748
    %v1300 = vunpack.c.l.b16 %v749
    %v1301 = vunpack.c.l.b16 %v750
    %v1302 = vunpack.c.l.b16 %v751
    %v1303 = vunpack.c.l.b16 %v752
    %v1304 = vunpack.c.l.b16 %v753
    %v1305 = vunpack.c.l.b16 %v754
    %v1306 = vunpack.c.l.b16 %v755
    %v1307 = vunpack.c.l.b16 %v756
    %v1308 = vunpack.c.l.b16 %v757
    %v1309 = vunpack.c.l.b16 %v758
    %v1310 = vunpack.c.l.b16 %v759
    %v1311 = vunpack.c.l.b16 %v760
    %v1312 = vunpack.c.l.b16 %v761
    %v1313 = vunpack.c.l.b16 %v762
    %v1314 = vunpack.c.l.b16 %v763
    %v1315 = vunpack.c.l.b16 %v764
    %v1316 = vunpack.c.l.b16 %v765
    %v1317 = vunpack.c.l.b16 %v766
    %v1318 = vunpack.c.l.b16 %v767
    %v1319 = vunpack.c.l.b16 %v768
    %v1320 = vunpack.c.l.b16 %v769
    %v1321 = vunpack.c.l.b16 %v770
    %v1322 = vunpack.c.l.b16 %v771
    %v1323 = vunpack.c.l.b16 %v772
    %v1324 = vunpack.c.l.b16 %v773
    %v1325 = vunpack.c.l.b16 %v774
    %v1326 = vunpack.c.l.b16 %v775
    %v1327 = vunpack.c.l.b16 %v776
    %v1328 = vunpack.c.l.b16 %v777
    %v1329 = vunpack.c.l.b16 %v778
    %v1330 = vunpack.c.l.b16 %v779
    %v1331 = vunpack.c.l.b16 %v780
    %v1332 = vunpack.c.l.b16 %v781
    %v1333 = vunpack.c.l.b16 %v782
    %v1334 = vunpack.c.l.b16 %v783
    %v1335 = vunpack.c.l.b16 %v784
    %v1336 = vunpack.c.l.b16 %v785
    %v1337 = vunpack.c.l.b16 %v786
    %v1338 = vunpack.c.l.b16 %v787
    %v1339 = vunpack.c.l.b16 %v788
    %v1340 = vunpack.c.l.b16 %v789
    %v1341 = vunpack.c.l.b16 %v790
    %v1342 = vunpack.c.l.b16 %v791
    %v1343 = vunpack.c.l.b16 %v792
    %v1344 = vunpack.c.l.b16 %v793
    %v1345 = vunpack.c.l.b16 %v794
    %v1346 = vunpack.c.l.b16 %v795
    %v1347 = vunpack.c.l.b16 %v796
    %v1348 = vunpack.c.l.b16 %v797
    %v1349 = vunpack.c.l.b16 %v798
    %v1350 = vunpack.c.l.b16 %v799
    %v1351 = vunpack.c.l.b16 %v800
    %v1352 = vunpack.c.l.b16 %v801
    %v1353 = vunpack.c.l.b16 %v802
    %v1354 = vunpack.c.l.b16 %v803
    %v1355 = vunpack.c.l.b16 %v804
    %v1356 = vunpack.c.l.b16 %v805
    %v1357 = vunpack.c.l.b16 %v806
    %v1358 = vunpack.c.l.b16 %v807
    %v1359 = vunpack.c.l.b16 %v808
    %v1360 = vunpack.c.l.b16 %v809
    %v1361 = vunpack.c.l.b16 %v810
    %v1362 = vunpack.c.l.b16 %v811
    %v1363 = vunpack.c.l.b16 %v812
    %v1364 = vunpack.c.l.b16 %v813
    %v1365 = vunpack.c.l.b16 %v814
    %v1366 = vunpack.c.l.b16 %v815
    %v1367 = vunpack.c.l.b16 %v816
    %v1368 = vunpack.c.l.b16 %v817
    %v1369 = vunpack.c.l.b16 %v818
    %v1370 = vunpack.c.l.b16 %v819
    %v1371 = vunpack.c.l.b16 %v820
    %v1372 = vunpack.c.l.b16 %v821
    %v1373 = vunpack.c.l.b16 %v822
    %v1374 = vunpack.c.l.b16 %v823
    %v1375 = vunpack.c.l.b16 %v824
    %v1376 = vunpack.c.l.b16 %v825
    %v1377 = vunpack.c.l.b16 %v826
    %v1378 = vunpack.c.l.b16 %v827
    %v1379 = vunpack.c.l.b16 %v828
    %v1380 = vunpack.c.l.b16 %v829
    %v1381 = vunpack.c.l.b16 %v830
    %v1382 = vunpack.c.l.b16 %v831
    %v1383 = vunpack.c.l.b16 %v832
    %v1384 = vunpack.c.l.b16 %v833
    %v1385 = vunpack.c.l.b16 %v834
    %v1386 = vunpack.c.l.b16 %v835
    %v1387 = vunpack.c.l.b16 %v836
    %v1388 = vunpack.c.l.b16 %v837
    %v1389 = vunpack.c.l.b16 %v838
    %v1390 = vunpack.c.l.b16 %v839
    %v1391 = vunpack.c.l.b16 %v840
    %v1392 = vunpack.c.l.b16 %v841
    %v1393 = vunpack.c.l.b16 %v842
    %v1394 = vunpack.c.l.b16 %v843
    %v1395 = vunpack.c.l.b16 %v844
    %v1396 = vunpack.c.l.b16 %v845
    %v1397 = vunpack.c.l.b16 %v846
    %v1398 = vunpack.c.l.b16 %v847
    %v1399 = vunpack.c.l.b16 %v848
    %v1400 = vunpack.c.l.b16 %v849
    %v1401 = vunpack.c.l.b16 %v850
    %v1402 = vunpack.c.l.b16 %v851
    %v1403 = vunpack.c.l.b16 %v852
    %v1404 = vunpack.c.l.b16 %v853
    %v1405 = vunpack.c.l.b16 %v854
    %v1406 = vunpack.c.l.b16 %v855
    %v1407 = vunpack.c.l.b16 %v856
    %v1408 = vunpack.c.l.b16 %v857
    %v1409 = vunpack.c.l.b16 %v858
    %v1410 = vunpack.c.l.b16 %v859
    %v1411 = vunpack.c.l.b16 %v860
    %v1412 = vunpack.c.l.b16 %v861
    %v1413 = vunpack.c.l.b16 %v862
    %v1414 = vunpack.c.l.b16 %v863
    %v1415 = vunpack.c.l.b16 %v864
    %v1416 = vunpack.c.l.b16 %v865
    %v1417 = vunpack.c.l.b16 %v866
    %v1418 = vunpack.c.l.b16 %v867
    %v1419 = vunpack.c.l.b16 %v868
    %v1420 = vunpack.c.l.b16 %v869
    %v1421 = vunpack.c.l.b16 %v870
    %v1422 = vunpack.c.l.b16 %v871
    %v1423 = vunpack.c.l.b16 %v872
    %v1424 = vunpack.c.l.b16 %v873
    %v1425 = vunpack.c.l.b16 %v874
    %v1426 = vunpack.c.l.b16 %v875
    %v1427 = vunpack.c.l.b16 %v876
    %v1428 = vunpack.c.l.b16 %v877
    %v1429 = vunpack.c.l.b16 %v878
    %v1430 = vunpack.c.l.b16 %v879
    %v1431 = vunpack.c.l.b16 %v880
    %v1432 = vunpack.c.l.b16 %v881
    %v1433 = vunpack.c.l.b16 %v882
    %v1434 = vunpack.c.l.b16 %v883
    %v1435 = vunpack.c.l.b16 %v884
    %v1436 = vunpack.c.l.b16 %v885
    %v1437 = vunpack.c.l.b16 %v886
    %v1438 = vunpack.c.l.b16 %v887
    %v1439 = vunpack.c.l.b16 %v888
    %v1440 = vunpack.c.l.b16 %v889
    %v1441 = vunpack.c.l.b16 %v890
    %v1442 = vunpack.c.l.b16 %v891
    %v1443 = vunpack.c.l.b16 %v892
    %v1444 = vunpack.c.l.b16 %v893
    %v1445 = vunpack.c.l.b16 %v894
    %v1446 = vunpack.c.l.b16 %v895
    %v1447 = vunpack.c.l.b16 %v896
    %v1448 = vunpack.c.l.b16 %v897
    %v1449 = vunpack.c.l.b16 %v898
    %v1450 = vunpack.c.l.b16 %v899
    %v1451 = vunpack.c.l.b16 %v900
    %v1452 = vunpack.c.l.b16 %v901
    %v1453 = vunpack.c.l.b16 %v902
    %v1454 = vunpack.c.l.b16 %v903
    %v1455 = vunpack.c.l.b16 %v904
    %v1456 = vunpack.c.l.b16 %v905
    %v1457 = vunpack.c.l.b16 %v906
    %v1458 = vunpack.c.l.b16 %v907
    %v1459 = vunpack.c.l.b16 %v908
    %v1460 = vunpack.c.l.b16 %v909
    %v1461 = vunpack.c.l.b16 %v910
    %v1462 = vunpack.c.l.b16 %v911
    %v1463 = vunpack.c.l.b16 %v912
    %v1464 = vunpack.c.l.b16 %v913
    %v1465 = vunpack.c.l.b16 %v914
    %v1466 = vunpack.c.l.b16 %v915
    %v1467 = vunpack.c.l.b16 %v916
    %v1468 = vunpack.c.l.b16 %v917
    %v1469 = vunpack.c.l.b16 %v918
    %v1470 = vunpack.c.l.b16 %v919
    %v1471 = vunpack.c.l.b16 %v920
    %v1472 = vunpack.c.l.b16 %v921
    %v1473 = vunpack.c.l.b16 %v922
    %v1474 = vunpack.c.l.b16 %v923
    %v1475 = vunpack.c.l.b16 %v924
    %v1476 = vunpack.c.l.b16 %v925
    %v1477 = vunpack.c.l.b16 %v926
    %v1478 = vunpack.c.l.b16 %v927
    %v1479 = vunpack.c.l.b16 %v928
    %v1480 = vunpack.c.l.b16 %v929
    %v1481 = vunpack.c.l.b16 %v930
    %v1482 = vunpack.c.l.b16 %v931
    %v1483 = vunpack.c.l.b16 %v932
    %v1484 = vunpack.c.l.b16 %v933
    %v1485 = vunpack.c.l.b16 %v934
    %v1486 = vunpack.c.l.b16 %v935
    %v1487 = vunpack.c.l.b16 %v936
    %v1488 = vunpack.c.l.b16 %v937
    %v1489 = vunpack.c.l.b16 %v938
    %v1490 = vunpack.c.l.b16 %v939
    %v1491 = vunpack.c.l.b16 %v940
    %v1492 = vunpack.c.l.b16 %v941
    %v1493 = vunpack.c.l.b16 %v942
    %v1494 = vunpack.c.l.b16 %v943
    %v1495 = vunpack.c.l.b16 %v944
    %v1496 = vunpack.c.l.b16 %v945
    %v1497 = vunpack.c.l.b16 %v946
    %v1498 = vunpack.c.l.b16 %v947
    %v1499 = vunpack.c.l.b16 %v948
    %v1500 = vunpack.c.l.b16 %v949
    %v1501 = vunpack.c.l.b16 %v950
    %v1502 = vunpack.c.l.b16 %v951
    %v1503 = vunpack.c.l.b16 %v952
    %v1504 = vunpack.c.l.b16 %v953
    %v1505 = vunpack.c.l.b16 %v954
    %v1506 = vunpack.c.l.b16 %v955
    %v1507 = vunpack.c.l.b16 %v956
    %v1508 = vunpack.c.l.b16 %v957
    %v1509 = vunpack.c.l.b16 %v958
    %v1510 = vunpack.c.l.b16 %v959
    %v1511 = vunpack.c.l.b16 %v960
    %v1512 = vunpack.c.l.b16 %v961
    %v1513 = vunpack.c.l.b16 %v962
    %v1514 = vunpack.c.l.b16 %v963
    %v1515 = vunpack.c.l.b16 %v964
    %v1516 = vunpack.c.l.b16 %v965
    %v1517 = vunpack.c.l.b16 %v966
    %v1518 = vunpack.c.l.b16 %v967
    %v1519 = vunpack.c.l.b16 %v968
    %v1520 = vunpack.c.l.b16 %v969
    %v1521 = vunpack.c.l.b16 %v970
    %v1522 = vunpack.c.l.b16 %v971
    %v1523 = vunpack.c.l.b16 %v972
    %v1524 = vunpack.c.l.b16 %v973
    %v1525 = vunpack.c.l.b16 %v974
    %v1526 = vunpack.c.l.b16 %v975
    %v1527 = vunpack.c.l.b16 %v976
    %v1528 = vunpack.c.l.b16 %v977
    %v1529 = vunpack.c.l.b16 %v978
    %v1530 = vunpack.c.l.b16 %v979
    %v1531 = vunpack.c.l.b16 %v980
    %v1532 = vunpack.c.l.b16 %v981
    %v1533 = vunpack.c.l.b16 %v982
    %v1534 = vunpack.c.l.b16 %v983
    %v1535 = vunpack.c.l.b16 %v984
    %v1536 = vunpack.c.l.b16 %v985
    %v1537 = vunpack.c.l.b16 %v986
    %v1538 = vunpack.c.l.b16 %v987
    %v1539 = vunpack.c.l.b16 %v988
    %v1540 = vunpack.c.l.b16 %v989
    %v1541 = vunpack.c.l.b16 %v990
    %v1542 = vpack.c.b16 %v1287, %v1286
    %v1543 = vpack.c.b16 %v1289, %v1288
    %v1544 = vpack.c.b16 %v1291, %v1290
    %v1545 = vpack.c.b16 %v1293, %v1292
    %v1546 = vpack.c.b16 %v1295, %v1294
    %v1547 = vpack.c.b16 %v1297, %v1296
    %v1548 = vpack.c.b16 %v1299, %v1298
    %v1549 = vpack.c.b16 %v1301, %v1300
    %v1550 = vpack.c.b16 %v1303, %v1302
    %v1551 = vpack.c.b16 %v1305, %v1304
    %v1552 = vpack.c.b16 %v1307, %v1306
    %v1553 = vpack.c.b16 %v1309, %v1308
    %v1554 = vpack.c.b16 %v1311, %v1310
    %v1555 = vpack.c.b16 %v1313, %v1312
    %v1556 = vpack.c.b16 %v1315, %v1314
    %v1557 = vpack.c.b16 %v1317, %v1316
    %v1558 = vpack.c.b16 %v1319, %v1318
    %v1559 = vpack.c.b16 %v1321, %v1320
    %v1560 = vpack.c.b16 %v1323, %v1322
    %v1561 = vpack.c.b16 %v1325, %v1324
    %v1562 = vpack.c.b16 %v1327, %v1326
    %v1563 = vpack.c.b16 %v1329, %v1328
    %v1564 = vpack.c.b16 %v1331, %v1330
    %v1565 = vpack.c.b16 %v1333, %v1332
    %v1566 = vpack.c.b16 %v1335, %v1334
    %v1567 = vpack.c.b16 %v1337, %v1336
    %v1568 = vpack.c.b16 %v1339, %v1338
    %v1569 = vpack.c.b16 %v1341, %v1340
    %v1570 = vpack.c.b16 %v1343, %v1342
    %v1571 = vpack.c.b16 %v1345, %v1344
    %v1572 = vpack.c.b16 %v1347, %v1346
    %v1573 = vpack.c.b16 %v1349, %v1348
    %v1574 = vpack.c.b16 %v1351, %v1350
    %v1575 = vpack.c.b16 %v1353, %v1352
    %v1576 = vpack.c.b16 %v1355, %v1354
    %v1577 = vpack.c.b16 %v1357, %v1356
    %v1578 = vpack.c.b16 %v1359, %v1358
    %v1579 = vpack.c.b16 %v1361, %v1360
    %v1580 = vpack.c.b16 %v1363, %v1362
    %v1581 = vpack.c.b16 %v1365, %v1364
    %v1582 = vpack.c.b16 %v1367, %v1366
    %v1583 = vpack.c.b16 %v1369, %v1368
    %v1584 = vpack.c.b16 %v1371, %v1370
    %v1585 = vpack.c.b16 %v1373, %v1372
    %v1586 = vpack.c.b16 %v1375, %v1374
    %v1587 = vpack.c.b16 %v1377, %v1376
    %v1588 = vpack.c.b16 %v1379, %v1378
    %v1589 = vpack.c.b16 %v1381, %v1380
    %v1590 = vpack.c.b16 %v1383, %v1382
    %v1591 = vpack.c.b16 %v1385, %v1384
    %v1592 = vpack.c.b16 %v1387, %v1386
    %v1593 = vpack.c.b16 %v1389, %v1388
    %v1594 = vpack.c.b16 %v1391, %v1390
    %v1595 = vpack.c.b16 %v1393, %v1392
    %v1596 = vpack.c.b16 %v1395, %v1394
    %v1597 = vpack.c.b16 %v1397, %v1396
    %v1598 = vpack.c.b16 %v1399, %v1398
    %v1599 = vpack.c.b16 %v1401, %v1400
    %v1600 = vpack.c.b16 %v1403, %v1402
    %v1601 = vpack.c.b16 %v1405, %v1404
    %v1602 = vpack.c.b16 %v1407, %v1406
    %v1603 = vpack.c.b16 %v1409, %v1408
    %v1604 = vpack.c.b16 %v1411, %v1410
    %v1605 = vpack.c.b16 %v1413, %v1412
    %v1606 = vpack.c.b16 %v1415, %v1414
    %v1607 = vpack.c.b16 %v1417, %v1416
    %v1608 = vpack.c.b16 %v1419, %v1418
    %v1609 = vpack.c.b16 %v1421, %v1420
    %v1610 = vpack.c.b16 %v1423, %v1422
    %v1611 = vpack.c.b16 %v1425, %v1424
    %v1612 = vpack.c.b16 %v1427, %v1426
    %v1613 = vpack.c.b16 %v1429, %v1428
    %v1614 = vpack.c.b16 %v1431, %v1430
    %v1615 = vpack.c.b16 %v1433, %v1432
    %v1616 = vpack.c.b16 %v1435, %v1434
    %v1617 = vpack.c.b16 %v1437, %v1436
    %v1618 = vpack.c.b16 %v1439, %v1438
    %v1619 = vpack.c.b16 %v1441, %v1440
    %v1620 = vpack.c.b16 %v1443, %v1442
    %v1621 = vpack.c.b16 %v1445, %v1444
    %v1622 = vpack.c.b16 %v1447, %v1446
    %v1623 = vpack.c.b16 %v1449, %v1448
    %v1624 = vpack.c.b16 %v1451, %v1450
    %v1625 = vpack.c.b16 %v1453, %v1452
    %v1626 = vpack.c.b16 %v1455, %v1454
    %v1627 = vpack.c.b16 %v1457, %v1456
    %v1628 = vpack.c.b16 %v1459, %v1458
    %v1629 = vpack.c.b16 %v1461, %v1460
    %v1630 = vpack.c.b16 %v1463, %v1462
    %v1631 = vpack.c.b16 %v1465, %v1464
    %v1632 = vpack.c.b16 %v1467, %v1466
    %v1633 = vpack.c.b16 %v1469, %v1468
    %v1634 = vpack.c.b16 %v1471, %v1470
    %v1635 = vpack.c.b16 %v1473, %v1472
    %v1636 = vpack.c.b16 %v1475, %v1474
    %v1637 = vpack.c.b16 %v1477, %v1476
    %v1638 = vpack.c.b16 %v1479, %v1478
    %v1639 = vpack.c.b16 %v1481, %v1480
    %v1640 = vpack.c.b16 %v1483, %v1482
    %v1641 = vpack.c.b16 %v1485, %v1484
    %v1642 = vpack.c.b16 %v1487, %v1486
    %v1643 = vpack.c.b16 %v1489, %v1488
    %v1644 = vpack.c.b16 %v1491, %v1490
    %v1645 = vpack.c.b16 %v1493, %v1492
    %v1646 = vpack.c.b16 %v1495, %v1494
    %v1647 = vpack.c.b16 %v1497, %v1496
    %v1648 = vpack.c.b16 %v1499, %v1498
    %v1649 = vpack.c.b16 %v1501, %v1500
    %v1650 = vpack.c.b16 %v1503, %v1502
    %v1651 = vpack.c.b16 %v1505, %v1504
    %v1652 = vpack.c.b16 %v1507, %v1506
    %v1653 = vpack.c.b16 %v1509, %v1508
    %v1654 = vpack.c.b16 %v1511, %v1510
    %v1655 = vpack.c.b16 %v1513, %v1512
    %v1656 = vpack.c.b16 %v1515, %v1514
    %v1657 = vpack.c.b16 %v1517, %v1516
    %v1658 = vpack.c.b16 %v1519, %v1518
    %v1659 = vpack.c.b16 %v1521, %v1520
    %v1660 = vpack.c.b16 %v1523, %v1522
    %v1661 = vpack.c.b16 %v1525, %v1524
    %v1662 = vpack.c.b16 %v1527, %v1526
    %v1663 = vpack.c.b16 %v1529, %v1528
    %v1664 = vpack.c.b16 %v1531, %v1530
    %v1665 = vpack.c.b16 %v1533, %v1532
    %v1666 = vpack.c.b16 %v1535, %v1534
    %v1667 = vpack.c.b16 %v1537, %v1536
    %v1668 = vpack.c.b16 %v1539, %v1538
    %v1669 = vpack.c.b16 %v1541, %v1540
    %1798 = vmatprep.subr.bf16.mxu0 0
    %1799 = vmatpush1.bf16.msra.mxu0 %v1542
    %1800 = vmatprep.subr.bf16.mxu0 0
    %1801 = vmatpush1.bf16.msra.mxu0 %v1543
    %1802 = vmatprep.subr.bf16.mxu0 0
    %1803 = vmatpush1.bf16.msra.mxu0 %v1544
    %1804 = vmatprep.subr.bf16.mxu0 0
    %1805 = vmatpush1.bf16.msra.mxu0 %v1545
    %1806 = vmatprep.subr.bf16.mxu0 0
    %1807 = vmatpush1.bf16.msra.mxu0 %v1546
    %1808 = vmatprep.subr.bf16.mxu0 0
    %1809 = vmatpush1.bf16.msra.mxu0 %v1547
    %1810 = vmatprep.subr.bf16.mxu0 0
    %1811 = vmatpush1.bf16.msra.mxu0 %v1548
    %1812 = vmatprep.subr.bf16.mxu0 0
    %1813 = vmatpush1.bf16.msra.mxu0 %v1549
    %1814 = vmatprep.subr.bf16.mxu0 0
    %1815 = vmatpush1.bf16.msra.mxu0 %v1550
    %1816 = vmatprep.subr.bf16.mxu0 0
    %1817 = vmatpush1.bf16.msra.mxu0 %v1551
    %1818 = vmatprep.subr.bf16.mxu0 0
    %1819 = vmatpush1.bf16.msra.mxu0 %v1552
    %1820 = vmatprep.subr.bf16.mxu0 0
    %1821 = vmatpush1.bf16.msra.mxu0 %v1553
    %1822 = vmatprep.subr.bf16.mxu0 0
    %1823 = vmatpush1.bf16.msra.mxu0 %v1554
    %1824 = vmatprep.subr.bf16.mxu0 0
    %1825 = vmatpush1.bf16.msra.mxu0 %v1555
    %1826 = vmatprep.subr.bf16.mxu0 0
    %1827 = vmatpush1.bf16.msra.mxu0 %v1556
    %1828 = vmatprep.subr.bf16.mxu0 0
    %1829 = vmatpush1.bf16.msra.mxu0 %v1557
    %1830 = vmatprep.mubr.bf16.mxu0 %v992
    %1831 = vmatmul.mubr.bf16.gmra.mrb[0].mxu0 %v991
    %v1832 = vpop.f32.mrb[0].mxu0
    %v1833 = vadd.f32 %v1028, %v1832
    %v1834 = vpop.f32.mrb[0].mxu0
    %v1835 = vpop.f32.mrb[0].mxu0
    %v1836 = vadd.f32 %v1028, %v1835
    %v1837 = vpop.f32.mrb[0].mxu0
    %1838 = vmatprep.mubr.bf16.mxu0 %v1008
    %1839 = vmatmul.mubr.bf16.gmra.mrb[0].mxu0 %v1007
    %v1840 = vpop.f32.mrb[0].mxu0
    %v1841 = vadd.f32 %v1028, %v1840
    %v1842 = vpop.f32.mrb[0].mxu0
    %v1843 = vpop.f32.mrb[0].mxu0
    %v1844 = vadd.f32 %v1028, %v1843
    %v1845 = vpop.f32.mrb[0].mxu0
    %1846 = vdwg.mxu0
    %1847 = vmatprep.subr.bf16.mxu0 0
    %1848 = vmatpush1.bf16.msra.mxu0 %v1558
    %1849 = vmatprep.subr.bf16.mxu0 0
    %1850 = vmatpush1.bf16.msra.mxu0 %v1559
    %1851 = vmatprep.subr.bf16.mxu0 0
    %1852 = vmatpush1.bf16.msra.mxu0 %v1560
    %1853 = vmatprep.subr.bf16.mxu0 0
    %1854 = vmatpush1.bf16.msra.mxu0 %v1561
    %1855 = vmatprep.subr.bf16.mxu0 0
    %1856 = vmatpush1.bf16.msra.mxu0 %v1562
    %1857 = vmatprep.subr.bf16.mxu0 0
    %1858 = vmatpush1.bf16.msra.mxu0 %v1563
    %1859 = vmatprep.subr.bf16.mxu0 0
    %1860 = vmatpush1.bf16.msra.mxu0 %v1564
    %1861 = vmatprep.subr.bf16.mxu0 0
    %1862 = vmatpush1.bf16.msra.mxu0 %v1565
    %1863 = vmatprep.subr.bf16.mxu0 0
    %1864 = vmatpush1.bf16.msra.mxu0 %v1566
    %1865 = vmatprep.subr.bf16.mxu0 0
    %1866 = vmatpush1.bf16.msra.mxu0 %v1567
    %1867 = vmatprep.subr.bf16.mxu0 0
    %1868 = vmatpush1.bf16.msra.mxu0 %v1568
    %1869 = vmatprep.subr.bf16.mxu0 0
    %1870 = vmatpush1.bf16.msra.mxu0 %v1569
    %1871 = vmatprep.subr.bf16.mxu0 0
    %1872 = vmatpush1.bf16.msra.mxu0 %v1570
    %1873 = vmatprep.subr.bf16.mxu0 0
    %1874 = vmatpush1.bf16.msra.mxu0 %v1571
    %1875 = vmatprep.subr.bf16.mxu0 0
    %1876 = vmatpush1.bf16.msra.mxu0 %v1572
    %1877 = vmatprep.subr.bf16.mxu0 0
    %1878 = vmatpush1.bf16.msra.mxu0 %v1573
    %1879 = vmatprep.mubr.bf16.mxu0 %v994
    %1880 = vmatmul.mubr.bf16.gmra.mrb[0].mxu0 %v993
    %v1881 = vpop.f32.mrb[0].mxu0
    %v1882 = vadd.f32 %v1833, %v1881
    %v1883 = vpop.f32.mrb[0].mxu0
    %v1884 = vpop.f32.mrb[0].mxu0
    %v1885 = vadd.f32 %v1836, %v1884
    %v1886 = vpop.f32.mrb[0].mxu0
    %1887 = vmatprep.mubr.bf16.mxu0 %v1010
    %1888 = vmatmul.mubr.bf16.gmra.mrb[0].mxu0 %v1009
    %v1889 = vpop.f32.mrb[0].mxu0
    %v1890 = vadd.f32 %v1841, %v1889
    %v1891 = vpop.f32.mrb[0].mxu0
    %v1892 = vpop.f32.mrb[0].mxu0
    %v1893 = vadd.f32 %v1844, %v1892
    %v1894 = vpop.f32.mrb[0].mxu0
    %1895 = vdwg.mxu0
    %1896 = vmatprep.subr.bf16.mxu0 0
    %1897 = vmatpush1.bf16.msra.mxu0 %v1574
    %1898 = vmatprep.subr.bf16.mxu0 0
    %1899 = vmatpush1.bf16.msra.mxu0 %v1575
    %1900 = vmatprep.subr.bf16.mxu0 0
    %1901 = vmatpush1.bf16.msra.mxu0 %v1576
    %1902 = vmatprep.subr.bf16.mxu0 0
    %1903 = vmatpush1.bf16.msra.mxu0 %v1577
    %1904 = vmatprep.subr.bf16.mxu0 0
    %1905 = vmatpush1.bf16.msra.mxu0 %v1578
    %1906 = vmatprep.subr.bf16.mxu0 0
    %1907 = vmatpush1.bf16.msra.mxu0 %v1579
    %1908 = vmatprep.subr.bf16.mxu0 0
    %1909 = vmatpush1.bf16.msra.mxu0 %v1580
    %1910 = vmatprep.subr.bf16.mxu0 0
    %1911 = vmatpush1.bf16.msra.mxu0 %v1581
    %1912 = vmatprep.subr.bf16.mxu0 0
    %1913 = vmatpush1.bf16.msra.mxu0 %v1582
    %1914 = vmatprep.subr.bf16.mxu0 0
    %1915 = vmatpush1.bf16.msra.mxu0 %v1583
    %1916 = vmatprep.subr.bf16.mxu0 0
    %1917 = vmatpush1.bf16.msra.mxu0 %v1584
    %1918 = vmatprep.subr.bf16.mxu0 0
    %1919 = vmatpush1.bf16.msra.mxu0 %v1585
    %1920 = vmatprep.subr.bf16.mxu0 0
    %1921 = vmatpush1.bf16.msra.mxu0 %v1586
    %1922 = vmatprep.subr.bf16.mxu0 0
    %1923 = vmatpush1.bf16.msra.mxu0 %v1587
    %1924 = vmatprep.subr.bf16.mxu0 0
    %1925 = vmatpush1.bf16.msra.mxu0 %v1588
    %1926 = vmatprep.subr.bf16.mxu0 0
    %1927 = vmatpush1.bf16.msra.mxu0 %v1589
    %1928 = vmatprep.mubr.bf16.mxu0 %v996
    %1929 = vmatmul.mubr.bf16.gmra.mrb[0].mxu0 %v995
    %v1930 = vpop.f32.mrb[0].mxu0
    %v1931 = vadd.f32 %v1882, %v1930
    %v1932 = vpop.f32.mrb[0].mxu0
    %v1933 = vpop.f32.mrb[0].mxu0
    %v1934 = vadd.f32 %v1885, %v1933
    %v1935 = vpop.f32.mrb[0].mxu0
    %1936 = vmatprep.mubr.bf16.mxu0 %v1012
    %1937 = vmatmul.mubr.bf16.gmra.mrb[0].mxu0 %v1011
    %v1938 = vpop.f32.mrb[0].mxu0
    %v1939 = vadd.f32 %v1890, %v1938
    %v1940 = vpop.f32.mrb[0].mxu0
    %v1941 = vpop.f32.mrb[0].mxu0
    %v1942 = vadd.f32 %v1893, %v1941
    %v1943 = vpop.f32.mrb[0].mxu0
    %1944 = vdwg.mxu0
    %1945 = vmatprep.subr.bf16.mxu0 0
    %1946 = vmatpush1.bf16.msra.mxu0 %v1590
    %1947 = vmatprep.subr.bf16.mxu0 0
    %1948 = vmatpush1.bf16.msra.mxu0 %v1591
    %1949 = vmatprep.subr.bf16.mxu0 0
    %1950 = vmatpush1.bf16.msra.mxu0 %v1592
    %1951 = vmatprep.subr.bf16.mxu0 0
    %1952 = vmatpush1.bf16.msra.mxu0 %v1593
    %1953 = vmatprep.subr.bf16.mxu0 0
    %1954 = vmatpush1.bf16.msra.mxu0 %v1594
    %1955 = vmatprep.subr.bf16.mxu0 0
    %1956 = vmatpush1.bf16.msra.mxu0 %v1595
    %1957 = vmatprep.subr.bf16.mxu0 0
    %1958 = vmatpush1.bf16.msra.mxu0 %v1596
    %1959 = vmatprep.subr.bf16.mxu0 0
    %1960 = vmatpush1.bf16.msra.mxu0 %v1597
    %1961 = vmatprep.subr.bf16.mxu0 0
    %1962 = vmatpush1.bf16.msra.mxu0 %v1598
    %1963 = vmatprep.subr.bf16.mxu0 0
    %1964 = vmatpush1.bf16.msra.mxu0 %v1599
    %1965 = vmatprep.subr.bf16.mxu0 0
    %1966 = vmatpush1.bf16.msra.mxu0 %v1600
    %1967 = vmatprep.subr.bf16.mxu0 0
    %1968 = vmatpush1.bf16.msra.mxu0 %v1601
    %1969 = vmatprep.subr.bf16.mxu0 0
    %1970 = vmatpush1.bf16.msra.mxu0 %v1602
    %1971 = vmatprep.subr.bf16.mxu0 0
    %1972 = vmatpush1.bf16.msra.mxu0 %v1603
    %1973 = vmatprep.subr.bf16.mxu0 0
    %1974 = vmatpush1.bf16.msra.mxu0 %v1604
    %1975 = vmatprep.subr.bf16.mxu0 0
    %1976 = vmatpush1.bf16.msra.mxu0 %v1605
    %1977 = vmatprep.mubr.bf16.mxu0 %v998
    %1978 = vmatmul.mubr.bf16.gmra.mrb[0].mxu0 %v997
    %v1979 = vpop.f32.mrb[0].mxu0
    %v1980 = vadd.f32 %v1931, %v1979
    %v1981 = vpop.f32.mrb[0].mxu0
    %v1982 = vpop.f32.mrb[0].mxu0
    %v1983 = vadd.f32 %v1934, %v1982
    %v1984 = vpop.f32.mrb[0].mxu0
    %1985 = vmatprep.mubr.bf16.mxu0 %v1014
    %1986 = vmatmul.mubr.bf16.gmra.mrb[0].mxu0 %v1013
    %v1987 = vpop.f32.mrb[0].mxu0
    %v1988 = vadd.f32 %v1939, %v1987
    %v1989 = vpop.f32.mrb[0].mxu0
    %v1990 = vpop.f32.mrb[0].mxu0
    %v1991 = vadd.f32 %v1942, %v1990
    %v1992 = vpop.f32.mrb[0].mxu0
    %1993 = vdwg.mxu0
    %1994 = vmatprep.subr.bf16.mxu0 0
    %1995 = vmatpush1.bf16.msra.mxu0 %v1606
    %1996 = vmatprep.subr.bf16.mxu0 0
    %1997 = vmatpush1.bf16.msra.mxu0 %v1607
    %1998 = vmatprep.subr.bf16.mxu0 0
    %1999 = vmatpush1.bf16.msra.mxu0 %v1608
    %2000 = vmatprep.subr.bf16.mxu0 0
    %2001 = vmatpush1.bf16.msra.mxu0 %v1609
    %2002 = vmatprep.subr.bf16.mxu0 0
    %2003 = vmatpush1.bf16.msra.mxu0 %v1610
    %2004 = vmatprep.subr.bf16.mxu0 0
    %2005 = vmatpush1.bf16.msra.mxu0 %v1611
    %2006 = vmatprep.subr.bf16.mxu0 0
    %2007 = vmatpush1.bf16.msra.mxu0 %v1612
    %2008 = vmatprep.subr.bf16.mxu0 0
    %2009 = vmatpush1.bf16.msra.mxu0 %v1613
    %2010 = vmatprep.subr.bf16.mxu0 0
    %2011 = vmatpush1.bf16.msra.mxu0 %v1614
    %2012 = vmatprep.subr.bf16.mxu0 0
    %2013 = vmatpush1.bf16.msra.mxu0 %v1615
    %2014 = vmatprep.subr.bf16.mxu0 0
    %2015 = vmatpush1.bf16.msra.mxu0 %v1616
    %2016 = vmatprep.subr.bf16.mxu0 0
    %2017 = vmatpush1.bf16.msra.mxu0 %v1617
    %2018 = vmatprep.subr.bf16.mxu0 0
    %2019 = vmatpush1.bf16.msra.mxu0 %v1618
    %2020 = vmatprep.subr.bf16.mxu0 0
    %2021 = vmatpush1.bf16.msra.mxu0 %v1619
    %2022 = vmatprep.subr.bf16.mxu0 0
    %2023 = vmatpush1.bf16.msra.mxu0 %v1620
    %2024 = vmatprep.subr.bf16.mxu0 0
    %2025 = vmatpush1.bf16.msra.mxu0 %v1621
    %2026 = vmatprep.mubr.bf16.mxu0 %v1000
    %2027 = vmatmul.mubr.bf16.gmra.mrb[0].mxu0 %v999
    %v2028 = vpop.f32.mrb[0].mxu0
    %v2029 = vadd.f32 %v1980, %v2028
    %v2030 = vpop.f32.mrb[0].mxu0
    %v2031 = vpop.f32.mrb[0].mxu0
    %v2032 = vadd.f32 %v1983, %v2031
    %v2033 = vpop.f32.mrb[0].mxu0
    %2034 = vmatprep.mubr.bf16.mxu0 %v1016
    %2035 = vmatmul.mubr.bf16.gmra.mrb[0].mxu0 %v1015
    %v2036 = vpop.f32.mrb[0].mxu0
    %v2037 = vadd.f32 %v1988, %v2036
    %v2038 = vpop.f32.mrb[0].mxu0
    %v2039 = vpop.f32.mrb[0].mxu0
    %v2040 = vadd.f32 %v1991, %v2039
    %v2041 = vpop.f32.mrb[0].mxu0
    %2042 = vdwg.mxu0
    %2043 = vmatprep.subr.bf16.mxu0 0
    %2044 = vmatpush1.bf16.msra.mxu0 %v1622
    %2045 = vmatprep.subr.bf16.mxu0 0
    %2046 = vmatpush1.bf16.msra.mxu0 %v1623
    %2047 = vmatprep.subr.bf16.mxu0 0
    %2048 = vmatpush1.bf16.msra.mxu0 %v1624
    %2049 = vmatprep.subr.bf16.mxu0 0
    %2050 = vmatpush1.bf16.msra.mxu0 %v1625
    %2051 = vmatprep.subr.bf16.mxu0 0
    %2052 = vmatpush1.bf16.msra.mxu0 %v1626
    %2053 = vmatprep.subr.bf16.mxu0 0
    %2054 = vmatpush1.bf16.msra.mxu0 %v1627
    %2055 = vmatprep.subr.bf16.mxu0 0
    %2056 = vmatpush1.bf16.msra.mxu0 %v1628
    %2057 = vmatprep.subr.bf16.mxu0 0
    %2058 = vmatpush1.bf16.msra.mxu0 %v1629
    %2059 = vmatprep.subr.bf16.mxu0 0
    %2060 = vmatpush1.bf16.msra.mxu0 %v1630
    %2061 = vmatprep.subr.bf16.mxu0 0
    %2062 = vmatpush1.bf16.msra.mxu0 %v1631
    %2063 = vmatprep.subr.bf16.mxu0 0
    %2064 = vmatpush1.bf16.msra.mxu0 %v1632
    %2065 = vmatprep.subr.bf16.mxu0 0
    %2066 = vmatpush1.bf16.msra.mxu0 %v1633
    %2067 = vmatprep.subr.bf16.mxu0 0
    %2068 = vmatpush1.bf16.msra.mxu0 %v1634
    %2069 = vmatprep.subr.bf16.mxu0 0
    %2070 = vmatpush1.bf16.msra.mxu0 %v1635
    %2071 = vmatprep.subr.bf16.mxu0 0
    %2072 = vmatpush1.bf16.msra.mxu0 %v1636
    %2073 = vmatprep.subr.bf16.mxu0 0
    %2074 = vmatpush1.bf16.msra.mxu0 %v1637
    %2075 = vmatprep.mubr.bf16.mxu0 %v1002
    %2076 = vmatmul.mubr.bf16.gmra.mrb[0].mxu0 %v1001
    %v2077 = vpop.f32.mrb[0].mxu0
    %v2078 = vadd.f32 %v2029, %v2077
    %v2079 = vpop.f32.mrb[0].mxu0
    %v2080 = vpop.f32.mrb[0].mxu0
    %v2081 = vadd.f32 %v2032, %v2080
    %v2082 = vpop.f32.mrb[0].mxu0
    %2083 = vmatprep.mubr.bf16.mxu0 %v1018
    %2084 = vmatmul.mubr.bf16.gmra.mrb[0].mxu0 %v1017
    %v2085 = vpop.f32.mrb[0].mxu0
    %v2086 = vadd.f32 %v2037, %v2085
    %v2087 = vpop.f32.mrb[0].mxu0
    %v2088 = vpop.f32.mrb[0].mxu0
    %v2089 = vadd.f32 %v2040, %v2088
    %v2090 = vpop.f32.mrb[0].mxu0
    %2091 = vdwg.mxu0
    %2092 = vmatprep.subr.bf16.mxu0 0
    %2093 = vmatpush1.bf16.msra.mxu0 %v1638
    %2094 = vmatprep.subr.bf16.mxu0 0
    %2095 = vmatpush1.bf16.msra.mxu0 %v1639
    %2096 = vmatprep.subr.bf16.mxu0 0
    %2097 = vmatpush1.bf16.msra.mxu0 %v1640
    %2098 = vmatprep.subr.bf16.mxu0 0
    %2099 = vmatpush1.bf16.msra.mxu0 %v1641
    %2100 = vmatprep.subr.bf16.mxu0 0
    %2101 = vmatpush1.bf16.msra.mxu0 %v1642
    %2102 = vmatprep.subr.bf16.mxu0 0
    %2103 = vmatpush1.bf16.msra.mxu0 %v1643
    %2104 = vmatprep.subr.bf16.mxu0 0
    %2105 = vmatpush1.bf16.msra.mxu0 %v1644
    %2106 = vmatprep.subr.bf16.mxu0 0
    %2107 = vmatpush1.bf16.msra.mxu0 %v1645
    %2108 = vmatprep.subr.bf16.mxu0 0
    %2109 = vmatpush1.bf16.msra.mxu0 %v1646
    %2110 = vmatprep.subr.bf16.mxu0 0
    %2111 = vmatpush1.bf16.msra.mxu0 %v1647
    %2112 = vmatprep.subr.bf16.mxu0 0
    %2113 = vmatpush1.bf16.msra.mxu0 %v1648
    %2114 = vmatprep.subr.bf16.mxu0 0
    %2115 = vmatpush1.bf16.msra.mxu0 %v1649
    %2116 = vmatprep.subr.bf16.mxu0 0
    %2117 = vmatpush1.bf16.msra.mxu0 %v1650
    %2118 = vmatprep.subr.bf16.mxu0 0
    %2119 = vmatpush1.bf16.msra.mxu0 %v1651
    %2120 = vmatprep.subr.bf16.mxu0 0
    %2121 = vmatpush1.bf16.msra.mxu0 %v1652
    %2122 = vmatprep.subr.bf16.mxu0 0
    %2123 = vmatpush1.bf16.msra.mxu0 %v1653
    %2124 = vmatprep.mubr.bf16.mxu0 %v1004
    %2125 = vmatmul.mubr.bf16.gmra.mrb[0].mxu0 %v1003
    %v2126 = vpop.f32.mrb[0].mxu0
    %v2127 = vadd.f32 %v2078, %v2126
    %v2128 = vpop.f32.mrb[0].mxu0
    %v2129 = vpop.f32.mrb[0].mxu0
    %v2130 = vadd.f32 %v2081, %v2129
    %v2131 = vpop.f32.mrb[0].mxu0
    %2132 = vmatprep.mubr.bf16.mxu0 %v1020
    %2133 = vmatmul.mubr.bf16.gmra.mrb[0].mxu0 %v1019
    %v2134 = vpop.f32.mrb[0].mxu0
    %v2135 = vadd.f32 %v2086, %v2134
    %v2136 = vpop.f32.mrb[0].mxu0
    %v2137 = vpop.f32.mrb[0].mxu0
    %v2138 = vadd.f32 %v2089, %v2137
    %v2139 = vpop.f32.mrb[0].mxu0
    %2140 = vdwg.mxu0
    %2141 = vmatprep.subr.bf16.mxu0 0
    %2142 = vmatpush1.bf16.msra.mxu0 %v1654
    %2143 = vmatprep.subr.bf16.mxu0 0
    %2144 = vmatpush1.bf16.msra.mxu0 %v1655
    %2145 = vmatprep.subr.bf16.mxu0 0
    %2146 = vmatpush1.bf16.msra.mxu0 %v1656
    %2147 = vmatprep.subr.bf16.mxu0 0
    %2148 = vmatpush1.bf16.msra.mxu0 %v1657
    %2149 = vmatprep.subr.bf16.mxu0 0
    %2150 = vmatpush1.bf16.msra.mxu0 %v1658
    %2151 = vmatprep.subr.bf16.mxu0 0
    %2152 = vmatpush1.bf16.msra.mxu0 %v1659
    %2153 = vmatprep.subr.bf16.mxu0 0
    %2154 = vmatpush1.bf16.msra.mxu0 %v1660
    %2155 = vmatprep.subr.bf16.mxu0 0
    %2156 = vmatpush1.bf16.msra.mxu0 %v1661
    %2157 = vmatprep.subr.bf16.mxu0 0
    %2158 = vmatpush1.bf16.msra.mxu0 %v1662
    %2159 = vmatprep.subr.bf16.mxu0 0
    %2160 = vmatpush1.bf16.msra.mxu0 %v1663
    %2161 = vmatprep.subr.bf16.mxu0 0
    %2162 = vmatpush1.bf16.msra.mxu0 %v1664
    %2163 = vmatprep.subr.bf16.mxu0 0
    %2164 = vmatpush1.bf16.msra.mxu0 %v1665
    %2165 = vmatprep.subr.bf16.mxu0 0
    %2166 = vmatpush1.bf16.msra.mxu0 %v1666
    %2167 = vmatprep.subr.bf16.mxu0 0
    %2168 = vmatpush1.bf16.msra.mxu0 %v1667
    %2169 = vmatprep.subr.bf16.mxu0 0
    %2170 = vmatpush1.bf16.msra.mxu0 %v1668
    %2171 = vmatprep.subr.bf16.mxu0 0
    %2172 = vmatpush1.bf16.msra.mxu0 %v1669
    %2173 = vmatprep.mubr.bf16.mxu0 %v1006
    %2174 = vmatmul.mubr.bf16.gmra.mrb[0].mxu0 %v1005
    %v2175 = vpop.f32.mrb[0].mxu0
    %v2176 = vadd.f32 %v2127, %v2175
    %v2177 = vpop.f32.mrb[0].mxu0
    %v2178 = vpop.f32.mrb[0].mxu0
    %v2179 = vadd.f32 %v2130, %v2178
    %v2180 = vpop.f32.mrb[0].mxu0
    %2181 = vmatprep.mubr.bf16.mxu0 %v1022
    %2182 = vmatmul.mubr.bf16.gmra.mrb[0].mxu0 %v1021
    %v2183 = vpop.f32.mrb[0].mxu0
    %v2184 = vadd.f32 %v2135, %v2183
    %v2185 = vpop.f32.mrb[0].mxu0
    %v2186 = vpop.f32.mrb[0].mxu0
    %v2187 = vadd.f32 %v2138, %v2186
    %v2188 = vpop.f32.mrb[0].mxu0
    %2189 = vdwg.mxu0
    %v2190 = vmax.f32 %v2176, 0.0
    %v2191 = vmax.f32 %v2179, 0.0
    %v2192 = vmax.f32 %v2184, 0.0
    %v2193 = vmax.f32 %v2187, 0.0
    %v2194 = vld [vmem:[#allocation10] sm:$0xff]
    %v2195 = vld [vmem:[#allocation10 + $0x8] sm:$0xff]
    %v2196 = vld [vmem:[#allocation10 + $0x10] sm:$0xff]
    %v2197 = vld [vmem:[#allocation10 + $0x18] sm:$0xff]
    %v2198 = vld [vmem:[#allocation10 + $0x20] sm:$0xff]
    %v2199 = vld [vmem:[#allocation10 + $0x28] sm:$0xff]
    %v2200 = vld [vmem:[#allocation10 + $0x30] sm:$0xff]
    %v2201 = vld [vmem:[#allocation10 + $0x38] sm:$0xff]
    %v2202 = vld [vmem:[#allocation10 + $0x40] sm:$0xff]
    %v2203 = vld [vmem:[#allocation10 + $0x48] sm:$0xff]
    %v2204 = vld [vmem:[#allocation10 + $0x50] sm:$0xff]
    %v2205 = vld [vmem:[#allocation10 + $0x58] sm:$0xff]
    %v2206 = vld [vmem:[#allocation10 + $0x60] sm:$0xff]
    %v2207 = vld [vmem:[#allocation10 + $0x68] sm:$0xff]
    %v2208 = vld [vmem:[#allocation10 + $0x70] sm:$0xff]
    %v2209 = vld [vmem:[#allocation10 + $0x78] sm:$0xff]
    %v2210 = vld [vmem:[#allocation10 + $0x80] sm:$0xff]
    %v2211 = vld [vmem:[#allocation10 + $0x88] sm:$0xff]
    %v2212 = vld [vmem:[#allocation10 + $0x90] sm:$0xff]
    %v2213 = vld [vmem:[#allocation10 + $0x98] sm:$0xff]
    %v2214 = vld [vmem:[#allocation10 + $0xa0] sm:$0xff]
    %v2215 = vld [vmem:[#allocation10 + $0xa8] sm:$0xff]
    %v2216 = vld [vmem:[#allocation10 + $0xb0] sm:$0xff]
    %v2217 = vld [vmem:[#allocation10 + $0xb8] sm:$0xff]
    %v2218 = vld [vmem:[#allocation10 + $0xc0] sm:$0xff]
    %v2219 = vld [vmem:[#allocation10 + $0xc8] sm:$0xff]
    %v2220 = vld [vmem:[#allocation10 + $0xd0] sm:$0xff]
    %v2221 = vld [vmem:[#allocation10 + $0xd8] sm:$0xff]
    %v2222 = vld [vmem:[#allocation10 + $0xe0] sm:$0xff]
    %v2223 = vld [vmem:[#allocation10 + $0xe8] sm:$0xff]
    %v2224 = vld [vmem:[#allocation10 + $0xf0] sm:$0xff]
    %v2225 = vld [vmem:[#allocation10 + $0xf8] sm:$0xff]
    %v2226 = vld [vmem:[#allocation10 + $0x100] sm:$0xff]
    %v2227 = vld [vmem:[#allocation10 + $0x108] sm:$0xff]
    %v2228 = vld [vmem:[#allocation10 + $0x110] sm:$0xff]
    %v2229 = vld [vmem:[#allocation10 + $0x118] sm:$0xff]
    %v2230 = vld [vmem:[#allocation10 + $0x120] sm:$0xff]
    %v2231 = vld [vmem:[#allocation10 + $0x128] sm:$0xff]
    %v2232 = vld [vmem:[#allocation10 + $0x130] sm:$0xff]
    %v2233 = vld [vmem:[#allocation10 + $0x138] sm:$0xff]
    %v2234 = vld [vmem:[#allocation10 + $0x140] sm:$0xff]
    %v2235 = vld [vmem:[#allocation10 + $0x148] sm:$0xff]
    %v2236 = vld [vmem:[#allocation10 + $0x150] sm:$0xff]
    %v2237 = vld [vmem:[#allocation10 + $0x158] sm:$0xff]
    %v2238 = vld [vmem:[#allocation10 + $0x160] sm:$0xff]
    %v2239 = vld [vmem:[#allocation10 + $0x168] sm:$0xff]
    %v2240 = vld [vmem:[#allocation10 + $0x170] sm:$0xff]
    %v2241 = vld [vmem:[#allocation10 + $0x178] sm:$0xff]
    %v2242 = vld [vmem:[#allocation10 + $0x180] sm:$0xff]
    %v2243 = vld [vmem:[#allocation10 + $0x188] sm:$0xff]
    %v2244 = vld [vmem:[#allocation10 + $0x190] sm:$0xff]
    %v2245 = vld [vmem:[#allocation10 + $0x198] sm:$0xff]
    %v2246 = vld [vmem:[#allocation10 + $0x1a0] sm:$0xff]
    %v2247 = vld [vmem:[#allocation10 + $0x1a8] sm:$0xff]
    %v2248 = vld [vmem:[#allocation10 + $0x1b0] sm:$0xff]
    %v2249 = vld [vmem:[#allocation10 + $0x1b8] sm:$0xff]
    %v2250 = vld [vmem:[#allocation10 + $0x1c0] sm:$0xff]
    %v2251 = vld [vmem:[#allocation10 + $0x1c8] sm:$0xff]
    %v2252 = vld [vmem:[#allocation10 + $0x1d0] sm:$0xff]
    %v2253 = vld [vmem:[#allocation10 + $0x1d8] sm:$0xff]
    %v2254 = vld [vmem:[#allocation10 + $0x1e0] sm:$0xff]
    %v2255 = vld [vmem:[#allocation10 + $0x1e8] sm:$0xff]
    %v2256 = vld [vmem:[#allocation10 + $0x1f0] sm:$0xff]
    %v2257 = vld [vmem:[#allocation10 + $0x1f8] sm:$0xff]
    %v2258 = vld [vmem:[#allocation10 + $0x200] sm:$0xff]
    %v2259 = vld [vmem:[#allocation10 + $0x208] sm:$0xff]
    %v2260 = vld [vmem:[#allocation10 + $0x210] sm:$0xff]
    %v2261 = vld [vmem:[#allocation10 + $0x218] sm:$0xff]
    %v2262 = vld [vmem:[#allocation10 + $0x220] sm:$0xff]
    %v2263 = vld [vmem:[#allocation10 + $0x228] sm:$0xff]
    %v2264 = vld [vmem:[#allocation10 + $0x230] sm:$0xff]
    %v2265 = vld [vmem:[#allocation10 + $0x238] sm:$0xff]
    %v2266 = vld [vmem:[#allocation10 + $0x240] sm:$0xff]
    %v2267 = vld [vmem:[#allocation10 + $0x248] sm:$0xff]
    %v2268 = vld [vmem:[#allocation10 + $0x250] sm:$0xff]
    %v2269 = vld [vmem:[#allocation10 + $0x258] sm:$0xff]
    %v2270 = vld [vmem:[#allocation10 + $0x260] sm:$0xff]
    %v2271 = vld [vmem:[#allocation10 + $0x268] sm:$0xff]
    %v2272 = vld [vmem:[#allocation10 + $0x270] sm:$0xff]
    %v2273 = vld [vmem:[#allocation10 + $0x278] sm:$0xff]
    %v2274 = vld [vmem:[#allocation10 + $0x280] sm:$0xff]
    %v2275 = vld [vmem:[#allocation10 + $0x288] sm:$0xff]
    %v2276 = vld [vmem:[#allocation10 + $0x290] sm:$0xff]
    %v2277 = vld [vmem:[#allocation10 + $0x298] sm:$0xff]
    %v2278 = vld [vmem:[#allocation10 + $0x2a0] sm:$0xff]
    %v2279 = vld [vmem:[#allocation10 + $0x2a8] sm:$0xff]
    %v2280 = vld [vmem:[#allocation10 + $0x2b0] sm:$0xff]
    %v2281 = vld [vmem:[#allocation10 + $0x2b8] sm:$0xff]
    %v2282 = vld [vmem:[#allocation10 + $0x2c0] sm:$0xff]
    %v2283 = vld [vmem:[#allocation10 + $0x2c8] sm:$0xff]
    %v2284 = vld [vmem:[#allocation10 + $0x2d0] sm:$0xff]
    %v2285 = vld [vmem:[#allocation10 + $0x2d8] sm:$0xff]
    %v2286 = vld [vmem:[#allocation10 + $0x2e0] sm:$0xff]
    %v2287 = vld [vmem:[#allocation10 + $0x2e8] sm:$0xff]
    %v2288 = vld [vmem:[#allocation10 + $0x2f0] sm:$0xff]
    %v2289 = vld [vmem:[#allocation10 + $0x2f8] sm:$0xff]
    %v2290 = vld [vmem:[#allocation10 + $0x300] sm:$0xff]
    %v2291 = vld [vmem:[#allocation10 + $0x308] sm:$0xff]
    %v2292 = vld [vmem:[#allocation10 + $0x310] sm:$0xff]
    %v2293 = vld [vmem:[#allocation10 + $0x318] sm:$0xff]
    %v2294 = vld [vmem:[#allocation10 + $0x320] sm:$0xff]
    %v2295 = vld [vmem:[#allocation10 + $0x328] sm:$0xff]
    %v2296 = vld [vmem:[#allocation10 + $0x330] sm:$0xff]
    %v2297 = vld [vmem:[#allocation10 + $0x338] sm:$0xff]
    %v2298 = vld [vmem:[#allocation10 + $0x340] sm:$0xff]
    %v2299 = vld [vmem:[#allocation10 + $0x348] sm:$0xff]
    %v2300 = vld [vmem:[#allocation10 + $0x350] sm:$0xff]
    %v2301 = vld [vmem:[#allocation10 + $0x358] sm:$0xff]
    %v2302 = vld [vmem:[#allocation10 + $0x360] sm:$0xff]
    %v2303 = vld [vmem:[#allocation10 + $0x368] sm:$0xff]
    %v2304 = vld [vmem:[#allocation10 + $0x370] sm:$0xff]
    %v2305 = vld [vmem:[#allocation10 + $0x378] sm:$0xff]
    %v2306 = vld [vmem:[#allocation10 + $0x380] sm:$0xff]
    %v2307 = vld [vmem:[#allocation10 + $0x388] sm:$0xff]
    %v2308 = vld [vmem:[#allocation10 + $0x390] sm:$0xff]
    %v2309 = vld [vmem:[#allocation10 + $0x398] sm:$0xff]
    %v2310 = vld [vmem:[#allocation10 + $0x3a0] sm:$0xff]
    %v2311 = vld [vmem:[#allocation10 + $0x3a8] sm:$0xff]
    %v2312 = vld [vmem:[#allocation10 + $0x3b0] sm:$0xff]
    %v2313 = vld [vmem:[#allocation10 + $0x3b8] sm:$0xff]
    %v2314 = vld [vmem:[#allocation10 + $0x3c0] sm:$0xff]
    %v2315 = vld [vmem:[#allocation10 + $0x3c8] sm:$0xff]
    %v2316 = vld [vmem:[#allocation10 + $0x3d0] sm:$0xff]
    %v2317 = vld [vmem:[#allocation10 + $0x3d8] sm:$0xff]
    %v2318 = vld [vmem:[#allocation10 + $0x3e0] sm:$0xff]
    %v2319 = vld [vmem:[#allocation10 + $0x3e8] sm:$0xff]
    %v2320 = vld [vmem:[#allocation10 + $0x3f0] sm:$0xff]
    %v2321 = vld [vmem:[#allocation10 + $0x3f8] sm:$0xff]
    %v2322 = vld [vmem:[#allocation10 + $0x400] sm:$0xff]
    %v2323 = vld [vmem:[#allocation10 + $0x408] sm:$0xff]
    %v2324 = vld [vmem:[#allocation10 + $0x410] sm:$0xff]
    %v2325 = vld [vmem:[#allocation10 + $0x418] sm:$0xff]
    %v2326 = vld [vmem:[#allocation10 + $0x420] sm:$0xff]
    %v2327 = vld [vmem:[#allocation10 + $0x428] sm:$0xff]
    %v2328 = vld [vmem:[#allocation10 + $0x430] sm:$0xff]
    %v2329 = vld [vmem:[#allocation10 + $0x438] sm:$0xff]
    %v2330 = vld [vmem:[#allocation10 + $0x440] sm:$0xff]
    %v2331 = vld [vmem:[#allocation10 + $0x448] sm:$0xff]
    %v2332 = vld [vmem:[#allocation10 + $0x450] sm:$0xff]
    %v2333 = vld [vmem:[#allocation10 + $0x458] sm:$0xff]
    %v2334 = vld [vmem:[#allocation10 + $0x460] sm:$0xff]
    %v2335 = vld [vmem:[#allocation10 + $0x468] sm:$0xff]
    %v2336 = vld [vmem:[#allocation10 + $0x470] sm:$0xff]
    %v2337 = vld [vmem:[#allocation10 + $0x478] sm:$0xff]
    %v2338 = vrot.slane %v2190, 3
    %v2339 = vrot.slane %v2191, 3
    %v2340 = vrot.slane %v2192, 3
    %v2341 = vrot.slane %v2193, 3
    %v2342 = vsel %vm391, %v2340, %v2341
    %v2343 = vsel %vm391, %v2339, %v2340
    %v2344 = vsel %vm391, %v2338, %v2339
    %v2345 = vsel %vm391, %v2341, %v2338
    %v2346 = vmul.f32 %v2345, %v403
    %v2347 = vmul.f32 %v2344, %v408
    %v2348 = vmul.f32 %v2343, %v413
    %v2349 = vmul.f32 %v2342, %v418
    %v2350 = vrot.slane %v2190, 4
    %v2351 = vrot.slane %v2191, 4
    %v2352 = vrot.slane %v2192, 4
    %v2353 = vrot.slane %v2193, 4
    %v2354 = vsel %vm428, %v2352, %v2353
    %v2355 = vsel %vm428, %v2351, %v2352
    %v2356 = vsel %vm428, %v2350, %v2351
    %v2357 = vsel %vm428, %v2353, %v2350
    %v2358 = vmul.f32 %v2357, %v441
    %v2359 = vmul.f32 %v2356, %v446
    %v2360 = vmul.f32 %v2355, %v451
    %v2361 = vmul.f32 %v2354, %v456
    %v2362 = vrot.slane %v2190, 5
    %v2363 = vrot.slane %v2191, 5
    %v2364 = vrot.slane %v2192, 5
    %v2365 = vrot.slane %v2193, 5
    %v2366 = vsel %vm478, %v2364, %v2365
    %v2367 = vsel %vm478, %v2363, %v2364
    %v2368 = vsel %vm478, %v2362, %v2363
    %v2369 = vsel %vm478, %v2365, %v2362
    %v2370 = vmul.f32 %v2369, %v491
    %v2371 = vmul.f32 %v2368, %v496
    %v2372 = vmul.f32 %v2367, %v501
    %v2373 = vmul.f32 %v2366, %v506
    %v2374 = vrot.slane %v2190, 7
    %v2375 = vrot.slane %v2191, 7
    %v2376 = vrot.slane %v2192, 7
    %v2377 = vrot.slane %v2193, 7
    %v2378 = vsel %vm516, %v2376, %v2377
    %v2379 = vsel %vm516, %v2375, %v2376
    %v2380 = vsel %vm516, %v2374, %v2375
    %v2381 = vsel %vm516, %v2377, %v2374
    %v2382 = vmul.f32 %v2381, %v529
    %v2383 = vmul.f32 %v2380, %v534
    %v2384 = vmul.f32 %v2379, %v539
    %v2385 = vmul.f32 %v2378, %v544
    %v2386 = vrot.slane %v2190, 1
    %v2387 = vrot.slane %v2191, 1
    %v2388 = vrot.slane %v2192, 1
    %v2389 = vrot.slane %v2193, 1
    %v2390 = vsel %vm554, %v2388, %v2389
    %v2391 = vsel %vm554, %v2387, %v2388
    %v2392 = vsel %vm554, %v2386, %v2387
    %v2393 = vsel %vm554, %v2389, %v2386
    %v2394 = vmul.f32 %v2392, %v567
    %v2395 = vmul.f32 %v2391, %v572
    %v2396 = vmul.f32 %v2390, %v577
    %v2397 = vmul.f32 %v2393, %v582
    %v2398 = vmul.f32 %v2344, %v628
    %v2399 = vmul.f32 %v2343, %v633
    %v2400 = vmul.f32 %v2342, %v638
    %v2401 = vmul.f32 %v2345, %v643
    %v2402 = vmul.f32 %v2356, %v665
    %v2403 = vmul.f32 %v2355, %v670
    %v2404 = vmul.f32 %v2354, %v675
    %v2405 = vmul.f32 %v2357, %v680
    %v2406 = vmul.f32 %v2368, %v714
    %v2407 = vmul.f32 %v2367, %v719
    %v2408 = vmul.f32 %v2366, %v724
    %v2409 = vmul.f32 %v2369, %v729
    %v2410 = vpack.c.bf16 %v2347, %v2346
    %v2411 = vpack.c.bf16 %v2359, %v2358
    %v2412 = vpack.c.bf16 %v2371, %v2370
    %v2413 = vpack.c.bf16 %v2383, %v2382
    %v2414 = vpack.c.bf16 %v2191, %v2190
    %v2415 = vpack.c.bf16 %v2395, %v2394
    %v2416 = vpack.c.bf16 %v2399, %v2398
    %v2417 = vpack.c.bf16 %v2403, %v2402
    %v2418 = vpack.c.bf16 %v2407, %v2406
    %v2419 = vpack.c.bf16 %v2349, %v2348
    %v2420 = vpack.c.bf16 %v2361, %v2360
    %v2421 = vpack.c.bf16 %v2373, %v2372
    %v2422 = vpack.c.bf16 %v2385, %v2384
    %v2423 = vpack.c.bf16 %v2193, %v2192
    %v2424 = vpack.c.bf16 %v2397, %v2396
    %v2425 = vpack.c.bf16 %v2401, %v2400
    %v2426 = vpack.c.bf16 %v2405, %v2404
    %v2427 = vpack.c.bf16 %v2409, %v2408
    %v2428 = vld [vmem:[#allocation12] sm:$0x3]
    %v2430 = vlaneseq
    %v2431 = vshrl.u32 %v2430, 7
    %v2432 = vsub.s32 0, %v2431
    %v2433 = vrot.slane %v2428, %v2432
    %v2434 = vlaneseq
    %v2435 = vshrl.u32 %v2434, 7
    %v2436 = vsub.s32 1, %v2435
    %v2437 = vrot.slane %v2428, %v2436
    %v2584 = vunpack.c.l.b16 %v2194
    %v2585 = vunpack.c.h.b16 %v2194
    %v2586 = vunpack.c.l.b16 %v2195
    %v2587 = vunpack.c.h.b16 %v2195
    %v2588 = vunpack.c.l.b16 %v2196
    %v2589 = vunpack.c.h.b16 %v2196
    %v2590 = vunpack.c.l.b16 %v2197
    %v2591 = vunpack.c.h.b16 %v2197
    %v2592 = vunpack.c.l.b16 %v2198
    %v2593 = vunpack.c.h.b16 %v2198
    %v2594 = vunpack.c.l.b16 %v2199
    %v2595 = vunpack.c.h.b16 %v2199
    %v2596 = vunpack.c.l.b16 %v2200
    %v2597 = vunpack.c.h.b16 %v2200
    %v2598 = vunpack.c.l.b16 %v2201
    %v2599 = vunpack.c.h.b16 %v2201
    %v2600 = vunpack.c.l.b16 %v2202
    %v2601 = vunpack.c.h.b16 %v2202
    %v2602 = vunpack.c.l.b16 %v2203
    %v2603 = vunpack.c.h.b16 %v2203
    %v2604 = vunpack.c.l.b16 %v2204
    %v2605 = vunpack.c.h.b16 %v2204
    %v2606 = vunpack.c.l.b16 %v2205
    %v2607 = vunpack.c.h.b16 %v2205
    %v2608 = vunpack.c.l.b16 %v2206
    %v2609 = vunpack.c.h.b16 %v2206
    %v2610 = vunpack.c.l.b16 %v2207
    %v2611 = vunpack.c.h.b16 %v2207
    %v2612 = vunpack.c.l.b16 %v2208
    %v2613 = vunpack.c.h.b16 %v2208
    %v2614 = vunpack.c.l.b16 %v2209
    %v2615 = vunpack.c.h.b16 %v2209
    %v2616 = vunpack.c.l.b16 %v2210
    %v2617 = vunpack.c.h.b16 %v2210
    %v2618 = vunpack.c.l.b16 %v2211
    %v2619 = vunpack.c.h.b16 %v2211
    %v2620 = vunpack.c.l.b16 %v2212
    %v2621 = vunpack.c.h.b16 %v2212
    %v2622 = vunpack.c.l.b16 %v2213
    %v2623 = vunpack.c.h.b16 %v2213
    %v2624 = vunpack.c.l.b16 %v2214
    %v2625 = vunpack.c.h.b16 %v2214
    %v2626 = vunpack.c.l.b16 %v2215
    %v2627 = vunpack.c.h.b16 %v2215
    %v2628 = vunpack.c.l.b16 %v2216
    %v2629 = vunpack.c.h.b16 %v2216
    %v2630 = vunpack.c.l.b16 %v2217
    %v2631 = vunpack.c.h.b16 %v2217
    %v2632 = vunpack.c.l.b16 %v2218
    %v2633 = vunpack.c.h.b16 %v2218
    %v2634 = vunpack.c.l.b16 %v2219
    %v2635 = vunpack.c.h.b16 %v2219
    %v2636 = vunpack.c.l.b16 %v2220
    %v2637 = vunpack.c.h.b16 %v2220
    %v2638 = vunpack.c.l.b16 %v2221
    %v2639 = vunpack.c.h.b16 %v2221
    %v2640 = vunpack.c.l.b16 %v2222
    %v2641 = vunpack.c.h.b16 %v2222
    %v2642 = vunpack.c.l.b16 %v2223
    %v2643 = vunpack.c.h.b16 %v2223
    %v2644 = vunpack.c.l.b16 %v2224
    %v2645 = vunpack.c.h.b16 %v2224
    %v2646 = vunpack.c.l.b16 %v2225
    %v2647 = vunpack.c.h.b16 %v2225
    %v2648 = vunpack.c.l.b16 %v2226
    %v2649 = vunpack.c.h.b16 %v2226
    %v2650 = vunpack.c.l.b16 %v2227
    %v2651 = vunpack.c.h.b16 %v2227
    %v2652 = vunpack.c.l.b16 %v2228
    %v2653 = vunpack.c.h.b16 %v2228
    %v2654 = vunpack.c.l.b16 %v2229
    %v2655 = vunpack.c.h.b16 %v2229
    %v2656 = vunpack.c.l.b16 %v2230
    %v2657 = vunpack.c.h.b16 %v2230
    %v2658 = vunpack.c.l.b16 %v2231
    %v2659 = vunpack.c.h.b16 %v2231
    %v2660 = vunpack.c.l.b16 %v2232
    %v2661 = vunpack.c.h.b16 %v2232
    %v2662 = vunpack.c.l.b16 %v2233
    %v2663 = vunpack.c.h.b16 %v2233
    %v2664 = vunpack.c.l.b16 %v2234
    %v2665 = vunpack.c.h.b16 %v2234
    %v2666 = vunpack.c.l.b16 %v2235
    %v2667 = vunpack.c.h.b16 %v2235
    %v2668 = vunpack.c.l.b16 %v2236
    %v2669 = vunpack.c.h.b16 %v2236
    %v2670 = vunpack.c.l.b16 %v2237
    %v2671 = vunpack.c.h.b16 %v2237
    %v2672 = vunpack.c.l.b16 %v2238
    %v2673 = vunpack.c.h.b16 %v2238
    %v2674 = vunpack.c.l.b16 %v2239
    %v2675 = vunpack.c.h.b16 %v2239
    %v2676 = vunpack.c.l.b16 %v2240
    %v2677 = vunpack.c.h.b16 %v2240
    %v2678 = vunpack.c.l.b16 %v2241
    %v2679 = vunpack.c.h.b16 %v2241
    %v2680 = vunpack.c.l.b16 %v2242
    %v2681 = vunpack.c.h.b16 %v2242
    %v2682 = vunpack.c.l.b16 %v2243
    %v2683 = vunpack.c.h.b16 %v2243
    %v2684 = vunpack.c.l.b16 %v2244
    %v2685 = vunpack.c.h.b16 %v2244
    %v2686 = vunpack.c.l.b16 %v2245
    %v2687 = vunpack.c.h.b16 %v2245
    %v2688 = vunpack.c.l.b16 %v2246
    %v2689 = vunpack.c.h.b16 %v2246
    %v2690 = vunpack.c.l.b16 %v2247
    %v2691 = vunpack.c.h.b16 %v2247
    %v2692 = vunpack.c.l.b16 %v2248
    %v2693 = vunpack.c.h.b16 %v2248
    %v2694 = vunpack.c.l.b16 %v2249
    %v2695 = vunpack.c.h.b16 %v2249
    %v2696 = vunpack.c.l.b16 %v2250
    %v2697 = vunpack.c.h.b16 %v2250
    %v2698 = vunpack.c.l.b16 %v2251
    %v2699 = vunpack.c.h.b16 %v2251
    %v2700 = vunpack.c.l.b16 %v2252
    %v2701 = vunpack.c.h.b16 %v2252
    %v2702 = vunpack.c.l.b16 %v2253
    %v2703 = vunpack.c.h.b16 %v2253
    %v2704 = vunpack.c.l.b16 %v2254
    %v2705 = vunpack.c.h.b16 %v2254
    %v2706 = vunpack.c.l.b16 %v2255
    %v2707 = vunpack.c.h.b16 %v2255
    %v2708 = vunpack.c.l.b16 %v2256
    %v2709 = vunpack.c.h.b16 %v2256
    %v2710 = vunpack.c.l.b16 %v2257
    %v2711 = vunpack.c.h.b16 %v2257
    %v2712 = vunpack.c.l.b16 %v2258
    %v2713 = vunpack.c.h.b16 %v2258
    %v2714 = vunpack.c.l.b16 %v2259
    %v2715 = vunpack.c.h.b16 %v2259
    %v2716 = vunpack.c.l.b16 %v2260
    %v2717 = vunpack.c.h.b16 %v2260
    %v2718 = vunpack.c.l.b16 %v2261
    %v2719 = vunpack.c.h.b16 %v2261
    %v2720 = vunpack.c.l.b16 %v2262
    %v2721 = vunpack.c.h.b16 %v2262
    %v2722 = vunpack.c.l.b16 %v2263
    %v2723 = vunpack.c.h.b16 %v2263
    %v2724 = vunpack.c.l.b16 %v2264
    %v2725 = vunpack.c.h.b16 %v2264
    %v2726 = vunpack.c.l.b16 %v2265
    %v2727 = vunpack.c.h.b16 %v2265
    %v2728 = vunpack.c.l.b16 %v2266
    %v2729 = vunpack.c.h.b16 %v2266
    %v2730 = vunpack.c.l.b16 %v2267
    %v2731 = vunpack.c.h.b16 %v2267
    %v2732 = vunpack.c.l.b16 %v2268
    %v2733 = vunpack.c.h.b16 %v2268
    %v2734 = vunpack.c.l.b16 %v2269
    %v2735 = vunpack.c.h.b16 %v2269
    %v2736 = vunpack.c.l.b16 %v2270
    %v2737 = vunpack.c.h.b16 %v2270
    %v2738 = vunpack.c.l.b16 %v2271
    %v2739 = vunpack.c.h.b16 %v2271
    %v2740 = vunpack.c.l.b16 %v2272
    %v2741 = vunpack.c.h.b16 %v2272
    %v2742 = vunpack.c.l.b16 %v2273
    %v2743 = vunpack.c.h.b16 %v2273
    %v2744 = vunpack.c.l.b16 %v2274
    %v2745 = vunpack.c.h.b16 %v2274
    %v2746 = vunpack.c.l.b16 %v2275
    %v2747 = vunpack.c.h.b16 %v2275
    %v2748 = vunpack.c.l.b16 %v2276
    %v2749 = vunpack.c.h.b16 %v2276
    %v2750 = vunpack.c.l.b16 %v2277
    %v2751 = vunpack.c.h.b16 %v2277
    %v2752 = vunpack.c.l.b16 %v2278
    %v2753 = vunpack.c.h.b16 %v2278
    %v2754 = vunpack.c.l.b16 %v2279
    %v2755 = vunpack.c.h.b16 %v2279
    %v2756 = vunpack.c.l.b16 %v2280
    %v2757 = vunpack.c.h.b16 %v2280
    %v2758 = vunpack.c.l.b16 %v2281
    %v2759 = vunpack.c.h.b16 %v2281
    %v2760 = vunpack.c.l.b16 %v2282
    %v2761 = vunpack.c.h.b16 %v2282
    %v2762 = vunpack.c.l.b16 %v2283
    %v2763 = vunpack.c.h.b16 %v2283
    %v2764 = vunpack.c.l.b16 %v2284
    %v2765 = vunpack.c.h.b16 %v2284
    %v2766 = vunpack.c.l.b16 %v2285
    %v2767 = vunpack.c.h.b16 %v2285
    %v2768 = vunpack.c.l.b16 %v2286
    %v2769 = vunpack.c.h.b16 %v2286
    %v2770 = vunpack.c.l.b16 %v2287
    %v2771 = vunpack.c.h.b16 %v2287
    %v2772 = vunpack.c.l.b16 %v2288
    %v2773 = vunpack.c.h.b16 %v2288
    %v2774 = vunpack.c.l.b16 %v2289
    %v2775 = vunpack.c.h.b16 %v2289
    %v2776 = vunpack.c.l.b16 %v2290
    %v2777 = vunpack.c.h.b16 %v2290
    %v2778 = vunpack.c.l.b16 %v2291
    %v2779 = vunpack.c.h.b16 %v2291
    %v2780 = vunpack.c.l.b16 %v2292
    %v2781 = vunpack.c.h.b16 %v2292
    %v2782 = vunpack.c.l.b16 %v2293
    %v2783 = vunpack.c.h.b16 %v2293
    %v2784 = vunpack.c.l.b16 %v2294
    %v2785 = vunpack.c.h.b16 %v2294
    %v2786 = vunpack.c.l.b16 %v2295
    %v2787 = vunpack.c.h.b16 %v2295
    %v2788 = vunpack.c.l.b16 %v2296
    %v2789 = vunpack.c.h.b16 %v2296
    %v2790 = vunpack.c.l.b16 %v2297
    %v2791 = vunpack.c.h.b16 %v2297
    %v2792 = vunpack.c.l.b16 %v2298
    %v2793 = vunpack.c.h.b16 %v2298
    %v2794 = vunpack.c.l.b16 %v2299
    %v2795 = vunpack.c.h.b16 %v2299
    %v2796 = vunpack.c.l.b16 %v2300
    %v2797 = vunpack.c.h.b16 %v2300
    %v2798 = vunpack.c.l.b16 %v2301
    %v2799 = vunpack.c.h.b16 %v2301
    %v2800 = vunpack.c.l.b16 %v2302
    %v2801 = vunpack.c.h.b16 %v2302
    %v2802 = vunpack.c.l.b16 %v2303
    %v2803 = vunpack.c.h.b16 %v2303
    %v2804 = vunpack.c.l.b16 %v2304
    %v2805 = vunpack.c.h.b16 %v2304
    %v2806 = vunpack.c.l.b16 %v2305
    %v2807 = vunpack.c.h.b16 %v2305
    %v2808 = vunpack.c.l.b16 %v2306
    %v2809 = vunpack.c.h.b16 %v2306
    %v2810 = vunpack.c.l.b16 %v2307
    %v2811 = vunpack.c.h.b16 %v2307
    %v2812 = vunpack.c.l.b16 %v2308
    %v2813 = vunpack.c.h.b16 %v2308
    %v2814 = vunpack.c.l.b16 %v2309
    %v2815 = vunpack.c.h.b16 %v2309
    %v2816 = vunpack.c.l.b16 %v2310
    %v2817 = vunpack.c.h.b16 %v2310
    %v2818 = vunpack.c.l.b16 %v2311
    %v2819 = vunpack.c.h.b16 %v2311
    %v2820 = vunpack.c.l.b16 %v2312
    %v2821 = vunpack.c.h.b16 %v2312
    %v2822 = vunpack.c.l.b16 %v2313
    %v2823 = vunpack.c.h.b16 %v2313
    %v2824 = vunpack.c.l.b16 %v2314
    %v2825 = vunpack.c.h.b16 %v2314
    %v2826 = vunpack.c.l.b16 %v2315
    %v2827 = vunpack.c.h.b16 %v2315
    %v2828 = vunpack.c.l.b16 %v2316
    %v2829 = vunpack.c.h.b16 %v2316
    %v2830 = vunpack.c.l.b16 %v2317
    %v2831 = vunpack.c.h.b16 %v2317
    %v2832 = vunpack.c.l.b16 %v2318
    %v2833 = vunpack.c.h.b16 %v2318
    %v2834 = vunpack.c.l.b16 %v2319
    %v2835 = vunpack.c.h.b16 %v2319
    %v2836 = vunpack.c.l.b16 %v2320
    %v2837 = vunpack.c.h.b16 %v2320
    %v2838 = vunpack.c.l.b16 %v2321
    %v2839 = vunpack.c.h.b16 %v2321
    %v2840 = vunpack.c.l.b16 %v2322
    %v2841 = vunpack.c.h.b16 %v2322
    %v2842 = vunpack.c.l.b16 %v2323
    %v2843 = vunpack.c.h.b16 %v2323
    %v2844 = vunpack.c.l.b16 %v2324
    %v2845 = vunpack.c.h.b16 %v2324
    %v2846 = vunpack.c.l.b16 %v2325
    %v2847 = vunpack.c.h.b16 %v2325
    %v2848 = vunpack.c.l.b16 %v2326
    %v2849 = vunpack.c.h.b16 %v2326
    %v2850 = vunpack.c.l.b16 %v2327
    %v2851 = vunpack.c.h.b16 %v2327
    %v2852 = vunpack.c.l.b16 %v2328
    %v2853 = vunpack.c.h.b16 %v2328
    %v2854 = vunpack.c.l.b16 %v2329
    %v2855 = vunpack.c.h.b16 %v2329
    %v2856 = vunpack.c.l.b16 %v2330
    %v2857 = vunpack.c.h.b16 %v2330
    %v2858 = vunpack.c.l.b16 %v2331
    %v2859 = vunpack.c.h.b16 %v2331
    %v2860 = vunpack.c.l.b16 %v2332
    %v2861 = vunpack.c.h.b16 %v2332
    %v2862 = vunpack.c.l.b16 %v2333
    %v2863 = vunpack.c.h.b16 %v2333
    %v2864 = vunpack.c.l.b16 %v2334
    %v2865 = vunpack.c.h.b16 %v2334
    %v2866 = vunpack.c.l.b16 %v2335
    %v2867 = vunpack.c.h.b16 %v2335
    %v2868 = vunpack.c.l.b16 %v2336
    %v2869 = vunpack.c.h.b16 %v2336
    %v2870 = vunpack.c.l.b16 %v2337
    %v2871 = vunpack.c.h.b16 %v2337
    %v2872 = vpack.c.b16 %v2586, %v2584
    %v2873 = vpack.c.b16 %v2587, %v2585
    %v2874 = vpack.c.b16 %v2590, %v2588
    %v2875 = vpack.c.b16 %v2591, %v2589
    %v2876 = vpack.c.b16 %v2594, %v2592
    %v2877 = vpack.c.b16 %v2595, %v2593
    %v2878 = vpack.c.b16 %v2598, %v2596
    %v2879 = vpack.c.b16 %v2599, %v2597
    %v2880 = vpack.c.b16 %v2602, %v2600
    %v2881 = vpack.c.b16 %v2603, %v2601
    %v2882 = vpack.c.b16 %v2606, %v2604
    %v2883 = vpack.c.b16 %v2607, %v2605
    %v2884 = vpack.c.b16 %v2610, %v2608
    %v2885 = vpack.c.b16 %v2611, %v2609
    %v2886 = vpack.c.b16 %v2614, %v2612
    %v2887 = vpack.c.b16 %v2615, %v2613
    %v2888 = vpack.c.b16 %v2618, %v2616
    %v2889 = vpack.c.b16 %v2619, %v2617
    %v2890 = vpack.c.b16 %v2622, %v2620
    %v2891 = vpack.c.b16 %v2623, %v2621
    %v2892 = vpack.c.b16 %v2626, %v2624
    %v2893 = vpack.c.b16 %v2627, %v2625
    %v2894 = vpack.c.b16 %v2630, %v2628
    %v2895 = vpack.c.b16 %v2631, %v2629
    %v2896 = vpack.c.b16 %v2634, %v2632
    %v2897 = vpack.c.b16 %v2635, %v2633
    %v2898 = vpack.c.b16 %v2638, %v2636
    %v2899 = vpack.c.b16 %v2639, %v2637
    %v2900 = vpack.c.b16 %v2642, %v2640
    %v2901 = vpack.c.b16 %v2643, %v2641
    %v2902 = vpack.c.b16 %v2646, %v2644
    %v2903 = vpack.c.b16 %v2647, %v2645
    %v2904 = vpack.c.b16 %v2650, %v2648
    %v2905 = vpack.c.b16 %v2651, %v2649
    %v2906 = vpack.c.b16 %v2654, %v2652
    %v2907 = vpack.c.b16 %v2655, %v2653
    %v2908 = vpack.c.b16 %v2658, %v2656
    %v2909 = vpack.c.b16 %v2659, %v2657
    %v2910 = vpack.c.b16 %v2662, %v2660
    %v2911 = vpack.c.b16 %v2663, %v2661
    %v2912 = vpack.c.b16 %v2666, %v2664
    %v2913 = vpack.c.b16 %v2667, %v2665
    %v2914 = vpack.c.b16 %v2670, %v2668
    %v2915 = vpack.c.b16 %v2671, %v2669
    %v2916 = vpack.c.b16 %v2674, %v2672
    %v2917 = vpack.c.b16 %v2675, %v2673
    %v2918 = vpack.c.b16 %v2678, %v2676
    %v2919 = vpack.c.b16 %v2679, %v2677
    %v2920 = vpack.c.b16 %v2682, %v2680
    %v2921 = vpack.c.b16 %v2683, %v2681
    %v2922 = vpack.c.b16 %v2686, %v2684
    %v2923 = vpack.c.b16 %v2687, %v2685
    %v2924 = vpack.c.b16 %v2690, %v2688
    %v2925 = vpack.c.b16 %v2691, %v2689
    %v2926 = vpack.c.b16 %v2694, %v2692
    %v2927 = vpack.c.b16 %v2695, %v2693
    %v2928 = vpack.c.b16 %v2698, %v2696
    %v2929 = vpack.c.b16 %v2699, %v2697
    %v2930 = vpack.c.b16 %v2702, %v2700
    %v2931 = vpack.c.b16 %v2703, %v2701
    %v2932 = vpack.c.b16 %v2706, %v2704
    %v2933 = vpack.c.b16 %v2707, %v2705
    %v2934 = vpack.c.b16 %v2710, %v2708
    %v2935 = vpack.c.b16 %v2711, %v2709
    %v2936 = vpack.c.b16 %v2714, %v2712
    %v2937 = vpack.c.b16 %v2715, %v2713
    %v2938 = vpack.c.b16 %v2718, %v2716
    %v2939 = vpack.c.b16 %v2719, %v2717
    %v2940 = vpack.c.b16 %v2722, %v2720
    %v2941 = vpack.c.b16 %v2723, %v2721
    %v2942 = vpack.c.b16 %v2726, %v2724
    %v2943 = vpack.c.b16 %v2727, %v2725
    %v2944 = vpack.c.b16 %v2730, %v2728
    %v2945 = vpack.c.b16 %v2731, %v2729
    %v2946 = vpack.c.b16 %v2734, %v2732
    %v2947 = vpack.c.b16 %v2735, %v2733
    %v2948 = vpack.c.b16 %v2738, %v2736
    %v2949 = vpack.c.b16 %v2739, %v2737
    %v2950 = vpack.c.b16 %v2742, %v2740
    %v2951 = vpack.c.b16 %v2743, %v2741
    %v2952 = vpack.c.b16 %v2746, %v2744
    %v2953 = vpack.c.b16 %v2747, %v2745
    %v2954 = vpack.c.b16 %v2750, %v2748
    %v2955 = vpack.c.b16 %v2751, %v2749
    %v2956 = vpack.c.b16 %v2754, %v2752
    %v2957 = vpack.c.b16 %v2755, %v2753
    %v2958 = vpack.c.b16 %v2758, %v2756
    %v2959 = vpack.c.b16 %v2759, %v2757
    %v2960 = vpack.c.b16 %v2762, %v2760
    %v2961 = vpack.c.b16 %v2763, %v2761
    %v2962 = vpack.c.b16 %v2766, %v2764
    %v2963 = vpack.c.b16 %v2767, %v2765
    %v2964 = vpack.c.b16 %v2770, %v2768
    %v2965 = vpack.c.b16 %v2771, %v2769
    %v2966 = vpack.c.b16 %v2774, %v2772
    %v2967 = vpack.c.b16 %v2775, %v2773
    %v2968 = vpack.c.b16 %v2778, %v2776
    %v2969 = vpack.c.b16 %v2779, %v2777
    %v2970 = vpack.c.b16 %v2782, %v2780
    %v2971 = vpack.c.b16 %v2783, %v2781
    %v2972 = vpack.c.b16 %v2786, %v2784
    %v2973 = vpack.c.b16 %v2787, %v2785
    %v2974 = vpack.c.b16 %v2790, %v2788
    %v2975 = vpack.c.b16 %v2791, %v2789
    %v2976 = vpack.c.b16 %v2794, %v2792
    %v2977 = vpack.c.b16 %v2795, %v2793
    %v2978 = vpack.c.b16 %v2798, %v2796
    %v2979 = vpack.c.b16 %v2799, %v2797
    %v2980 = vpack.c.b16 %v2802, %v2800
    %v2981 = vpack.c.b16 %v2803, %v2801
    %v2982 = vpack.c.b16 %v2806, %v2804
    %v2983 = vpack.c.b16 %v2807, %v2805
    %v2984 = vpack.c.b16 %v2810, %v2808
    %v2985 = vpack.c.b16 %v2811, %v2809
    %v2986 = vpack.c.b16 %v2814, %v2812
    %v2987 = vpack.c.b16 %v2815, %v2813
    %v2988 = vpack.c.b16 %v2818, %v2816
    %v2989 = vpack.c.b16 %v2819, %v2817
    %v2990 = vpack.c.b16 %v2822, %v2820
    %v2991 = vpack.c.b16 %v2823, %v2821
    %v2992 = vpack.c.b16 %v2826, %v2824
    %v2993 = vpack.c.b16 %v2827, %v2825
    %v2994 = vpack.c.b16 %v2830, %v2828
    %v2995 = vpack.c.b16 %v2831, %v2829
    %v2996 = vpack.c.b16 %v2834, %v2832
    %v2997 = vpack.c.b16 %v2835, %v2833
    %v2998 = vpack.c.b16 %v2838, %v2836
    %v2999 = vpack.c.b16 %v2839, %v2837
    %v3000 = vpack.c.b16 %v2842, %v2840
    %v3001 = vpack.c.b16 %v2843, %v2841
    %v3002 = vpack.c.b16 %v2846, %v2844
    %v3003 = vpack.c.b16 %v2847, %v2845
    %v3004 = vpack.c.b16 %v2850, %v2848
    %v3005 = vpack.c.b16 %v2851, %v2849
    %v3006 = vpack.c.b16 %v2854, %v2852
    %v3007 = vpack.c.b16 %v2855, %v2853
    %v3008 = vpack.c.b16 %v2858, %v2856
    %v3009 = vpack.c.b16 %v2859, %v2857
    %v3010 = vpack.c.b16 %v2862, %v2860
    %v3011 = vpack.c.b16 %v2863, %v2861
    %v3012 = vpack.c.b16 %v2866, %v2864
    %v3013 = vpack.c.b16 %v2867, %v2865
    %v3014 = vpack.c.b16 %v2870, %v2868
    %v3015 = vpack.c.b16 %v2871, %v2869
    %3160 = vmatprep.subr.bf16.mxu0 %v2873
    %3161 = vmatpush1.bf16.msra.mxu0 %v2872
    %3162 = vmatprep.subr.bf16.mxu0 %v2875
    %3163 = vmatpush1.bf16.msra.mxu0 %v2874
    %3164 = vmatprep.subr.bf16.mxu0 %v2877
    %3165 = vmatpush1.bf16.msra.mxu0 %v2876
    %3166 = vmatprep.subr.bf16.mxu0 %v2879
    %3167 = vmatpush1.bf16.msra.mxu0 %v2878
    %3168 = vmatprep.subr.bf16.mxu0 %v2881
    %3169 = vmatpush1.bf16.msra.mxu0 %v2880
    %3170 = vmatprep.subr.bf16.mxu0 %v2883
    %3171 = vmatpush1.bf16.msra.mxu0 %v2882
    %3172 = vmatprep.subr.bf16.mxu0 %v2885
    %3173 = vmatpush1.bf16.msra.mxu0 %v2884
    %3174 = vmatprep.subr.bf16.mxu0 %v2887
    %3175 = vmatpush1.bf16.msra.mxu0 %v2886
    %3176 = vmatprep.subr.bf16.mxu0 %v2889
    %3177 = vmatpush1.bf16.msra.mxu0 %v2888
    %3178 = vmatprep.subr.bf16.mxu0 %v2891
    %3179 = vmatpush1.bf16.msra.mxu0 %v2890
    %3180 = vmatprep.subr.bf16.mxu0 %v2893
    %3181 = vmatpush1.bf16.msra.mxu0 %v2892
    %3182 = vmatprep.subr.bf16.mxu0 %v2895
    %3183 = vmatpush1.bf16.msra.mxu0 %v2894
    %3184 = vmatprep.subr.bf16.mxu0 %v2897
    %3185 = vmatpush1.bf16.msra.mxu0 %v2896
    %3186 = vmatprep.subr.bf16.mxu0 %v2899
    %3187 = vmatpush1.bf16.msra.mxu0 %v2898
    %3188 = vmatprep.subr.bf16.mxu0 %v2901
    %3189 = vmatpush1.bf16.msra.mxu0 %v2900
    %3190 = vmatprep.subr.bf16.mxu0 %v2903
    %3191 = vmatpush1.bf16.msra.mxu0 %v2902
    %3192 = vmatprep.mubr.bf16.mxu0 %v2411
    %3193 = vmatmul.mubr.bf16.gmra.mrb[0].mxu0 %v2410
    %v3194 = vpop.f32.mrb[0].mxu0
    %v3195 = vadd.f32 %v2433, %v3194
    %v3196 = vpop.f32.mrb[0].mxu0
    %v3197 = vadd.f32 %v2437, %v3196
    %v3198 = vpop.f32.mrb[0].mxu0
    %v3199 = vadd.f32 %v2433, %v3198
    %v3200 = vpop.f32.mrb[0].mxu0
    %v3201 = vadd.f32 %v2437, %v3200
    %3202 = vmatprep.mubr.bf16.mxu0 %v2420
    %3203 = vmatmul.mubr.bf16.gmra.mrb[0].mxu0 %v2419
    %v3204 = vpop.f32.mrb[0].mxu0
    %v3205 = vadd.f32 %v2433, %v3204
    %v3206 = vpop.f32.mrb[0].mxu0
    %v3207 = vadd.f32 %v2437, %v3206
    %v3208 = vpop.f32.mrb[0].mxu0
    %v3209 = vadd.f32 %v2433, %v3208
    %v3210 = vpop.f32.mrb[0].mxu0
    %v3211 = vadd.f32 %v2437, %v3210
    %3212 = vdwg.mxu0
    %3213 = vmatprep.subr.bf16.mxu0 %v2905
    %3214 = vmatpush1.bf16.msra.mxu0 %v2904
    %3215 = vmatprep.subr.bf16.mxu0 %v2907
    %3216 = vmatpush1.bf16.msra.mxu0 %v2906
    %3217 = vmatprep.subr.bf16.mxu0 %v2909
    %3218 = vmatpush1.bf16.msra.mxu0 %v2908
    %3219 = vmatprep.subr.bf16.mxu0 %v2911
    %3220 = vmatpush1.bf16.msra.mxu0 %v2910
    %3221 = vmatprep.subr.bf16.mxu0 %v2913
    %3222 = vmatpush1.bf16.msra.mxu0 %v2912
    %3223 = vmatprep.subr.bf16.mxu0 %v2915
    %3224 = vmatpush1.bf16.msra.mxu0 %v2914
    %3225 = vmatprep.subr.bf16.mxu0 %v2917
    %3226 = vmatpush1.bf16.msra.mxu0 %v2916
    %3227 = vmatprep.subr.bf16.mxu0 %v2919
    %3228 = vmatpush1.bf16.msra.mxu0 %v2918
    %3229 = vmatprep.subr.bf16.mxu0 %v2921
    %3230 = vmatpush1.bf16.msra.mxu0 %v2920
    %3231 = vmatprep.subr.bf16.mxu0 %v2923
    %3232 = vmatpush1.bf16.msra.mxu0 %v2922
    %3233 = vmatprep.subr.bf16.mxu0 %v2925
    %3234 = vmatpush1.bf16.msra.mxu0 %v2924
    %3235 = vmatprep.subr.bf16.mxu0 %v2927
    %3236 = vmatpush1.bf16.msra.mxu0 %v2926
    %3237 = vmatprep.subr.bf16.mxu0 %v2929
    %3238 = vmatpush1.bf16.msra.mxu0 %v2928
    %3239 = vmatprep.subr.bf16.mxu0 %v2931
    %3240 = vmatpush1.bf16.msra.mxu0 %v2930
    %3241 = vmatprep.subr.bf16.mxu0 %v2933
    %3242 = vmatpush1.bf16.msra.mxu0 %v2932
    %3243 = vmatprep.subr.bf16.mxu0 %v2935
    %3244 = vmatpush1.bf16.msra.mxu0 %v2934
    %3245 = vmatprep.mubr.bf16.mxu0 %v2413
    %3246 = vmatmul.mubr.bf16.gmra.mrb[0].mxu0 %v2412
    %v3247 = vpop.f32.mrb[0].mxu0
    %v3248 = vadd.f32 %v3195, %v3247
    %v3249 = vpop.f32.mrb[0].mxu0
    %v3250 = vadd.f32 %v3197, %v3249
    %v3251 = vpop.f32.mrb[0].mxu0
    %v3252 = vadd.f32 %v3199, %v3251
    %v3253 = vpop.f32.mrb[0].mxu0
    %v3254 = vadd.f32 %v3201, %v3253
    %3255 = vmatprep.mubr.bf16.mxu0 %v2422
    %3256 = vmatmul.mubr.bf16.gmra.mrb[0].mxu0 %v2421
    %v3257 = vpop.f32.mrb[0].mxu0
    %v3258 = vadd.f32 %v3205, %v3257
    %v3259 = vpop.f32.mrb[0].mxu0
    %v3260 = vadd.f32 %v3207, %v3259
    %v3261 = vpop.f32.mrb[0].mxu0
    %v3262 = vadd.f32 %v3209, %v3261
    %v3263 = vpop.f32.mrb[0].mxu0
    %v3264 = vadd.f32 %v3211, %v3263
    %3265 = vdwg.mxu0
    %3266 = vmatprep.subr.bf16.mxu0 %v2937
    %3267 = vmatpush1.bf16.msra.mxu0 %v2936
    %3268 = vmatprep.subr.bf16.mxu0 %v2939
    %3269 = vmatpush1.bf16.msra.mxu0 %v2938
    %3270 = vmatprep.subr.bf16.mxu0 %v2941
    %3271 = vmatpush1.bf16.msra.mxu0 %v2940
    %3272 = vmatprep.subr.bf16.mxu0 %v2943
    %3273 = vmatpush1.bf16.msra.mxu0 %v2942
    %3274 = vmatprep.subr.bf16.mxu0 %v2945
    %3275 = vmatpush1.bf16.msra.mxu0 %v2944
    %3276 = vmatprep.subr.bf16.mxu0 %v2947
    %3277 = vmatpush1.bf16.msra.mxu0 %v2946
    %3278 = vmatprep.subr.bf16.mxu0 %v2949
    %3279 = vmatpush1.bf16.msra.mxu0 %v2948
    %3280 = vmatprep.subr.bf16.mxu0 %v2951
    %3281 = vmatpush1.bf16.msra.mxu0 %v2950
    %3282 = vmatprep.subr.bf16.mxu0 %v2953
    %3283 = vmatpush1.bf16.msra.mxu0 %v2952
    %3284 = vmatprep.subr.bf16.mxu0 %v2955
    %3285 = vmatpush1.bf16.msra.mxu0 %v2954
    %3286 = vmatprep.subr.bf16.mxu0 %v2957
    %3287 = vmatpush1.bf16.msra.mxu0 %v2956
    %3288 = vmatprep.subr.bf16.mxu0 %v2959
    %3289 = vmatpush1.bf16.msra.mxu0 %v2958
    %3290 = vmatprep.subr.bf16.mxu0 %v2961
    %3291 = vmatpush1.bf16.msra.mxu0 %v2960
    %3292 = vmatprep.subr.bf16.mxu0 %v2963
    %3293 = vmatpush1.bf16.msra.mxu0 %v2962
    %3294 = vmatprep.subr.bf16.mxu0 %v2965
    %3295 = vmatpush1.bf16.msra.mxu0 %v2964
    %3296 = vmatprep.subr.bf16.mxu0 %v2967
    %3297 = vmatpush1.bf16.msra.mxu0 %v2966
    %3298 = vmatprep.mubr.bf16.mxu0 %v2415
    %3299 = vmatmul.mubr.bf16.gmra.mrb[0].mxu0 %v2414
    %v3300 = vpop.f32.mrb[0].mxu0
    %v3301 = vadd.f32 %v3248, %v3300
    %v3302 = vpop.f32.mrb[0].mxu0
    %v3303 = vadd.f32 %v3250, %v3302
    %v3304 = vpop.f32.mrb[0].mxu0
    %v3305 = vadd.f32 %v3252, %v3304
    %v3306 = vpop.f32.mrb[0].mxu0
    %v3307 = vadd.f32 %v3254, %v3306
    %3308 = vmatprep.mubr.bf16.mxu0 %v2424
    %3309 = vmatmul.mubr.bf16.gmra.mrb[0].mxu0 %v2423
    %v3310 = vpop.f32.mrb[0].mxu0
    %v3311 = vadd.f32 %v3258, %v3310
    %v3312 = vpop.f32.mrb[0].mxu0
    %v3313 = vadd.f32 %v3260, %v3312
    %v3314 = vpop.f32.mrb[0].mxu0
    %v3315 = vadd.f32 %v3262, %v3314
    %v3316 = vpop.f32.mrb[0].mxu0
    %v3317 = vadd.f32 %v3264, %v3316
    %3318 = vdwg.mxu0
    %3319 = vmatprep.subr.bf16.mxu0 %v2969
    %3320 = vmatpush1.bf16.msra.mxu0 %v2968
    %3321 = vmatprep.subr.bf16.mxu0 %v2971
    %3322 = vmatpush1.bf16.msra.mxu0 %v2970
    %3323 = vmatprep.subr.bf16.mxu0 %v2973
    %3324 = vmatpush1.bf16.msra.mxu0 %v2972
    %3325 = vmatprep.subr.bf16.mxu0 %v2975
    %3326 = vmatpush1.bf16.msra.mxu0 %v2974
    %3327 = vmatprep.subr.bf16.mxu0 %v2977
    %3328 = vmatpush1.bf16.msra.mxu0 %v2976
    %3329 = vmatprep.subr.bf16.mxu0 %v2979
    %3330 = vmatpush1.bf16.msra.mxu0 %v2978
    %3331 = vmatprep.subr.bf16.mxu0 %v2981
    %3332 = vmatpush1.bf16.msra.mxu0 %v2980
    %3333 = vmatprep.subr.bf16.mxu0 %v2983
    %3334 = vmatpush1.bf16.msra.mxu0 %v2982
    %3335 = vmatprep.subr.bf16.mxu0 %v2985
    %3336 = vmatpush1.bf16.msra.mxu0 %v2984
    %3337 = vmatprep.subr.bf16.mxu0 %v2987
    %3338 = vmatpush1.bf16.msra.mxu0 %v2986
    %3339 = vmatprep.subr.bf16.mxu0 %v2989
    %3340 = vmatpush1.bf16.msra.mxu0 %v2988
    %3341 = vmatprep.subr.bf16.mxu0 %v2991
    %3342 = vmatpush1.bf16.msra.mxu0 %v2990
    %3343 = vmatprep.subr.bf16.mxu0 %v2993
    %3344 = vmatpush1.bf16.msra.mxu0 %v2992
    %3345 = vmatprep.subr.bf16.mxu0 %v2995
    %3346 = vmatpush1.bf16.msra.mxu0 %v2994
    %3347 = vmatprep.subr.bf16.mxu0 %v2997
    %3348 = vmatpush1.bf16.msra.mxu0 %v2996
    %3349 = vmatprep.subr.bf16.mxu0 %v2999
    %3350 = vmatpush1.bf16.msra.mxu0 %v2998
    %3351 = vmatprep.mubr.bf16.mxu0 %v2417
    %3352 = vmatmul.mubr.bf16.gmra.mrb[0].mxu0 %v2416
    %v3353 = vpop.f32.mrb[0].mxu0
    %v3354 = vadd.f32 %v3301, %v3353
    %v3355 = vpop.f32.mrb[0].mxu0
    %v3356 = vadd.f32 %v3303, %v3355
    %v3357 = vpop.f32.mrb[0].mxu0
    %v3358 = vadd.f32 %v3305, %v3357
    %v3359 = vpop.f32.mrb[0].mxu0
    %v3360 = vadd.f32 %v3307, %v3359
    %3361 = vmatprep.mubr.bf16.mxu0 %v2426
    %3362 = vmatmul.mubr.bf16.gmra.mrb[0].mxu0 %v2425
    %v3363 = vpop.f32.mrb[0].mxu0
    %v3364 = vadd.f32 %v3311, %v3363
    %v3365 = vpop.f32.mrb[0].mxu0
    %v3366 = vadd.f32 %v3313, %v3365
    %v3367 = vpop.f32.mrb[0].mxu0
    %v3368 = vadd.f32 %v3315, %v3367
    %v3369 = vpop.f32.mrb[0].mxu0
    %v3370 = vadd.f32 %v3317, %v3369
    %3371 = vdwg.mxu0
    %3372 = vmatprep.subr.bf16.mxu0 %v3001
    %3373 = vmatpush1.bf16.msra.mxu0 %v3000
    %3374 = vmatprep.subr.bf16.mxu0 %v3003
    %3375 = vmatpush1.bf16.msra.mxu0 %v3002
    %3376 = vmatprep.subr.bf16.mxu0 %v3005
    %3377 = vmatpush1.bf16.msra.mxu0 %v3004
    %3378 = vmatprep.subr.bf16.mxu0 %v3007
    %3379 = vmatpush1.bf16.msra.mxu0 %v3006
    %3380 = vmatprep.subr.bf16.mxu0 %v3009
    %3381 = vmatpush1.bf16.msra.mxu0 %v3008
    %3382 = vmatprep.subr.bf16.mxu0 %v3011
    %3383 = vmatpush1.bf16.msra.mxu0 %v3010
    %3384 = vmatprep.subr.bf16.mxu0 %v3013
    %3385 = vmatpush1.bf16.msra.mxu0 %v3012
    %3386 = vmatprep.subr.bf16.mxu0 %v3015
    %3387 = vmatpush1.bf16.msra.mxu0 %v3014
    %3388 = vmatprep.subr.bf16.mxu0 0
    %3389 = vmatpush1.bf16.msra.mxu0 0
    %3390 = vmatprep.subr.bf16.mxu0 0
    %3391 = vmatpush1.bf16.msra.mxu0 0
    %3392 = vmatprep.subr.bf16.mxu0 0
    %3393 = vmatpush1.bf16.msra.mxu0 0
    %3394 = vmatprep.subr.bf16.mxu0 0
    %3395 = vmatpush1.bf16.msra.mxu0 0
    %3396 = vmatprep.subr.bf16.mxu0 0
    %3397 = vmatpush1.bf16.msra.mxu0 0
    %3398 = vmatprep.subr.bf16.mxu0 0
    %3399 = vmatpush1.bf16.msra.mxu0 0
    %3400 = vmatprep.subr.bf16.mxu0 0
    %3401 = vmatpush1.bf16.msra.mxu0 0
    %3402 = vmatprep.subr.bf16.mxu0 0
    %3403 = vmatpush1.bf16.msra.mxu0 0
    %3404 = vmatprep.mubr.bf16.mxu0 0
    %3405 = vmatmul.mubr.bf16.gmra.mrb[0].mxu0 %v2418
    %v3406 = vpop.f32.mrb[0].mxu0
    %v3407 = vadd.f32 %v3354, %v3406
    %v3408 = vpop.f32.mrb[0].mxu0
    %v3409 = vadd.f32 %v3356, %v3408
    %v3410 = vpop.f32.mrb[0].mxu0
    %v3411 = vadd.f32 %v3358, %v3410
    %v3412 = vpop.f32.mrb[0].mxu0
    %v3413 = vadd.f32 %v3360, %v3412
    %3414 = vmatprep.mubr.bf16.mxu0 0
    %3415 = vmatmul.mubr.bf16.gmra.mrb[0].mxu0 %v2427
    %v3416 = vpop.f32.mrb[0].mxu0
    %v3417 = vadd.f32 %v3364, %v3416
    %v3418 = vpop.f32.mrb[0].mxu0
    %v3419 = vadd.f32 %v3366, %v3418
    %v3420 = vpop.f32.mrb[0].mxu0
    %v3421 = vadd.f32 %v3368, %v3420
    %v3422 = vpop.f32.mrb[0].mxu0
    %v3423 = vadd.f32 %v3370, %v3422
    %3424 = vdwg.mxu0
    %v3425 = vmax.f32 %v3407, 0.0
    %v3426 = vmax.f32 %v3409, 0.0
    %v3427 = vmax.f32 %v3411, 0.0
    %v3428 = vmax.f32 %v3413, 0.0
    %v3429 = vmax.f32 %v3417, 0.0
    %v3430 = vmax.f32 %v3419, 0.0
    %v3431 = vmax.f32 %v3421, 0.0
    %v3432 = vmax.f32 %v3423, 0.0
    %v3433 = vld [vmem:[#allocation13] sm:$0xff]
    %v3434 = vld [vmem:[#allocation13 + $0x8] sm:$0xff]
    %v3435 = vld [vmem:[#allocation13 + $0x10] sm:$0xff]
    %v3436 = vld [vmem:[#allocation13 + $0x18] sm:$0xff]
    %v3437 = vld [vmem:[#allocation13 + $0x20] sm:$0xff]
    %v3438 = vld [vmem:[#allocation13 + $0x28] sm:$0xff]
    %v3439 = vld [vmem:[#allocation13 + $0x30] sm:$0xff]
    %v3440 = vld [vmem:[#allocation13 + $0x38] sm:$0xff]
    %v3441 = vld [vmem:[#allocation13 + $0x40] sm:$0xff]
    %v3442 = vld [vmem:[#allocation13 + $0x48] sm:$0xff]
    %v3443 = vld [vmem:[#allocation13 + $0x50] sm:$0xff]
    %v3444 = vld [vmem:[#allocation13 + $0x58] sm:$0xff]
    %v3445 = vld [vmem:[#allocation13 + $0x60] sm:$0xff]
    %v3446 = vld [vmem:[#allocation13 + $0x68] sm:$0xff]
    %v3447 = vld [vmem:[#allocation13 + $0x70] sm:$0xff]
    %v3448 = vld [vmem:[#allocation13 + $0x78] sm:$0xff]
    %v3449 = vld [vmem:[#allocation13 + $0x80] sm:$0xff]
    %v3450 = vld [vmem:[#allocation13 + $0x88] sm:$0xff]
    %v3451 = vld [vmem:[#allocation13 + $0x90] sm:$0xff]
    %v3452 = vld [vmem:[#allocation13 + $0x98] sm:$0xff]
    %v3453 = vld [vmem:[#allocation13 + $0xa0] sm:$0xff]
    %v3454 = vld [vmem:[#allocation13 + $0xa8] sm:$0xff]
    %v3455 = vld [vmem:[#allocation13 + $0xb0] sm:$0xff]
    %v3456 = vld [vmem:[#allocation13 + $0xb8] sm:$0xff]
    %v3457 = vld [vmem:[#allocation13 + $0xc0] sm:$0xff]
    %v3458 = vld [vmem:[#allocation13 + $0xc8] sm:$0xff]
    %v3459 = vld [vmem:[#allocation13 + $0xd0] sm:$0xff]
    %v3460 = vld [vmem:[#allocation13 + $0xd8] sm:$0xff]
    %v3461 = vld [vmem:[#allocation13 + $0xe0] sm:$0xff]
    %v3462 = vld [vmem:[#allocation13 + $0xe8] sm:$0xff]
    %v3463 = vld [vmem:[#allocation13 + $0xf0] sm:$0xff]
    %v3464 = vld [vmem:[#allocation13 + $0xf8] sm:$0xff]
    %v3465 = vld [vmem:[#allocation13 + $0x100] sm:$0xff]
    %v3466 = vld [vmem:[#allocation13 + $0x108] sm:$0xff]
    %v3467 = vld [vmem:[#allocation13 + $0x110] sm:$0xff]
    %v3468 = vld [vmem:[#allocation13 + $0x118] sm:$0xff]
    %v3469 = vld [vmem:[#allocation13 + $0x120] sm:$0xff]
    %v3470 = vld [vmem:[#allocation13 + $0x128] sm:$0xff]
    %v3471 = vld [vmem:[#allocation13 + $0x130] sm:$0xff]
    %v3472 = vld [vmem:[#allocation13 + $0x138] sm:$0xff]
    %v3473 = vld [vmem:[#allocation13 + $0x140] sm:$0xff]
    %v3474 = vld [vmem:[#allocation13 + $0x148] sm:$0xff]
    %v3475 = vld [vmem:[#allocation13 + $0x150] sm:$0xff]
    %v3476 = vld [vmem:[#allocation13 + $0x158] sm:$0xff]
    %v3477 = vld [vmem:[#allocation13 + $0x160] sm:$0xff]
    %v3478 = vld [vmem:[#allocation13 + $0x168] sm:$0xff]
    %v3479 = vld [vmem:[#allocation13 + $0x170] sm:$0xff]
    %v3480 = vld [vmem:[#allocation13 + $0x178] sm:$0xff]
    %v3481 = vld [vmem:[#allocation13 + $0x180] sm:$0xff]
    %v3482 = vld [vmem:[#allocation13 + $0x188] sm:$0xff]
    %v3483 = vld [vmem:[#allocation13 + $0x190] sm:$0xff]
    %v3484 = vld [vmem:[#allocation13 + $0x198] sm:$0xff]
    %v3485 = vld [vmem:[#allocation13 + $0x1a0] sm:$0xff]
    %v3486 = vld [vmem:[#allocation13 + $0x1a8] sm:$0xff]
    %v3487 = vld [vmem:[#allocation13 + $0x1b0] sm:$0xff]
    %v3488 = vld [vmem:[#allocation13 + $0x1b8] sm:$0xff]
    %v3489 = vld [vmem:[#allocation13 + $0x1c0] sm:$0xff]
    %v3490 = vld [vmem:[#allocation13 + $0x1c8] sm:$0xff]
    %v3491 = vld [vmem:[#allocation13 + $0x1d0] sm:$0xff]
    %v3492 = vld [vmem:[#allocation13 + $0x1d8] sm:$0xff]
    %v3493 = vld [vmem:[#allocation13 + $0x1e0] sm:$0xff]
    %v3494 = vld [vmem:[#allocation13 + $0x1e8] sm:$0xff]
    %v3495 = vld [vmem:[#allocation13 + $0x1f0] sm:$0xff]
    %v3496 = vld [vmem:[#allocation13 + $0x1f8] sm:$0xff]
    %v3497 = vld [vmem:[#allocation13 + $0x200] sm:$0xff]
    %v3498 = vld [vmem:[#allocation13 + $0x208] sm:$0xff]
    %v3499 = vld [vmem:[#allocation13 + $0x210] sm:$0xff]
    %v3500 = vld [vmem:[#allocation13 + $0x218] sm:$0xff]
    %v3501 = vld [vmem:[#allocation13 + $0x220] sm:$0xff]
    %v3502 = vld [vmem:[#allocation13 + $0x228] sm:$0xff]
    %v3503 = vld [vmem:[#allocation13 + $0x230] sm:$0xff]
    %v3504 = vld [vmem:[#allocation13 + $0x238] sm:$0xff]
    %v3505 = vld [vmem:[#allocation13 + $0x240] sm:$0xff]
    %v3506 = vld [vmem:[#allocation13 + $0x248] sm:$0xff]
    %v3507 = vld [vmem:[#allocation13 + $0x250] sm:$0xff]
    %v3508 = vld [vmem:[#allocation13 + $0x258] sm:$0xff]
    %v3509 = vld [vmem:[#allocation13 + $0x260] sm:$0xff]
    %v3510 = vld [vmem:[#allocation13 + $0x268] sm:$0xff]
    %v3511 = vld [vmem:[#allocation13 + $0x270] sm:$0xff]
    %v3512 = vld [vmem:[#allocation13 + $0x278] sm:$0xff]
    %v3513 = vld [vmem:[#allocation13 + $0x280] sm:$0xff]
    %v3514 = vld [vmem:[#allocation13 + $0x288] sm:$0xff]
    %v3515 = vld [vmem:[#allocation13 + $0x290] sm:$0xff]
    %v3516 = vld [vmem:[#allocation13 + $0x298] sm:$0xff]
    %v3517 = vld [vmem:[#allocation13 + $0x2a0] sm:$0xff]
    %v3518 = vld [vmem:[#allocation13 + $0x2a8] sm:$0xff]
    %v3519 = vld [vmem:[#allocation13 + $0x2b0] sm:$0xff]
    %v3520 = vld [vmem:[#allocation13 + $0x2b8] sm:$0xff]
    %v3521 = vld [vmem:[#allocation13 + $0x2c0] sm:$0xff]
    %v3522 = vld [vmem:[#allocation13 + $0x2c8] sm:$0xff]
    %v3523 = vld [vmem:[#allocation13 + $0x2d0] sm:$0xff]
    %v3524 = vld [vmem:[#allocation13 + $0x2d8] sm:$0xff]
    %v3525 = vld [vmem:[#allocation13 + $0x2e0] sm:$0xff]
    %v3526 = vld [vmem:[#allocation13 + $0x2e8] sm:$0xff]
    %v3527 = vld [vmem:[#allocation13 + $0x2f0] sm:$0xff]
    %v3528 = vld [vmem:[#allocation13 + $0x2f8] sm:$0xff]
    %v3529 = vld [vmem:[#allocation13 + $0x300] sm:$0xff]
    %v3530 = vld [vmem:[#allocation13 + $0x308] sm:$0xff]
    %v3531 = vld [vmem:[#allocation13 + $0x310] sm:$0xff]
    %v3532 = vld [vmem:[#allocation13 + $0x318] sm:$0xff]
    %v3533 = vld [vmem:[#allocation13 + $0x320] sm:$0xff]
    %v3534 = vld [vmem:[#allocation13 + $0x328] sm:$0xff]
    %v3535 = vld [vmem:[#allocation13 + $0x330] sm:$0xff]
    %v3536 = vld [vmem:[#allocation13 + $0x338] sm:$0xff]
    %v3537 = vld [vmem:[#allocation13 + $0x340] sm:$0xff]
    %v3538 = vld [vmem:[#allocation13 + $0x348] sm:$0xff]
    %v3539 = vld [vmem:[#allocation13 + $0x350] sm:$0xff]
    %v3540 = vld [vmem:[#allocation13 + $0x358] sm:$0xff]
    %v3541 = vld [vmem:[#allocation13 + $0x360] sm:$0xff]
    %v3542 = vld [vmem:[#allocation13 + $0x368] sm:$0xff]
    %v3543 = vld [vmem:[#allocation13 + $0x370] sm:$0xff]
    %v3544 = vld [vmem:[#allocation13 + $0x378] sm:$0xff]
    %v3545 = vld [vmem:[#allocation13 + $0x380] sm:$0xff]
    %v3546 = vld [vmem:[#allocation13 + $0x388] sm:$0xff]
    %v3547 = vld [vmem:[#allocation13 + $0x390] sm:$0xff]
    %v3548 = vld [vmem:[#allocation13 + $0x398] sm:$0xff]
    %v3549 = vld [vmem:[#allocation13 + $0x3a0] sm:$0xff]
    %v3550 = vld [vmem:[#allocation13 + $0x3a8] sm:$0xff]
    %v3551 = vld [vmem:[#allocation13 + $0x3b0] sm:$0xff]
    %v3552 = vld [vmem:[#allocation13 + $0x3b8] sm:$0xff]
    %v3553 = vld [vmem:[#allocation13 + $0x3c0] sm:$0xff]
    %v3554 = vld [vmem:[#allocation13 + $0x3c8] sm:$0xff]
    %v3555 = vld [vmem:[#allocation13 + $0x3d0] sm:$0xff]
    %v3556 = vld [vmem:[#allocation13 + $0x3d8] sm:$0xff]
    %v3557 = vld [vmem:[#allocation13 + $0x3e0] sm:$0xff]
    %v3558 = vld [vmem:[#allocation13 + $0x3e8] sm:$0xff]
    %v3559 = vld [vmem:[#allocation13 + $0x3f0] sm:$0xff]
    %v3560 = vld [vmem:[#allocation13 + $0x3f8] sm:$0xff]
    %v3561 = vld [vmem:[#allocation13 + $0x400] sm:$0xff]
    %v3562 = vld [vmem:[#allocation13 + $0x408] sm:$0xff]
    %v3563 = vld [vmem:[#allocation13 + $0x410] sm:$0xff]
    %v3564 = vld [vmem:[#allocation13 + $0x418] sm:$0xff]
    %v3565 = vld [vmem:[#allocation13 + $0x420] sm:$0xff]
    %v3566 = vld [vmem:[#allocation13 + $0x428] sm:$0xff]
    %v3567 = vld [vmem:[#allocation13 + $0x430] sm:$0xff]
    %v3568 = vld [vmem:[#allocation13 + $0x438] sm:$0xff]
    %v3569 = vld [vmem:[#allocation13 + $0x440] sm:$0xff]
    %v3570 = vld [vmem:[#allocation13 + $0x448] sm:$0xff]
    %v3571 = vld [vmem:[#allocation13 + $0x450] sm:$0xff]
    %v3572 = vld [vmem:[#allocation13 + $0x458] sm:$0xff]
    %v3573 = vld [vmem:[#allocation13 + $0x460] sm:$0xff]
    %v3574 = vld [vmem:[#allocation13 + $0x468] sm:$0xff]
    %v3575 = vld [vmem:[#allocation13 + $0x470] sm:$0xff]
    %v3576 = vld [vmem:[#allocation13 + $0x478] sm:$0xff]
    %v3577 = vld [vmem:[#allocation13 + $0x480] sm:$0xff]
    %v3578 = vld [vmem:[#allocation13 + $0x488] sm:$0xff]
    %v3579 = vld [vmem:[#allocation13 + $0x490] sm:$0xff]
    %v3580 = vld [vmem:[#allocation13 + $0x498] sm:$0xff]
    %v3581 = vld [vmem:[#allocation13 + $0x4a0] sm:$0xff]
    %v3582 = vld [vmem:[#allocation13 + $0x4a8] sm:$0xff]
    %v3583 = vld [vmem:[#allocation13 + $0x4b0] sm:$0xff]
    %v3584 = vld [vmem:[#allocation13 + $0x4b8] sm:$0xff]
    %v3585 = vld [vmem:[#allocation13 + $0x4c0] sm:$0xff]
    %v3586 = vld [vmem:[#allocation13 + $0x4c8] sm:$0xff]
    %v3587 = vld [vmem:[#allocation13 + $0x4d0] sm:$0xff]
    %v3588 = vld [vmem:[#allocation13 + $0x4d8] sm:$0xff]
    %v3589 = vld [vmem:[#allocation13 + $0x4e0] sm:$0xff]
    %v3590 = vld [vmem:[#allocation13 + $0x4e8] sm:$0xff]
    %v3591 = vld [vmem:[#allocation13 + $0x4f0] sm:$0xff]
    %v3592 = vld [vmem:[#allocation13 + $0x4f8] sm:$0xff]
    %v3593 = vld [vmem:[#allocation13 + $0x500] sm:$0xff]
    %v3594 = vld [vmem:[#allocation13 + $0x508] sm:$0xff]
    %v3595 = vld [vmem:[#allocation13 + $0x510] sm:$0xff]
    %v3596 = vld [vmem:[#allocation13 + $0x518] sm:$0xff]
    %v3597 = vld [vmem:[#allocation13 + $0x520] sm:$0xff]
    %v3598 = vld [vmem:[#allocation13 + $0x528] sm:$0xff]
    %v3599 = vld [vmem:[#allocation13 + $0x530] sm:$0xff]
    %v3600 = vld [vmem:[#allocation13 + $0x538] sm:$0xff]
    %v3601 = vld [vmem:[#allocation13 + $0x540] sm:$0xff]
    %v3602 = vld [vmem:[#allocation13 + $0x548] sm:$0xff]
    %v3603 = vld [vmem:[#allocation13 + $0x550] sm:$0xff]
    %v3604 = vld [vmem:[#allocation13 + $0x558] sm:$0xff]
    %v3605 = vld [vmem:[#allocation13 + $0x560] sm:$0xff]
    %v3606 = vld [vmem:[#allocation13 + $0x568] sm:$0xff]
    %v3607 = vld [vmem:[#allocation13 + $0x570] sm:$0xff]
    %v3608 = vld [vmem:[#allocation13 + $0x578] sm:$0xff]
    %v3609 = vld [vmem:[#allocation13 + $0x580] sm:$0xff]
    %v3610 = vld [vmem:[#allocation13 + $0x588] sm:$0xff]
    %v3611 = vld [vmem:[#allocation13 + $0x590] sm:$0xff]
    %v3612 = vld [vmem:[#allocation13 + $0x598] sm:$0xff]
    %v3613 = vld [vmem:[#allocation13 + $0x5a0] sm:$0xff]
    %v3614 = vld [vmem:[#allocation13 + $0x5a8] sm:$0xff]
    %v3615 = vld [vmem:[#allocation13 + $0x5b0] sm:$0xff]
    %v3616 = vld [vmem:[#allocation13 + $0x5b8] sm:$0xff]
    %v3617 = vld [vmem:[#allocation13 + $0x5c0] sm:$0xff]
    %v3618 = vld [vmem:[#allocation13 + $0x5c8] sm:$0xff]
    %v3619 = vld [vmem:[#allocation13 + $0x5d0] sm:$0xff]
    %v3620 = vld [vmem:[#allocation13 + $0x5d8] sm:$0xff]
    %v3621 = vld [vmem:[#allocation13 + $0x5e0] sm:$0xff]
    %v3622 = vld [vmem:[#allocation13 + $0x5e8] sm:$0xff]
    %v3623 = vld [vmem:[#allocation13 + $0x5f0] sm:$0xff]
    %v3624 = vld [vmem:[#allocation13 + $0x5f8] sm:$0xff]
    %v3625 = vld [vmem:[#allocation13 + $0x600] sm:$0xff]
    %v3626 = vld [vmem:[#allocation13 + $0x608] sm:$0xff]
    %v3627 = vld [vmem:[#allocation13 + $0x610] sm:$0xff]
    %v3628 = vld [vmem:[#allocation13 + $0x618] sm:$0xff]
    %v3629 = vld [vmem:[#allocation13 + $0x620] sm:$0xff]
    %v3630 = vld [vmem:[#allocation13 + $0x628] sm:$0xff]
    %v3631 = vld [vmem:[#allocation13 + $0x630] sm:$0xff]
    %v3632 = vld [vmem:[#allocation13 + $0x638] sm:$0xff]
    %v3633 = vld [vmem:[#allocation13 + $0x640] sm:$0xff]
    %v3634 = vld [vmem:[#allocation13 + $0x648] sm:$0xff]
    %v3635 = vld [vmem:[#allocation13 + $0x650] sm:$0xff]
    %v3636 = vld [vmem:[#allocation13 + $0x658] sm:$0xff]
    %v3637 = vld [vmem:[#allocation13 + $0x660] sm:$0xff]
    %v3638 = vld [vmem:[#allocation13 + $0x668] sm:$0xff]
    %v3639 = vld [vmem:[#allocation13 + $0x670] sm:$0xff]
    %v3640 = vld [vmem:[#allocation13 + $0x678] sm:$0xff]
    %v3641 = vld [vmem:[#allocation13 + $0x680] sm:$0xff]
    %v3642 = vld [vmem:[#allocation13 + $0x688] sm:$0xff]
    %v3643 = vld [vmem:[#allocation13 + $0x690] sm:$0xff]
    %v3644 = vld [vmem:[#allocation13 + $0x698] sm:$0xff]
    %v3645 = vld [vmem:[#allocation13 + $0x6a0] sm:$0xff]
    %v3646 = vld [vmem:[#allocation13 + $0x6a8] sm:$0xff]
    %v3647 = vld [vmem:[#allocation13 + $0x6b0] sm:$0xff]
    %v3648 = vld [vmem:[#allocation13 + $0x6b8] sm:$0xff]
    %v3649 = vld [vmem:[#allocation13 + $0x6c0] sm:$0xff]
    %v3650 = vld [vmem:[#allocation13 + $0x6c8] sm:$0xff]
    %v3651 = vld [vmem:[#allocation13 + $0x6d0] sm:$0xff]
    %v3652 = vld [vmem:[#allocation13 + $0x6d8] sm:$0xff]
    %v3653 = vld [vmem:[#allocation13 + $0x6e0] sm:$0xff]
    %v3654 = vld [vmem:[#allocation13 + $0x6e8] sm:$0xff]
    %v3655 = vld [vmem:[#allocation13 + $0x6f0] sm:$0xff]
    %v3656 = vld [vmem:[#allocation13 + $0x6f8] sm:$0xff]
    %v3657 = vld [vmem:[#allocation13 + $0x700] sm:$0xff]
    %v3658 = vld [vmem:[#allocation13 + $0x708] sm:$0xff]
    %v3659 = vld [vmem:[#allocation13 + $0x710] sm:$0xff]
    %v3660 = vld [vmem:[#allocation13 + $0x718] sm:$0xff]
    %v3661 = vld [vmem:[#allocation13 + $0x720] sm:$0xff]
    %v3662 = vld [vmem:[#allocation13 + $0x728] sm:$0xff]
    %v3663 = vld [vmem:[#allocation13 + $0x730] sm:$0xff]
    %v3664 = vld [vmem:[#allocation13 + $0x738] sm:$0xff]
    %v3665 = vld [vmem:[#allocation13 + $0x740] sm:$0xff]
    %v3666 = vld [vmem:[#allocation13 + $0x748] sm:$0xff]
    %v3667 = vld [vmem:[#allocation13 + $0x750] sm:$0xff]
    %v3668 = vld [vmem:[#allocation13 + $0x758] sm:$0xff]
    %v3669 = vld [vmem:[#allocation13 + $0x760] sm:$0xff]
    %v3670 = vld [vmem:[#allocation13 + $0x768] sm:$0xff]
    %v3671 = vld [vmem:[#allocation13 + $0x770] sm:$0xff]
    %v3672 = vld [vmem:[#allocation13 + $0x778] sm:$0xff]
    %v3673 = vld [vmem:[#allocation13 + $0x780] sm:$0xff]
    %v3674 = vld [vmem:[#allocation13 + $0x788] sm:$0xff]
    %v3675 = vld [vmem:[#allocation13 + $0x790] sm:$0xff]
    %v3676 = vld [vmem:[#allocation13 + $0x798] sm:$0xff]
    %v3677 = vld [vmem:[#allocation13 + $0x7a0] sm:$0xff]
    %v3678 = vld [vmem:[#allocation13 + $0x7a8] sm:$0xff]
    %v3679 = vld [vmem:[#allocation13 + $0x7b0] sm:$0xff]
    %v3680 = vld [vmem:[#allocation13 + $0x7b8] sm:$0xff]
    %v3681 = vld [vmem:[#allocation13 + $0x7c0] sm:$0xff]
    %v3682 = vld [vmem:[#allocation13 + $0x7c8] sm:$0xff]
    %v3683 = vld [vmem:[#allocation13 + $0x7d0] sm:$0xff]
    %v3684 = vld [vmem:[#allocation13 + $0x7d8] sm:$0xff]
    %v3685 = vld [vmem:[#allocation13 + $0x7e0] sm:$0xff]
    %v3686 = vld [vmem:[#allocation13 + $0x7e8] sm:$0xff]
    %v3687 = vld [vmem:[#allocation13 + $0x7f0] sm:$0xff]
    %v3688 = vld [vmem:[#allocation13 + $0x7f8] sm:$0xff]
    %v3689 = vld [vmem:[#allocation13 + $0x800] sm:$0xff]
    %v3690 = vld [vmem:[#allocation13 + $0x808] sm:$0xff]
    %v3691 = vld [vmem:[#allocation13 + $0x810] sm:$0xff]
    %v3692 = vld [vmem:[#allocation13 + $0x818] sm:$0xff]
    %v3693 = vld [vmem:[#allocation13 + $0x820] sm:$0xff]
    %v3694 = vld [vmem:[#allocation13 + $0x828] sm:$0xff]
    %v3695 = vld [vmem:[#allocation13 + $0x830] sm:$0xff]
    %v3696 = vld [vmem:[#allocation13 + $0x838] sm:$0xff]
    %v3697 = vld [vmem:[#allocation13 + $0x840] sm:$0xff]
    %v3698 = vld [vmem:[#allocation13 + $0x848] sm:$0xff]
    %v3699 = vld [vmem:[#allocation13 + $0x850] sm:$0xff]
    %v3700 = vld [vmem:[#allocation13 + $0x858] sm:$0xff]
    %v3701 = vld [vmem:[#allocation13 + $0x860] sm:$0xff]
    %v3702 = vld [vmem:[#allocation13 + $0x868] sm:$0xff]
    %v3703 = vld [vmem:[#allocation13 + $0x870] sm:$0xff]
    %v3704 = vld [vmem:[#allocation13 + $0x878] sm:$0xff]
    %v3705 = vld [vmem:[#allocation13 + $0x880] sm:$0xff]
    %v3706 = vld [vmem:[#allocation13 + $0x888] sm:$0xff]
    %v3707 = vld [vmem:[#allocation13 + $0x890] sm:$0xff]
    %v3708 = vld [vmem:[#allocation13 + $0x898] sm:$0xff]
    %v3709 = vld [vmem:[#allocation13 + $0x8a0] sm:$0xff]
    %v3710 = vld [vmem:[#allocation13 + $0x8a8] sm:$0xff]
    %v3711 = vld [vmem:[#allocation13 + $0x8b0] sm:$0xff]
    %v3712 = vld [vmem:[#allocation13 + $0x8b8] sm:$0xff]
    %v3713 = vld [vmem:[#allocation13 + $0x8c0] sm:$0xff]
    %v3714 = vld [vmem:[#allocation13 + $0x8c8] sm:$0xff]
    %v3715 = vld [vmem:[#allocation13 + $0x8d0] sm:$0xff]
    %v3716 = vld [vmem:[#allocation13 + $0x8d8] sm:$0xff]
    %v3717 = vld [vmem:[#allocation13 + $0x8e0] sm:$0xff]
    %v3718 = vld [vmem:[#allocation13 + $0x8e8] sm:$0xff]
    %v3719 = vld [vmem:[#allocation13 + $0x8f0] sm:$0xff]
    %v3720 = vld [vmem:[#allocation13 + $0x8f8] sm:$0xff]
    %v3721 = vrot.slane %v3425, 3
    %v3722 = vrot.slane %v3426, 3
    %v3723 = vrot.slane %v3427, 3
    %v3724 = vrot.slane %v3428, 3
    %v3725 = vrot.slane %v3429, 3
    %v3726 = vrot.slane %v3430, 3
    %v3727 = vrot.slane %v3431, 3
    %v3728 = vrot.slane %v3432, 3
    %v3729 = vsel %vm391, %v3725, %v3727
    %v3730 = vsel %vm391, %v3726, %v3728
    %v3731 = vsel %vm391, %v3723, %v3725
    %v3732 = vsel %vm391, %v3724, %v3726
    %v3733 = vsel %vm391, %v3721, %v3723
    %v3734 = vsel %vm391, %v3722, %v3724
    %v3735 = vsel %vm391, %v3727, %v3721
    %v3736 = vsel %vm391, %v3728, %v3722
    %v3737 = vmul.f32 %v3735, %v403
    %v3738 = vmul.f32 %v3736, %v403
    %v3739 = vmul.f32 %v3733, %v408
    %v3740 = vmul.f32 %v3734, %v408
    %v3741 = vmul.f32 %v3731, %v413
    %v3742 = vmul.f32 %v3732, %v413
    %v3743 = vmul.f32 %v3729, %v418
    %v3744 = vmul.f32 %v3730, %v418
    %v3745 = vrot.slane %v3425, 4
    %v3746 = vrot.slane %v3426, 4
    %v3747 = vrot.slane %v3427, 4
    %v3748 = vrot.slane %v3428, 4
    %v3749 = vrot.slane %v3429, 4
    %v3750 = vrot.slane %v3430, 4
    %v3751 = vrot.slane %v3431, 4
    %v3752 = vrot.slane %v3432, 4
    %v3753 = vsel %vm428, %v3749, %v3751
    %v3754 = vsel %vm428, %v3750, %v3752
    %v3755 = vsel %vm428, %v3747, %v3749
    %v3756 = vsel %vm428, %v3748, %v3750
    %v3757 = vsel %vm428, %v3745, %v3747
    %v3758 = vsel %vm428, %v3746, %v3748
    %v3759 = vsel %vm428, %v3751, %v3745
    %v3760 = vsel %vm428, %v3752, %v3746
    %v3761 = vmul.f32 %v3759, %v441
    %v3762 = vmul.f32 %v3760, %v441
    %v3763 = vmul.f32 %v3757, %v446
    %v3764 = vmul.f32 %v3758, %v446
    %v3765 = vmul.f32 %v3755, %v451
    %v3766 = vmul.f32 %v3756, %v451
    %v3767 = vmul.f32 %v3753, %v456
    %v3768 = vmul.f32 %v3754, %v456
    %v3769 = vrot.slane %v3425, 5
    %v3770 = vrot.slane %v3426, 5
    %v3771 = vrot.slane %v3427, 5
    %v3772 = vrot.slane %v3428, 5
    %v3773 = vrot.slane %v3429, 5
    %v3774 = vrot.slane %v3430, 5
    %v3775 = vrot.slane %v3431, 5
    %v3776 = vrot.slane %v3432, 5
    %v3777 = vsel %vm478, %v3773, %v3775
    %v3778 = vsel %vm478, %v3774, %v3776
    %v3779 = vsel %vm478, %v3771, %v3773
    %v3780 = vsel %vm478, %v3772, %v3774
    %v3781 = vsel %vm478, %v3769, %v3771
    %v3782 = vsel %vm478, %v3770, %v3772
    %v3783 = vsel %vm478, %v3775, %v3769
    %v3784 = vsel %vm478, %v3776, %v3770
    %v3785 = vmul.f32 %v3783, %v491
    %v3786 = vmul.f32 %v3784, %v491
    %v3787 = vmul.f32 %v3781, %v496
    %v3788 = vmul.f32 %v3782, %v496
    %v3789 = vmul.f32 %v3779, %v501
    %v3790 = vmul.f32 %v3780, %v501
    %v3791 = vmul.f32 %v3777, %v506
    %v3792 = vmul.f32 %v3778, %v506
    %v3793 = vrot.slane %v3425, 7
    %v3794 = vrot.slane %v3426, 7
    %v3795 = vrot.slane %v3427, 7
    %v3796 = vrot.slane %v3428, 7
    %v3797 = vrot.slane %v3429, 7
    %v3798 = vrot.slane %v3430, 7
    %v3799 = vrot.slane %v3431, 7
    %v3800 = vrot.slane %v3432, 7
    %v3801 = vsel %vm516, %v3797, %v3799
    %v3802 = vsel %vm516, %v3798, %v3800
    %v3803 = vsel %vm516, %v3795, %v3797
    %v3804 = vsel %vm516, %v3796, %v3798
    %v3805 = vsel %vm516, %v3793, %v3795
    %v3806 = vsel %vm516, %v3794, %v3796
    %v3807 = vsel %vm516, %v3799, %v3793
    %v3808 = vsel %vm516, %v3800, %v3794
    %v3809 = vmul.f32 %v3807, %v529
    %v3810 = vmul.f32 %v3808, %v529
    %v3811 = vmul.f32 %v3805, %v534
    %v3812 = vmul.f32 %v3806, %v534
    %v3813 = vmul.f32 %v3803, %v539
    %v3814 = vmul.f32 %v3804, %v539
    %v3815 = vmul.f32 %v3801, %v544
    %v3816 = vmul.f32 %v3802, %v544
    %v3817 = vrot.slane %v3425, 1
    %v3818 = vrot.slane %v3426, 1
    %v3819 = vrot.slane %v3427, 1
    %v3820 = vrot.slane %v3428, 1
    %v3821 = vrot.slane %v3429, 1
    %v3822 = vrot.slane %v3430, 1
    %v3823 = vrot.slane %v3431, 1
    %v3824 = vrot.slane %v3432, 1
    %v3825 = vsel %vm554, %v3821, %v3823
    %v3826 = vsel %vm554, %v3822, %v3824
    %v3827 = vsel %vm554, %v3819, %v3821
    %v3828 = vsel %vm554, %v3820, %v3822
    %v3829 = vsel %vm554, %v3817, %v3819
    %v3830 = vsel %vm554, %v3818, %v3820
    %v3831 = vsel %vm554, %v3823, %v3817
    %v3832 = vsel %vm554, %v3824, %v3818
    %v3833 = vmul.f32 %v3829, %v567
    %v3834 = vmul.f32 %v3830, %v567
    %v3835 = vmul.f32 %v3827, %v572
    %v3836 = vmul.f32 %v3828, %v572
    %v3837 = vmul.f32 %v3825, %v577
    %v3838 = vmul.f32 %v3826, %v577
    %v3839 = vmul.f32 %v3831, %v582
    %v3840 = vmul.f32 %v3832, %v582
    %v3841 = vmul.f32 %v3733, %v628
    %v3842 = vmul.f32 %v3734, %v628
    %v3843 = vmul.f32 %v3731, %v633
    %v3844 = vmul.f32 %v3732, %v633
    %v3845 = vmul.f32 %v3729, %v638
    %v3846 = vmul.f32 %v3730, %v638
    %v3847 = vmul.f32 %v3735, %v643
    %v3848 = vmul.f32 %v3736, %v643
    %v3849 = vmul.f32 %v3757, %v665
    %v3850 = vmul.f32 %v3758, %v665
    %v3851 = vmul.f32 %v3755, %v670
    %v3852 = vmul.f32 %v3756, %v670
    %v3853 = vmul.f32 %v3753, %v675
    %v3854 = vmul.f32 %v3754, %v675
    %v3855 = vmul.f32 %v3759, %v680
    %v3856 = vmul.f32 %v3760, %v680
    %v3857 = vmul.f32 %v3781, %v714
    %v3858 = vmul.f32 %v3782, %v714
    %v3859 = vmul.f32 %v3779, %v719
    %v3860 = vmul.f32 %v3780, %v719
    %v3861 = vmul.f32 %v3777, %v724
    %v3862 = vmul.f32 %v3778, %v724
    %v3863 = vmul.f32 %v3783, %v729
    %v3864 = vmul.f32 %v3784, %v729
    %v3865 = vpack.c.bf16 %v3739, %v3737
    %v3866 = vpack.c.bf16 %v3740, %v3738
    %v3867 = vpack.c.bf16 %v3763, %v3761
    %v3868 = vpack.c.bf16 %v3764, %v3762
    %v3869 = vpack.c.bf16 %v3787, %v3785
    %v3870 = vpack.c.bf16 %v3788, %v3786
    %v3871 = vpack.c.bf16 %v3811, %v3809
    %v3872 = vpack.c.bf16 %v3812, %v3810
    %v3873 = vpack.c.bf16 %v3427, %v3425
    %v3874 = vpack.c.bf16 %v3428, %v3426
    %v3875 = vpack.c.bf16 %v3835, %v3833
    %v3876 = vpack.c.bf16 %v3836, %v3834
    %v3877 = vpack.c.bf16 %v3843, %v3841
    %v3878 = vpack.c.bf16 %v3844, %v3842
    %v3879 = vpack.c.bf16 %v3851, %v3849
    %v3880 = vpack.c.bf16 %v3852, %v3850
    %v3881 = vpack.c.bf16 %v3859, %v3857
    %v3882 = vpack.c.bf16 %v3860, %v3858
    %v3883 = vpack.c.bf16 %v3743, %v3741
    %v3884 = vpack.c.bf16 %v3744, %v3742
    %v3885 = vpack.c.bf16 %v3767, %v3765
    %v3886 = vpack.c.bf16 %v3768, %v3766
    %v3887 = vpack.c.bf16 %v3791, %v3789
    %v3888 = vpack.c.bf16 %v3792, %v3790
    %v3889 = vpack.c.bf16 %v3815, %v3813
    %v3890 = vpack.c.bf16 %v3816, %v3814
    %v3891 = vpack.c.bf16 %v3431, %v3429
    %v3892 = vpack.c.bf16 %v3432, %v3430
    %v3893 = vpack.c.bf16 %v3839, %v3837
    %v3894 = vpack.c.bf16 %v3840, %v3838
    %v3895 = vpack.c.bf16 %v3847, %v3845
    %v3896 = vpack.c.bf16 %v3848, %v3846
    %v3897 = vpack.c.bf16 %v3855, %v3853
    %v3898 = vpack.c.bf16 %v3856, %v3854
    %v3899 = vpack.c.bf16 %v3863, %v3861
    %v3900 = vpack.c.bf16 %v3864, %v3862
    %v4189 = vunpack.c.l.b16 %v3433
    %v4190 = vunpack.c.h.b16 %v3433
    %v4191 = vunpack.c.l.b16 %v3434
    %v4192 = vunpack.c.h.b16 %v3434
    %v4193 = vunpack.c.l.b16 %v3435
    %v4194 = vunpack.c.h.b16 %v3435
    %v4195 = vunpack.c.l.b16 %v3436
    %v4196 = vunpack.c.h.b16 %v3436
    %v4197 = vunpack.c.l.b16 %v3437
    %v4198 = vunpack.c.h.b16 %v3437
    %v4199 = vunpack.c.l.b16 %v3438
    %v4200 = vunpack.c.h.b16 %v3438
    %v4201 = vunpack.c.l.b16 %v3439
    %v4202 = vunpack.c.h.b16 %v3439
    %v4203 = vunpack.c.l.b16 %v3440
    %v4204 = vunpack.c.h.b16 %v3440
    %v4205 = vunpack.c.l.b16 %v3441
    %v4206 = vunpack.c.h.b16 %v3441
    %v4207 = vunpack.c.l.b16 %v3442
    %v4208 = vunpack.c.h.b16 %v3442
    %v4209 = vunpack.c.l.b16 %v3443
    %v4210 = vunpack.c.h.b16 %v3443
    %v4211 = vunpack.c.l.b16 %v3444
    %v4212 = vunpack.c.h.b16 %v3444
    %v4213 = vunpack.c.l.b16 %v3445
    %v4214 = vunpack.c.h.b16 %v3445
    %v4215 = vunpack.c.l.b16 %v3446
    %v4216 = vunpack.c.h.b16 %v3446
    %v4217 = vunpack.c.l.b16 %v3447
    %v4218 = vunpack.c.h.b16 %v3447
    %v4219 = vunpack.c.l.b16 %v3448
    %v4220 = vunpack.c.h.b16 %v3448
    %v4221 = vunpack.c.l.b16 %v3449
    %v4222 = vunpack.c.h.b16 %v3449
    %v4223 = vunpack.c.l.b16 %v3450
    %v4224 = vunpack.c.h.b16 %v3450
    %v4225 = vunpack.c.l.b16 %v3451
    %v4226 = vunpack.c.h.b16 %v3451
    %v4227 = vunpack.c.l.b16 %v3452
    %v4228 = vunpack.c.h.b16 %v3452
    %v4229 = vunpack.c.l.b16 %v3453
    %v4230 = vunpack.c.h.b16 %v3453
    %v4231 = vunpack.c.l.b16 %v3454
    %v4232 = vunpack.c.h.b16 %v3454
    %v4233 = vunpack.c.l.b16 %v3455
    %v4234 = vunpack.c.h.b16 %v3455
    %v4235 = vunpack.c.l.b16 %v3456
    %v4236 = vunpack.c.h.b16 %v3456
    %v4237 = vunpack.c.l.b16 %v3457
    %v4238 = vunpack.c.h.b16 %v3457
    %v4239 = vunpack.c.l.b16 %v3458
    %v4240 = vunpack.c.h.b16 %v3458
    %v4241 = vunpack.c.l.b16 %v3459
    %v4242 = vunpack.c.h.b16 %v3459
    %v4243 = vunpack.c.l.b16 %v3460
    %v4244 = vunpack.c.h.b16 %v3460
    %v4245 = vunpack.c.l.b16 %v3461
    %v4246 = vunpack.c.h.b16 %v3461
    %v4247 = vunpack.c.l.b16 %v3462
    %v4248 = vunpack.c.h.b16 %v3462
    %v4249 = vunpack.c.l.b16 %v3463
    %v4250 = vunpack.c.h.b16 %v3463
    %v4251 = vunpack.c.l.b16 %v3464
    %v4252 = vunpack.c.h.b16 %v3464
    %v4253 = vunpack.c.l.b16 %v3465
    %v4254 = vunpack.c.h.b16 %v3465
    %v4255 = vunpack.c.l.b16 %v3466
    %v4256 = vunpack.c.h.b16 %v3466
    %v4257 = vunpack.c.l.b16 %v3467
    %v4258 = vunpack.c.h.b16 %v3467
    %v4259 = vunpack.c.l.b16 %v3468
    %v4260 = vunpack.c.h.b16 %v3468
    %v4261 = vunpack.c.l.b16 %v3469
    %v4262 = vunpack.c.h.b16 %v3469
    %v4263 = vunpack.c.l.b16 %v3470
    %v4264 = vunpack.c.h.b16 %v3470
    %v4265 = vunpack.c.l.b16 %v3471
    %v4266 = vunpack.c.h.b16 %v3471
    %v4267 = vunpack.c.l.b16 %v3472
    %v4268 = vunpack.c.h.b16 %v3472
    %v4269 = vunpack.c.l.b16 %v3473
    %v4270 = vunpack.c.h.b16 %v3473
    %v4271 = vunpack.c.l.b16 %v3474
    %v4272 = vunpack.c.h.b16 %v3474
    %v4273 = vunpack.c.l.b16 %v3475
    %v4274 = vunpack.c.h.b16 %v3475
    %v4275 = vunpack.c.l.b16 %v3476
    %v4276 = vunpack.c.h.b16 %v3476
    %v4277 = vunpack.c.l.b16 %v3477
    %v4278 = vunpack.c.h.b16 %v3477
    %v4279 = vunpack.c.l.b16 %v3478
    %v4280 = vunpack.c.h.b16 %v3478
    %v4281 = vunpack.c.l.b16 %v3479
    %v4282 = vunpack.c.h.b16 %v3479
    %v4283 = vunpack.c.l.b16 %v3480
    %v4284 = vunpack.c.h.b16 %v3480
    %v4285 = vunpack.c.l.b16 %v3481
    %v4286 = vunpack.c.h.b16 %v3481
    %v4287 = vunpack.c.l.b16 %v3482
    %v4288 = vunpack.c.h.b16 %v3482
    %v4289 = vunpack.c.l.b16 %v3483
    %v4290 = vunpack.c.h.b16 %v3483
    %v4291 = vunpack.c.l.b16 %v3484
    %v4292 = vunpack.c.h.b16 %v3484
    %v4293 = vunpack.c.l.b16 %v3485
    %v4294 = vunpack.c.h.b16 %v3485
    %v4295 = vunpack.c.l.b16 %v3486
    %v4296 = vunpack.c.h.b16 %v3486
    %v4297 = vunpack.c.l.b16 %v3487
    %v4298 = vunpack.c.h.b16 %v3487
    %v4299 = vunpack.c.l.b16 %v3488
    %v4300 = vunpack.c.h.b16 %v3488
    %v4301 = vunpack.c.l.b16 %v3489
    %v4302 = vunpack.c.h.b16 %v3489
    %v4303 = vunpack.c.l.b16 %v3490
    %v4304 = vunpack.c.h.b16 %v3490
    %v4305 = vunpack.c.l.b16 %v3491
    %v4306 = vunpack.c.h.b16 %v3491
    %v4307 = vunpack.c.l.b16 %v3492
    %v4308 = vunpack.c.h.b16 %v3492
    %v4309 = vunpack.c.l.b16 %v3493
    %v4310 = vunpack.c.h.b16 %v3493
    %v4311 = vunpack.c.l.b16 %v3494
    %v4312 = vunpack.c.h.b16 %v3494
    %v4313 = vunpack.c.l.b16 %v3495
    %v4314 = vunpack.c.h.b16 %v3495
    %v4315 = vunpack.c.l.b16 %v3496
    %v4316 = vunpack.c.h.b16 %v3496
    %v4317 = vunpack.c.l.b16 %v3497
    %v4318 = vunpack.c.h.b16 %v3497
    %v4319 = vunpack.c.l.b16 %v3498
    %v4320 = vunpack.c.h.b16 %v3498
    %v4321 = vunpack.c.l.b16 %v3499
    %v4322 = vunpack.c.h.b16 %v3499
    %v4323 = vunpack.c.l.b16 %v3500
    %v4324 = vunpack.c.h.b16 %v3500
    %v4325 = vunpack.c.l.b16 %v3501
    %v4326 = vunpack.c.h.b16 %v3501
    %v4327 = vunpack.c.l.b16 %v3502
    %v4328 = vunpack.c.h.b16 %v3502
    %v4329 = vunpack.c.l.b16 %v3503
    %v4330 = vunpack.c.h.b16 %v3503
    %v4331 = vunpack.c.l.b16 %v3504
    %v4332 = vunpack.c.h.b16 %v3504
    %v4333 = vunpack.c.l.b16 %v3505
    %v4334 = vunpack.c.h.b16 %v3505
    %v4335 = vunpack.c.l.b16 %v3506
    %v4336 = vunpack.c.h.b16 %v3506
    %v4337 = vunpack.c.l.b16 %v3507
    %v4338 = vunpack.c.h.b16 %v3507
    %v4339 = vunpack.c.l.b16 %v3508
    %v4340 = vunpack.c.h.b16 %v3508
    %v4341 = vunpack.c.l.b16 %v3509
    %v4342 = vunpack.c.h.b16 %v3509
    %v4343 = vunpack.c.l.b16 %v3510
    %v4344 = vunpack.c.h.b16 %v3510
    %v4345 = vunpack.c.l.b16 %v3511
    %v4346 = vunpack.c.h.b16 %v3511
    %v4347 = vunpack.c.l.b16 %v3512
    %v4348 = vunpack.c.h.b16 %v3512
    %v4349 = vunpack.c.l.b16 %v3513
    %v4350 = vunpack.c.h.b16 %v3513
    %v4351 = vunpack.c.l.b16 %v3514
    %v4352 = vunpack.c.h.b16 %v3514
    %v4353 = vunpack.c.l.b16 %v3515
    %v4354 = vunpack.c.h.b16 %v3515
    %v4355 = vunpack.c.l.b16 %v3516
    %v4356 = vunpack.c.h.b16 %v3516
    %v4357 = vunpack.c.l.b16 %v3517
    %v4358 = vunpack.c.h.b16 %v3517
    %v4359 = vunpack.c.l.b16 %v3518
    %v4360 = vunpack.c.h.b16 %v3518
    %v4361 = vunpack.c.l.b16 %v3519
    %v4362 = vunpack.c.h.b16 %v3519
    %v4363 = vunpack.c.l.b16 %v3520
    %v4364 = vunpack.c.h.b16 %v3520
    %v4365 = vunpack.c.l.b16 %v3521
    %v4366 = vunpack.c.h.b16 %v3521
    %v4367 = vunpack.c.l.b16 %v3522
    %v4368 = vunpack.c.h.b16 %v3522
    %v4369 = vunpack.c.l.b16 %v3523
    %v4370 = vunpack.c.h.b16 %v3523
    %v4371 = vunpack.c.l.b16 %v3524
    %v4372 = vunpack.c.h.b16 %v3524
    %v4373 = vunpack.c.l.b16 %v3525
    %v4374 = vunpack.c.h.b16 %v3525
    %v4375 = vunpack.c.l.b16 %v3526
    %v4376 = vunpack.c.h.b16 %v3526
    %v4377 = vunpack.c.l.b16 %v3527
    %v4378 = vunpack.c.h.b16 %v3527
    %v4379 = vunpack.c.l.b16 %v3528
    %v4380 = vunpack.c.h.b16 %v3528
    %v4381 = vunpack.c.l.b16 %v3529
    %v4382 = vunpack.c.h.b16 %v3529
    %v4383 = vunpack.c.l.b16 %v3530
    %v4384 = vunpack.c.h.b16 %v3530
    %v4385 = vunpack.c.l.b16 %v3531
    %v4386 = vunpack.c.h.b16 %v3531
    %v4387 = vunpack.c.l.b16 %v3532
    %v4388 = vunpack.c.h.b16 %v3532
    %v4389 = vunpack.c.l.b16 %v3533
    %v4390 = vunpack.c.h.b16 %v3533
    %v4391 = vunpack.c.l.b16 %v3534
    %v4392 = vunpack.c.h.b16 %v3534
    %v4393 = vunpack.c.l.b16 %v3535
    %v4394 = vunpack.c.h.b16 %v3535
    %v4395 = vunpack.c.l.b16 %v3536
    %v4396 = vunpack.c.h.b16 %v3536
    %v4397 = vunpack.c.l.b16 %v3537
    %v4398 = vunpack.c.h.b16 %v3537
    %v4399 = vunpack.c.l.b16 %v3538
    %v4400 = vunpack.c.h.b16 %v3538
    %v4401 = vunpack.c.l.b16 %v3539
    %v4402 = vunpack.c.h.b16 %v3539
    %v4403 = vunpack.c.l.b16 %v3540
    %v4404 = vunpack.c.h.b16 %v3540
    %v4405 = vunpack.c.l.b16 %v3541
    %v4406 = vunpack.c.h.b16 %v3541
    %v4407 = vunpack.c.l.b16 %v3542
    %v4408 = vunpack.c.h.b16 %v3542
    %v4409 = vunpack.c.l.b16 %v3543
    %v4410 = vunpack.c.h.b16 %v3543
    %v4411 = vunpack.c.l.b16 %v3544
    %v4412 = vunpack.c.h.b16 %v3544
    %v4413 = vunpack.c.l.b16 %v3545
    %v4414 = vunpack.c.h.b16 %v3545
    %v4415 = vunpack.c.l.b16 %v3546
    %v4416 = vunpack.c.h.b16 %v3546
    %v4417 = vunpack.c.l.b16 %v3547
    %v4418 = vunpack.c.h.b16 %v3547
    %v4419 = vunpack.c.l.b16 %v3548
    %v4420 = vunpack.c.h.b16 %v3548
    %v4421 = vunpack.c.l.b16 %v3549
    %v4422 = vunpack.c.h.b16 %v3549
    %v4423 = vunpack.c.l.b16 %v3550
    %v4424 = vunpack.c.h.b16 %v3550
    %v4425 = vunpack.c.l.b16 %v3551
    %v4426 = vunpack.c.h.b16 %v3551
    %v4427 = vunpack.c.l.b16 %v3552
    %v4428 = vunpack.c.h.b16 %v3552
    %v4429 = vunpack.c.l.b16 %v3553
    %v4430 = vunpack.c.h.b16 %v3553
    %v4431 = vunpack.c.l.b16 %v3554
    %v4432 = vunpack.c.h.b16 %v3554
    %v4433 = vunpack.c.l.b16 %v3555
    %v4434 = vunpack.c.h.b16 %v3555
    %v4435 = vunpack.c.l.b16 %v3556
    %v4436 = vunpack.c.h.b16 %v3556
    %v4437 = vunpack.c.l.b16 %v3557
    %v4438 = vunpack.c.h.b16 %v3557
    %v4439 = vunpack.c.l.b16 %v3558
    %v4440 = vunpack.c.h.b16 %v3558
    %v4441 = vunpack.c.l.b16 %v3559
    %v4442 = vunpack.c.h.b16 %v3559
    %v4443 = vunpack.c.l.b16 %v3560
    %v4444 = vunpack.c.h.b16 %v3560
    %v4445 = vunpack.c.l.b16 %v3561
    %v4446 = vunpack.c.h.b16 %v3561
    %v4447 = vunpack.c.l.b16 %v3562
    %v4448 = vunpack.c.h.b16 %v3562
    %v4449 = vunpack.c.l.b16 %v3563
    %v4450 = vunpack.c.h.b16 %v3563
    %v4451 = vunpack.c.l.b16 %v3564
    %v4452 = vunpack.c.h.b16 %v3564
    %v4453 = vunpack.c.l.b16 %v3565
    %v4454 = vunpack.c.h.b16 %v3565
    %v4455 = vunpack.c.l.b16 %v3566
    %v4456 = vunpack.c.h.b16 %v3566
    %v4457 = vunpack.c.l.b16 %v3567
    %v4458 = vunpack.c.h.b16 %v3567
    %v4459 = vunpack.c.l.b16 %v3568
    %v4460 = vunpack.c.h.b16 %v3568
    %v4461 = vunpack.c.l.b16 %v3569
    %v4462 = vunpack.c.h.b16 %v3569
    %v4463 = vunpack.c.l.b16 %v3570
    %v4464 = vunpack.c.h.b16 %v3570
    %v4465 = vunpack.c.l.b16 %v3571
    %v4466 = vunpack.c.h.b16 %v3571
    %v4467 = vunpack.c.l.b16 %v3572
    %v4468 = vunpack.c.h.b16 %v3572
    %v4469 = vunpack.c.l.b16 %v3573
    %v4470 = vunpack.c.h.b16 %v3573
    %v4471 = vunpack.c.l.b16 %v3574
    %v4472 = vunpack.c.h.b16 %v3574
    %v4473 = vunpack.c.l.b16 %v3575
    %v4474 = vunpack.c.h.b16 %v3575
    %v4475 = vunpack.c.l.b16 %v3576
    %v4476 = vunpack.c.h.b16 %v3576
    %v4477 = vunpack.c.l.b16 %v3577
    %v4478 = vunpack.c.h.b16 %v3577
    %v4479 = vunpack.c.l.b16 %v3578
    %v4480 = vunpack.c.h.b16 %v3578
    %v4481 = vunpack.c.l.b16 %v3579
    %v4482 = vunpack.c.h.b16 %v3579
    %v4483 = vunpack.c.l.b16 %v3580
    %v4484 = vunpack.c.h.b16 %v3580
    %v4485 = vunpack.c.l.b16 %v3581
    %v4486 = vunpack.c.h.b16 %v3581
    %v4487 = vunpack.c.l.b16 %v3582
    %v4488 = vunpack.c.h.b16 %v3582
    %v4489 = vunpack.c.l.b16 %v3583
    %v4490 = vunpack.c.h.b16 %v3583
    %v4491 = vunpack.c.l.b16 %v3584
    %v4492 = vunpack.c.h.b16 %v3584
    %v4493 = vunpack.c.l.b16 %v3585
    %v4494 = vunpack.c.h.b16 %v3585
    %v4495 = vunpack.c.l.b16 %v3586
    %v4496 = vunpack.c.h.b16 %v3586
    %v4497 = vunpack.c.l.b16 %v3587
    %v4498 = vunpack.c.h.b16 %v3587
    %v4499 = vunpack.c.l.b16 %v3588
    %v4500 = vunpack.c.h.b16 %v3588
    %v4501 = vunpack.c.l.b16 %v3589
    %v4502 = vunpack.c.h.b16 %v3589
    %v4503 = vunpack.c.l.b16 %v3590
    %v4504 = vunpack.c.h.b16 %v3590
    %v4505 = vunpack.c.l.b16 %v3591
    %v4506 = vunpack.c.h.b16 %v3591
    %v4507 = vunpack.c.l.b16 %v3592
    %v4508 = vunpack.c.h.b16 %v3592
    %v4509 = vunpack.c.l.b16 %v3593
    %v4510 = vunpack.c.h.b16 %v3593
    %v4511 = vunpack.c.l.b16 %v3594
    %v4512 = vunpack.c.h.b16 %v3594
    %v4513 = vunpack.c.l.b16 %v3595
    %v4514 = vunpack.c.h.b16 %v3595
    %v4515 = vunpack.c.l.b16 %v3596
    %v4516 = vunpack.c.h.b16 %v3596
    %v4517 = vunpack.c.l.b16 %v3597
    %v4518 = vunpack.c.h.b16 %v3597
    %v4519 = vunpack.c.l.b16 %v3598
    %v4520 = vunpack.c.h.b16 %v3598
    %v4521 = vunpack.c.l.b16 %v3599
    %v4522 = vunpack.c.h.b16 %v3599
    %v4523 = vunpack.c.l.b16 %v3600
    %v4524 = vunpack.c.h.b16 %v3600
    %v4525 = vunpack.c.l.b16 %v3601
    %v4526 = vunpack.c.h.b16 %v3601
    %v4527 = vunpack.c.l.b16 %v3602
    %v4528 = vunpack.c.h.b16 %v3602
    %v4529 = vunpack.c.l.b16 %v3603
    %v4530 = vunpack.c.h.b16 %v3603
    %v4531 = vunpack.c.l.b16 %v3604
    %v4532 = vunpack.c.h.b16 %v3604
    %v4533 = vunpack.c.l.b16 %v3605
    %v4534 = vunpack.c.h.b16 %v3605
    %v4535 = vunpack.c.l.b16 %v3606
    %v4536 = vunpack.c.h.b16 %v3606
    %v4537 = vunpack.c.l.b16 %v3607
    %v4538 = vunpack.c.h.b16 %v3607
    %v4539 = vunpack.c.l.b16 %v3608
    %v4540 = vunpack.c.h.b16 %v3608
    %v4541 = vunpack.c.l.b16 %v3609
    %v4542 = vunpack.c.h.b16 %v3609
    %v4543 = vunpack.c.l.b16 %v3610
    %v4544 = vunpack.c.h.b16 %v3610
    %v4545 = vunpack.c.l.b16 %v3611
    %v4546 = vunpack.c.h.b16 %v3611
    %v4547 = vunpack.c.l.b16 %v3612
    %v4548 = vunpack.c.h.b16 %v3612
    %v4549 = vunpack.c.l.b16 %v3613
    %v4550 = vunpack.c.h.b16 %v3613
    %v4551 = vunpack.c.l.b16 %v3614
    %v4552 = vunpack.c.h.b16 %v3614
    %v4553 = vunpack.c.l.b16 %v3615
    %v4554 = vunpack.c.h.b16 %v3615
    %v4555 = vunpack.c.l.b16 %v3616
    %v4556 = vunpack.c.h.b16 %v3616
    %v4557 = vunpack.c.l.b16 %v3617
    %v4558 = vunpack.c.h.b16 %v3617
    %v4559 = vunpack.c.l.b16 %v3618
    %v4560 = vunpack.c.h.b16 %v3618
    %v4561 = vunpack.c.l.b16 %v3619
    %v4562 = vunpack.c.h.b16 %v3619
    %v4563 = vunpack.c.l.b16 %v3620
    %v4564 = vunpack.c.h.b16 %v3620
    %v4565 = vunpack.c.l.b16 %v3621
    %v4566 = vunpack.c.h.b16 %v3621
    %v4567 = vunpack.c.l.b16 %v3622
    %v4568 = vunpack.c.h.b16 %v3622
    %v4569 = vunpack.c.l.b16 %v3623
    %v4570 = vunpack.c.h.b16 %v3623
    %v4571 = vunpack.c.l.b16 %v3624
    %v4572 = vunpack.c.h.b16 %v3624
    %v4573 = vunpack.c.l.b16 %v3625
    %v4574 = vunpack.c.h.b16 %v3625
    %v4575 = vunpack.c.l.b16 %v3626
    %v4576 = vunpack.c.h.b16 %v3626
    %v4577 = vunpack.c.l.b16 %v3627
    %v4578 = vunpack.c.h.b16 %v3627
    %v4579 = vunpack.c.l.b16 %v3628
    %v4580 = vunpack.c.h.b16 %v3628
    %v4581 = vunpack.c.l.b16 %v3629
    %v4582 = vunpack.c.h.b16 %v3629
    %v4583 = vunpack.c.l.b16 %v3630
    %v4584 = vunpack.c.h.b16 %v3630
    %v4585 = vunpack.c.l.b16 %v3631
    %v4586 = vunpack.c.h.b16 %v3631
    %v4587 = vunpack.c.l.b16 %v3632
    %v4588 = vunpack.c.h.b16 %v3632
    %v4589 = vunpack.c.l.b16 %v3633
    %v4590 = vunpack.c.h.b16 %v3633
    %v4591 = vunpack.c.l.b16 %v3634
    %v4592 = vunpack.c.h.b16 %v3634
    %v4593 = vunpack.c.l.b16 %v3635
    %v4594 = vunpack.c.h.b16 %v3635
    %v4595 = vunpack.c.l.b16 %v3636
    %v4596 = vunpack.c.h.b16 %v3636
    %v4597 = vunpack.c.l.b16 %v3637
    %v4598 = vunpack.c.h.b16 %v3637
    %v4599 = vunpack.c.l.b16 %v3638
    %v4600 = vunpack.c.h.b16 %v3638
    %v4601 = vunpack.c.l.b16 %v3639
    %v4602 = vunpack.c.h.b16 %v3639
    %v4603 = vunpack.c.l.b16 %v3640
    %v4604 = vunpack.c.h.b16 %v3640
    %v4605 = vunpack.c.l.b16 %v3641
    %v4606 = vunpack.c.h.b16 %v3641
    %v4607 = vunpack.c.l.b16 %v3642
    %v4608 = vunpack.c.h.b16 %v3642
    %v4609 = vunpack.c.l.b16 %v3643
    %v4610 = vunpack.c.h.b16 %v3643
    %v4611 = vunpack.c.l.b16 %v3644
    %v4612 = vunpack.c.h.b16 %v3644
    %v4613 = vunpack.c.l.b16 %v3645
    %v4614 = vunpack.c.h.b16 %v3645
    %v4615 = vunpack.c.l.b16 %v3646
    %v4616 = vunpack.c.h.b16 %v3646
    %v4617 = vunpack.c.l.b16 %v3647
    %v4618 = vunpack.c.h.b16 %v3647
    %v4619 = vunpack.c.l.b16 %v3648
    %v4620 = vunpack.c.h.b16 %v3648
    %v4621 = vunpack.c.l.b16 %v3649
    %v4622 = vunpack.c.h.b16 %v3649
    %v4623 = vunpack.c.l.b16 %v3650
    %v4624 = vunpack.c.h.b16 %v3650
    %v4625 = vunpack.c.l.b16 %v3651
    %v4626 = vunpack.c.h.b16 %v3651
    %v4627 = vunpack.c.l.b16 %v3652
    %v4628 = vunpack.c.h.b16 %v3652
    %v4629 = vunpack.c.l.b16 %v3653
    %v4630 = vunpack.c.h.b16 %v3653
    %v4631 = vunpack.c.l.b16 %v3654
    %v4632 = vunpack.c.h.b16 %v3654
    %v4633 = vunpack.c.l.b16 %v3655
    %v4634 = vunpack.c.h.b16 %v3655
    %v4635 = vunpack.c.l.b16 %v3656
    %v4636 = vunpack.c.h.b16 %v3656
    %v4637 = vunpack.c.l.b16 %v3657
    %v4638 = vunpack.c.h.b16 %v3657
    %v4639 = vunpack.c.l.b16 %v3658
    %v4640 = vunpack.c.h.b16 %v3658
    %v4641 = vunpack.c.l.b16 %v3659
    %v4642 = vunpack.c.h.b16 %v3659
    %v4643 = vunpack.c.l.b16 %v3660
    %v4644 = vunpack.c.h.b16 %v3660
    %v4645 = vunpack.c.l.b16 %v3661
    %v4646 = vunpack.c.h.b16 %v3661
    %v4647 = vunpack.c.l.b16 %v3662
    %v4648 = vunpack.c.h.b16 %v3662
    %v4649 = vunpack.c.l.b16 %v3663
    %v4650 = vunpack.c.h.b16 %v3663
    %v4651 = vunpack.c.l.b16 %v3664
    %v4652 = vunpack.c.h.b16 %v3664
    %v4653 = vunpack.c.l.b16 %v3665
    %v4654 = vunpack.c.h.b16 %v3665
    %v4655 = vunpack.c.l.b16 %v3666
    %v4656 = vunpack.c.h.b16 %v3666
    %v4657 = vunpack.c.l.b16 %v3667
    %v4658 = vunpack.c.h.b16 %v3667
    %v4659 = vunpack.c.l.b16 %v3668
    %v4660 = vunpack.c.h.b16 %v3668
    %v4661 = vunpack.c.l.b16 %v3669
    %v4662 = vunpack.c.h.b16 %v3669
    %v4663 = vunpack.c.l.b16 %v3670
    %v4664 = vunpack.c.h.b16 %v3670
    %v4665 = vunpack.c.l.b16 %v3671
    %v4666 = vunpack.c.h.b16 %v3671
    %v4667 = vunpack.c.l.b16 %v3672
    %v4668 = vunpack.c.h.b16 %v3672
    %v4669 = vunpack.c.l.b16 %v3673
    %v4670 = vunpack.c.h.b16 %v3673
    %v4671 = vunpack.c.l.b16 %v3674
    %v4672 = vunpack.c.h.b16 %v3674
    %v4673 = vunpack.c.l.b16 %v3675
    %v4674 = vunpack.c.h.b16 %v3675
    %v4675 = vunpack.c.l.b16 %v3676
    %v4676 = vunpack.c.h.b16 %v3676
    %v4677 = vunpack.c.l.b16 %v3677
    %v4678 = vunpack.c.h.b16 %v3677
    %v4679 = vunpack.c.l.b16 %v3678
    %v4680 = vunpack.c.h.b16 %v3678
    %v4681 = vunpack.c.l.b16 %v3679
    %v4682 = vunpack.c.h.b16 %v3679
    %v4683 = vunpack.c.l.b16 %v3680
    %v4684 = vunpack.c.h.b16 %v3680
    %v4685 = vunpack.c.l.b16 %v3681
    %v4686 = vunpack.c.h.b16 %v3681
    %v4687 = vunpack.c.l.b16 %v3682
    %v4688 = vunpack.c.h.b16 %v3682
    %v4689 = vunpack.c.l.b16 %v3683
    %v4690 = vunpack.c.h.b16 %v3683
    %v4691 = vunpack.c.l.b16 %v3684
    %v4692 = vunpack.c.h.b16 %v3684
    %v4693 = vunpack.c.l.b16 %v3685
    %v4694 = vunpack.c.h.b16 %v3685
    %v4695 = vunpack.c.l.b16 %v3686
    %v4696 = vunpack.c.h.b16 %v3686
    %v4697 = vunpack.c.l.b16 %v3687
    %v4698 = vunpack.c.h.b16 %v3687
    %v4699 = vunpack.c.l.b16 %v3688
    %v4700 = vunpack.c.h.b16 %v3688
    %v4701 = vunpack.c.l.b16 %v3689
    %v4702 = vunpack.c.h.b16 %v3689
    %v4703 = vunpack.c.l.b16 %v3690
    %v4704 = vunpack.c.h.b16 %v3690
    %v4705 = vunpack.c.l.b16 %v3691
    %v4706 = vunpack.c.h.b16 %v3691
    %v4707 = vunpack.c.l.b16 %v3692
    %v4708 = vunpack.c.h.b16 %v3692
    %v4709 = vunpack.c.l.b16 %v3693
    %v4710 = vunpack.c.h.b16 %v3693
    %v4711 = vunpack.c.l.b16 %v3694
    %v4712 = vunpack.c.h.b16 %v3694
    %v4713 = vunpack.c.l.b16 %v3695
    %v4714 = vunpack.c.h.b16 %v3695
    %v4715 = vunpack.c.l.b16 %v3696
    %v4716 = vunpack.c.h.b16 %v3696
    %v4717 = vunpack.c.l.b16 %v3697
    %v4718 = vunpack.c.h.b16 %v3697
    %v4719 = vunpack.c.l.b16 %v3698
    %v4720 = vunpack.c.h.b16 %v3698
    %v4721 = vunpack.c.l.b16 %v3699
    %v4722 = vunpack.c.h.b16 %v3699
    %v4723 = vunpack.c.l.b16 %v3700
    %v4724 = vunpack.c.h.b16 %v3700
    %v4725 = vunpack.c.l.b16 %v3701
    %v4726 = vunpack.c.h.b16 %v3701
    %v4727 = vunpack.c.l.b16 %v3702
    %v4728 = vunpack.c.h.b16 %v3702
    %v4729 = vunpack.c.l.b16 %v3703
    %v4730 = vunpack.c.h.b16 %v3703
    %v4731 = vunpack.c.l.b16 %v3704
    %v4732 = vunpack.c.h.b16 %v3704
    %v4733 = vunpack.c.l.b16 %v3705
    %v4734 = vunpack.c.h.b16 %v3705
    %v4735 = vunpack.c.l.b16 %v3706
    %v4736 = vunpack.c.h.b16 %v3706
    %v4737 = vunpack.c.l.b16 %v3707
    %v4738 = vunpack.c.h.b16 %v3707
    %v4739 = vunpack.c.l.b16 %v3708
    %v4740 = vunpack.c.h.b16 %v3708
    %v4741 = vunpack.c.l.b16 %v3709
    %v4742 = vunpack.c.h.b16 %v3709
    %v4743 = vunpack.c.l.b16 %v3710
    %v4744 = vunpack.c.h.b16 %v3710
    %v4745 = vunpack.c.l.b16 %v3711
    %v4746 = vunpack.c.h.b16 %v3711
    %v4747 = vunpack.c.l.b16 %v3712
    %v4748 = vunpack.c.h.b16 %v3712
    %v4749 = vunpack.c.l.b16 %v3713
    %v4750 = vunpack.c.h.b16 %v3713
    %v4751 = vunpack.c.l.b16 %v3714
    %v4752 = vunpack.c.h.b16 %v3714
    %v4753 = vunpack.c.l.b16 %v3715
    %v4754 = vunpack.c.h.b16 %v3715
    %v4755 = vunpack.c.l.b16 %v3716
    %v4756 = vunpack.c.h.b16 %v3716
    %v4757 = vunpack.c.l.b16 %v3717
    %v4758 = vunpack.c.h.b16 %v3717
    %v4759 = vunpack.c.l.b16 %v3718
    %v4760 = vunpack.c.h.b16 %v3718
    %v4761 = vunpack.c.l.b16 %v3719
    %v4762 = vunpack.c.h.b16 %v3719
    %v4763 = vunpack.c.l.b16 %v3720
    %v4764 = vunpack.c.h.b16 %v3720
    %v4765 = vpack.c.b16 %v4191, %v4189
    %v4766 = vpack.c.b16 %v4192, %v4190
    %v4767 = vpack.c.b16 %v4195, %v4193
    %v4768 = vpack.c.b16 %v4196, %v4194
    %v4769 = vpack.c.b16 %v4199, %v4197
    %v4770 = vpack.c.b16 %v4200, %v4198
    %v4771 = vpack.c.b16 %v4203, %v4201
    %v4772 = vpack.c.b16 %v4204, %v4202
    %v4773 = vpack.c.b16 %v4207, %v4205
    %v4774 = vpack.c.b16 %v4208, %v4206
    %v4775 = vpack.c.b16 %v4211, %v4209
    %v4776 = vpack.c.b16 %v4212, %v4210
    %v4777 = vpack.c.b16 %v4215, %v4213
    %v4778 = vpack.c.b16 %v4216, %v4214
    %v4779 = vpack.c.b16 %v4219, %v4217
    %v4780 = vpack.c.b16 %v4220, %v4218
    %v4781 = vpack.c.b16 %v4223, %v4221
    %v4782 = vpack.c.b16 %v4224, %v4222
    %v4783 = vpack.c.b16 %v4227, %v4225
    %v4784 = vpack.c.b16 %v4228, %v4226
    %v4785 = vpack.c.b16 %v4231, %v4229
    %v4786 = vpack.c.b16 %v4232, %v4230
    %v4787 = vpack.c.b16 %v4235, %v4233
    %v4788 = vpack.c.b16 %v4236, %v4234
    %v4789 = vpack.c.b16 %v4239, %v4237
    %v4790 = vpack.c.b16 %v4240, %v4238
    %v4791 = vpack.c.b16 %v4243, %v4241
    %v4792 = vpack.c.b16 %v4244, %v4242
    %v4793 = vpack.c.b16 %v4247, %v4245
    %v4794 = vpack.c.b16 %v4248, %v4246
    %v4795 = vpack.c.b16 %v4251, %v4249
    %v4796 = vpack.c.b16 %v4252, %v4250
    %v4797 = vpack.c.b16 %v4255, %v4253
    %v4798 = vpack.c.b16 %v4256, %v4254
    %v4799 = vpack.c.b16 %v4259, %v4257
    %v4800 = vpack.c.b16 %v4260, %v4258
    %v4801 = vpack.c.b16 %v4263, %v4261
    %v4802 = vpack.c.b16 %v4264, %v4262
    %v4803 = vpack.c.b16 %v4267, %v4265
    %v4804 = vpack.c.b16 %v4268, %v4266
    %v4805 = vpack.c.b16 %v4271, %v4269
    %v4806 = vpack.c.b16 %v4272, %v4270
    %v4807 = vpack.c.b16 %v4275, %v4273
    %v4808 = vpack.c.b16 %v4276, %v4274
    %v4809 = vpack.c.b16 %v4279, %v4277
    %v4810 = vpack.c.b16 %v4280, %v4278
    %v4811 = vpack.c.b16 %v4283, %v4281
    %v4812 = vpack.c.b16 %v4284, %v4282
    %v4813 = vpack.c.b16 %v4287, %v4285
    %v4814 = vpack.c.b16 %v4288, %v4286
    %v4815 = vpack.c.b16 %v4291, %v4289
    %v4816 = vpack.c.b16 %v4292, %v4290
    %v4817 = vpack.c.b16 %v4295, %v4293
    %v4818 = vpack.c.b16 %v4296, %v4294
    %v4819 = vpack.c.b16 %v4299, %v4297
    %v4820 = vpack.c.b16 %v4300, %v4298
    %v4821 = vpack.c.b16 %v4303, %v4301
    %v4822 = vpack.c.b16 %v4304, %v4302
    %v4823 = vpack.c.b16 %v4307, %v4305
    %v4824 = vpack.c.b16 %v4308, %v4306
    %v4825 = vpack.c.b16 %v4311, %v4309
    %v4826 = vpack.c.b16 %v4312, %v4310
    %v4827 = vpack.c.b16 %v4315, %v4313
    %v4828 = vpack.c.b16 %v4316, %v4314
    %v4829 = vpack.c.b16 %v4319, %v4317
    %v4830 = vpack.c.b16 %v4320, %v4318
    %v4831 = vpack.c.b16 %v4323, %v4321
    %v4832 = vpack.c.b16 %v4324, %v4322
    %v4833 = vpack.c.b16 %v4327, %v4325
    %v4834 = vpack.c.b16 %v4328, %v4326
    %v4835 = vpack.c.b16 %v4331, %v4329
    %v4836 = vpack.c.b16 %v4332, %v4330
    %v4837 = vpack.c.b16 %v4335, %v4333
    %v4838 = vpack.c.b16 %v4336, %v4334
    %v4839 = vpack.c.b16 %v4339, %v4337
    %v4840 = vpack.c.b16 %v4340, %v4338
    %v4841 = vpack.c.b16 %v4343, %v4341
    %v4842 = vpack.c.b16 %v4344, %v4342
    %v4843 = vpack.c.b16 %v4347, %v4345
    %v4844 = vpack.c.b16 %v4348, %v4346
    %v4845 = vpack.c.b16 %v4351, %v4349
    %v4846 = vpack.c.b16 %v4352, %v4350
    %v4847 = vpack.c.b16 %v4355, %v4353
    %v4848 = vpack.c.b16 %v4356, %v4354
    %v4849 = vpack.c.b16 %v4359, %v4357
    %v4850 = vpack.c.b16 %v4360, %v4358
    %v4851 = vpack.c.b16 %v4363, %v4361
    %v4852 = vpack.c.b16 %v4364, %v4362
    %v4853 = vpack.c.b16 %v4367, %v4365
    %v4854 = vpack.c.b16 %v4368, %v4366
    %v4855 = vpack.c.b16 %v4371, %v4369
    %v4856 = vpack.c.b16 %v4372, %v4370
    %v4857 = vpack.c.b16 %v4375, %v4373
    %v4858 = vpack.c.b16 %v4376, %v4374
    %v4859 = vpack.c.b16 %v4379, %v4377
    %v4860 = vpack.c.b16 %v4380, %v4378
    %v4861 = vpack.c.b16 %v4383, %v4381
    %v4862 = vpack.c.b16 %v4384, %v4382
    %v4863 = vpack.c.b16 %v4387, %v4385
    %v4864 = vpack.c.b16 %v4388, %v4386
    %v4865 = vpack.c.b16 %v4391, %v4389
    %v4866 = vpack.c.b16 %v4392, %v4390
    %v4867 = vpack.c.b16 %v4395, %v4393
    %v4868 = vpack.c.b16 %v4396, %v4394
    %v4869 = vpack.c.b16 %v4399, %v4397
    %v4870 = vpack.c.b16 %v4400, %v4398
    %v4871 = vpack.c.b16 %v4403, %v4401
    %v4872 = vpack.c.b16 %v4404, %v4402
    %v4873 = vpack.c.b16 %v4407, %v4405
    %v4874 = vpack.c.b16 %v4408, %v4406
    %v4875 = vpack.c.b16 %v4411, %v4409
    %v4876 = vpack.c.b16 %v4412, %v4410
    %v4877 = vpack.c.b16 %v4415, %v4413
    %v4878 = vpack.c.b16 %v4416, %v4414
    %v4879 = vpack.c.b16 %v4419, %v4417
    %v4880 = vpack.c.b16 %v4420, %v4418
    %v4881 = vpack.c.b16 %v4423, %v4421
    %v4882 = vpack.c.b16 %v4424, %v4422
    %v4883 = vpack.c.b16 %v4427, %v4425
    %v4884 = vpack.c.b16 %v4428, %v4426
    %v4885 = vpack.c.b16 %v4431, %v4429
    %v4886 = vpack.c.b16 %v4432, %v4430
    %v4887 = vpack.c.b16 %v4435, %v4433
    %v4888 = vpack.c.b16 %v4436, %v4434
    %v4889 = vpack.c.b16 %v4439, %v4437
    %v4890 = vpack.c.b16 %v4440, %v4438
    %v4891 = vpack.c.b16 %v4443, %v4441
    %v4892 = vpack.c.b16 %v4444, %v4442
    %v4893 = vpack.c.b16 %v4447, %v4445
    %v4894 = vpack.c.b16 %v4448, %v4446
    %v4895 = vpack.c.b16 %v4451, %v4449
    %v4896 = vpack.c.b16 %v4452, %v4450
    %v4897 = vpack.c.b16 %v4455, %v4453
    %v4898 = vpack.c.b16 %v4456, %v4454
    %v4899 = vpack.c.b16 %v4459, %v4457
    %v4900 = vpack.c.b16 %v4460, %v4458
    %v4901 = vpack.c.b16 %v4463, %v4461
    %v4902 = vpack.c.b16 %v4464, %v4462
    %v4903 = vpack.c.b16 %v4467, %v4465
    %v4904 = vpack.c.b16 %v4468, %v4466
    %v4905 = vpack.c.b16 %v4471, %v4469
    %v4906 = vpack.c.b16 %v4472, %v4470
    %v4907 = vpack.c.b16 %v4475, %v4473
    %v4908 = vpack.c.b16 %v4476, %v4474
    %v4909 = vpack.c.b16 %v4479, %v4477
    %v4910 = vpack.c.b16 %v4480, %v4478
    %v4911 = vpack.c.b16 %v4483, %v4481
    %v4912 = vpack.c.b16 %v4484, %v4482
    %v4913 = vpack.c.b16 %v4487, %v4485
    %v4914 = vpack.c.b16 %v4488, %v4486
    %v4915 = vpack.c.b16 %v4491, %v4489
    %v4916 = vpack.c.b16 %v4492, %v4490
    %v4917 = vpack.c.b16 %v4495, %v4493
    %v4918 = vpack.c.b16 %v4496, %v4494
    %v4919 = vpack.c.b16 %v4499, %v4497
    %v4920 = vpack.c.b16 %v4500, %v4498
    %v4921 = vpack.c.b16 %v4503, %v4501
    %v4922 = vpack.c.b16 %v4504, %v4502
    %v4923 = vpack.c.b16 %v4507, %v4505
    %v4924 = vpack.c.b16 %v4508, %v4506
    %v4925 = vpack.c.b16 %v4511, %v4509
    %v4926 = vpack.c.b16 %v4512, %v4510
    %v4927 = vpack.c.b16 %v4515, %v4513
    %v4928 = vpack.c.b16 %v4516, %v4514
    %v4929 = vpack.c.b16 %v4519, %v4517
    %v4930 = vpack.c.b16 %v4520, %v4518
    %v4931 = vpack.c.b16 %v4523, %v4521
    %v4932 = vpack.c.b16 %v4524, %v4522
    %v4933 = vpack.c.b16 %v4527, %v4525
    %v4934 = vpack.c.b16 %v4528, %v4526
    %v4935 = vpack.c.b16 %v4531, %v4529
    %v4936 = vpack.c.b16 %v4532, %v4530
    %v4937 = vpack.c.b16 %v4535, %v4533
    %v4938 = vpack.c.b16 %v4536, %v4534
    %v4939 = vpack.c.b16 %v4539, %v4537
    %v4940 = vpack.c.b16 %v4540, %v4538
    %v4941 = vpack.c.b16 %v4543, %v4541
    %v4942 = vpack.c.b16 %v4544, %v4542
    %v4943 = vpack.c.b16 %v4547, %v4545
    %v4944 = vpack.c.b16 %v4548, %v4546
    %v4945 = vpack.c.b16 %v4551, %v4549
    %v4946 = vpack.c.b16 %v4552, %v4550
    %v4947 = vpack.c.b16 %v4555, %v4553
    %v4948 = vpack.c.b16 %v4556, %v4554
    %v4949 = vpack.c.b16 %v4559, %v4557
    %v4950 = vpack.c.b16 %v4560, %v4558
    %v4951 = vpack.c.b16 %v4563, %v4561
    %v4952 = vpack.c.b16 %v4564, %v4562
    %v4953 = vpack.c.b16 %v4567, %v4565
    %v4954 = vpack.c.b16 %v4568, %v4566
    %v4955 = vpack.c.b16 %v4571, %v4569
    %v4956 = vpack.c.b16 %v4572, %v4570
    %v4957 = vpack.c.b16 %v4575, %v4573
    %v4958 = vpack.c.b16 %v4576, %v4574
    %v4959 = vpack.c.b16 %v4579, %v4577
    %v4960 = vpack.c.b16 %v4580, %v4578
    %v4961 = vpack.c.b16 %v4583, %v4581
    %v4962 = vpack.c.b16 %v4584, %v4582
    %v4963 = vpack.c.b16 %v4587, %v4585
    %v4964 = vpack.c.b16 %v4588, %v4586
    %v4965 = vpack.c.b16 %v4591, %v4589
    %v4966 = vpack.c.b16 %v4592, %v4590
    %v4967 = vpack.c.b16 %v4595, %v4593
    %v4968 = vpack.c.b16 %v4596, %v4594
    %v4969 = vpack.c.b16 %v4599, %v4597
    %v4970 = vpack.c.b16 %v4600, %v4598
    %v4971 = vpack.c.b16 %v4603, %v4601
    %v4972 = vpack.c.b16 %v4604, %v4602
    %v4973 = vpack.c.b16 %v4607, %v4605
    %v4974 = vpack.c.b16 %v4608, %v4606
    %v4975 = vpack.c.b16 %v4611, %v4609
    %v4976 = vpack.c.b16 %v4612, %v4610
    %v4977 = vpack.c.b16 %v4615, %v4613
    %v4978 = vpack.c.b16 %v4616, %v4614
    %v4979 = vpack.c.b16 %v4619, %v4617
    %v4980 = vpack.c.b16 %v4620, %v4618
    %v4981 = vpack.c.b16 %v4623, %v4621
    %v4982 = vpack.c.b16 %v4624, %v4622
    %v4983 = vpack.c.b16 %v4627, %v4625
    %v4984 = vpack.c.b16 %v4628, %v4626
    %v4985 = vpack.c.b16 %v4631, %v4629
    %v4986 = vpack.c.b16 %v4632, %v4630
    %v4987 = vpack.c.b16 %v4635, %v4633
    %v4988 = vpack.c.b16 %v4636, %v4634
    %v4989 = vpack.c.b16 %v4639, %v4637
    %v4990 = vpack.c.b16 %v4640, %v4638
    %v4991 = vpack.c.b16 %v4643, %v4641
    %v4992 = vpack.c.b16 %v4644, %v4642
    %v4993 = vpack.c.b16 %v4647, %v4645
    %v4994 = vpack.c.b16 %v4648, %v4646
    %v4995 = vpack.c.b16 %v4651, %v4649
    %v4996 = vpack.c.b16 %v4652, %v4650
    %v4997 = vpack.c.b16 %v4655, %v4653
    %v4998 = vpack.c.b16 %v4656, %v4654
    %v4999 = vpack.c.b16 %v4659, %v4657
    %v5000 = vpack.c.b16 %v4660, %v4658
    %v5001 = vpack.c.b16 %v4663, %v4661
    %v5002 = vpack.c.b16 %v4664, %v4662
    %v5003 = vpack.c.b16 %v4667, %v4665
    %v5004 = vpack.c.b16 %v4668, %v4666
    %v5005 = vpack.c.b16 %v4671, %v4669
    %v5006 = vpack.c.b16 %v4672, %v4670
    %v5007 = vpack.c.b16 %v4675, %v4673
    %v5008 = vpack.c.b16 %v4676, %v4674
    %v5009 = vpack.c.b16 %v4679, %v4677
    %v5010 = vpack.c.b16 %v4680, %v4678
    %v5011 = vpack.c.b16 %v4683, %v4681
    %v5012 = vpack.c.b16 %v4684, %v4682
    %v5013 = vpack.c.b16 %v4687, %v4685
    %v5014 = vpack.c.b16 %v4688, %v4686
    %v5015 = vpack.c.b16 %v4691, %v4689
    %v5016 = vpack.c.b16 %v4692, %v4690
    %v5017 = vpack.c.b16 %v4695, %v4693
    %v5018 = vpack.c.b16 %v4696, %v4694
    %v5019 = vpack.c.b16 %v4699, %v4697
    %v5020 = vpack.c.b16 %v4700, %v4698
    %v5021 = vpack.c.b16 %v4703, %v4701
    %v5022 = vpack.c.b16 %v4704, %v4702
    %v5023 = vpack.c.b16 %v4707, %v4705
    %v5024 = vpack.c.b16 %v4708, %v4706
    %v5025 = vpack.c.b16 %v4711, %v4709
    %v5026 = vpack.c.b16 %v4712, %v4710
    %v5027 = vpack.c.b16 %v4715, %v4713
    %v5028 = vpack.c.b16 %v4716, %v4714
    %v5029 = vpack.c.b16 %v4719, %v4717
    %v5030 = vpack.c.b16 %v4720, %v4718
    %v5031 = vpack.c.b16 %v4723, %v4721
    %v5032 = vpack.c.b16 %v4724, %v4722
    %v5033 = vpack.c.b16 %v4727, %v4725
    %v5034 = vpack.c.b16 %v4728, %v4726
    %v5035 = vpack.c.b16 %v4731, %v4729
    %v5036 = vpack.c.b16 %v4732, %v4730
    %v5037 = vpack.c.b16 %v4735, %v4733
    %v5038 = vpack.c.b16 %v4736, %v4734
    %v5039 = vpack.c.b16 %v4739, %v4737
    %v5040 = vpack.c.b16 %v4740, %v4738
    %v5041 = vpack.c.b16 %v4743, %v4741
    %v5042 = vpack.c.b16 %v4744, %v4742
    %v5043 = vpack.c.b16 %v4747, %v4745
    %v5044 = vpack.c.b16 %v4748, %v4746
    %v5045 = vpack.c.b16 %v4751, %v4749
    %v5046 = vpack.c.b16 %v4752, %v4750
    %v5047 = vpack.c.b16 %v4755, %v4753
    %v5048 = vpack.c.b16 %v4756, %v4754
    %v5049 = vpack.c.b16 %v4759, %v4757
    %v5050 = vpack.c.b16 %v4760, %v4758
    %v5051 = vpack.c.b16 %v4763, %v4761
    %v5052 = vpack.c.b16 %v4764, %v4762
    %5341 = vmatprep.subr.bf16.mxu0 %v4766
    %5342 = vmatpush1.bf16.msra.mxu0 %v4765
    %5343 = vmatprep.subr.bf16.mxu0 %v4768
    %5344 = vmatpush1.bf16.msra.mxu0 %v4767
    %5345 = vmatprep.subr.bf16.mxu0 %v4770
    %5346 = vmatpush1.bf16.msra.mxu0 %v4769
    %5347 = vmatprep.subr.bf16.mxu0 %v4772
    %5348 = vmatpush1.bf16.msra.mxu0 %v4771
    %5349 = vmatprep.subr.bf16.mxu0 %v4774
    %5350 = vmatpush1.bf16.msra.mxu0 %v4773
    %5351 = vmatprep.subr.bf16.mxu0 %v4776
    %5352 = vmatpush1.bf16.msra.mxu0 %v4775
    %5353 = vmatprep.subr.bf16.mxu0 %v4778
    %5354 = vmatpush1.bf16.msra.mxu0 %v4777
    %5355 = vmatprep.subr.bf16.mxu0 %v4780
    %5356 = vmatpush1.bf16.msra.mxu0 %v4779
    %5357 = vmatprep.subr.bf16.mxu0 %v4782
    %5358 = vmatpush1.bf16.msra.mxu0 %v4781
    %5359 = vmatprep.subr.bf16.mxu0 %v4784
    %5360 = vmatpush1.bf16.msra.mxu0 %v4783
    %5361 = vmatprep.subr.bf16.mxu0 %v4786
    %5362 = vmatpush1.bf16.msra.mxu0 %v4785
    %5363 = vmatprep.subr.bf16.mxu0 %v4788
    %5364 = vmatpush1.bf16.msra.mxu0 %v4787
    %5365 = vmatprep.subr.bf16.mxu0 %v4790
    %5366 = vmatpush1.bf16.msra.mxu0 %v4789
    %5367 = vmatprep.subr.bf16.mxu0 %v4792
    %5368 = vmatpush1.bf16.msra.mxu0 %v4791
    %5369 = vmatprep.subr.bf16.mxu0 %v4794
    %5370 = vmatpush1.bf16.msra.mxu0 %v4793
    %5371 = vmatprep.subr.bf16.mxu0 %v4796
    %5372 = vmatpush1.bf16.msra.mxu0 %v4795
    %5373 = vmatprep.mubr.bf16.mxu0 %v3866
    %5374 = vmatmul.mubr.bf16.gmra.mrb[0].mxu0 %v3865
    %v5375 = vpop.f32.mrb[0].mxu0
    %v5376 = vadd.f32 0.0, %v5375
    %v5377 = vpop.f32.mrb[0].mxu0
    %v5378 = vadd.f32 0.0, %v5377
    %v5379 = vpop.f32.mrb[0].mxu0
    %v5380 = vadd.f32 0.0, %v5379
    %v5381 = vpop.f32.mrb[0].mxu0
    %v5382 = vadd.f32 0.0, %v5381
    %5383 = vmatprep.mubr.bf16.mxu0 %v3884
    %5384 = vmatmul.mubr.bf16.gmra.mrb[0].mxu0 %v3883
    %v5385 = vpop.f32.mrb[0].mxu0
    %v5386 = vadd.f32 0.0, %v5385
    %v5387 = vpop.f32.mrb[0].mxu0
    %v5388 = vadd.f32 0.0, %v5387
    %v5389 = vpop.f32.mrb[0].mxu0
    %v5390 = vadd.f32 0.0, %v5389
    %v5391 = vpop.f32.mrb[0].mxu0
    %v5392 = vadd.f32 0.0, %v5391
    %5393 = vdwg.mxu0
    %5394 = vmatprep.subr.bf16.mxu0 %v4798
    %5395 = vmatpush1.bf16.msra.mxu0 %v4797
    %5396 = vmatprep.subr.bf16.mxu0 %v4800
    %5397 = vmatpush1.bf16.msra.mxu0 %v4799
    %5398 = vmatprep.subr.bf16.mxu0 %v4802
    %5399 = vmatpush1.bf16.msra.mxu0 %v4801
    %5400 = vmatprep.subr.bf16.mxu0 %v4804
    %5401 = vmatpush1.bf16.msra.mxu0 %v4803
    %5402 = vmatprep.subr.bf16.mxu0 %v4806
    %5403 = vmatpush1.bf16.msra.mxu0 %v4805
    %5404 = vmatprep.subr.bf16.mxu0 %v4808
    %5405 = vmatpush1.bf16.msra.mxu0 %v4807
    %5406 = vmatprep.subr.bf16.mxu0 %v4810
    %5407 = vmatpush1.bf16.msra.mxu0 %v4809
    %5408 = vmatprep.subr.bf16.mxu0 %v4812
    %5409 = vmatpush1.bf16.msra.mxu0 %v4811
    %5410 = vmatprep.subr.bf16.mxu0 %v4814
    %5411 = vmatpush1.bf16.msra.mxu0 %v4813
    %5412 = vmatprep.subr.bf16.mxu0 %v4816
    %5413 = vmatpush1.bf16.msra.mxu0 %v4815
    %5414 = vmatprep.subr.bf16.mxu0 %v4818
    %5415 = vmatpush1.bf16.msra.mxu0 %v4817
    %5416 = vmatprep.subr.bf16.mxu0 %v4820
    %5417 = vmatpush1.bf16.msra.mxu0 %v4819
    %5418 = vmatprep.subr.bf16.mxu0 %v4822
    %5419 = vmatpush1.bf16.msra.mxu0 %v4821
    %5420 = vmatprep.subr.bf16.mxu0 %v4824
    %5421 = vmatpush1.bf16.msra.mxu0 %v4823
    %5422 = vmatprep.subr.bf16.mxu0 %v4826
    %5423 = vmatpush1.bf16.msra.mxu0 %v4825
    %5424 = vmatprep.subr.bf16.mxu0 %v4828
    %5425 = vmatpush1.bf16.msra.mxu0 %v4827
    %5426 = vmatprep.mubr.bf16.mxu0 %v3868
    %5427 = vmatmul.mubr.bf16.gmra.mrb[0].mxu0 %v3867
    %v5428 = vpop.f32.mrb[0].mxu0
    %v5429 = vadd.f32 %v5376, %v5428
    %v5430 = vpop.f32.mrb[0].mxu0
    %v5431 = vadd.f32 %v5378, %v5430
    %v5432 = vpop.f32.mrb[0].mxu0
    %v5433 = vadd.f32 %v5380, %v5432
    %v5434 = vpop.f32.mrb[0].mxu0
    %v5435 = vadd.f32 %v5382, %v5434
    %5436 = vmatprep.mubr.bf16.mxu0 %v3886
    %5437 = vmatmul.mubr.bf16.gmra.mrb[0].mxu0 %v3885
    %v5438 = vpop.f32.mrb[0].mxu0
    %v5439 = vadd.f32 %v5386, %v5438
    %v5440 = vpop.f32.mrb[0].mxu0
    %v5441 = vadd.f32 %v5388, %v5440
    %v5442 = vpop.f32.mrb[0].mxu0
    %v5443 = vadd.f32 %v5390, %v5442
    %v5444 = vpop.f32.mrb[0].mxu0
    %v5445 = vadd.f32 %v5392, %v5444
    %5446 = vdwg.mxu0
    %5447 = vmatprep.subr.bf16.mxu0 %v4830
    %5448 = vmatpush1.bf16.msra.mxu0 %v4829
    %5449 = vmatprep.subr.bf16.mxu0 %v4832
    %5450 = vmatpush1.bf16.msra.mxu0 %v4831
    %5451 = vmatprep.subr.bf16.mxu0 %v4834
    %5452 = vmatpush1.bf16.msra.mxu0 %v4833
    %5453 = vmatprep.subr.bf16.mxu0 %v4836
    %5454 = vmatpush1.bf16.msra.mxu0 %v4835
    %5455 = vmatprep.subr.bf16.mxu0 %v4838
    %5456 = vmatpush1.bf16.msra.mxu0 %v4837
    %5457 = vmatprep.subr.bf16.mxu0 %v4840
    %5458 = vmatpush1.bf16.msra.mxu0 %v4839
    %5459 = vmatprep.subr.bf16.mxu0 %v4842
    %5460 = vmatpush1.bf16.msra.mxu0 %v4841
    %5461 = vmatprep.subr.bf16.mxu0 %v4844
    %5462 = vmatpush1.bf16.msra.mxu0 %v4843
    %5463 = vmatprep.subr.bf16.mxu0 %v4846
    %5464 = vmatpush1.bf16.msra.mxu0 %v4845
    %5465 = vmatprep.subr.bf16.mxu0 %v4848
    %5466 = vmatpush1.bf16.msra.mxu0 %v4847
    %5467 = vmatprep.subr.bf16.mxu0 %v4850
    %5468 = vmatpush1.bf16.msra.mxu0 %v4849
    %5469 = vmatprep.subr.bf16.mxu0 %v4852
    %5470 = vmatpush1.bf16.msra.mxu0 %v4851
    %5471 = vmatprep.subr.bf16.mxu0 %v4854
    %5472 = vmatpush1.bf16.msra.mxu0 %v4853
    %5473 = vmatprep.subr.bf16.mxu0 %v4856
    %5474 = vmatpush1.bf16.msra.mxu0 %v4855
    %5475 = vmatprep.subr.bf16.mxu0 %v4858
    %5476 = vmatpush1.bf16.msra.mxu0 %v4857
    %5477 = vmatprep.subr.bf16.mxu0 %v4860
    %5478 = vmatpush1.bf16.msra.mxu0 %v4859
    %5479 = vmatprep.mubr.bf16.mxu0 %v3870
    %5480 = vmatmul.mubr.bf16.gmra.mrb[0].mxu0 %v3869
    %v5481 = vpop.f32.mrb[0].mxu0
    %v5482 = vadd.f32 %v5429, %v5481
    %v5483 = vpop.f32.mrb[0].mxu0
    %v5484 = vadd.f32 %v5431, %v5483
    %v5485 = vpop.f32.mrb[0].mxu0
    %v5486 = vadd.f32 %v5433, %v5485
    %v5487 = vpop.f32.mrb[0].mxu0
    %v5488 = vadd.f32 %v5435, %v5487
    %5489 = vmatprep.mubr.bf16.mxu0 %v3888
    %5490 = vmatmul.mubr.bf16.gmra.mrb[0].mxu0 %v3887
    %v5491 = vpop.f32.mrb[0].mxu0
    %v5492 = vadd.f32 %v5439, %v5491
    %v5493 = vpop.f32.mrb[0].mxu0
    %v5494 = vadd.f32 %v5441, %v5493
    %v5495 = vpop.f32.mrb[0].mxu0
    %v5496 = vadd.f32 %v5443, %v5495
    %v5497 = vpop.f32.mrb[0].mxu0
    %v5498 = vadd.f32 %v5445, %v5497
    %5499 = vdwg.mxu0
    %5500 = vmatprep.subr.bf16.mxu0 %v4862
    %5501 = vmatpush1.bf16.msra.mxu0 %v4861
    %5502 = vmatprep.subr.bf16.mxu0 %v4864
    %5503 = vmatpush1.bf16.msra.mxu0 %v4863
    %5504 = vmatprep.subr.bf16.mxu0 %v4866
    %5505 = vmatpush1.bf16.msra.mxu0 %v4865
    %5506 = vmatprep.subr.bf16.mxu0 %v4868
    %5507 = vmatpush1.bf16.msra.mxu0 %v4867
    %5508 = vmatprep.subr.bf16.mxu0 %v4870
    %5509 = vmatpush1.bf16.msra.mxu0 %v4869
    %5510 = vmatprep.subr.bf16.mxu0 %v4872
    %5511 = vmatpush1.bf16.msra.mxu0 %v4871
    %5512 = vmatprep.subr.bf16.mxu0 %v4874
    %5513 = vmatpush1.bf16.msra.mxu0 %v4873
    %5514 = vmatprep.subr.bf16.mxu0 %v4876
    %5515 = vmatpush1.bf16.msra.mxu0 %v4875
    %5516 = vmatprep.subr.bf16.mxu0 %v4878
    %5517 = vmatpush1.bf16.msra.mxu0 %v4877
    %5518 = vmatprep.subr.bf16.mxu0 %v4880
    %5519 = vmatpush1.bf16.msra.mxu0 %v4879
    %5520 = vmatprep.subr.bf16.mxu0 %v4882
    %5521 = vmatpush1.bf16.msra.mxu0 %v4881
    %5522 = vmatprep.subr.bf16.mxu0 %v4884
    %5523 = vmatpush1.bf16.msra.mxu0 %v4883
    %5524 = vmatprep.subr.bf16.mxu0 %v4886
    %5525 = vmatpush1.bf16.msra.mxu0 %v4885
    %5526 = vmatprep.subr.bf16.mxu0 %v4888
    %5527 = vmatpush1.bf16.msra.mxu0 %v4887
    %5528 = vmatprep.subr.bf16.mxu0 %v4890
    %5529 = vmatpush1.bf16.msra.mxu0 %v4889
    %5530 = vmatprep.subr.bf16.mxu0 %v4892
    %5531 = vmatpush1.bf16.msra.mxu0 %v4891
    %5532 = vmatprep.mubr.bf16.mxu0 %v3872
    %5533 = vmatmul.mubr.bf16.gmra.mrb[0].mxu0 %v3871
    %v5534 = vpop.f32.mrb[0].mxu0
    %v5535 = vadd.f32 %v5482, %v5534
    %v5536 = vpop.f32.mrb[0].mxu0
    %v5537 = vadd.f32 %v5484, %v5536
    %v5538 = vpop.f32.mrb[0].mxu0
    %v5539 = vadd.f32 %v5486, %v5538
    %v5540 = vpop.f32.mrb[0].mxu0
    %v5541 = vadd.f32 %v5488, %v5540
    %5542 = vmatprep.mubr.bf16.mxu0 %v3890
    %5543 = vmatmul.mubr.bf16.gmra.mrb[0].mxu0 %v3889
    %v5544 = vpop.f32.mrb[0].mxu0
    %v5545 = vadd.f32 %v5492, %v5544
    %v5546 = vpop.f32.mrb[0].mxu0
    %v5547 = vadd.f32 %v5494, %v5546
    %v5548 = vpop.f32.mrb[0].mxu0
    %v5549 = vadd.f32 %v5496, %v5548
    %v5550 = vpop.f32.mrb[0].mxu0
    %v5551 = vadd.f32 %v5498, %v5550
    %5552 = vdwg.mxu0
    %5553 = vmatprep.subr.bf16.mxu0 %v4894
    %5554 = vmatpush1.bf16.msra.mxu0 %v4893
    %5555 = vmatprep.subr.bf16.mxu0 %v4896
    %5556 = vmatpush1.bf16.msra.mxu0 %v4895
    %5557 = vmatprep.subr.bf16.mxu0 %v4898
    %5558 = vmatpush1.bf16.msra.mxu0 %v4897
    %5559 = vmatprep.subr.bf16.mxu0 %v4900
    %5560 = vmatpush1.bf16.msra.mxu0 %v4899
    %5561 = vmatprep.subr.bf16.mxu0 %v4902
    %5562 = vmatpush1.bf16.msra.mxu0 %v4901
    %5563 = vmatprep.subr.bf16.mxu0 %v4904
    %5564 = vmatpush1.bf16.msra.mxu0 %v4903
    %5565 = vmatprep.subr.bf16.mxu0 %v4906
    %5566 = vmatpush1.bf16.msra.mxu0 %v4905
    %5567 = vmatprep.subr.bf16.mxu0 %v4908
    %5568 = vmatpush1.bf16.msra.mxu0 %v4907
    %5569 = vmatprep.subr.bf16.mxu0 %v4910
    %5570 = vmatpush1.bf16.msra.mxu0 %v4909
    %5571 = vmatprep.subr.bf16.mxu0 %v4912
    %5572 = vmatpush1.bf16.msra.mxu0 %v4911
    %5573 = vmatprep.subr.bf16.mxu0 %v4914
    %5574 = vmatpush1.bf16.msra.mxu0 %v4913
    %5575 = vmatprep.subr.bf16.mxu0 %v4916
    %5576 = vmatpush1.bf16.msra.mxu0 %v4915
    %5577 = vmatprep.subr.bf16.mxu0 %v4918
    %5578 = vmatpush1.bf16.msra.mxu0 %v4917
    %5579 = vmatprep.subr.bf16.mxu0 %v4920
    %5580 = vmatpush1.bf16.msra.mxu0 %v4919
    %5581 = vmatprep.subr.bf16.mxu0 %v4922
    %5582 = vmatpush1.bf16.msra.mxu0 %v4921
    %5583 = vmatprep.subr.bf16.mxu0 %v4924
    %5584 = vmatpush1.bf16.msra.mxu0 %v4923
    %5585 = vmatprep.mubr.bf16.mxu0 %v3874
    %5586 = vmatmul.mubr.bf16.gmra.mrb[0].mxu0 %v3873
    %v5587 = vpop.f32.mrb[0].mxu0
    %v5588 = vadd.f32 %v5535, %v5587
    %v5589 = vpop.f32.mrb[0].mxu0
    %v5590 = vadd.f32 %v5537, %v5589
    %v5591 = vpop.f32.mrb[0].mxu0
    %v5592 = vadd.f32 %v5539, %v5591
    %v5593 = vpop.f32.mrb[0].mxu0
    %v5594 = vadd.f32 %v5541, %v5593
    %5595 = vmatprep.mubr.bf16.mxu0 %v3892
    %5596 = vmatmul.mubr.bf16.gmra.mrb[0].mxu0 %v3891
    %v5597 = vpop.f32.mrb[0].mxu0
    %v5598 = vadd.f32 %v5545, %v5597
    %v5599 = vpop.f32.mrb[0].mxu0
    %v5600 = vadd.f32 %v5547, %v5599
    %v5601 = vpop.f32.mrb[0].mxu0
    %v5602 = vadd.f32 %v5549, %v5601
    %v5603 = vpop.f32.mrb[0].mxu0
    %v5604 = vadd.f32 %v5551, %v5603
    %5605 = vdwg.mxu0
    %5606 = vmatprep.subr.bf16.mxu0 %v4926
    %5607 = vmatpush1.bf16.msra.mxu0 %v4925
    %5608 = vmatprep.subr.bf16.mxu0 %v4928
    %5609 = vmatpush1.bf16.msra.mxu0 %v4927
    %5610 = vmatprep.subr.bf16.mxu0 %v4930
    %5611 = vmatpush1.bf16.msra.mxu0 %v4929
    %5612 = vmatprep.subr.bf16.mxu0 %v4932
    %5613 = vmatpush1.bf16.msra.mxu0 %v4931
    %5614 = vmatprep.subr.bf16.mxu0 %v4934
    %5615 = vmatpush1.bf16.msra.mxu0 %v4933
    %5616 = vmatprep.subr.bf16.mxu0 %v4936
    %5617 = vmatpush1.bf16.msra.mxu0 %v4935
    %5618 = vmatprep.subr.bf16.mxu0 %v4938
    %5619 = vmatpush1.bf16.msra.mxu0 %v4937
    %5620 = vmatprep.subr.bf16.mxu0 %v4940
    %5621 = vmatpush1.bf16.msra.mxu0 %v4939
    %5622 = vmatprep.subr.bf16.mxu0 %v4942
    %5623 = vmatpush1.bf16.msra.mxu0 %v4941
    %5624 = vmatprep.subr.bf16.mxu0 %v4944
    %5625 = vmatpush1.bf16.msra.mxu0 %v4943
    %5626 = vmatprep.subr.bf16.mxu0 %v4946
    %5627 = vmatpush1.bf16.msra.mxu0 %v4945
    %5628 = vmatprep.subr.bf16.mxu0 %v4948
    %5629 = vmatpush1.bf16.msra.mxu0 %v4947
    %5630 = vmatprep.subr.bf16.mxu0 %v4950
    %5631 = vmatpush1.bf16.msra.mxu0 %v4949
    %5632 = vmatprep.subr.bf16.mxu0 %v4952
    %5633 = vmatpush1.bf16.msra.mxu0 %v4951
    %5634 = vmatprep.subr.bf16.mxu0 %v4954
    %5635 = vmatpush1.bf16.msra.mxu0 %v4953
    %5636 = vmatprep.subr.bf16.mxu0 %v4956
    %5637 = vmatpush1.bf16.msra.mxu0 %v4955
    %5638 = vmatprep.mubr.bf16.mxu0 %v3876
    %5639 = vmatmul.mubr.bf16.gmra.mrb[0].mxu0 %v3875
    %v5640 = vpop.f32.mrb[0].mxu0
    %v5641 = vadd.f32 %v5588, %v5640
    %v5642 = vpop.f32.mrb[0].mxu0
    %v5643 = vadd.f32 %v5590, %v5642
    %v5644 = vpop.f32.mrb[0].mxu0
    %v5645 = vadd.f32 %v5592, %v5644
    %v5646 = vpop.f32.mrb[0].mxu0
    %v5647 = vadd.f32 %v5594, %v5646
    %5648 = vmatprep.mubr.bf16.mxu0 %v3894
    %5649 = vmatmul.mubr.bf16.gmra.mrb[0].mxu0 %v3893
    %v5650 = vpop.f32.mrb[0].mxu0
    %v5651 = vadd.f32 %v5598, %v5650
    %v5652 = vpop.f32.mrb[0].mxu0
    %v5653 = vadd.f32 %v5600, %v5652
    %v5654 = vpop.f32.mrb[0].mxu0
    %v5655 = vadd.f32 %v5602, %v5654
    %v5656 = vpop.f32.mrb[0].mxu0
    %v5657 = vadd.f32 %v5604, %v5656
    %5658 = vdwg.mxu0
    %5659 = vmatprep.subr.bf16.mxu0 %v4958
    %5660 = vmatpush1.bf16.msra.mxu0 %v4957
    %5661 = vmatprep.subr.bf16.mxu0 %v4960
    %5662 = vmatpush1.bf16.msra.mxu0 %v4959
    %5663 = vmatprep.subr.bf16.mxu0 %v4962
    %5664 = vmatpush1.bf16.msra.mxu0 %v4961
    %5665 = vmatprep.subr.bf16.mxu0 %v4964
    %5666 = vmatpush1.bf16.msra.mxu0 %v4963
    %5667 = vmatprep.subr.bf16.mxu0 %v4966
    %5668 = vmatpush1.bf16.msra.mxu0 %v4965
    %5669 = vmatprep.subr.bf16.mxu0 %v4968
    %5670 = vmatpush1.bf16.msra.mxu0 %v4967
    %5671 = vmatprep.subr.bf16.mxu0 %v4970
    %5672 = vmatpush1.bf16.msra.mxu0 %v4969
    %5673 = vmatprep.subr.bf16.mxu0 %v4972
    %5674 = vmatpush1.bf16.msra.mxu0 %v4971
    %5675 = vmatprep.subr.bf16.mxu0 %v4974
    %5676 = vmatpush1.bf16.msra.mxu0 %v4973
    %5677 = vmatprep.subr.bf16.mxu0 %v4976
    %5678 = vmatpush1.bf16.msra.mxu0 %v4975
    %5679 = vmatprep.subr.bf16.mxu0 %v4978
    %5680 = vmatpush1.bf16.msra.mxu0 %v4977
    %5681 = vmatprep.subr.bf16.mxu0 %v4980
    %5682 = vmatpush1.bf16.msra.mxu0 %v4979
    %5683 = vmatprep.subr.bf16.mxu0 %v4982
    %5684 = vmatpush1.bf16.msra.mxu0 %v4981
    %5685 = vmatprep.subr.bf16.mxu0 %v4984
    %5686 = vmatpush1.bf16.msra.mxu0 %v4983
    %5687 = vmatprep.subr.bf16.mxu0 %v4986
    %5688 = vmatpush1.bf16.msra.mxu0 %v4985
    %5689 = vmatprep.subr.bf16.mxu0 %v4988
    %5690 = vmatpush1.bf16.msra.mxu0 %v4987
    %5691 = vmatprep.mubr.bf16.mxu0 %v3878
    %5692 = vmatmul.mubr.bf16.gmra.mrb[0].mxu0 %v3877
    %v5693 = vpop.f32.mrb[0].mxu0
    %v5694 = vadd.f32 %v5641, %v5693
    %v5695 = vpop.f32.mrb[0].mxu0
    %v5696 = vadd.f32 %v5643, %v5695
    %v5697 = vpop.f32.mrb[0].mxu0
    %v5698 = vadd.f32 %v5645, %v5697
    %v5699 = vpop.f32.mrb[0].mxu0
    %v5700 = vadd.f32 %v5647, %v5699
    %5701 = vmatprep.mubr.bf16.mxu0 %v3896
    %5702 = vmatmul.mubr.bf16.gmra.mrb[0].mxu0 %v3895
    %v5703 = vpop.f32.mrb[0].mxu0
    %v5704 = vadd.f32 %v5651, %v5703
    %v5705 = vpop.f32.mrb[0].mxu0
    %v5706 = vadd.f32 %v5653, %v5705
    %v5707 = vpop.f32.mrb[0].mxu0
    %v5708 = vadd.f32 %v5655, %v5707
    %v5709 = vpop.f32.mrb[0].mxu0
    %v5710 = vadd.f32 %v5657, %v5709
    %5711 = vdwg.mxu0
    %5712 = vmatprep.subr.bf16.mxu0 %v4990
    %5713 = vmatpush1.bf16.msra.mxu0 %v4989
    %5714 = vmatprep.subr.bf16.mxu0 %v4992
    %5715 = vmatpush1.bf16.msra.mxu0 %v4991
    %5716 = vmatprep.subr.bf16.mxu0 %v4994
    %5717 = vmatpush1.bf16.msra.mxu0 %v4993
    %5718 = vmatprep.subr.bf16.mxu0 %v4996
    %5719 = vmatpush1.bf16.msra.mxu0 %v4995
    %5720 = vmatprep.subr.bf16.mxu0 %v4998
    %5721 = vmatpush1.bf16.msra.mxu0 %v4997
    %5722 = vmatprep.subr.bf16.mxu0 %v5000
    %5723 = vmatpush1.bf16.msra.mxu0 %v4999
    %5724 = vmatprep.subr.bf16.mxu0 %v5002
    %5725 = vmatpush1.bf16.msra.mxu0 %v5001
    %5726 = vmatprep.subr.bf16.mxu0 %v5004
    %5727 = vmatpush1.bf16.msra.mxu0 %v5003
    %5728 = vmatprep.subr.bf16.mxu0 %v5006
    %5729 = vmatpush1.bf16.msra.mxu0 %v5005
    %5730 = vmatprep.subr.bf16.mxu0 %v5008
    %5731 = vmatpush1.bf16.msra.mxu0 %v5007
    %5732 = vmatprep.subr.bf16.mxu0 %v5010
    %5733 = vmatpush1.bf16.msra.mxu0 %v5009
    %5734 = vmatprep.subr.bf16.mxu0 %v5012
    %5735 = vmatpush1.bf16.msra.mxu0 %v5011
    %5736 = vmatprep.subr.bf16.mxu0 %v5014
    %5737 = vmatpush1.bf16.msra.mxu0 %v5013
    %5738 = vmatprep.subr.bf16.mxu0 %v5016
    %5739 = vmatpush1.bf16.msra.mxu0 %v5015
    %5740 = vmatprep.subr.bf16.mxu0 %v5018
    %5741 = vmatpush1.bf16.msra.mxu0 %v5017
    %5742 = vmatprep.subr.bf16.mxu0 %v5020
    %5743 = vmatpush1.bf16.msra.mxu0 %v5019
    %5744 = vmatprep.mubr.bf16.mxu0 %v3880
    %5745 = vmatmul.mubr.bf16.gmra.mrb[0].mxu0 %v3879
    %v5746 = vpop.f32.mrb[0].mxu0
    %v5747 = vadd.f32 %v5694, %v5746
    %v5748 = vpop.f32.mrb[0].mxu0
    %v5749 = vadd.f32 %v5696, %v5748
    %v5750 = vpop.f32.mrb[0].mxu0
    %v5751 = vadd.f32 %v5698, %v5750
    %v5752 = vpop.f32.mrb[0].mxu0
    %v5753 = vadd.f32 %v5700, %v5752
    %5754 = vmatprep.mubr.bf16.mxu0 %v3898
    %5755 = vmatmul.mubr.bf16.gmra.mrb[0].mxu0 %v3897
    %v5756 = vpop.f32.mrb[0].mxu0
    %v5757 = vadd.f32 %v5704, %v5756
    %v5758 = vpop.f32.mrb[0].mxu0
    %v5759 = vadd.f32 %v5706, %v5758
    %v5760 = vpop.f32.mrb[0].mxu0
    %v5761 = vadd.f32 %v5708, %v5760
    %v5762 = vpop.f32.mrb[0].mxu0
    %v5763 = vadd.f32 %v5710, %v5762
    %5764 = vdwg.mxu0
    %5765 = vmatprep.subr.bf16.mxu0 %v5022
    %5766 = vmatpush1.bf16.msra.mxu0 %v5021
    %5767 = vmatprep.subr.bf16.mxu0 %v5024
    %5768 = vmatpush1.bf16.msra.mxu0 %v5023
    %5769 = vmatprep.subr.bf16.mxu0 %v5026
    %5770 = vmatpush1.bf16.msra.mxu0 %v5025
    %5771 = vmatprep.subr.bf16.mxu0 %v5028
    %5772 = vmatpush1.bf16.msra.mxu0 %v5027
    %5773 = vmatprep.subr.bf16.mxu0 %v5030
    %5774 = vmatpush1.bf16.msra.mxu0 %v5029
    %5775 = vmatprep.subr.bf16.mxu0 %v5032
    %5776 = vmatpush1.bf16.msra.mxu0 %v5031
    %5777 = vmatprep.subr.bf16.mxu0 %v5034
    %5778 = vmatpush1.bf16.msra.mxu0 %v5033
    %5779 = vmatprep.subr.bf16.mxu0 %v5036
    %5780 = vmatpush1.bf16.msra.mxu0 %v5035
    %5781 = vmatprep.subr.bf16.mxu0 %v5038
    %5782 = vmatpush1.bf16.msra.mxu0 %v5037
    %5783 = vmatprep.subr.bf16.mxu0 %v5040
    %5784 = vmatpush1.bf16.msra.mxu0 %v5039
    %5785 = vmatprep.subr.bf16.mxu0 %v5042
    %5786 = vmatpush1.bf16.msra.mxu0 %v5041
    %5787 = vmatprep.subr.bf16.mxu0 %v5044
    %5788 = vmatpush1.bf16.msra.mxu0 %v5043
    %5789 = vmatprep.subr.bf16.mxu0 %v5046
    %5790 = vmatpush1.bf16.msra.mxu0 %v5045
    %5791 = vmatprep.subr.bf16.mxu0 %v5048
    %5792 = vmatpush1.bf16.msra.mxu0 %v5047
    %5793 = vmatprep.subr.bf16.mxu0 %v5050
    %5794 = vmatpush1.bf16.msra.mxu0 %v5049
    %5795 = vmatprep.subr.bf16.mxu0 %v5052
    %5796 = vmatpush1.bf16.msra.mxu0 %v5051
    %5797 = vmatprep.mubr.bf16.mxu0 %v3882
    %5798 = vmatmul.mubr.bf16.gmra.mrb[0].mxu0 %v3881
    %v5799 = vpop.f32.mrb[0].mxu0
    %v5800 = vadd.f32 %v5747, %v5799
    %v5801 = vpop.f32.mrb[0].mxu0
    %v5802 = vadd.f32 %v5749, %v5801
    %v5803 = vpop.f32.mrb[0].mxu0
    %v5804 = vadd.f32 %v5751, %v5803
    %v5805 = vpop.f32.mrb[0].mxu0
    %v5806 = vadd.f32 %v5753, %v5805
    %5807 = vmatprep.mubr.bf16.mxu0 %v3900
    %5808 = vmatmul.mubr.bf16.gmra.mrb[0].mxu0 %v3899
    %v5809 = vpop.f32.mrb[0].mxu0
    %v5810 = vadd.f32 %v5757, %v5809
    %v5811 = vpop.f32.mrb[0].mxu0
    %v5812 = vadd.f32 %v5759, %v5811
    %v5813 = vpop.f32.mrb[0].mxu0
    %v5814 = vadd.f32 %v5761, %v5813
    %v5815 = vpop.f32.mrb[0].mxu0
    %v5816 = vadd.f32 %v5763, %v5815
    %5817 = vdwg.mxu0
    %v5818 = vmax.f32 %v5800, 0.0
    %v5819 = vmax.f32 %v5802, 0.0
    %v5820 = vmax.f32 %v5804, 0.0
    %v5821 = vmax.f32 %v5806, 0.0
    %v5822 = vmax.f32 %v5810, 0.0
    %v5823 = vmax.f32 %v5812, 0.0
    %v5824 = vmax.f32 %v5814, 0.0
    %v5825 = vmax.f32 %v5816, 0.0
    %v5826 = vpack.c.bf16 %v5820, %v5818
    %v5827 = vpack.c.bf16 %v5821, %v5819
    %v5828 = vpack.c.bf16 %v5824, %v5822
    %v5829 = vpack.c.bf16 %v5825, %v5823
    %v5830 = vld [vmem:[#allocation15] sm:$0xff]
    %v5831 = vld [vmem:[#allocation15 + $0x8] sm:$0xff]
    %v5832 = vld [vmem:[#allocation15 + $0x10] sm:$0xff]
    %v5833 = vld [vmem:[#allocation15 + $0x18] sm:$0xff]
    %v5834 = vld [vmem:[#allocation15 + $0x20] sm:$0xff]
    %v5835 = vld [vmem:[#allocation15 + $0x28] sm:$0xff]
    %v5836 = vld [vmem:[#allocation15 + $0x30] sm:$0xff]
    %v5837 = vld [vmem:[#allocation15 + $0x38] sm:$0xff]
    %v5838 = vld [vmem:[#allocation15 + $0x40] sm:$0xff]
    %v5839 = vld [vmem:[#allocation15 + $0x48] sm:$0xff]
    %v5840 = vld [vmem:[#allocation15 + $0x50] sm:$0xff]
    %v5841 = vld [vmem:[#allocation15 + $0x58] sm:$0xff]
    %v5842 = vld [vmem:[#allocation15 + $0x60] sm:$0xff]
    %v5843 = vld [vmem:[#allocation15 + $0x68] sm:$0xff]
    %v5844 = vld [vmem:[#allocation15 + $0x70] sm:$0xff]
    %v5845 = vld [vmem:[#allocation15 + $0x78] sm:$0xff]
    %v5846 = vld [vmem:[#allocation15 + $0x80] sm:$0xff]
    %v5847 = vld [vmem:[#allocation15 + $0x88] sm:$0xff]
    %v5848 = vld [vmem:[#allocation15 + $0x90] sm:$0xff]
    %v5849 = vld [vmem:[#allocation15 + $0x98] sm:$0xff]
    %v5850 = vld [vmem:[#allocation15 + $0xa0] sm:$0xff]
    %v5851 = vld [vmem:[#allocation15 + $0xa8] sm:$0xff]
    %v5852 = vld [vmem:[#allocation15 + $0xb0] sm:$0xff]
    %v5853 = vld [vmem:[#allocation15 + $0xb8] sm:$0xff]
    %v5854 = vld [vmem:[#allocation15 + $0xc0] sm:$0xff]
    %v5855 = vld [vmem:[#allocation15 + $0xc8] sm:$0xff]
    %v5856 = vld [vmem:[#allocation15 + $0xd0] sm:$0xff]
    %v5857 = vld [vmem:[#allocation15 + $0xd8] sm:$0xff]
    %v5858 = vld [vmem:[#allocation15 + $0xe0] sm:$0xff]
    %v5859 = vld [vmem:[#allocation15 + $0xe8] sm:$0xff]
    %v5860 = vld [vmem:[#allocation15 + $0xf0] sm:$0xff]
    %v5861 = vld [vmem:[#allocation15 + $0xf8] sm:$0xff]
    %v5894 = vunpack.c.l.b16 %v5830
    %v5895 = vunpack.c.h.b16 %v5830
    %v5896 = vunpack.c.l.b16 %v5831
    %v5897 = vunpack.c.h.b16 %v5831
    %v5898 = vunpack.c.l.b16 %v5832
    %v5899 = vunpack.c.h.b16 %v5832
    %v5900 = vunpack.c.l.b16 %v5833
    %v5901 = vunpack.c.h.b16 %v5833
    %v5902 = vunpack.c.l.b16 %v5834
    %v5903 = vunpack.c.h.b16 %v5834
    %v5904 = vunpack.c.l.b16 %v5835
    %v5905 = vunpack.c.h.b16 %v5835
    %v5906 = vunpack.c.l.b16 %v5836
    %v5907 = vunpack.c.h.b16 %v5836
    %v5908 = vunpack.c.l.b16 %v5837
    %v5909 = vunpack.c.h.b16 %v5837
    %v5910 = vunpack.c.l.b16 %v5838
    %v5911 = vunpack.c.h.b16 %v5838
    %v5912 = vunpack.c.l.b16 %v5839
    %v5913 = vunpack.c.h.b16 %v5839
    %v5914 = vunpack.c.l.b16 %v5840
    %v5915 = vunpack.c.h.b16 %v5840
    %v5916 = vunpack.c.l.b16 %v5841
    %v5917 = vunpack.c.h.b16 %v5841
    %v5918 = vunpack.c.l.b16 %v5842
    %v5919 = vunpack.c.h.b16 %v5842
    %v5920 = vunpack.c.l.b16 %v5843
    %v5921 = vunpack.c.h.b16 %v5843
    %v5922 = vunpack.c.l.b16 %v5844
    %v5923 = vunpack.c.h.b16 %v5844
    %v5924 = vunpack.c.l.b16 %v5845
    %v5925 = vunpack.c.h.b16 %v5845
    %v5926 = vunpack.c.l.b16 %v5846
    %v5927 = vunpack.c.h.b16 %v5846
    %v5928 = vunpack.c.l.b16 %v5847
    %v5929 = vunpack.c.h.b16 %v5847
    %v5930 = vunpack.c.l.b16 %v5848
    %v5931 = vunpack.c.h.b16 %v5848
    %v5932 = vunpack.c.l.b16 %v5849
    %v5933 = vunpack.c.h.b16 %v5849
    %v5934 = vunpack.c.l.b16 %v5850
    %v5935 = vunpack.c.h.b16 %v5850
    %v5936 = vunpack.c.l.b16 %v5851
    %v5937 = vunpack.c.h.b16 %v5851
    %v5938 = vunpack.c.l.b16 %v5852
    %v5939 = vunpack.c.h.b16 %v5852
    %v5940 = vunpack.c.l.b16 %v5853
    %v5941 = vunpack.c.h.b16 %v5853
    %v5942 = vunpack.c.l.b16 %v5854
    %v5943 = vunpack.c.h.b16 %v5854
    %v5944 = vunpack.c.l.b16 %v5855
    %v5945 = vunpack.c.h.b16 %v5855
    %v5946 = vunpack.c.l.b16 %v5856
    %v5947 = vunpack.c.h.b16 %v5856
    %v5948 = vunpack.c.l.b16 %v5857
    %v5949 = vunpack.c.h.b16 %v5857
    %v5950 = vunpack.c.l.b16 %v5858
    %v5951 = vunpack.c.h.b16 %v5858
    %v5952 = vunpack.c.l.b16 %v5859
    %v5953 = vunpack.c.h.b16 %v5859
    %v5954 = vunpack.c.l.b16 %v5860
    %v5955 = vunpack.c.h.b16 %v5860
    %v5956 = vunpack.c.l.b16 %v5861
    %v5957 = vunpack.c.h.b16 %v5861
    %v5958 = vpack.c.b16 %v5896, %v5894
    %v5959 = vpack.c.b16 %v5897, %v5895
    %v5960 = vpack.c.b16 %v5900, %v5898
    %v5961 = vpack.c.b16 %v5901, %v5899
    %v5962 = vpack.c.b16 %v5904, %v5902
    %v5963 = vpack.c.b16 %v5905, %v5903
    %v5964 = vpack.c.b16 %v5908, %v5906
    %v5965 = vpack.c.b16 %v5909, %v5907
    %v5966 = vpack.c.b16 %v5912, %v5910
    %v5967 = vpack.c.b16 %v5913, %v5911
    %v5968 = vpack.c.b16 %v5916, %v5914
    %v5969 = vpack.c.b16 %v5917, %v5915
    %v5970 = vpack.c.b16 %v5920, %v5918
    %v5971 = vpack.c.b16 %v5921, %v5919
    %v5972 = vpack.c.b16 %v5924, %v5922
    %v5973 = vpack.c.b16 %v5925, %v5923
    %v5974 = vpack.c.b16 %v5928, %v5926
    %v5975 = vpack.c.b16 %v5929, %v5927
    %v5976 = vpack.c.b16 %v5932, %v5930
    %v5977 = vpack.c.b16 %v5933, %v5931
    %v5978 = vpack.c.b16 %v5936, %v5934
    %v5979 = vpack.c.b16 %v5937, %v5935
    %v5980 = vpack.c.b16 %v5940, %v5938
    %v5981 = vpack.c.b16 %v5941, %v5939
    %v5982 = vpack.c.b16 %v5944, %v5942
    %v5983 = vpack.c.b16 %v5945, %v5943
    %v5984 = vpack.c.b16 %v5948, %v5946
    %v5985 = vpack.c.b16 %v5949, %v5947
    %v5986 = vpack.c.b16 %v5952, %v5950
    %v5987 = vpack.c.b16 %v5953, %v5951
    %v5988 = vpack.c.b16 %v5956, %v5954
    %v5989 = vpack.c.b16 %v5957, %v5955
    %6022 = vmatprep.subr.bf16.mxu0 %v5959
    %6023 = vmatpush1.bf16.msra.mxu0 %v5958
    %6024 = vmatprep.subr.bf16.mxu0 %v5961
    %6025 = vmatpush1.bf16.msra.mxu0 %v5960
    %6026 = vmatprep.subr.bf16.mxu0 %v5963
    %6027 = vmatpush1.bf16.msra.mxu0 %v5962
    %6028 = vmatprep.subr.bf16.mxu0 %v5965
    %6029 = vmatpush1.bf16.msra.mxu0 %v5964
    %6030 = vmatprep.subr.bf16.mxu0 %v5967
    %6031 = vmatpush1.bf16.msra.mxu0 %v5966
    %6032 = vmatprep.subr.bf16.mxu0 %v5969
    %6033 = vmatpush1.bf16.msra.mxu0 %v5968
    %6034 = vmatprep.subr.bf16.mxu0 %v5971
    %6035 = vmatpush1.bf16.msra.mxu0 %v5970
    %6036 = vmatprep.subr.bf16.mxu0 %v5973
    %6037 = vmatpush1.bf16.msra.mxu0 %v5972
    %6038 = vmatprep.subr.bf16.mxu0 %v5975
    %6039 = vmatpush1.bf16.msra.mxu0 %v5974
    %6040 = vmatprep.subr.bf16.mxu0 %v5977
    %6041 = vmatpush1.bf16.msra.mxu0 %v5976
    %6042 = vmatprep.subr.bf16.mxu0 %v5979
    %6043 = vmatpush1.bf16.msra.mxu0 %v5978
    %6044 = vmatprep.subr.bf16.mxu0 %v5981
    %6045 = vmatpush1.bf16.msra.mxu0 %v5980
    %6046 = vmatprep.subr.bf16.mxu0 %v5983
    %6047 = vmatpush1.bf16.msra.mxu0 %v5982
    %6048 = vmatprep.subr.bf16.mxu0 %v5985
    %6049 = vmatpush1.bf16.msra.mxu0 %v5984
    %6050 = vmatprep.subr.bf16.mxu0 %v5987
    %6051 = vmatpush1.bf16.msra.mxu0 %v5986
    %6052 = vmatprep.subr.bf16.mxu0 %v5989
    %6053 = vmatpush1.bf16.msra.mxu0 %v5988
    %6054 = vmatprep.mubr.bf16.mxu0 %v5827
    %6055 = vmatmul.mubr.bf16.gmra.mrb[0].mxu0 %v5826
    %v6056 = vpop.f32.mrb[0].mxu0
    %v6057 = vadd.f32 0.0, %v6056
    %v6058 = vpop.f32.mrb[0].mxu0
    %v6059 = vadd.f32 0.0, %v6058
    %v6060 = vpop.f32.mrb[0].mxu0
    %v6061 = vadd.f32 0.0, %v6060
    %v6062 = vpop.f32.mrb[0].mxu0
    %v6063 = vadd.f32 0.0, %v6062
    %6064 = vmatprep.mubr.bf16.mxu0 %v5829
    %6065 = vmatmul.mubr.bf16.gmra.mrb[0].mxu0 %v5828
    %v6066 = vpop.f32.mrb[0].mxu0
    %v6067 = vadd.f32 0.0, %v6066
    %v6068 = vpop.f32.mrb[0].mxu0
    %v6069 = vadd.f32 0.0, %v6068
    %v6070 = vpop.f32.mrb[0].mxu0
    %v6071 = vadd.f32 0.0, %v6070
    %v6072 = vpop.f32.mrb[0].mxu0
    %v6073 = vadd.f32 0.0, %v6072
    %6074 = vdwg.mxu0
    %v6075 = vadd.f32 %v3407, %v6057
    %v6076 = vadd.f32 %v3409, %v6059
    %v6077 = vadd.f32 %v3411, %v6061
    %v6078 = vadd.f32 %v3413, %v6063
    %v6079 = vadd.f32 %v3417, %v6067
    %v6080 = vadd.f32 %v3419, %v6069
    %v6081 = vadd.f32 %v3421, %v6071
    %v6082 = vadd.f32 %v3423, %v6073
    %v6083 = vmax.f32 %v6075, 0.0
    %v6084 = vmax.f32 %v6076, 0.0
    %v6085 = vmax.f32 %v6077, 0.0
    %v6086 = vmax.f32 %v6078, 0.0
    %v6087 = vmax.f32 %v6079, 0.0
    %v6088 = vmax.f32 %v6080, 0.0
    %v6089 = vmax.f32 %v6081, 0.0
    %v6090 = vmax.f32 %v6082, 0.0
    %s6091 = scalar_lea.vmem [#allocation13], 2304
    %v6092 = vld [vmem:[%s6091] sm:$0xff]
    %v6093 = vld [vmem:[%s6091 + $0x8] sm:$0xff]
    %v6094 = vld [vmem:[%s6091 + $0x10] sm:$0xff]
    %v6095 = vld [vmem:[%s6091 + $0x18] sm:$0xff]
    %v6096 = vld [vmem:[%s6091 + $0x20] sm:$0xff]
    %v6097 = vld [vmem:[%s6091 + $0x28] sm:$0xff]
    %v6098 = vld [vmem:[%s6091 + $0x30] sm:$0xff]
    %v6099 = vld [vmem:[%s6091 + $0x38] sm:$0xff]
    %v6100 = vld [vmem:[%s6091 + $0x40] sm:$0xff]
    %v6101 = vld [vmem:[%s6091 + $0x48] sm:$0xff]
    %v6102 = vld [vmem:[%s6091 + $0x50] sm:$0xff]
    %v6103 = vld [vmem:[%s6091 + $0x58] sm:$0xff]
    %v6104 = vld [vmem:[%s6091 + $0x60] sm:$0xff]
    %v6105 = vld [vmem:[%s6091 + $0x68] sm:$0xff]
    %v6106 = vld [vmem:[%s6091 + $0x70] sm:$0xff]
    %v6107 = vld [vmem:[%s6091 + $0x78] sm:$0xff]
    %v6108 = vld [vmem:[%s6091 + $0x80] sm:$0xff]
    %v6109 = vld [vmem:[%s6091 + $0x88] sm:$0xff]
    %v6110 = vld [vmem:[%s6091 + $0x90] sm:$0xff]
    %v6111 = vld [vmem:[%s6091 + $0x98] sm:$0xff]
    %v6112 = vld [vmem:[%s6091 + $0xa0] sm:$0xff]
    %v6113 = vld [vmem:[%s6091 + $0xa8] sm:$0xff]
    %v6114 = vld [vmem:[%s6091 + $0xb0] sm:$0xff]
    %v6115 = vld [vmem:[%s6091 + $0xb8] sm:$0xff]
    %v6116 = vld [vmem:[%s6091 + $0xc0] sm:$0xff]
    %v6117 = vld [vmem:[%s6091 + $0xc8] sm:$0xff]
    %v6118 = vld [vmem:[%s6091 + $0xd0] sm:$0xff]
    %v6119 = vld [vmem:[%s6091 + $0xd8] sm:$0xff]
    %v6120 = vld [vmem:[%s6091 + $0xe0] sm:$0xff]
    %v6121 = vld [vmem:[%s6091 + $0xe8] sm:$0xff]
    %v6122 = vld [vmem:[%s6091 + $0xf0] sm:$0xff]
    %v6123 = vld [vmem:[%s6091 + $0xf8] sm:$0xff]
    %v6124 = vld [vmem:[%s6091 + $0x100] sm:$0xff]
    %v6125 = vld [vmem:[%s6091 + $0x108] sm:$0xff]
    %v6126 = vld [vmem:[%s6091 + $0x110] sm:$0xff]
    %v6127 = vld [vmem:[%s6091 + $0x118] sm:$0xff]
    %v6128 = vld [vmem:[%s6091 + $0x120] sm:$0xff]
    %v6129 = vld [vmem:[%s6091 + $0x128] sm:$0xff]
    %v6130 = vld [vmem:[%s6091 + $0x130] sm:$0xff]
    %v6131 = vld [vmem:[%s6091 + $0x138] sm:$0xff]
    %v6132 = vld [vmem:[%s6091 + $0x140] sm:$0xff]
    %v6133 = vld [vmem:[%s6091 + $0x148] sm:$0xff]
    %v6134 = vld [vmem:[%s6091 + $0x150] sm:$0xff]
    %v6135 = vld [vmem:[%s6091 + $0x158] sm:$0xff]
    %v6136 = vld [vmem:[%s6091 + $0x160] sm:$0xff]
    %v6137 = vld [vmem:[%s6091 + $0x168] sm:$0xff]
    %v6138 = vld [vmem:[%s6091 + $0x170] sm:$0xff]
    %v6139 = vld [vmem:[%s6091 + $0x178] sm:$0xff]
    %v6140 = vld [vmem:[%s6091 + $0x180] sm:$0xff]
    %v6141 = vld [vmem:[%s6091 + $0x188] sm:$0xff]
    %v6142 = vld [vmem:[%s6091 + $0x190] sm:$0xff]
    %v6143 = vld [vmem:[%s6091 + $0x198] sm:$0xff]
    %v6144 = vld [vmem:[%s6091 + $0x1a0] sm:$0xff]
    %v6145 = vld [vmem:[%s6091 + $0x1a8] sm:$0xff]
    %v6146 = vld [vmem:[%s6091 + $0x1b0] sm:$0xff]
    %v6147 = vld [vmem:[%s6091 + $0x1b8] sm:$0xff]
    %v6148 = vld [vmem:[%s6091 + $0x1c0] sm:$0xff]
    %v6149 = vld [vmem:[%s6091 + $0x1c8] sm:$0xff]
    %v6150 = vld [vmem:[%s6091 + $0x1d0] sm:$0xff]
    %v6151 = vld [vmem:[%s6091 + $0x1d8] sm:$0xff]
    %v6152 = vld [vmem:[%s6091 + $0x1e0] sm:$0xff]
    %v6153 = vld [vmem:[%s6091 + $0x1e8] sm:$0xff]
    %v6154 = vld [vmem:[%s6091 + $0x1f0] sm:$0xff]
    %v6155 = vld [vmem:[%s6091 + $0x1f8] sm:$0xff]
    %v6156 = vld [vmem:[%s6091 + $0x200] sm:$0xff]
    %v6157 = vld [vmem:[%s6091 + $0x208] sm:$0xff]
    %v6158 = vld [vmem:[%s6091 + $0x210] sm:$0xff]
    %v6159 = vld [vmem:[%s6091 + $0x218] sm:$0xff]
    %v6160 = vld [vmem:[%s6091 + $0x220] sm:$0xff]
    %v6161 = vld [vmem:[%s6091 + $0x228] sm:$0xff]
    %v6162 = vld [vmem:[%s6091 + $0x230] sm:$0xff]
    %v6163 = vld [vmem:[%s6091 + $0x238] sm:$0xff]
    %v6164 = vld [vmem:[%s6091 + $0x240] sm:$0xff]
    %v6165 = vld [vmem:[%s6091 + $0x248] sm:$0xff]
    %v6166 = vld [vmem:[%s6091 + $0x250] sm:$0xff]
    %v6167 = vld [vmem:[%s6091 + $0x258] sm:$0xff]
    %v6168 = vld [vmem:[%s6091 + $0x260] sm:$0xff]
    %v6169 = vld [vmem:[%s6091 + $0x268] sm:$0xff]
    %v6170 = vld [vmem:[%s6091 + $0x270] sm:$0xff]
    %v6171 = vld [vmem:[%s6091 + $0x278] sm:$0xff]
    %v6172 = vld [vmem:[%s6091 + $0x280] sm:$0xff]
    %v6173 = vld [vmem:[%s6091 + $0x288] sm:$0xff]
    %v6174 = vld [vmem:[%s6091 + $0x290] sm:$0xff]
    %v6175 = vld [vmem:[%s6091 + $0x298] sm:$0xff]
    %v6176 = vld [vmem:[%s6091 + $0x2a0] sm:$0xff]
    %v6177 = vld [vmem:[%s6091 + $0x2a8] sm:$0xff]
    %v6178 = vld [vmem:[%s6091 + $0x2b0] sm:$0xff]
    %v6179 = vld [vmem:[%s6091 + $0x2b8] sm:$0xff]
    %v6180 = vld [vmem:[%s6091 + $0x2c0] sm:$0xff]
    %v6181 = vld [vmem:[%s6091 + $0x2c8] sm:$0xff]
    %v6182 = vld [vmem:[%s6091 + $0x2d0] sm:$0xff]
    %v6183 = vld [vmem:[%s6091 + $0x2d8] sm:$0xff]
    %v6184 = vld [vmem:[%s6091 + $0x2e0] sm:$0xff]
    %v6185 = vld [vmem:[%s6091 + $0x2e8] sm:$0xff]
    %v6186 = vld [vmem:[%s6091 + $0x2f0] sm:$0xff]
    %v6187 = vld [vmem:[%s6091 + $0x2f8] sm:$0xff]
    %v6188 = vld [vmem:[%s6091 + $0x300] sm:$0xff]
    %v6189 = vld [vmem:[%s6091 + $0x308] sm:$0xff]
    %v6190 = vld [vmem:[%s6091 + $0x310] sm:$0xff]
    %v6191 = vld [vmem:[%s6091 + $0x318] sm:$0xff]
    %v6192 = vld [vmem:[%s6091 + $0x320] sm:$0xff]
    %v6193 = vld [vmem:[%s6091 + $0x328] sm:$0xff]
    %v6194 = vld [vmem:[%s6091 + $0x330] sm:$0xff]
    %v6195 = vld [vmem:[%s6091 + $0x338] sm:$0xff]
    %v6196 = vld [vmem:[%s6091 + $0x340] sm:$0xff]
    %v6197 = vld [vmem:[%s6091 + $0x348] sm:$0xff]
    %v6198 = vld [vmem:[%s6091 + $0x350] sm:$0xff]
    %v6199 = vld [vmem:[%s6091 + $0x358] sm:$0xff]
    %v6200 = vld [vmem:[%s6091 + $0x360] sm:$0xff]
    %v6201 = vld [vmem:[%s6091 + $0x368] sm:$0xff]
    %v6202 = vld [vmem:[%s6091 + $0x370] sm:$0xff]
    %v6203 = vld [vmem:[%s6091 + $0x378] sm:$0xff]
    %v6204 = vld [vmem:[%s6091 + $0x380] sm:$0xff]
    %v6205 = vld [vmem:[%s6091 + $0x388] sm:$0xff]
    %v6206 = vld [vmem:[%s6091 + $0x390] sm:$0xff]
    %v6207 = vld [vmem:[%s6091 + $0x398] sm:$0xff]
    %v6208 = vld [vmem:[%s6091 + $0x3a0] sm:$0xff]
    %v6209 = vld [vmem:[%s6091 + $0x3a8] sm:$0xff]
    %v6210 = vld [vmem:[%s6091 + $0x3b0] sm:$0xff]
    %v6211 = vld [vmem:[%s6091 + $0x3b8] sm:$0xff]
    %v6212 = vld [vmem:[%s6091 + $0x3c0] sm:$0xff]
    %v6213 = vld [vmem:[%s6091 + $0x3c8] sm:$0xff]
    %v6214 = vld [vmem:[%s6091 + $0x3d0] sm:$0xff]
    %v6215 = vld [vmem:[%s6091 + $0x3d8] sm:$0xff]
    %v6216 = vld [vmem:[%s6091 + $0x3e0] sm:$0xff]
    %v6217 = vld [vmem:[%s6091 + $0x3e8] sm:$0xff]
    %v6218 = vld [vmem:[%s6091 + $0x3f0] sm:$0xff]
    %v6219 = vld [vmem:[%s6091 + $0x3f8] sm:$0xff]
    %v6220 = vld [vmem:[%s6091 + $0x400] sm:$0xff]
    %v6221 = vld [vmem:[%s6091 + $0x408] sm:$0xff]
    %v6222 = vld [vmem:[%s6091 + $0x410] sm:$0xff]
    %v6223 = vld [vmem:[%s6091 + $0x418] sm:$0xff]
    %v6224 = vld [vmem:[%s6091 + $0x420] sm:$0xff]
    %v6225 = vld [vmem:[%s6091 + $0x428] sm:$0xff]
    %v6226 = vld [vmem:[%s6091 + $0x430] sm:$0xff]
    %v6227 = vld [vmem:[%s6091 + $0x438] sm:$0xff]
    %v6228 = vld [vmem:[%s6091 + $0x440] sm:$0xff]
    %v6229 = vld [vmem:[%s6091 + $0x448] sm:$0xff]
    %v6230 = vld [vmem:[%s6091 + $0x450] sm:$0xff]
    %v6231 = vld [vmem:[%s6091 + $0x458] sm:$0xff]
    %v6232 = vld [vmem:[%s6091 + $0x460] sm:$0xff]
    %v6233 = vld [vmem:[%s6091 + $0x468] sm:$0xff]
    %v6234 = vld [vmem:[%s6091 + $0x470] sm:$0xff]
    %v6235 = vld [vmem:[%s6091 + $0x478] sm:$0xff]
    %v6236 = vld [vmem:[%s6091 + $0x480] sm:$0xff]
    %v6237 = vld [vmem:[%s6091 + $0x488] sm:$0xff]
    %v6238 = vld [vmem:[%s6091 + $0x490] sm:$0xff]
    %v6239 = vld [vmem:[%s6091 + $0x498] sm:$0xff]
    %v6240 = vld [vmem:[%s6091 + $0x4a0] sm:$0xff]
    %v6241 = vld [vmem:[%s6091 + $0x4a8] sm:$0xff]
    %v6242 = vld [vmem:[%s6091 + $0x4b0] sm:$0xff]
    %v6243 = vld [vmem:[%s6091 + $0x4b8] sm:$0xff]
    %v6244 = vld [vmem:[%s6091 + $0x4c0] sm:$0xff]
    %v6245 = vld [vmem:[%s6091 + $0x4c8] sm:$0xff]
    %v6246 = vld [vmem:[%s6091 + $0x4d0] sm:$0xff]
    %v6247 = vld [vmem:[%s6091 + $0x4d8] sm:$0xff]
    %v6248 = vld [vmem:[%s6091 + $0x4e0] sm:$0xff]
    %v6249 = vld [vmem:[%s6091 + $0x4e8] sm:$0xff]
    %v6250 = vld [vmem:[%s6091 + $0x4f0] sm:$0xff]
    %v6251 = vld [vmem:[%s6091 + $0x4f8] sm:$0xff]
    %v6252 = vld [vmem:[%s6091 + $0x500] sm:$0xff]
    %v6253 = vld [vmem:[%s6091 + $0x508] sm:$0xff]
    %v6254 = vld [vmem:[%s6091 + $0x510] sm:$0xff]
    %v6255 = vld [vmem:[%s6091 + $0x518] sm:$0xff]
    %v6256 = vld [vmem:[%s6091 + $0x520] sm:$0xff]
    %v6257 = vld [vmem:[%s6091 + $0x528] sm:$0xff]
    %v6258 = vld [vmem:[%s6091 + $0x530] sm:$0xff]
    %v6259 = vld [vmem:[%s6091 + $0x538] sm:$0xff]
    %v6260 = vld [vmem:[%s6091 + $0x540] sm:$0xff]
    %v6261 = vld [vmem:[%s6091 + $0x548] sm:$0xff]
    %v6262 = vld [vmem:[%s6091 + $0x550] sm:$0xff]
    %v6263 = vld [vmem:[%s6091 + $0x558] sm:$0xff]
    %v6264 = vld [vmem:[%s6091 + $0x560] sm:$0xff]
    %v6265 = vld [vmem:[%s6091 + $0x568] sm:$0xff]
    %v6266 = vld [vmem:[%s6091 + $0x570] sm:$0xff]
    %v6267 = vld [vmem:[%s6091 + $0x578] sm:$0xff]
    %v6268 = vld [vmem:[%s6091 + $0x580] sm:$0xff]
    %v6269 = vld [vmem:[%s6091 + $0x588] sm:$0xff]
    %v6270 = vld [vmem:[%s6091 + $0x590] sm:$0xff]
    %v6271 = vld [vmem:[%s6091 + $0x598] sm:$0xff]
    %v6272 = vld [vmem:[%s6091 + $0x5a0] sm:$0xff]
    %v6273 = vld [vmem:[%s6091 + $0x5a8] sm:$0xff]
    %v6274 = vld [vmem:[%s6091 + $0x5b0] sm:$0xff]
    %v6275 = vld [vmem:[%s6091 + $0x5b8] sm:$0xff]
    %v6276 = vld [vmem:[%s6091 + $0x5c0] sm:$0xff]
    %v6277 = vld [vmem:[%s6091 + $0x5c8] sm:$0xff]
    %v6278 = vld [vmem:[%s6091 + $0x5d0] sm:$0xff]
    %v6279 = vld [vmem:[%s6091 + $0x5d8] sm:$0xff]
    %v6280 = vld [vmem:[%s6091 + $0x5e0] sm:$0xff]
    %v6281 = vld [vmem:[%s6091 + $0x5e8] sm:$0xff]
    %v6282 = vld [vmem:[%s6091 + $0x5f0] sm:$0xff]
    %v6283 = vld [vmem:[%s6091 + $0x5f8] sm:$0xff]
    %v6284 = vld [vmem:[%s6091 + $0x600] sm:$0xff]
    %v6285 = vld [vmem:[%s6091 + $0x608] sm:$0xff]
    %v6286 = vld [vmem:[%s6091 + $0x610] sm:$0xff]
    %v6287 = vld [vmem:[%s6091 + $0x618] sm:$0xff]
    %v6288 = vld [vmem:[%s6091 + $0x620] sm:$0xff]
    %v6289 = vld [vmem:[%s6091 + $0x628] sm:$0xff]
    %v6290 = vld [vmem:[%s6091 + $0x630] sm:$0xff]
    %v6291 = vld [vmem:[%s6091 + $0x638] sm:$0xff]
    %v6292 = vld [vmem:[%s6091 + $0x640] sm:$0xff]
    %v6293 = vld [vmem:[%s6091 + $0x648] sm:$0xff]
    %v6294 = vld [vmem:[%s6091 + $0x650] sm:$0xff]
    %v6295 = vld [vmem:[%s6091 + $0x658] sm:$0xff]
    %v6296 = vld [vmem:[%s6091 + $0x660] sm:$0xff]
    %v6297 = vld [vmem:[%s6091 + $0x668] sm:$0xff]
    %v6298 = vld [vmem:[%s6091 + $0x670] sm:$0xff]
    %v6299 = vld [vmem:[%s6091 + $0x678] sm:$0xff]
    %v6300 = vld [vmem:[%s6091 + $0x680] sm:$0xff]
    %v6301 = vld [vmem:[%s6091 + $0x688] sm:$0xff]
    %v6302 = vld [vmem:[%s6091 + $0x690] sm:$0xff]
    %v6303 = vld [vmem:[%s6091 + $0x698] sm:$0xff]
    %v6304 = vld [vmem:[%s6091 + $0x6a0] sm:$0xff]
    %v6305 = vld [vmem:[%s6091 + $0x6a8] sm:$0xff]
    %v6306 = vld [vmem:[%s6091 + $0x6b0] sm:$0xff]
    %v6307 = vld [vmem:[%s6091 + $0x6b8] sm:$0xff]
    %v6308 = vld [vmem:[%s6091 + $0x6c0] sm:$0xff]
    %v6309 = vld [vmem:[%s6091 + $0x6c8] sm:$0xff]
    %v6310 = vld [vmem:[%s6091 + $0x6d0] sm:$0xff]
    %v6311 = vld [vmem:[%s6091 + $0x6d8] sm:$0xff]
    %v6312 = vld [vmem:[%s6091 + $0x6e0] sm:$0xff]
    %v6313 = vld [vmem:[%s6091 + $0x6e8] sm:$0xff]
    %v6314 = vld [vmem:[%s6091 + $0x6f0] sm:$0xff]
    %v6315 = vld [vmem:[%s6091 + $0x6f8] sm:$0xff]
    %v6316 = vld [vmem:[%s6091 + $0x700] sm:$0xff]
    %v6317 = vld [vmem:[%s6091 + $0x708] sm:$0xff]
    %v6318 = vld [vmem:[%s6091 + $0x710] sm:$0xff]
    %v6319 = vld [vmem:[%s6091 + $0x718] sm:$0xff]
    %v6320 = vld [vmem:[%s6091 + $0x720] sm:$0xff]
    %v6321 = vld [vmem:[%s6091 + $0x728] sm:$0xff]
    %v6322 = vld [vmem:[%s6091 + $0x730] sm:$0xff]
    %v6323 = vld [vmem:[%s6091 + $0x738] sm:$0xff]
    %v6324 = vld [vmem:[%s6091 + $0x740] sm:$0xff]
    %v6325 = vld [vmem:[%s6091 + $0x748] sm:$0xff]
    %v6326 = vld [vmem:[%s6091 + $0x750] sm:$0xff]
    %v6327 = vld [vmem:[%s6091 + $0x758] sm:$0xff]
    %v6328 = vld [vmem:[%s6091 + $0x760] sm:$0xff]
    %v6329 = vld [vmem:[%s6091 + $0x768] sm:$0xff]
    %v6330 = vld [vmem:[%s6091 + $0x770] sm:$0xff]
    %v6331 = vld [vmem:[%s6091 + $0x778] sm:$0xff]
    %v6332 = vld [vmem:[%s6091 + $0x780] sm:$0xff]
    %v6333 = vld [vmem:[%s6091 + $0x788] sm:$0xff]
    %v6334 = vld [vmem:[%s6091 + $0x790] sm:$0xff]
    %v6335 = vld [vmem:[%s6091 + $0x798] sm:$0xff]
    %v6336 = vld [vmem:[%s6091 + $0x7a0] sm:$0xff]
    %v6337 = vld [vmem:[%s6091 + $0x7a8] sm:$0xff]
    %v6338 = vld [vmem:[%s6091 + $0x7b0] sm:$0xff]
    %v6339 = vld [vmem:[%s6091 + $0x7b8] sm:$0xff]
    %v6340 = vld [vmem:[%s6091 + $0x7c0] sm:$0xff]
    %v6341 = vld [vmem:[%s6091 + $0x7c8] sm:$0xff]
    %v6342 = vld [vmem:[%s6091 + $0x7d0] sm:$0xff]
    %v6343 = vld [vmem:[%s6091 + $0x7d8] sm:$0xff]
    %v6344 = vld [vmem:[%s6091 + $0x7e0] sm:$0xff]
    %v6345 = vld [vmem:[%s6091 + $0x7e8] sm:$0xff]
    %v6346 = vld [vmem:[%s6091 + $0x7f0] sm:$0xff]
    %v6347 = vld [vmem:[%s6091 + $0x7f8] sm:$0xff]
    %v6348 = vld [vmem:[%s6091 + $0x800] sm:$0xff]
    %v6349 = vld [vmem:[%s6091 + $0x808] sm:$0xff]
    %v6350 = vld [vmem:[%s6091 + $0x810] sm:$0xff]
    %v6351 = vld [vmem:[%s6091 + $0x818] sm:$0xff]
    %v6352 = vld [vmem:[%s6091 + $0x820] sm:$0xff]
    %v6353 = vld [vmem:[%s6091 + $0x828] sm:$0xff]
    %v6354 = vld [vmem:[%s6091 + $0x830] sm:$0xff]
    %v6355 = vld [vmem:[%s6091 + $0x838] sm:$0xff]
    %v6356 = vld [vmem:[%s6091 + $0x840] sm:$0xff]
    %v6357 = vld [vmem:[%s6091 + $0x848] sm:$0xff]
    %v6358 = vld [vmem:[%s6091 + $0x850] sm:$0xff]
    %v6359 = vld [vmem:[%s6091 + $0x858] sm:$0xff]
    %v6360 = vld [vmem:[%s6091 + $0x860] sm:$0xff]
    %v6361 = vld [vmem:[%s6091 + $0x868] sm:$0xff]
    %v6362 = vld [vmem:[%s6091 + $0x870] sm:$0xff]
    %v6363 = vld [vmem:[%s6091 + $0x878] sm:$0xff]
    %v6364 = vld [vmem:[%s6091 + $0x880] sm:$0xff]
    %v6365 = vld [vmem:[%s6091 + $0x888] sm:$0xff]
    %v6366 = vld [vmem:[%s6091 + $0x890] sm:$0xff]
    %v6367 = vld [vmem:[%s6091 + $0x898] sm:$0xff]
    %v6368 = vld [vmem:[%s6091 + $0x8a0] sm:$0xff]
    %v6369 = vld [vmem:[%s6091 + $0x8a8] sm:$0xff]
    %v6370 = vld [vmem:[%s6091 + $0x8b0] sm:$0xff]
    %v6371 = vld [vmem:[%s6091 + $0x8b8] sm:$0xff]
    %v6372 = vld [vmem:[%s6091 + $0x8c0] sm:$0xff]
    %v6373 = vld [vmem:[%s6091 + $0x8c8] sm:$0xff]
    %v6374 = vld [vmem:[%s6091 + $0x8d0] sm:$0xff]
    %v6375 = vld [vmem:[%s6091 + $0x8d8] sm:$0xff]
    %v6376 = vld [vmem:[%s6091 + $0x8e0] sm:$0xff]
    %v6377 = vld [vmem:[%s6091 + $0x8e8] sm:$0xff]
    %v6378 = vld [vmem:[%s6091 + $0x8f0] sm:$0xff]
    %v6379 = vld [vmem:[%s6091 + $0x8f8] sm:$0xff]
    %v6380 = vrot.slane %v6083, 3
    %v6381 = vrot.slane %v6084, 3
    %v6382 = vrot.slane %v6085, 3
    %v6383 = vrot.slane %v6086, 3
    %v6384 = vrot.slane %v6087, 3
    %v6385 = vrot.slane %v6088, 3
    %v6386 = vrot.slane %v6089, 3
    %v6387 = vrot.slane %v6090, 3
    %v6388 = vsel %vm391, %v6384, %v6386
    %v6389 = vsel %vm391, %v6385, %v6387
    %v6390 = vsel %vm391, %v6382, %v6384
    %v6391 = vsel %vm391, %v6383, %v6385
    %v6392 = vsel %vm391, %v6380, %v6382
    %v6393 = vsel %vm391, %v6381, %v6383
    %v6394 = vsel %vm391, %v6386, %v6380
    %v6395 = vsel %vm391, %v6387, %v6381
    %v6396 = vmul.f32 %v6394, %v403
    %v6397 = vmul.f32 %v6395, %v403
    %v6398 = vmul.f32 %v6392, %v408
    %v6399 = vmul.f32 %v6393, %v408
    %v6400 = vmul.f32 %v6390, %v413
    %v6401 = vmul.f32 %v6391, %v413
    %v6402 = vmul.f32 %v6388, %v418
    %v6403 = vmul.f32 %v6389, %v418
    %v6404 = vrot.slane %v6083, 4
    %v6405 = vrot.slane %v6084, 4
    %v6406 = vrot.slane %v6085, 4
    %v6407 = vrot.slane %v6086, 4
    %v6408 = vrot.slane %v6087, 4
    %v6409 = vrot.slane %v6088, 4
    %v6410 = vrot.slane %v6089, 4
    %v6411 = vrot.slane %v6090, 4
    %v6412 = vsel %vm428, %v6408, %v6410
    %v6413 = vsel %vm428, %v6409, %v6411
    %v6414 = vsel %vm428, %v6406, %v6408
    %v6415 = vsel %vm428, %v6407, %v6409
    %v6416 = vsel %vm428, %v6404, %v6406
    %v6417 = vsel %vm428, %v6405, %v6407
    %v6418 = vsel %vm428, %v6410, %v6404
    %v6419 = vsel %vm428, %v6411, %v6405
    %v6420 = vmul.f32 %v6418, %v441
    %v6421 = vmul.f32 %v6419, %v441
    %v6422 = vmul.f32 %v6416, %v446
    %v6423 = vmul.f32 %v6417, %v446
    %v6424 = vmul.f32 %v6414, %v451
    %v6425 = vmul.f32 %v6415, %v451
    %v6426 = vmul.f32 %v6412, %v456
    %v6427 = vmul.f32 %v6413, %v456
    %v6428 = vrot.slane %v6083, 5
    %v6429 = vrot.slane %v6084, 5
    %v6430 = vrot.slane %v6085, 5
    %v6431 = vrot.slane %v6086, 5
    %v6432 = vrot.slane %v6087, 5
    %v6433 = vrot.slane %v6088, 5
    %v6434 = vrot.slane %v6089, 5
    %v6435 = vrot.slane %v6090, 5
    %v6436 = vsel %vm478, %v6432, %v6434
    %v6437 = vsel %vm478, %v6433, %v6435
    %v6438 = vsel %vm478, %v6430, %v6432
    %v6439 = vsel %vm478, %v6431, %v6433
    %v6440 = vsel %vm478, %v6428, %v6430
    %v6441 = vsel %vm478, %v6429, %v6431
    %v6442 = vsel %vm478, %v6434, %v6428
    %v6443 = vsel %vm478, %v6435, %v6429
    %v6444 = vmul.f32 %v6442, %v491
    %v6445 = vmul.f32 %v6443, %v491
    %v6446 = vmul.f32 %v6440, %v496
    %v6447 = vmul.f32 %v6441, %v496
    %v6448 = vmul.f32 %v6438, %v501
    %v6449 = vmul.f32 %v6439, %v501
    %v6450 = vmul.f32 %v6436, %v506
    %v6451 = vmul.f32 %v6437, %v506
    %v6452 = vrot.slane %v6083, 7
    %v6453 = vrot.slane %v6084, 7
    %v6454 = vrot.slane %v6085, 7
    %v6455 = vrot.slane %v6086, 7
    %v6456 = vrot.slane %v6087, 7
    %v6457 = vrot.slane %v6088, 7
    %v6458 = vrot.slane %v6089, 7
    %v6459 = vrot.slane %v6090, 7
    %v6460 = vsel %vm516, %v6456, %v6458
    %v6461 = vsel %vm516, %v6457, %v6459
    %v6462 = vsel %vm516, %v6454, %v6456
    %v6463 = vsel %vm516, %v6455, %v6457
    %v6464 = vsel %vm516, %v6452, %v6454
    %v6465 = vsel %vm516, %v6453, %v6455
    %v6466 = vsel %vm516, %v6458, %v6452
    %v6467 = vsel %vm516, %v6459, %v6453
    %v6468 = vmul.f32 %v6466, %v529
    %v6469 = vmul.f32 %v6467, %v529
    %v6470 = vmul.f32 %v6464, %v534
    %v6471 = vmul.f32 %v6465, %v534
    %v6472 = vmul.f32 %v6462, %v539
    %v6473 = vmul.f32 %v6463, %v539
    %v6474 = vmul.f32 %v6460, %v544
    %v6475 = vmul.f32 %v6461, %v544
    %v6476 = vrot.slane %v6083, 1
    %v6477 = vrot.slane %v6084, 1
    %v6478 = vrot.slane %v6085, 1
    %v6479 = vrot.slane %v6086, 1
    %v6480 = vrot.slane %v6087, 1
    %v6481 = vrot.slane %v6088, 1
    %v6482 = vrot.slane %v6089, 1
    %v6483 = vrot.slane %v6090, 1
    %v6484 = vsel %vm554, %v6480, %v6482
    %v6485 = vsel %vm554, %v6481, %v6483
    %v6486 = vsel %vm554, %v6478, %v6480
    %v6487 = vsel %vm554, %v6479, %v6481
    %v6488 = vsel %vm554, %v6476, %v6478
    %v6489 = vsel %vm554, %v6477, %v6479
    %v6490 = vsel %vm554, %v6482, %v6476
    %v6491 = vsel %vm554, %v6483, %v6477
    %v6492 = vmul.f32 %v6488, %v567
    %v6493 = vmul.f32 %v6489, %v567
    %v6494 = vmul.f32 %v6486, %v572
    %v6495 = vmul.f32 %v6487, %v572
    %v6496 = vmul.f32 %v6484, %v577
    %v6497 = vmul.f32 %v6485, %v577
    %v6498 = vmul.f32 %v6490, %v582
    %v6499 = vmul.f32 %v6491, %v582
    %v6500 = vmul.f32 %v6392, %v628
    %v6501 = vmul.f32 %v6393, %v628
    %v6502 = vmul.f32 %v6390, %v633
    %v6503 = vmul.f32 %v6391, %v633
    %v6504 = vmul.f32 %v6388, %v638
    %v6505 = vmul.f32 %v6389, %v638
    %v6506 = vmul.f32 %v6394, %v643
    %v6507 = vmul.f32 %v6395, %v643
    %v6508 = vmul.f32 %v6416, %v665
    %v6509 = vmul.f32 %v6417, %v665
    %v6510 = vmul.f32 %v6414, %v670
    %v6511 = vmul.f32 %v6415, %v670
    %v6512 = vmul.f32 %v6412, %v675
    %v6513 = vmul.f32 %v6413, %v675
    %v6514 = vmul.f32 %v6418, %v680
    %v6515 = vmul.f32 %v6419, %v680
    %v6516 = vmul.f32 %v6440, %v714
    %v6517 = vmul.f32 %v6441, %v714
    %v6518 = vmul.f32 %v6438, %v719
    %v6519 = vmul.f32 %v6439, %v719
    %v6520 = vmul.f32 %v6436, %v724
    %v6521 = vmul.f32 %v6437, %v724
    %v6522 = vmul.f32 %v6442, %v729
    %v6523 = vmul.f32 %v6443, %v729
    %v6524 = vpack.c.bf16 %v6398, %v6396
    %v6525 = vpack.c.bf16 %v6399, %v6397
    %v6526 = vpack.c.bf16 %v6422, %v6420
    %v6527 = vpack.c.bf16 %v6423, %v6421
    %v6528 = vpack.c.bf16 %v6446, %v6444
    %v6529 = vpack.c.bf16 %v6447, %v6445
    %v6530 = vpack.c.bf16 %v6470, %v6468
    %v6531 = vpack.c.bf16 %v6471, %v6469
    %v6532 = vpack.c.bf16 %v6085, %v6083
    %v6533 = vpack.c.bf16 %v6086, %v6084
    %v6534 = vpack.c.bf16 %v6494, %v6492
    %v6535 = vpack.c.bf16 %v6495, %v6493
    %v6536 = vpack.c.bf16 %v6502, %v6500
    %v6537 = vpack.c.bf16 %v6503, %v6501
    %v6538 = vpack.c.bf16 %v6510, %v6508
    %v6539 = vpack.c.bf16 %v6511, %v6509
    %v6540 = vpack.c.bf16 %v6518, %v6516
    %v6541 = vpack.c.bf16 %v6519, %v6517
    %v6542 = vpack.c.bf16 %v6402, %v6400
    %v6543 = vpack.c.bf16 %v6403, %v6401
    %v6544 = vpack.c.bf16 %v6426, %v6424
    %v6545 = vpack.c.bf16 %v6427, %v6425
    %v6546 = vpack.c.bf16 %v6450, %v6448
    %v6547 = vpack.c.bf16 %v6451, %v6449
    %v6548 = vpack.c.bf16 %v6474, %v6472
    %v6549 = vpack.c.bf16 %v6475, %v6473
    %v6550 = vpack.c.bf16 %v6089, %v6087
    %v6551 = vpack.c.bf16 %v6090, %v6088
    %v6552 = vpack.c.bf16 %v6498, %v6496
    %v6553 = vpack.c.bf16 %v6499, %v6497
    %v6554 = vpack.c.bf16 %v6506, %v6504
    %v6555 = vpack.c.bf16 %v6507, %v6505
    %v6556 = vpack.c.bf16 %v6514, %v6512
    %v6557 = vpack.c.bf16 %v6515, %v6513
    %v6558 = vpack.c.bf16 %v6522, %v6520
    %v6559 = vpack.c.bf16 %v6523, %v6521
    %v6848 = vunpack.c.l.b16 %v6092
    %v6849 = vunpack.c.h.b16 %v6092
    %v6850 = vunpack.c.l.b16 %v6093
    %v6851 = vunpack.c.h.b16 %v6093
    %v6852 = vunpack.c.l.b16 %v6094
    %v6853 = vunpack.c.h.b16 %v6094
    %v6854 = vunpack.c.l.b16 %v6095
    %v6855 = vunpack.c.h.b16 %v6095
    %v6856 = vunpack.c.l.b16 %v6096
    %v6857 = vunpack.c.h.b16 %v6096
    %v6858 = vunpack.c.l.b16 %v6097
    %v6859 = vunpack.c.h.b16 %v6097
    %v6860 = vunpack.c.l.b16 %v6098
    %v6861 = vunpack.c.h.b16 %v6098
    %v6862 = vunpack.c.l.b16 %v6099
    %v6863 = vunpack.c.h.b16 %v6099
    %v6864 = vunpack.c.l.b16 %v6100
    %v6865 = vunpack.c.h.b16 %v6100
    %v6866 = vunpack.c.l.b16 %v6101
    %v6867 = vunpack.c.h.b16 %v6101
    %v6868 = vunpack.c.l.b16 %v6102
    %v6869 = vunpack.c.h.b16 %v6102
    %v6870 = vunpack.c.l.b16 %v6103
    %v6871 = vunpack.c.h.b16 %v6103
    %v6872 = vunpack.c.l.b16 %v6104
    %v6873 = vunpack.c.h.b16 %v6104
    %v6874 = vunpack.c.l.b16 %v6105
    %v6875 = vunpack.c.h.b16 %v6105
    %v6876 = vunpack.c.l.b16 %v6106
    %v6877 = vunpack.c.h.b16 %v6106
    %v6878 = vunpack.c.l.b16 %v6107
    %v6879 = vunpack.c.h.b16 %v6107
    %v6880 = vunpack.c.l.b16 %v6108
    %v6881 = vunpack.c.h.b16 %v6108
    %v6882 = vunpack.c.l.b16 %v6109
    %v6883 = vunpack.c.h.b16 %v6109
    %v6884 = vunpack.c.l.b16 %v6110
    %v6885 = vunpack.c.h.b16 %v6110
    %v6886 = vunpack.c.l.b16 %v6111
    %v6887 = vunpack.c.h.b16 %v6111
    %v6888 = vunpack.c.l.b16 %v6112
    %v6889 = vunpack.c.h.b16 %v6112
    %v6890 = vunpack.c.l.b16 %v6113
    %v6891 = vunpack.c.h.b16 %v6113
    %v6892 = vunpack.c.l.b16 %v6114
    %v6893 = vunpack.c.h.b16 %v6114
    %v6894 = vunpack.c.l.b16 %v6115
    %v6895 = vunpack.c.h.b16 %v6115
    %v6896 = vunpack.c.l.b16 %v6116
    %v6897 = vunpack.c.h.b16 %v6116
    %v6898 = vunpack.c.l.b16 %v6117
    %v6899 = vunpack.c.h.b16 %v6117
    %v6900 = vunpack.c.l.b16 %v6118
    %v6901 = vunpack.c.h.b16 %v6118
    %v6902 = vunpack.c.l.b16 %v6119
    %v6903 = vunpack.c.h.b16 %v6119
    %v6904 = vunpack.c.l.b16 %v6120
    %v6905 = vunpack.c.h.b16 %v6120
    %v6906 = vunpack.c.l.b16 %v6121
    %v6907 = vunpack.c.h.b16 %v6121
    %v6908 = vunpack.c.l.b16 %v6122
    %v6909 = vunpack.c.h.b16 %v6122
    %v6910 = vunpack.c.l.b16 %v6123
    %v6911 = vunpack.c.h.b16 %v6123
    %v6912 = vunpack.c.l.b16 %v6124
    %v6913 = vunpack.c.h.b16 %v6124
    %v6914 = vunpack.c.l.b16 %v6125
    %v6915 = vunpack.c.h.b16 %v6125
    %v6916 = vunpack.c.l.b16 %v6126
    %v6917 = vunpack.c.h.b16 %v6126
    %v6918 = vunpack.c.l.b16 %v6127
    %v6919 = vunpack.c.h.b16 %v6127
    %v6920 = vunpack.c.l.b16 %v6128
    %v6921 = vunpack.c.h.b16 %v6128
    %v6922 = vunpack.c.l.b16 %v6129
    %v6923 = vunpack.c.h.b16 %v6129
    %v6924 = vunpack.c.l.b16 %v6130
    %v6925 = vunpack.c.h.b16 %v6130
    %v6926 = vunpack.c.l.b16 %v6131
    %v6927 = vunpack.c.h.b16 %v6131
    %v6928 = vunpack.c.l.b16 %v6132
    %v6929 = vunpack.c.h.b16 %v6132
    %v6930 = vunpack.c.l.b16 %v6133
    %v6931 = vunpack.c.h.b16 %v6133
    %v6932 = vunpack.c.l.b16 %v6134
    %v6933 = vunpack.c.h.b16 %v6134
    %v6934 = vunpack.c.l.b16 %v6135
    %v6935 = vunpack.c.h.b16 %v6135
    %v6936 = vunpack.c.l.b16 %v6136
    %v6937 = vunpack.c.h.b16 %v6136
    %v6938 = vunpack.c.l.b16 %v6137
    %v6939 = vunpack.c.h.b16 %v6137
    %v6940 = vunpack.c.l.b16 %v6138
    %v6941 = vunpack.c.h.b16 %v6138
    %v6942 = vunpack.c.l.b16 %v6139
    %v6943 = vunpack.c.h.b16 %v6139
    %v6944 = vunpack.c.l.b16 %v6140
    %v6945 = vunpack.c.h.b16 %v6140
    %v6946 = vunpack.c.l.b16 %v6141
    %v6947 = vunpack.c.h.b16 %v6141
    %v6948 = vunpack.c.l.b16 %v6142
    %v6949 = vunpack.c.h.b16 %v6142
    %v6950 = vunpack.c.l.b16 %v6143
    %v6951 = vunpack.c.h.b16 %v6143
    %v6952 = vunpack.c.l.b16 %v6144
    %v6953 = vunpack.c.h.b16 %v6144
    %v6954 = vunpack.c.l.b16 %v6145
    %v6955 = vunpack.c.h.b16 %v6145
    %v6956 = vunpack.c.l.b16 %v6146
    %v6957 = vunpack.c.h.b16 %v6146
    %v6958 = vunpack.c.l.b16 %v6147
    %v6959 = vunpack.c.h.b16 %v6147
    %v6960 = vunpack.c.l.b16 %v6148
    %v6961 = vunpack.c.h.b16 %v6148
    %v6962 = vunpack.c.l.b16 %v6149
    %v6963 = vunpack.c.h.b16 %v6149
    %v6964 = vunpack.c.l.b16 %v6150
    %v6965 = vunpack.c.h.b16 %v6150
    %v6966 = vunpack.c.l.b16 %v6151
    %v6967 = vunpack.c.h.b16 %v6151
    %v6968 = vunpack.c.l.b16 %v6152
    %v6969 = vunpack.c.h.b16 %v6152
    %v6970 = vunpack.c.l.b16 %v6153
    %v6971 = vunpack.c.h.b16 %v6153
    %v6972 = vunpack.c.l.b16 %v6154
    %v6973 = vunpack.c.h.b16 %v6154
    %v6974 = vunpack.c.l.b16 %v6155
    %v6975 = vunpack.c.h.b16 %v6155
    %v6976 = vunpack.c.l.b16 %v6156
    %v6977 = vunpack.c.h.b16 %v6156
    %v6978 = vunpack.c.l.b16 %v6157
    %v6979 = vunpack.c.h.b16 %v6157
    %v6980 = vunpack.c.l.b16 %v6158
    %v6981 = vunpack.c.h.b16 %v6158
    %v6982 = vunpack.c.l.b16 %v6159
    %v6983 = vunpack.c.h.b16 %v6159
    %v6984 = vunpack.c.l.b16 %v6160
    %v6985 = vunpack.c.h.b16 %v6160
    %v6986 = vunpack.c.l.b16 %v6161
    %v6987 = vunpack.c.h.b16 %v6161
    %v6988 = vunpack.c.l.b16 %v6162
    %v6989 = vunpack.c.h.b16 %v6162
    %v6990 = vunpack.c.l.b16 %v6163
    %v6991 = vunpack.c.h.b16 %v6163
    %v6992 = vunpack.c.l.b16 %v6164
    %v6993 = vunpack.c.h.b16 %v6164
    %v6994 = vunpack.c.l.b16 %v6165
    %v6995 = vunpack.c.h.b16 %v6165
    %v6996 = vunpack.c.l.b16 %v6166
    %v6997 = vunpack.c.h.b16 %v6166
    %v6998 = vunpack.c.l.b16 %v6167
    %v6999 = vunpack.c.h.b16 %v6167
    %v7000 = vunpack.c.l.b16 %v6168
    %v7001 = vunpack.c.h.b16 %v6168
    %v7002 = vunpack.c.l.b16 %v6169
    %v7003 = vunpack.c.h.b16 %v6169
    %v7004 = vunpack.c.l.b16 %v6170
    %v7005 = vunpack.c.h.b16 %v6170
    %v7006 = vunpack.c.l.b16 %v6171
    %v7007 = vunpack.c.h.b16 %v6171
    %v7008 = vunpack.c.l.b16 %v6172
    %v7009 = vunpack.c.h.b16 %v6172
    %v7010 = vunpack.c.l.b16 %v6173
    %v7011 = vunpack.c.h.b16 %v6173
    %v7012 = vunpack.c.l.b16 %v6174
    %v7013 = vunpack.c.h.b16 %v6174
    %v7014 = vunpack.c.l.b16 %v6175
    %v7015 = vunpack.c.h.b16 %v6175
    %v7016 = vunpack.c.l.b16 %v6176
    %v7017 = vunpack.c.h.b16 %v6176
    %v7018 = vunpack.c.l.b16 %v6177
    %v7019 = vunpack.c.h.b16 %v6177
    %v7020 = vunpack.c.l.b16 %v6178
    %v7021 = vunpack.c.h.b16 %v6178
    %v7022 = vunpack.c.l.b16 %v6179
    %v7023 = vunpack.c.h.b16 %v6179
    %v7024 = vunpack.c.l.b16 %v6180
    %v7025 = vunpack.c.h.b16 %v6180
    %v7026 = vunpack.c.l.b16 %v6181
    %v7027 = vunpack.c.h.b16 %v6181
    %v7028 = vunpack.c.l.b16 %v6182
    %v7029 = vunpack.c.h.b16 %v6182
    %v7030 = vunpack.c.l.b16 %v6183
    %v7031 = vunpack.c.h.b16 %v6183
    %v7032 = vunpack.c.l.b16 %v6184
    %v7033 = vunpack.c.h.b16 %v6184
    %v7034 = vunpack.c.l.b16 %v6185
    %v7035 = vunpack.c.h.b16 %v6185
    %v7036 = vunpack.c.l.b16 %v6186
    %v7037 = vunpack.c.h.b16 %v6186
    %v7038 = vunpack.c.l.b16 %v6187
    %v7039 = vunpack.c.h.b16 %v6187
    %v7040 = vunpack.c.l.b16 %v6188
    %v7041 = vunpack.c.h.b16 %v6188
    %v7042 = vunpack.c.l.b16 %v6189
    %v7043 = vunpack.c.h.b16 %v6189
    %v7044 = vunpack.c.l.b16 %v6190
    %v7045 = vunpack.c.h.b16 %v6190
    %v7046 = vunpack.c.l.b16 %v6191
    %v7047 = vunpack.c.h.b16 %v6191
    %v7048 = vunpack.c.l.b16 %v6192
    %v7049 = vunpack.c.h.b16 %v6192
    %v7050 = vunpack.c.l.b16 %v6193
    %v7051 = vunpack.c.h.b16 %v6193
    %v7052 = vunpack.c.l.b16 %v6194
    %v7053 = vunpack.c.h.b16 %v6194
    %v7054 = vunpack.c.l.b16 %v6195
    %v7055 = vunpack.c.h.b16 %v6195
    %v7056 = vunpack.c.l.b16 %v6196
    %v7057 = vunpack.c.h.b16 %v6196
    %v7058 = vunpack.c.l.b16 %v6197
    %v7059 = vunpack.c.h.b16 %v6197
    %v7060 = vunpack.c.l.b16 %v6198
    %v7061 = vunpack.c.h.b16 %v6198
    %v7062 = vunpack.c.l.b16 %v6199
    %v7063 = vunpack.c.h.b16 %v6199
    %v7064 = vunpack.c.l.b16 %v6200
    %v7065 = vunpack.c.h.b16 %v6200
    %v7066 = vunpack.c.l.b16 %v6201
    %v7067 = vunpack.c.h.b16 %v6201
    %v7068 = vunpack.c.l.b16 %v6202
    %v7069 = vunpack.c.h.b16 %v6202
    %v7070 = vunpack.c.l.b16 %v6203
    %v7071 = vunpack.c.h.b16 %v6203
    %v7072 = vunpack.c.l.b16 %v6204
    %v7073 = vunpack.c.h.b16 %v6204
    %v7074 = vunpack.c.l.b16 %v6205
    %v7075 = vunpack.c.h.b16 %v6205
    %v7076 = vunpack.c.l.b16 %v6206
    %v7077 = vunpack.c.h.b16 %v6206
    %v7078 = vunpack.c.l.b16 %v6207
    %v7079 = vunpack.c.h.b16 %v6207
    %v7080 = vunpack.c.l.b16 %v6208
    %v7081 = vunpack.c.h.b16 %v6208
    %v7082 = vunpack.c.l.b16 %v6209
    %v7083 = vunpack.c.h.b16 %v6209
    %v7084 = vunpack.c.l.b16 %v6210
    %v7085 = vunpack.c.h.b16 %v6210
    %v7086 = vunpack.c.l.b16 %v6211
    %v7087 = vunpack.c.h.b16 %v6211
    %v7088 = vunpack.c.l.b16 %v6212
    %v7089 = vunpack.c.h.b16 %v6212
    %v7090 = vunpack.c.l.b16 %v6213
    %v7091 = vunpack.c.h.b16 %v6213
    %v7092 = vunpack.c.l.b16 %v6214
    %v7093 = vunpack.c.h.b16 %v6214
    %v7094 = vunpack.c.l.b16 %v6215
    %v7095 = vunpack.c.h.b16 %v6215
    %v7096 = vunpack.c.l.b16 %v6216
    %v7097 = vunpack.c.h.b16 %v6216
    %v7098 = vunpack.c.l.b16 %v6217
    %v7099 = vunpack.c.h.b16 %v6217
    %v7100 = vunpack.c.l.b16 %v6218
    %v7101 = vunpack.c.h.b16 %v6218
    %v7102 = vunpack.c.l.b16 %v6219
    %v7103 = vunpack.c.h.b16 %v6219
    %v7104 = vunpack.c.l.b16 %v6220
    %v7105 = vunpack.c.h.b16 %v6220
    %v7106 = vunpack.c.l.b16 %v6221
    %v7107 = vunpack.c.h.b16 %v6221
    %v7108 = vunpack.c.l.b16 %v6222
    %v7109 = vunpack.c.h.b16 %v6222
    %v7110 = vunpack.c.l.b16 %v6223
    %v7111 = vunpack.c.h.b16 %v6223
    %v7112 = vunpack.c.l.b16 %v6224
    %v7113 = vunpack.c.h.b16 %v6224
    %v7114 = vunpack.c.l.b16 %v6225
    %v7115 = vunpack.c.h.b16 %v6225
    %v7116 = vunpack.c.l.b16 %v6226
    %v7117 = vunpack.c.h.b16 %v6226
    %v7118 = vunpack.c.l.b16 %v6227
    %v7119 = vunpack.c.h.b16 %v6227
    %v7120 = vunpack.c.l.b16 %v6228
    %v7121 = vunpack.c.h.b16 %v6228
    %v7122 = vunpack.c.l.b16 %v6229
    %v7123 = vunpack.c.h.b16 %v6229
    %v7124 = vunpack.c.l.b16 %v6230
    %v7125 = vunpack.c.h.b16 %v6230
    %v7126 = vunpack.c.l.b16 %v6231
    %v7127 = vunpack.c.h.b16 %v6231
    %v7128 = vunpack.c.l.b16 %v6232
    %v7129 = vunpack.c.h.b16 %v6232
    %v7130 = vunpack.c.l.b16 %v6233
    %v7131 = vunpack.c.h.b16 %v6233
    %v7132 = vunpack.c.l.b16 %v6234
    %v7133 = vunpack.c.h.b16 %v6234
    %v7134 = vunpack.c.l.b16 %v6235
    %v7135 = vunpack.c.h.b16 %v6235
    %v7136 = vunpack.c.l.b16 %v6236
    %v7137 = vunpack.c.h.b16 %v6236
    %v7138 = vunpack.c.l.b16 %v6237
    %v7139 = vunpack.c.h.b16 %v6237
    %v7140 = vunpack.c.l.b16 %v6238
    %v7141 = vunpack.c.h.b16 %v6238
    %v7142 = vunpack.c.l.b16 %v6239
    %v7143 = vunpack.c.h.b16 %v6239
    %v7144 = vunpack.c.l.b16 %v6240
    %v7145 = vunpack.c.h.b16 %v6240
    %v7146 = vunpack.c.l.b16 %v6241
    %v7147 = vunpack.c.h.b16 %v6241
    %v7148 = vunpack.c.l.b16 %v6242
    %v7149 = vunpack.c.h.b16 %v6242
    %v7150 = vunpack.c.l.b16 %v6243
    %v7151 = vunpack.c.h.b16 %v6243
    %v7152 = vunpack.c.l.b16 %v6244
    %v7153 = vunpack.c.h.b16 %v6244
    %v7154 = vunpack.c.l.b16 %v6245
    %v7155 = vunpack.c.h.b16 %v6245
    %v7156 = vunpack.c.l.b16 %v6246
    %v7157 = vunpack.c.h.b16 %v6246
    %v7158 = vunpack.c.l.b16 %v6247
    %v7159 = vunpack.c.h.b16 %v6247
    %v7160 = vunpack.c.l.b16 %v6248
    %v7161 = vunpack.c.h.b16 %v6248
    %v7162 = vunpack.c.l.b16 %v6249
    %v7163 = vunpack.c.h.b16 %v6249
    %v7164 = vunpack.c.l.b16 %v6250
    %v7165 = vunpack.c.h.b16 %v6250
    %v7166 = vunpack.c.l.b16 %v6251
    %v7167 = vunpack.c.h.b16 %v6251
    %v7168 = vunpack.c.l.b16 %v6252
    %v7169 = vunpack.c.h.b16 %v6252
    %v7170 = vunpack.c.l.b16 %v6253
    %v7171 = vunpack.c.h.b16 %v6253
    %v7172 = vunpack.c.l.b16 %v6254
    %v7173 = vunpack.c.h.b16 %v6254
    %v7174 = vunpack.c.l.b16 %v6255
    %v7175 = vunpack.c.h.b16 %v6255
    %v7176 = vunpack.c.l.b16 %v6256
    %v7177 = vunpack.c.h.b16 %v6256
    %v7178 = vunpack.c.l.b16 %v6257
    %v7179 = vunpack.c.h.b16 %v6257
    %v7180 = vunpack.c.l.b16 %v6258
    %v7181 = vunpack.c.h.b16 %v6258
    %v7182 = vunpack.c.l.b16 %v6259
    %v7183 = vunpack.c.h.b16 %v6259
    %v7184 = vunpack.c.l.b16 %v6260
    %v7185 = vunpack.c.h.b16 %v6260
    %v7186 = vunpack.c.l.b16 %v6261
    %v7187 = vunpack.c.h.b16 %v6261
    %v7188 = vunpack.c.l.b16 %v6262
    %v7189 = vunpack.c.h.b16 %v6262
    %v7190 = vunpack.c.l.b16 %v6263
    %v7191 = vunpack.c.h.b16 %v6263
    %v7192 = vunpack.c.l.b16 %v6264
    %v7193 = vunpack.c.h.b16 %v6264
    %v7194 = vunpack.c.l.b16 %v6265
    %v7195 = vunpack.c.h.b16 %v6265
    %v7196 = vunpack.c.l.b16 %v6266
    %v7197 = vunpack.c.h.b16 %v6266
    %v7198 = vunpack.c.l.b16 %v6267
    %v7199 = vunpack.c.h.b16 %v6267
    %v7200 = vunpack.c.l.b16 %v6268
    %v7201 = vunpack.c.h.b16 %v6268
    %v7202 = vunpack.c.l.b16 %v6269
    %v7203 = vunpack.c.h.b16 %v6269
    %v7204 = vunpack.c.l.b16 %v6270
    %v7205 = vunpack.c.h.b16 %v6270
    %v7206 = vunpack.c.l.b16 %v6271
    %v7207 = vunpack.c.h.b16 %v6271
    %v7208 = vunpack.c.l.b16 %v6272
    %v7209 = vunpack.c.h.b16 %v6272
    %v7210 = vunpack.c.l.b16 %v6273
    %v7211 = vunpack.c.h.b16 %v6273
    %v7212 = vunpack.c.l.b16 %v6274
    %v7213 = vunpack.c.h.b16 %v6274
    %v7214 = vunpack.c.l.b16 %v6275
    %v7215 = vunpack.c.h.b16 %v6275
    %v7216 = vunpack.c.l.b16 %v6276
    %v7217 = vunpack.c.h.b16 %v6276
    %v7218 = vunpack.c.l.b16 %v6277
    %v7219 = vunpack.c.h.b16 %v6277
    %v7220 = vunpack.c.l.b16 %v6278
    %v7221 = vunpack.c.h.b16 %v6278
    %v7222 = vunpack.c.l.b16 %v6279
    %v7223 = vunpack.c.h.b16 %v6279
    %v7224 = vunpack.c.l.b16 %v6280
    %v7225 = vunpack.c.h.b16 %v6280
    %v7226 = vunpack.c.l.b16 %v6281
    %v7227 = vunpack.c.h.b16 %v6281
    %v7228 = vunpack.c.l.b16 %v6282
    %v7229 = vunpack.c.h.b16 %v6282
    %v7230 = vunpack.c.l.b16 %v6283
    %v7231 = vunpack.c.h.b16 %v6283
    %v7232 = vunpack.c.l.b16 %v6284
    %v7233 = vunpack.c.h.b16 %v6284
    %v7234 = vunpack.c.l.b16 %v6285
    %v7235 = vunpack.c.h.b16 %v6285
    %v7236 = vunpack.c.l.b16 %v6286
    %v7237 = vunpack.c.h.b16 %v6286
    %v7238 = vunpack.c.l.b16 %v6287
    %v7239 = vunpack.c.h.b16 %v6287
    %v7240 = vunpack.c.l.b16 %v6288
    %v7241 = vunpack.c.h.b16 %v6288
    %v7242 = vunpack.c.l.b16 %v6289
    %v7243 = vunpack.c.h.b16 %v6289
    %v7244 = vunpack.c.l.b16 %v6290
    %v7245 = vunpack.c.h.b16 %v6290
    %v7246 = vunpack.c.l.b16 %v6291
    %v7247 = vunpack.c.h.b16 %v6291
    %v7248 = vunpack.c.l.b16 %v6292
    %v7249 = vunpack.c.h.b16 %v6292
    %v7250 = vunpack.c.l.b16 %v6293
    %v7251 = vunpack.c.h.b16 %v6293
    %v7252 = vunpack.c.l.b16 %v6294
    %v7253 = vunpack.c.h.b16 %v6294
    %v7254 = vunpack.c.l.b16 %v6295
    %v7255 = vunpack.c.h.b16 %v6295
    %v7256 = vunpack.c.l.b16 %v6296
    %v7257 = vunpack.c.h.b16 %v6296
    %v7258 = vunpack.c.l.b16 %v6297
    %v7259 = vunpack.c.h.b16 %v6297
    %v7260 = vunpack.c.l.b16 %v6298
    %v7261 = vunpack.c.h.b16 %v6298
    %v7262 = vunpack.c.l.b16 %v6299
    %v7263 = vunpack.c.h.b16 %v6299
    %v7264 = vunpack.c.l.b16 %v6300
    %v7265 = vunpack.c.h.b16 %v6300
    %v7266 = vunpack.c.l.b16 %v6301
    %v7267 = vunpack.c.h.b16 %v6301
    %v7268 = vunpack.c.l.b16 %v6302
    %v7269 = vunpack.c.h.b16 %v6302
    %v7270 = vunpack.c.l.b16 %v6303
    %v7271 = vunpack.c.h.b16 %v6303
    %v7272 = vunpack.c.l.b16 %v6304
    %v7273 = vunpack.c.h.b16 %v6304
    %v7274 = vunpack.c.l.b16 %v6305
    %v7275 = vunpack.c.h.b16 %v6305
    %v7276 = vunpack.c.l.b16 %v6306
    %v7277 = vunpack.c.h.b16 %v6306
    %v7278 = vunpack.c.l.b16 %v6307
    %v7279 = vunpack.c.h.b16 %v6307
    %v7280 = vunpack.c.l.b16 %v6308
    %v7281 = vunpack.c.h.b16 %v6308
    %v7282 = vunpack.c.l.b16 %v6309
    %v7283 = vunpack.c.h.b16 %v6309
    %v7284 = vunpack.c.l.b16 %v6310
    %v7285 = vunpack.c.h.b16 %v6310
    %v7286 = vunpack.c.l.b16 %v6311
    %v7287 = vunpack.c.h.b16 %v6311
    %v7288 = vunpack.c.l.b16 %v6312
    %v7289 = vunpack.c.h.b16 %v6312
    %v7290 = vunpack.c.l.b16 %v6313
    %v7291 = vunpack.c.h.b16 %v6313
    %v7292 = vunpack.c.l.b16 %v6314
    %v7293 = vunpack.c.h.b16 %v6314
    %v7294 = vunpack.c.l.b16 %v6315
    %v7295 = vunpack.c.h.b16 %v6315
    %v7296 = vunpack.c.l.b16 %v6316
    %v7297 = vunpack.c.h.b16 %v6316
    %v7298 = vunpack.c.l.b16 %v6317
    %v7299 = vunpack.c.h.b16 %v6317
    %v7300 = vunpack.c.l.b16 %v6318
    %v7301 = vunpack.c.h.b16 %v6318
    %v7302 = vunpack.c.l.b16 %v6319
    %v7303 = vunpack.c.h.b16 %v6319
    %v7304 = vunpack.c.l.b16 %v6320
    %v7305 = vunpack.c.h.b16 %v6320
    %v7306 = vunpack.c.l.b16 %v6321
    %v7307 = vunpack.c.h.b16 %v6321
    %v7308 = vunpack.c.l.b16 %v6322
    %v7309 = vunpack.c.h.b16 %v6322
    %v7310 = vunpack.c.l.b16 %v6323
    %v7311 = vunpack.c.h.b16 %v6323
    %v7312 = vunpack.c.l.b16 %v6324
    %v7313 = vunpack.c.h.b16 %v6324
    %v7314 = vunpack.c.l.b16 %v6325
    %v7315 = vunpack.c.h.b16 %v6325
    %v7316 = vunpack.c.l.b16 %v6326
    %v7317 = vunpack.c.h.b16 %v6326
    %v7318 = vunpack.c.l.b16 %v6327
    %v7319 = vunpack.c.h.b16 %v6327
    %v7320 = vunpack.c.l.b16 %v6328
    %v7321 = vunpack.c.h.b16 %v6328
    %v7322 = vunpack.c.l.b16 %v6329
    %v7323 = vunpack.c.h.b16 %v6329
    %v7324 = vunpack.c.l.b16 %v6330
    %v7325 = vunpack.c.h.b16 %v6330
    %v7326 = vunpack.c.l.b16 %v6331
    %v7327 = vunpack.c.h.b16 %v6331
    %v7328 = vunpack.c.l.b16 %v6332
    %v7329 = vunpack.c.h.b16 %v6332
    %v7330 = vunpack.c.l.b16 %v6333
    %v7331 = vunpack.c.h.b16 %v6333
    %v7332 = vunpack.c.l.b16 %v6334
    %v7333 = vunpack.c.h.b16 %v6334
    %v7334 = vunpack.c.l.b16 %v6335
    %v7335 = vunpack.c.h.b16 %v6335
    %v7336 = vunpack.c.l.b16 %v6336
    %v7337 = vunpack.c.h.b16 %v6336
    %v7338 = vunpack.c.l.b16 %v6337
    %v7339 = vunpack.c.h.b16 %v6337
    %v7340 = vunpack.c.l.b16 %v6338
    %v7341 = vunpack.c.h.b16 %v6338
    %v7342 = vunpack.c.l.b16 %v6339
    %v7343 = vunpack.c.h.b16 %v6339
    %v7344 = vunpack.c.l.b16 %v6340
    %v7345 = vunpack.c.h.b16 %v6340
    %v7346 = vunpack.c.l.b16 %v6341
    %v7347 = vunpack.c.h.b16 %v6341
    %v7348 = vunpack.c.l.b16 %v6342
    %v7349 = vunpack.c.h.b16 %v6342
    %v7350 = vunpack.c.l.b16 %v6343
    %v7351 = vunpack.c.h.b16 %v6343
    %v7352 = vunpack.c.l.b16 %v6344
    %v7353 = vunpack.c.h.b16 %v6344
    %v7354 = vunpack.c.l.b16 %v6345
    %v7355 = vunpack.c.h.b16 %v6345
    %v7356 = vunpack.c.l.b16 %v6346
    %v7357 = vunpack.c.h.b16 %v6346
    %v7358 = vunpack.c.l.b16 %v6347
    %v7359 = vunpack.c.h.b16 %v6347
    %v7360 = vunpack.c.l.b16 %v6348
    %v7361 = vunpack.c.h.b16 %v6348
    %v7362 = vunpack.c.l.b16 %v6349
    %v7363 = vunpack.c.h.b16 %v6349
    %v7364 = vunpack.c.l.b16 %v6350
    %v7365 = vunpack.c.h.b16 %v6350
    %v7366 = vunpack.c.l.b16 %v6351
    %v7367 = vunpack.c.h.b16 %v6351
    %v7368 = vunpack.c.l.b16 %v6352
    %v7369 = vunpack.c.h.b16 %v6352
    %v7370 = vunpack.c.l.b16 %v6353
    %v7371 = vunpack.c.h.b16 %v6353
    %v7372 = vunpack.c.l.b16 %v6354
    %v7373 = vunpack.c.h.b16 %v6354
    %v7374 = vunpack.c.l.b16 %v6355
    %v7375 = vunpack.c.h.b16 %v6355
    %v7376 = vunpack.c.l.b16 %v6356
    %v7377 = vunpack.c.h.b16 %v6356
    %v7378 = vunpack.c.l.b16 %v6357
    %v7379 = vunpack.c.h.b16 %v6357
    %v7380 = vunpack.c.l.b16 %v6358
    %v7381 = vunpack.c.h.b16 %v6358
    %v7382 = vunpack.c.l.b16 %v6359
    %v7383 = vunpack.c.h.b16 %v6359
    %v7384 = vunpack.c.l.b16 %v6360
    %v7385 = vunpack.c.h.b16 %v6360
    %v7386 = vunpack.c.l.b16 %v6361
    %v7387 = vunpack.c.h.b16 %v6361
    %v7388 = vunpack.c.l.b16 %v6362
    %v7389 = vunpack.c.h.b16 %v6362
    %v7390 = vunpack.c.l.b16 %v6363
    %v7391 = vunpack.c.h.b16 %v6363
    %v7392 = vunpack.c.l.b16 %v6364
    %v7393 = vunpack.c.h.b16 %v6364
    %v7394 = vunpack.c.l.b16 %v6365
    %v7395 = vunpack.c.h.b16 %v6365
    %v7396 = vunpack.c.l.b16 %v6366
    %v7397 = vunpack.c.h.b16 %v6366
    %v7398 = vunpack.c.l.b16 %v6367
    %v7399 = vunpack.c.h.b16 %v6367
    %v7400 = vunpack.c.l.b16 %v6368
    %v7401 = vunpack.c.h.b16 %v6368
    %v7402 = vunpack.c.l.b16 %v6369
    %v7403 = vunpack.c.h.b16 %v6369
    %v7404 = vunpack.c.l.b16 %v6370
    %v7405 = vunpack.c.h.b16 %v6370
    %v7406 = vunpack.c.l.b16 %v6371
    %v7407 = vunpack.c.h.b16 %v6371
    %v7408 = vunpack.c.l.b16 %v6372
    %v7409 = vunpack.c.h.b16 %v6372
    %v7410 = vunpack.c.l.b16 %v6373
    %v7411 = vunpack.c.h.b16 %v6373
    %v7412 = vunpack.c.l.b16 %v6374
    %v7413 = vunpack.c.h.b16 %v6374
    %v7414 = vunpack.c.l.b16 %v6375
    %v7415 = vunpack.c.h.b16 %v6375
    %v7416 = vunpack.c.l.b16 %v6376
    %v7417 = vunpack.c.h.b16 %v6376
    %v7418 = vunpack.c.l.b16 %v6377
    %v7419 = vunpack.c.h.b16 %v6377
    %v7420 = vunpack.c.l.b16 %v6378
    %v7421 = vunpack.c.h.b16 %v6378
    %v7422 = vunpack.c.l.b16 %v6379
    %v7423 = vunpack.c.h.b16 %v6379
    %v7424 = vpack.c.b16 %v6850, %v6848
    %v7425 = vpack.c.b16 %v6851, %v6849
    %v7426 = vpack.c.b16 %v6854, %v6852
    %v7427 = vpack.c.b16 %v6855, %v6853
    %v7428 = vpack.c.b16 %v6858, %v6856
    %v7429 = vpack.c.b16 %v6859, %v6857
    %v7430 = vpack.c.b16 %v6862, %v6860
    %v7431 = vpack.c.b16 %v6863, %v6861
    %v7432 = vpack.c.b16 %v6866, %v6864
    %v7433 = vpack.c.b16 %v6867, %v6865
    %v7434 = vpack.c.b16 %v6870, %v6868
    %v7435 = vpack.c.b16 %v6871, %v6869
    %v7436 = vpack.c.b16 %v6874, %v6872
    %v7437 = vpack.c.b16 %v6875, %v6873
    %v7438 = vpack.c.b16 %v6878, %v6876
    %v7439 = vpack.c.b16 %v6879, %v6877
    %v7440 = vpack.c.b16 %v6882, %v6880
    %v7441 = vpack.c.b16 %v6883, %v6881
    %v7442 = vpack.c.b16 %v6886, %v6884
    %v7443 = vpack.c.b16 %v6887, %v6885
    %v7444 = vpack.c.b16 %v6890, %v6888
    %v7445 = vpack.c.b16 %v6891, %v6889
    %v7446 = vpack.c.b16 %v6894, %v6892
    %v7447 = vpack.c.b16 %v6895, %v6893
    %v7448 = vpack.c.b16 %v6898, %v6896
    %v7449 = vpack.c.b16 %v6899, %v6897
    %v7450 = vpack.c.b16 %v6902, %v6900
    %v7451 = vpack.c.b16 %v6903, %v6901
    %v7452 = vpack.c.b16 %v6906, %v6904
    %v7453 = vpack.c.b16 %v6907, %v6905
    %v7454 = vpack.c.b16 %v6910, %v6908
    %v7455 = vpack.c.b16 %v6911, %v6909
    %v7456 = vpack.c.b16 %v6914, %v6912
    %v7457 = vpack.c.b16 %v6915, %v6913
    %v7458 = vpack.c.b16 %v6918, %v6916
    %v7459 = vpack.c.b16 %v6919, %v6917
    %v7460 = vpack.c.b16 %v6922, %v6920
    %v7461 = vpack.c.b16 %v6923, %v6921
    %v7462 = vpack.c.b16 %v6926, %v6924
    %v7463 = vpack.c.b16 %v6927, %v6925
    %v7464 = vpack.c.b16 %v6930, %v6928
    %v7465 = vpack.c.b16 %v6931, %v6929
    %v7466 = vpack.c.b16 %v6934, %v6932
    %v7467 = vpack.c.b16 %v6935, %v6933
    %v7468 = vpack.c.b16 %v6938, %v6936
    %v7469 = vpack.c.b16 %v6939, %v6937
    %v7470 = vpack.c.b16 %v6942, %v6940
    %v7471 = vpack.c.b16 %v6943, %v6941
    %v7472 = vpack.c.b16 %v6946, %v6944
    %v7473 = vpack.c.b16 %v6947, %v6945
    %v7474 = vpack.c.b16 %v6950, %v6948
    %v7475 = vpack.c.b16 %v6951, %v6949
    %v7476 = vpack.c.b16 %v6954, %v6952
    %v7477 = vpack.c.b16 %v6955, %v6953
    %v7478 = vpack.c.b16 %v6958, %v6956
    %v7479 = vpack.c.b16 %v6959, %v6957
    %v7480 = vpack.c.b16 %v6962, %v6960
    %v7481 = vpack.c.b16 %v6963, %v6961
    %v7482 = vpack.c.b16 %v6966, %v6964
    %v7483 = vpack.c.b16 %v6967, %v6965
    %v7484 = vpack.c.b16 %v6970, %v6968
    %v7485 = vpack.c.b16 %v6971, %v6969
    %v7486 = vpack.c.b16 %v6974, %v6972
    %v7487 = vpack.c.b16 %v6975, %v6973
    %v7488 = vpack.c.b16 %v6978, %v6976
    %v7489 = vpack.c.b16 %v6979, %v6977
    %v7490 = vpack.c.b16 %v6982, %v6980
    %v7491 = vpack.c.b16 %v6983, %v6981
    %v7492 = vpack.c.b16 %v6986, %v6984
    %v7493 = vpack.c.b16 %v6987, %v6985
    %v7494 = vpack.c.b16 %v6990, %v6988
    %v7495 = vpack.c.b16 %v6991, %v6989
    %v7496 = vpack.c.b16 %v6994, %v6992
    %v7497 = vpack.c.b16 %v6995, %v6993
    %v7498 = vpack.c.b16 %v6998, %v6996
    %v7499 = vpack.c.b16 %v6999, %v6997
    %v7500 = vpack.c.b16 %v7002, %v7000
    %v7501 = vpack.c.b16 %v7003, %v7001
    %v7502 = vpack.c.b16 %v7006, %v7004
    %v7503 = vpack.c.b16 %v7007, %v7005
    %v7504 = vpack.c.b16 %v7010, %v7008
    %v7505 = vpack.c.b16 %v7011, %v7009
    %v7506 = vpack.c.b16 %v7014, %v7012
    %v7507 = vpack.c.b16 %v7015, %v7013
    %v7508 = vpack.c.b16 %v7018, %v7016
    %v7509 = vpack.c.b16 %v7019, %v7017
    %v7510 = vpack.c.b16 %v7022, %v7020
    %v7511 = vpack.c.b16 %v7023, %v7021
    %v7512 = vpack.c.b16 %v7026, %v7024
    %v7513 = vpack.c.b16 %v7027, %v7025
    %v7514 = vpack.c.b16 %v7030, %v7028
    %v7515 = vpack.c.b16 %v7031, %v7029
    %v7516 = vpack.c.b16 %v7034, %v7032
    %v7517 = vpack.c.b16 %v7035, %v7033
    %v7518 = vpack.c.b16 %v7038, %v7036
    %v7519 = vpack.c.b16 %v7039, %v7037
    %v7520 = vpack.c.b16 %v7042, %v7040
    %v7521 = vpack.c.b16 %v7043, %v7041
    %v7522 = vpack.c.b16 %v7046, %v7044
    %v7523 = vpack.c.b16 %v7047, %v7045
    %v7524 = vpack.c.b16 %v7050, %v7048
    %v7525 = vpack.c.b16 %v7051, %v7049
    %v7526 = vpack.c.b16 %v7054, %v7052
    %v7527 = vpack.c.b16 %v7055, %v7053
    %v7528 = vpack.c.b16 %v7058, %v7056
    %v7529 = vpack.c.b16 %v7059, %v7057
    %v7530 = vpack.c.b16 %v7062, %v7060
    %v7531 = vpack.c.b16 %v7063, %v7061
    %v7532 = vpack.c.b16 %v7066, %v7064
    %v7533 = vpack.c.b16 %v7067, %v7065
    %v7534 = vpack.c.b16 %v7070, %v7068
    %v7535 = vpack.c.b16 %v7071, %v7069
    %v7536 = vpack.c.b16 %v7074, %v7072
    %v7537 = vpack.c.b16 %v7075, %v7073
    %v7538 = vpack.c.b16 %v7078, %v7076
    %v7539 = vpack.c.b16 %v7079, %v7077
    %v7540 = vpack.c.b16 %v7082, %v7080
    %v7541 = vpack.c.b16 %v7083, %v7081
    %v7542 = vpack.c.b16 %v7086, %v7084
    %v7543 = vpack.c.b16 %v7087, %v7085
    %v7544 = vpack.c.b16 %v7090, %v7088
    %v7545 = vpack.c.b16 %v7091, %v7089
    %v7546 = vpack.c.b16 %v7094, %v7092
    %v7547 = vpack.c.b16 %v7095, %v7093
    %v7548 = vpack.c.b16 %v7098, %v7096
    %v7549 = vpack.c.b16 %v7099, %v7097
    %v7550 = vpack.c.b16 %v7102, %v7100
    %v7551 = vpack.c.b16 %v7103, %v7101
    %v7552 = vpack.c.b16 %v7106, %v7104
    %v7553 = vpack.c.b16 %v7107, %v7105
    %v7554 = vpack.c.b16 %v7110, %v7108
    %v7555 = vpack.c.b16 %v7111, %v7109
    %v7556 = vpack.c.b16 %v7114, %v7112
    %v7557 = vpack.c.b16 %v7115, %v7113
    %v7558 = vpack.c.b16 %v7118, %v7116
    %v7559 = vpack.c.b16 %v7119, %v7117
    %v7560 = vpack.c.b16 %v7122, %v7120
    %v7561 = vpack.c.b16 %v7123, %v7121
    %v7562 = vpack.c.b16 %v7126, %v7124
    %v7563 = vpack.c.b16 %v7127, %v7125
    %v7564 = vpack.c.b16 %v7130, %v7128
    %v7565 = vpack.c.b16 %v7131, %v7129
    %v7566 = vpack.c.b16 %v7134, %v7132
    %v7567 = vpack.c.b16 %v7135, %v7133
    %v7568 = vpack.c.b16 %v7138, %v7136
    %v7569 = vpack.c.b16 %v7139, %v7137
    %v7570 = vpack.c.b16 %v7142, %v7140
    %v7571 = vpack.c.b16 %v7143, %v7141
    %v7572 = vpack.c.b16 %v7146, %v7144
    %v7573 = vpack.c.b16 %v7147, %v7145
    %v7574 = vpack.c.b16 %v7150, %v7148
    %v7575 = vpack.c.b16 %v7151, %v7149
    %v7576 = vpack.c.b16 %v7154, %v7152
    %v7577 = vpack.c.b16 %v7155, %v7153
    %v7578 = vpack.c.b16 %v7158, %v7156
    %v7579 = vpack.c.b16 %v7159, %v7157
    %v7580 = vpack.c.b16 %v7162, %v7160
    %v7581 = vpack.c.b16 %v7163, %v7161
    %v7582 = vpack.c.b16 %v7166, %v7164
    %v7583 = vpack.c.b16 %v7167, %v7165
    %v7584 = vpack.c.b16 %v7170, %v7168
    %v7585 = vpack.c.b16 %v7171, %v7169
    %v7586 = vpack.c.b16 %v7174, %v7172
    %v7587 = vpack.c.b16 %v7175, %v7173
    %v7588 = vpack.c.b16 %v7178, %v7176
    %v7589 = vpack.c.b16 %v7179, %v7177
    %v7590 = vpack.c.b16 %v7182, %v7180
    %v7591 = vpack.c.b16 %v7183, %v7181
    %v7592 = vpack.c.b16 %v7186, %v7184
    %v7593 = vpack.c.b16 %v7187, %v7185
    %v7594 = vpack.c.b16 %v7190, %v7188
    %v7595 = vpack.c.b16 %v7191, %v7189
    %v7596 = vpack.c.b16 %v7194, %v7192
    %v7597 = vpack.c.b16 %v7195, %v7193
    %v7598 = vpack.c.b16 %v7198, %v7196
    %v7599 = vpack.c.b16 %v7199, %v7197
    %v7600 = vpack.c.b16 %v7202, %v7200
    %v7601 = vpack.c.b16 %v7203, %v7201
    %v7602 = vpack.c.b16 %v7206, %v7204
    %v7603 = vpack.c.b16 %v7207, %v7205
    %v7604 = vpack.c.b16 %v7210, %v7208
    %v7605 = vpack.c.b16 %v7211, %v7209
    %v7606 = vpack.c.b16 %v7214, %v7212
    %v7607 = vpack.c.b16 %v7215, %v7213
    %v7608 = vpack.c.b16 %v7218, %v7216
    %v7609 = vpack.c.b16 %v7219, %v7217
    %v7610 = vpack.c.b16 %v7222, %v7220
    %v7611 = vpack.c.b16 %v7223, %v7221
    %v7612 = vpack.c.b16 %v7226, %v7224
    %v7613 = vpack.c.b16 %v7227, %v7225
    %v7614 = vpack.c.b16 %v7230, %v7228
    %v7615 = vpack.c.b16 %v7231, %v7229
    %v7616 = vpack.c.b16 %v7234, %v7232
    %v7617 = vpack.c.b16 %v7235, %v7233
    %v7618 = vpack.c.b16 %v7238, %v7236
    %v7619 = vpack.c.b16 %v7239, %v7237
    %v7620 = vpack.c.b16 %v7242, %v7240
    %v7621 = vpack.c.b16 %v7243, %v7241
    %v7622 = vpack.c.b16 %v7246, %v7244
    %v7623 = vpack.c.b16 %v7247, %v7245
    %v7624 = vpack.c.b16 %v7250, %v7248
    %v7625 = vpack.c.b16 %v7251, %v7249
    %v7626 = vpack.c.b16 %v7254, %v7252
    %v7627 = vpack.c.b16 %v7255, %v7253
    %v7628 = vpack.c.b16 %v7258, %v7256
    %v7629 = vpack.c.b16 %v7259, %v7257
    %v7630 = vpack.c.b16 %v7262, %v7260
    %v7631 = vpack.c.b16 %v7263, %v7261
    %v7632 = vpack.c.b16 %v7266, %v7264
    %v7633 = vpack.c.b16 %v7267, %v7265
    %v7634 = vpack.c.b16 %v7270, %v7268
    %v7635 = vpack.c.b16 %v7271, %v7269
    %v7636 = vpack.c.b16 %v7274, %v7272
    %v7637 = vpack.c.b16 %v7275, %v7273
    %v7638 = vpack.c.b16 %v7278, %v7276
    %v7639 = vpack.c.b16 %v7279, %v7277
    %v7640 = vpack.c.b16 %v7282, %v7280
    %v7641 = vpack.c.b16 %v7283, %v7281
    %v7642 = vpack.c.b16 %v7286, %v7284
    %v7643 = vpack.c.b16 %v7287, %v7285
    %v7644 = vpack.c.b16 %v7290, %v7288
    %v7645 = vpack.c.b16 %v7291, %v7289
    %v7646 = vpack.c.b16 %v7294, %v7292
    %v7647 = vpack.c.b16 %v7295, %v7293
    %v7648 = vpack.c.b16 %v7298, %v7296
    %v7649 = vpack.c.b16 %v7299, %v7297
    %v7650 = vpack.c.b16 %v7302, %v7300
    %v7651 = vpack.c.b16 %v7303, %v7301
    %v7652 = vpack.c.b16 %v7306, %v7304
    %v7653 = vpack.c.b16 %v7307, %v7305
    %v7654 = vpack.c.b16 %v7310, %v7308
    %v7655 = vpack.c.b16 %v7311, %v7309
    %v7656 = vpack.c.b16 %v7314, %v7312
    %v7657 = vpack.c.b16 %v7315, %v7313
    %v7658 = vpack.c.b16 %v7318, %v7316
    %v7659 = vpack.c.b16 %v7319, %v7317
    %v7660 = vpack.c.b16 %v7322, %v7320
    %v7661 = vpack.c.b16 %v7323, %v7321
    %v7662 = vpack.c.b16 %v7326, %v7324
    %v7663 = vpack.c.b16 %v7327, %v7325
    %v7664 = vpack.c.b16 %v7330, %v7328
    %v7665 = vpack.c.b16 %v7331, %v7329
    %v7666 = vpack.c.b16 %v7334, %v7332
    %v7667 = vpack.c.b16 %v7335, %v7333
    %v7668 = vpack.c.b16 %v7338, %v7336
    %v7669 = vpack.c.b16 %v7339, %v7337
    %v7670 = vpack.c.b16 %v7342, %v7340
    %v7671 = vpack.c.b16 %v7343, %v7341
    %v7672 = vpack.c.b16 %v7346, %v7344
    %v7673 = vpack.c.b16 %v7347, %v7345
    %v7674 = vpack.c.b16 %v7350, %v7348
    %v7675 = vpack.c.b16 %v7351, %v7349
    %v7676 = vpack.c.b16 %v7354, %v7352
    %v7677 = vpack.c.b16 %v7355, %v7353
    %v7678 = vpack.c.b16 %v7358, %v7356
    %v7679 = vpack.c.b16 %v7359, %v7357
    %v7680 = vpack.c.b16 %v7362, %v7360
    %v7681 = vpack.c.b16 %v7363, %v7361
    %v7682 = vpack.c.b16 %v7366, %v7364
    %v7683 = vpack.c.b16 %v7367, %v7365
    %v7684 = vpack.c.b16 %v7370, %v7368
    %v7685 = vpack.c.b16 %v7371, %v7369
    %v7686 = vpack.c.b16 %v7374, %v7372
    %v7687 = vpack.c.b16 %v7375, %v7373
    %v7688 = vpack.c.b16 %v7378, %v7376
    %v7689 = vpack.c.b16 %v7379, %v7377
    %v7690 = vpack.c.b16 %v7382, %v7380
    %v7691 = vpack.c.b16 %v7383, %v7381
    %v7692 = vpack.c.b16 %v7386, %v7384
    %v7693 = vpack.c.b16 %v7387, %v7385
    %v7694 = vpack.c.b16 %v7390, %v7388
    %v7695 = vpack.c.b16 %v7391, %v7389
    %v7696 = vpack.c.b16 %v7394, %v7392
    %v7697 = vpack.c.b16 %v7395, %v7393
    %v7698 = vpack.c.b16 %v7398, %v7396
    %v7699 = vpack.c.b16 %v7399, %v7397
    %v7700 = vpack.c.b16 %v7402, %v7400
    %v7701 = vpack.c.b16 %v7403, %v7401
    %v7702 = vpack.c.b16 %v7406, %v7404
    %v7703 = vpack.c.b16 %v7407, %v7405
    %v7704 = vpack.c.b16 %v7410, %v7408
    %v7705 = vpack.c.b16 %v7411, %v7409
    %v7706 = vpack.c.b16 %v7414, %v7412
    %v7707 = vpack.c.b16 %v7415, %v7413
    %v7708 = vpack.c.b16 %v7418, %v7416
    %v7709 = vpack.c.b16 %v7419, %v7417
    %v7710 = vpack.c.b16 %v7422, %v7420
    %v7711 = vpack.c.b16 %v7423, %v7421
    %8000 = vmatprep.subr.bf16.mxu0 %v7425
    %8001 = vmatpush1.bf16.msra.mxu0 %v7424
    %8002 = vmatprep.subr.bf16.mxu0 %v7427
    %8003 = vmatpush1.bf16.msra.mxu0 %v7426
    %8004 = vmatprep.subr.bf16.mxu0 %v7429
    %8005 = vmatpush1.bf16.msra.mxu0 %v7428
    %8006 = vmatprep.subr.bf16.mxu0 %v7431
    %8007 = vmatpush1.bf16.msra.mxu0 %v7430
    %8008 = vmatprep.subr.bf16.mxu0 %v7433
    %8009 = vmatpush1.bf16.msra.mxu0 %v7432
    %8010 = vmatprep.subr.bf16.mxu0 %v7435
    %8011 = vmatpush1.bf16.msra.mxu0 %v7434
    %8012 = vmatprep.subr.bf16.mxu0 %v7437
    %8013 = vmatpush1.bf16.msra.mxu0 %v7436
    %8014 = vmatprep.subr.bf16.mxu0 %v7439
    %8015 = vmatpush1.bf16.msra.mxu0 %v7438
    %8016 = vmatprep.subr.bf16.mxu0 %v7441
    %8017 = vmatpush1.bf16.msra.mxu0 %v7440
    %8018 = vmatprep.subr.bf16.mxu0 %v7443
    %8019 = vmatpush1.bf16.msra.mxu0 %v7442
    %8020 = vmatprep.subr.bf16.mxu0 %v7445
    %8021 = vmatpush1.bf16.msra.mxu0 %v7444
    %8022 = vmatprep.subr.bf16.mxu0 %v7447
    %8023 = vmatpush1.bf16.msra.mxu0 %v7446
    %8024 = vmatprep.subr.bf16.mxu0 %v7449
    %8025 = vmatpush1.bf16.msra.mxu0 %v7448
    %8026 = vmatprep.subr.bf16.mxu0 %v7451
    %8027 = vmatpush1.bf16.msra.mxu0 %v7450
    %8028 = vmatprep.subr.bf16.mxu0 %v7453
    %8029 = vmatpush1.bf16.msra.mxu0 %v7452
    %8030 = vmatprep.subr.bf16.mxu0 %v7455
    %8031 = vmatpush1.bf16.msra.mxu0 %v7454
    %8032 = vmatprep.mubr.bf16.mxu0 %v6525
    %8033 = vmatmul.mubr.bf16.gmra.mrb[0].mxu0 %v6524
    %v8034 = vpop.f32.mrb[0].mxu0
    %v8035 = vadd.f32 0.0, %v8034
    %v8036 = vpop.f32.mrb[0].mxu0
    %v8037 = vadd.f32 0.0, %v8036
    %v8038 = vpop.f32.mrb[0].mxu0
    %v8039 = vadd.f32 0.0, %v8038
    %v8040 = vpop.f32.mrb[0].mxu0
    %v8041 = vadd.f32 0.0, %v8040
    %8042 = vmatprep.mubr.bf16.mxu0 %v6543
    %8043 = vmatmul.mubr.bf16.gmra.mrb[0].mxu0 %v6542
    %v8044 = vpop.f32.mrb[0].mxu0
    %v8045 = vadd.f32 0.0, %v8044
    %v8046 = vpop.f32.mrb[0].mxu0
    %v8047 = vadd.f32 0.0, %v8046
    %v8048 = vpop.f32.mrb[0].mxu0
    %v8049 = vadd.f32 0.0, %v8048
    %v8050 = vpop.f32.mrb[0].mxu0
    %v8051 = vadd.f32 0.0, %v8050
    %8052 = vdwg.mxu0
    %8053 = vmatprep.subr.bf16.mxu0 %v7457
    %8054 = vmatpush1.bf16.msra.mxu0 %v7456
    %8055 = vmatprep.subr.bf16.mxu0 %v7459
    %8056 = vmatpush1.bf16.msra.mxu0 %v7458
    %8057 = vmatprep.subr.bf16.mxu0 %v7461
    %8058 = vmatpush1.bf16.msra.mxu0 %v7460
    %8059 = vmatprep.subr.bf16.mxu0 %v7463
    %8060 = vmatpush1.bf16.msra.mxu0 %v7462
    %8061 = vmatprep.subr.bf16.mxu0 %v7465
    %8062 = vmatpush1.bf16.msra.mxu0 %v7464
    %8063 = vmatprep.subr.bf16.mxu0 %v7467
    %8064 = vmatpush1.bf16.msra.mxu0 %v7466
    %8065 = vmatprep.subr.bf16.mxu0 %v7469
    %8066 = vmatpush1.bf16.msra.mxu0 %v7468
    %8067 = vmatprep.subr.bf16.mxu0 %v7471
    %8068 = vmatpush1.bf16.msra.mxu0 %v7470
    %8069 = vmatprep.subr.bf16.mxu0 %v7473
    %8070 = vmatpush1.bf16.msra.mxu0 %v7472
    %8071 = vmatprep.subr.bf16.mxu0 %v7475
    %8072 = vmatpush1.bf16.msra.mxu0 %v7474
    %8073 = vmatprep.subr.bf16.mxu0 %v7477
    %8074 = vmatpush1.bf16.msra.mxu0 %v7476
    %8075 = vmatprep.subr.bf16.mxu0 %v7479
    %8076 = vmatpush1.bf16.msra.mxu0 %v7478
    %8077 = vmatprep.subr.bf16.mxu0 %v7481
    %8078 = vmatpush1.bf16.msra.mxu0 %v7480
    %8079 = vmatprep.subr.bf16.mxu0 %v7483
    %8080 = vmatpush1.bf16.msra.mxu0 %v7482
    %8081 = vmatprep.subr.bf16.mxu0 %v7485
    %8082 = vmatpush1.bf16.msra.mxu0 %v7484
    %8083 = vmatprep.subr.bf16.mxu0 %v7487
    %8084 = vmatpush1.bf16.msra.mxu0 %v7486
    %8085 = vmatprep.mubr.bf16.mxu0 %v6527
    %8086 = vmatmul.mubr.bf16.gmra.mrb[0].mxu0 %v6526
    %v8087 = vpop.f32.mrb[0].mxu0
    %v8088 = vadd.f32 %v8035, %v8087
    %v8089 = vpop.f32.mrb[0].mxu0
    %v8090 = vadd.f32 %v8037, %v8089
    %v8091 = vpop.f32.mrb[0].mxu0
    %v8092 = vadd.f32 %v8039, %v8091
    %v8093 = vpop.f32.mrb[0].mxu0
    %v8094 = vadd.f32 %v8041, %v8093
    %8095 = vmatprep.mubr.bf16.mxu0 %v6545
    %8096 = vmatmul.mubr.bf16.gmra.mrb[0].mxu0 %v6544
    %v8097 = vpop.f32.mrb[0].mxu0
    %v8098 = vadd.f32 %v8045, %v8097
    %v8099 = vpop.f32.mrb[0].mxu0
    %v8100 = vadd.f32 %v8047, %v8099
    %v8101 = vpop.f32.mrb[0].mxu0
    %v8102 = vadd.f32 %v8049, %v8101
    %v8103 = vpop.f32.mrb[0].mxu0
    %v8104 = vadd.f32 %v8051, %v8103
    %8105 = vdwg.mxu0
    %8106 = vmatprep.subr.bf16.mxu0 %v7489
    %8107 = vmatpush1.bf16.msra.mxu0 %v7488
    %8108 = vmatprep.subr.bf16.mxu0 %v7491
    %8109 = vmatpush1.bf16.msra.mxu0 %v7490
    %8110 = vmatprep.subr.bf16.mxu0 %v7493
    %8111 = vmatpush1.bf16.msra.mxu0 %v7492
    %8112 = vmatprep.subr.bf16.mxu0 %v7495
    %8113 = vmatpush1.bf16.msra.mxu0 %v7494
    %8114 = vmatprep.subr.bf16.mxu0 %v7497
    %8115 = vmatpush1.bf16.msra.mxu0 %v7496
    %8116 = vmatprep.subr.bf16.mxu0 %v7499
    %8117 = vmatpush1.bf16.msra.mxu0 %v7498
    %8118 = vmatprep.subr.bf16.mxu0 %v7501
    %8119 = vmatpush1.bf16.msra.mxu0 %v7500
    %8120 = vmatprep.subr.bf16.mxu0 %v7503
    %8121 = vmatpush1.bf16.msra.mxu0 %v7502
    %8122 = vmatprep.subr.bf16.mxu0 %v7505
    %8123 = vmatpush1.bf16.msra.mxu0 %v7504
    %8124 = vmatprep.subr.bf16.mxu0 %v7507
    %8125 = vmatpush1.bf16.msra.mxu0 %v7506
    %8126 = vmatprep.subr.bf16.mxu0 %v7509
    %8127 = vmatpush1.bf16.msra.mxu0 %v7508
    %8128 = vmatprep.subr.bf16.mxu0 %v7511
    %8129 = vmatpush1.bf16.msra.mxu0 %v7510
    %8130 = vmatprep.subr.bf16.mxu0 %v7513
    %8131 = vmatpush1.bf16.msra.mxu0 %v7512
    %8132 = vmatprep.subr.bf16.mxu0 %v7515
    %8133 = vmatpush1.bf16.msra.mxu0 %v7514
    %8134 = vmatprep.subr.bf16.mxu0 %v7517
    %8135 = vmatpush1.bf16.msra.mxu0 %v7516
    %8136 = vmatprep.subr.bf16.mxu0 %v7519
    %8137 = vmatpush1.bf16.msra.mxu0 %v7518
    %8138 = vmatprep.mubr.bf16.mxu0 %v6529
    %8139 = vmatmul.mubr.bf16.gmra.mrb[0].mxu0 %v6528
    %v8140 = vpop.f32.mrb[0].mxu0
    %v8141 = vadd.f32 %v8088, %v8140
    %v8142 = vpop.f32.mrb[0].mxu0
    %v8143 = vadd.f32 %v8090, %v8142
    %v8144 = vpop.f32.mrb[0].mxu0
    %v8145 = vadd.f32 %v8092, %v8144
    %v8146 = vpop.f32.mrb[0].mxu0
    %v8147 = vadd.f32 %v8094, %v8146
    %8148 = vmatprep.mubr.bf16.mxu0 %v6547
    %8149 = vmatmul.mubr.bf16.gmra.mrb[0].mxu0 %v6546
    %v8150 = vpop.f32.mrb[0].mxu0
    %v8151 = vadd.f32 %v8098, %v8150
    %v8152 = vpop.f32.mrb[0].mxu0
    %v8153 = vadd.f32 %v8100, %v8152
    %v8154 = vpop.f32.mrb[0].mxu0
    %v8155 = vadd.f32 %v8102, %v8154
    %v8156 = vpop.f32.mrb[0].mxu0
    %v8157 = vadd.f32 %v8104, %v8156
    %8158 = vdwg.mxu0
    %8159 = vmatprep.subr.bf16.mxu0 %v7521
    %8160 = vmatpush1.bf16.msra.mxu0 %v7520
    %8161 = vmatprep.subr.bf16.mxu0 %v7523
    %8162 = vmatpush1.bf16.msra.mxu0 %v7522
    %8163 = vmatprep.subr.bf16.mxu0 %v7525
    %8164 = vmatpush1.bf16.msra.mxu0 %v7524
    %8165 = vmatprep.subr.bf16.mxu0 %v7527
    %8166 = vmatpush1.bf16.msra.mxu0 %v7526
    %8167 = vmatprep.subr.bf16.mxu0 %v7529
    %8168 = vmatpush1.bf16.msra.mxu0 %v7528
    %8169 = vmatprep.subr.bf16.mxu0 %v7531
    %8170 = vmatpush1.bf16.msra.mxu0 %v7530
    %8171 = vmatprep.subr.bf16.mxu0 %v7533
    %8172 = vmatpush1.bf16.msra.mxu0 %v7532
    %8173 = vmatprep.subr.bf16.mxu0 %v7535
    %8174 = vmatpush1.bf16.msra.mxu0 %v7534
    %8175 = vmatprep.subr.bf16.mxu0 %v7537
    %8176 = vmatpush1.bf16.msra.mxu0 %v7536
    %8177 = vmatprep.subr.bf16.mxu0 %v7539
    %8178 = vmatpush1.bf16.msra.mxu0 %v7538
    %8179 = vmatprep.subr.bf16.mxu0 %v7541
    %8180 = vmatpush1.bf16.msra.mxu0 %v7540
    %8181 = vmatprep.subr.bf16.mxu0 %v7543
    %8182 = vmatpush1.bf16.msra.mxu0 %v7542
    %8183 = vmatprep.subr.bf16.mxu0 %v7545
    %8184 = vmatpush1.bf16.msra.mxu0 %v7544
    %8185 = vmatprep.subr.bf16.mxu0 %v7547
    %8186 = vmatpush1.bf16.msra.mxu0 %v7546
    %8187 = vmatprep.subr.bf16.mxu0 %v7549
    %8188 = vmatpush1.bf16.msra.mxu0 %v7548
    %8189 = vmatprep.subr.bf16.mxu0 %v7551
    %8190 = vmatpush1.bf16.msra.mxu0 %v7550
    %8191 = vmatprep.mubr.bf16.mxu0 %v6531
    %8192 = vmatmul.mubr.bf16.gmra.mrb[0].mxu0 %v6530
    %v8193 = vpop.f32.mrb[0].mxu0
    %v8194 = vadd.f32 %v8141, %v8193
    %v8195 = vpop.f32.mrb[0].mxu0
    %v8196 = vadd.f32 %v8143, %v8195
    %v8197 = vpop.f32.mrb[0].mxu0
    %v8198 = vadd.f32 %v8145, %v8197
    %v8199 = vpop.f32.mrb[0].mxu0
    %v8200 = vadd.f32 %v8147, %v8199
    %8201 = vmatprep.mubr.bf16.mxu0 %v6549
    %8202 = vmatmul.mubr.bf16.gmra.mrb[0].mxu0 %v6548
    %v8203 = vpop.f32.mrb[0].mxu0
    %v8204 = vadd.f32 %v8151, %v8203
    %v8205 = vpop.f32.mrb[0].mxu0
    %v8206 = vadd.f32 %v8153, %v8205
    %v8207 = vpop.f32.mrb[0].mxu0
    %v8208 = vadd.f32 %v8155, %v8207
    %v8209 = vpop.f32.mrb[0].mxu0
    %v8210 = vadd.f32 %v8157, %v8209
    %8211 = vdwg.mxu0
    %8212 = vmatprep.subr.bf16.mxu0 %v7553
    %8213 = vmatpush1.bf16.msra.mxu0 %v7552
    %8214 = vmatprep.subr.bf16.mxu0 %v7555
    %8215 = vmatpush1.bf16.msra.mxu0 %v7554
    %8216 = vmatprep.subr.bf16.mxu0 %v7557
    %8217 = vmatpush1.bf16.msra.mxu0 %v7556
    %8218 = vmatprep.subr.bf16.mxu0 %v7559
    %8219 = vmatpush1.bf16.msra.mxu0 %v7558
    %8220 = vmatprep.subr.bf16.mxu0 %v7561
    %8221 = vmatpush1.bf16.msra.mxu0 %v7560
    %8222 = vmatprep.subr.bf16.mxu0 %v7563
    %8223 = vmatpush1.bf16.msra.mxu0 %v7562
    %8224 = vmatprep.subr.bf16.mxu0 %v7565
    %8225 = vmatpush1.bf16.msra.mxu0 %v7564
    %8226 = vmatprep.subr.bf16.mxu0 %v7567
    %8227 = vmatpush1.bf16.msra.mxu0 %v7566
    %8228 = vmatprep.subr.bf16.mxu0 %v7569
    %8229 = vmatpush1.bf16.msra.mxu0 %v7568
    %8230 = vmatprep.subr.bf16.mxu0 %v7571
    %8231 = vmatpush1.bf16.msra.mxu0 %v7570
    %8232 = vmatprep.subr.bf16.mxu0 %v7573
    %8233 = vmatpush1.bf16.msra.mxu0 %v7572
    %8234 = vmatprep.subr.bf16.mxu0 %v7575
    %8235 = vmatpush1.bf16.msra.mxu0 %v7574
    %8236 = vmatprep.subr.bf16.mxu0 %v7577
    %8237 = vmatpush1.bf16.msra.mxu0 %v7576
    %8238 = vmatprep.subr.bf16.mxu0 %v7579
    %8239 = vmatpush1.bf16.msra.mxu0 %v7578
    %8240 = vmatprep.subr.bf16.mxu0 %v7581
    %8241 = vmatpush1.bf16.msra.mxu0 %v7580
    %8242 = vmatprep.subr.bf16.mxu0 %v7583
    %8243 = vmatpush1.bf16.msra.mxu0 %v7582
    %8244 = vmatprep.mubr.bf16.mxu0 %v6533
    %8245 = vmatmul.mubr.bf16.gmra.mrb[0].mxu0 %v6532
    %v8246 = vpop.f32.mrb[0].mxu0
    %v8247 = vadd.f32 %v8194, %v8246
    %v8248 = vpop.f32.mrb[0].mxu0
    %v8249 = vadd.f32 %v8196, %v8248
    %v8250 = vpop.f32.mrb[0].mxu0
    %v8251 = vadd.f32 %v8198, %v8250
    %v8252 = vpop.f32.mrb[0].mxu0
    %v8253 = vadd.f32 %v8200, %v8252
    %8254 = vmatprep.mubr.bf16.mxu0 %v6551
    %8255 = vmatmul.mubr.bf16.gmra.mrb[0].mxu0 %v6550
    %v8256 = vpop.f32.mrb[0].mxu0
    %v8257 = vadd.f32 %v8204, %v8256
    %v8258 = vpop.f32.mrb[0].mxu0
    %v8259 = vadd.f32 %v8206, %v8258
    %v8260 = vpop.f32.mrb[0].mxu0
    %v8261 = vadd.f32 %v8208, %v8260
    %v8262 = vpop.f32.mrb[0].mxu0
    %v8263 = vadd.f32 %v8210, %v8262
    %8264 = vdwg.mxu0
    %8265 = vmatprep.subr.bf16.mxu0 %v7585
    %8266 = vmatpush1.bf16.msra.mxu0 %v7584
    %8267 = vmatprep.subr.bf16.mxu0 %v7587
    %8268 = vmatpush1.bf16.msra.mxu0 %v7586
    %8269 = vmatprep.subr.bf16.mxu0 %v7589
    %8270 = vmatpush1.bf16.msra.mxu0 %v7588
    %8271 = vmatprep.subr.bf16.mxu0 %v7591
    %8272 = vmatpush1.bf16.msra.mxu0 %v7590
    %8273 = vmatprep.subr.bf16.mxu0 %v7593
    %8274 = vmatpush1.bf16.msra.mxu0 %v7592
    %8275 = vmatprep.subr.bf16.mxu0 %v7595
    %8276 = vmatpush1.bf16.msra.mxu0 %v7594
    %8277 = vmatprep.subr.bf16.mxu0 %v7597
    %8278 = vmatpush1.bf16.msra.mxu0 %v7596
    %8279 = vmatprep.subr.bf16.mxu0 %v7599
    %8280 = vmatpush1.bf16.msra.mxu0 %v7598
    %8281 = vmatprep.subr.bf16.mxu0 %v7601
    %8282 = vmatpush1.bf16.msra.mxu0 %v7600
    %8283 = vmatprep.subr.bf16.mxu0 %v7603
    %8284 = vmatpush1.bf16.msra.mxu0 %v7602
    %8285 = vmatprep.subr.bf16.mxu0 %v7605
    %8286 = vmatpush1.bf16.msra.mxu0 %v7604
    %8287 = vmatprep.subr.bf16.mxu0 %v7607
    %8288 = vmatpush1.bf16.msra.mxu0 %v7606
    %8289 = vmatprep.subr.bf16.mxu0 %v7609
    %8290 = vmatpush1.bf16.msra.mxu0 %v7608
    %8291 = vmatprep.subr.bf16.mxu0 %v7611
    %8292 = vmatpush1.bf16.msra.mxu0 %v7610
    %8293 = vmatprep.subr.bf16.mxu0 %v7613
    %8294 = vmatpush1.bf16.msra.mxu0 %v7612
    %8295 = vmatprep.subr.bf16.mxu0 %v7615
    %8296 = vmatpush1.bf16.msra.mxu0 %v7614
    %8297 = vmatprep.mubr.bf16.mxu0 %v6535
    %8298 = vmatmul.mubr.bf16.gmra.mrb[0].mxu0 %v6534
    %v8299 = vpop.f32.mrb[0].mxu0
    %v8300 = vadd.f32 %v8247, %v8299
    %v8301 = vpop.f32.mrb[0].mxu0
    %v8302 = vadd.f32 %v8249, %v8301
    %v8303 = vpop.f32.mrb[0].mxu0
    %v8304 = vadd.f32 %v8251, %v8303
    %v8305 = vpop.f32.mrb[0].mxu0
    %v8306 = vadd.f32 %v8253, %v8305
    %8307 = vmatprep.mubr.bf16.mxu0 %v6553
    %8308 = vmatmul.mubr.bf16.gmra.mrb[0].mxu0 %v6552
    %v8309 = vpop.f32.mrb[0].mxu0
    %v8310 = vadd.f32 %v8257, %v8309
    %v8311 = vpop.f32.mrb[0].mxu0
    %v8312 = vadd.f32 %v8259, %v8311
    %v8313 = vpop.f32.mrb[0].mxu0
    %v8314 = vadd.f32 %v8261, %v8313
    %v8315 = vpop.f32.mrb[0].mxu0
    %v8316 = vadd.f32 %v8263, %v8315
    %8317 = vdwg.mxu0
    %8318 = vmatprep.subr.bf16.mxu0 %v7617
    %8319 = vmatpush1.bf16.msra.mxu0 %v7616
    %8320 = vmatprep.subr.bf16.mxu0 %v7619
    %8321 = vmatpush1.bf16.msra.mxu0 %v7618
    %8322 = vmatprep.subr.bf16.mxu0 %v7621
    %8323 = vmatpush1.bf16.msra.mxu0 %v7620
    %8324 = vmatprep.subr.bf16.mxu0 %v7623
    %8325 = vmatpush1.bf16.msra.mxu0 %v7622
    %8326 = vmatprep.subr.bf16.mxu0 %v7625
    %8327 = vmatpush1.bf16.msra.mxu0 %v7624
    %8328 = vmatprep.subr.bf16.mxu0 %v7627
    %8329 = vmatpush1.bf16.msra.mxu0 %v7626
    %8330 = vmatprep.subr.bf16.mxu0 %v7629
    %8331 = vmatpush1.bf16.msra.mxu0 %v7628
    %8332 = vmatprep.subr.bf16.mxu0 %v7631
    %8333 = vmatpush1.bf16.msra.mxu0 %v7630
    %8334 = vmatprep.subr.bf16.mxu0 %v7633
    %8335 = vmatpush1.bf16.msra.mxu0 %v7632
    %8336 = vmatprep.subr.bf16.mxu0 %v7635
    %8337 = vmatpush1.bf16.msra.mxu0 %v7634
    %8338 = vmatprep.subr.bf16.mxu0 %v7637
    %8339 = vmatpush1.bf16.msra.mxu0 %v7636
    %8340 = vmatprep.subr.bf16.mxu0 %v7639
    %8341 = vmatpush1.bf16.msra.mxu0 %v7638
    %8342 = vmatprep.subr.bf16.mxu0 %v7641
    %8343 = vmatpush1.bf16.msra.mxu0 %v7640
    %8344 = vmatprep.subr.bf16.mxu0 %v7643
    %8345 = vmatpush1.bf16.msra.mxu0 %v7642
    %8346 = vmatprep.subr.bf16.mxu0 %v7645
    %8347 = vmatpush1.bf16.msra.mxu0 %v7644
    %8348 = vmatprep.subr.bf16.mxu0 %v7647
    %8349 = vmatpush1.bf16.msra.mxu0 %v7646
    %8350 = vmatprep.mubr.bf16.mxu0 %v6537
    %8351 = vmatmul.mubr.bf16.gmra.mrb[0].mxu0 %v6536
    %v8352 = vpop.f32.mrb[0].mxu0
    %v8353 = vadd.f32 %v8300, %v8352
    %v8354 = vpop.f32.mrb[0].mxu0
    %v8355 = vadd.f32 %v8302, %v8354
    %v8356 = vpop.f32.mrb[0].mxu0
    %v8357 = vadd.f32 %v8304, %v8356
    %v8358 = vpop.f32.mrb[0].mxu0
    %v8359 = vadd.f32 %v8306, %v8358
    %8360 = vmatprep.mubr.bf16.mxu0 %v6555
    %8361 = vmatmul.mubr.bf16.gmra.mrb[0].mxu0 %v6554
    %v8362 = vpop.f32.mrb[0].mxu0
    %v8363 = vadd.f32 %v8310, %v8362
    %v8364 = vpop.f32.mrb[0].mxu0
    %v8365 = vadd.f32 %v8312, %v8364
    %v8366 = vpop.f32.mrb[0].mxu0
    %v8367 = vadd.f32 %v8314, %v8366
    %v8368 = vpop.f32.mrb[0].mxu0
    %v8369 = vadd.f32 %v8316, %v8368
    %8370 = vdwg.mxu0
    %8371 = vmatprep.subr.bf16.mxu0 %v7649
    %8372 = vmatpush1.bf16.msra.mxu0 %v7648
    %8373 = vmatprep.subr.bf16.mxu0 %v7651
    %8374 = vmatpush1.bf16.msra.mxu0 %v7650
    %8375 = vmatprep.subr.bf16.mxu0 %v7653
    %8376 = vmatpush1.bf16.msra.mxu0 %v7652
    %8377 = vmatprep.subr.bf16.mxu0 %v7655
    %8378 = vmatpush1.bf16.msra.mxu0 %v7654
    %8379 = vmatprep.subr.bf16.mxu0 %v7657
    %8380 = vmatpush1.bf16.msra.mxu0 %v7656
    %8381 = vmatprep.subr.bf16.mxu0 %v7659
    %8382 = vmatpush1.bf16.msra.mxu0 %v7658
    %8383 = vmatprep.subr.bf16.mxu0 %v7661
    %8384 = vmatpush1.bf16.msra.mxu0 %v7660
    %8385 = vmatprep.subr.bf16.mxu0 %v7663
    %8386 = vmatpush1.bf16.msra.mxu0 %v7662
    %8387 = vmatprep.subr.bf16.mxu0 %v7665
    %8388 = vmatpush1.bf16.msra.mxu0 %v7664
    %8389 = vmatprep.subr.bf16.mxu0 %v7667
    %8390 = vmatpush1.bf16.msra.mxu0 %v7666
    %8391 = vmatprep.subr.bf16.mxu0 %v7669
    %8392 = vmatpush1.bf16.msra.mxu0 %v7668
    %8393 = vmatprep.subr.bf16.mxu0 %v7671
    %8394 = vmatpush1.bf16.msra.mxu0 %v7670
    %8395 = vmatprep.subr.bf16.mxu0 %v7673
    %8396 = vmatpush1.bf16.msra.mxu0 %v7672
    %8397 = vmatprep.subr.bf16.mxu0 %v7675
    %8398 = vmatpush1.bf16.msra.mxu0 %v7674
    %8399 = vmatprep.subr.bf16.mxu0 %v7677
    %8400 = vmatpush1.bf16.msra.mxu0 %v7676
    %8401 = vmatprep.subr.bf16.mxu0 %v7679
    %8402 = vmatpush1.bf16.msra.mxu0 %v7678
    %8403 = vmatprep.mubr.bf16.mxu0 %v6539
    %8404 = vmatmul.mubr.bf16.gmra.mrb[0].mxu0 %v6538
    %v8405 = vpop.f32.mrb[0].mxu0
    %v8406 = vadd.f32 %v8353, %v8405
    %v8407 = vpop.f32.mrb[0].mxu0
    %v8408 = vadd.f32 %v8355, %v8407
    %v8409 = vpop.f32.mrb[0].mxu0
    %v8410 = vadd.f32 %v8357, %v8409
    %v8411 = vpop.f32.mrb[0].mxu0
    %v8412 = vadd.f32 %v8359, %v8411
    %8413 = vmatprep.mubr.bf16.mxu0 %v6557
    %8414 = vmatmul.mubr.bf16.gmra.mrb[0].mxu0 %v6556
    %v8415 = vpop.f32.mrb[0].mxu0
    %v8416 = vadd.f32 %v8363, %v8415
    %v8417 = vpop.f32.mrb[0].mxu0
    %v8418 = vadd.f32 %v8365, %v8417
    %v8419 = vpop.f32.mrb[0].mxu0
    %v8420 = vadd.f32 %v8367, %v8419
    %v8421 = vpop.f32.mrb[0].mxu0
    %v8422 = vadd.f32 %v8369, %v8421
    %8423 = vdwg.mxu0
    %8424 = vmatprep.subr.bf16.mxu0 %v7681
    %8425 = vmatpush1.bf16.msra.mxu0 %v7680
    %8426 = vmatprep.subr.bf16.mxu0 %v7683
    %8427 = vmatpush1.bf16.msra.mxu0 %v7682
    %8428 = vmatprep.subr.bf16.mxu0 %v7685
    %8429 = vmatpush1.bf16.msra.mxu0 %v7684
    %8430 = vmatprep.subr.bf16.mxu0 %v7687
    %8431 = vmatpush1.bf16.msra.mxu0 %v7686
    %8432 = vmatprep.subr.bf16.mxu0 %v7689
    %8433 = vmatpush1.bf16.msra.mxu0 %v7688
    %8434 = vmatprep.subr.bf16.mxu0 %v7691
    %8435 = vmatpush1.bf16.msra.mxu0 %v7690
    %8436 = vmatprep.subr.bf16.mxu0 %v7693
    %8437 = vmatpush1.bf16.msra.mxu0 %v7692
    %8438 = vmatprep.subr.bf16.mxu0 %v7695
    %8439 = vmatpush1.bf16.msra.mxu0 %v7694
    %8440 = vmatprep.subr.bf16.mxu0 %v7697
    %8441 = vmatpush1.bf16.msra.mxu0 %v7696
    %8442 = vmatprep.subr.bf16.mxu0 %v7699
    %8443 = vmatpush1.bf16.msra.mxu0 %v7698
    %8444 = vmatprep.subr.bf16.mxu0 %v7701
    %8445 = vmatpush1.bf16.msra.mxu0 %v7700
    %8446 = vmatprep.subr.bf16.mxu0 %v7703
    %8447 = vmatpush1.bf16.msra.mxu0 %v7702
    %8448 = vmatprep.subr.bf16.mxu0 %v7705
    %8449 = vmatpush1.bf16.msra.mxu0 %v7704
    %8450 = vmatprep.subr.bf16.mxu0 %v7707
    %8451 = vmatpush1.bf16.msra.mxu0 %v7706
    %8452 = vmatprep.subr.bf16.mxu0 %v7709
    %8453 = vmatpush1.bf16.msra.mxu0 %v7708
    %8454 = vmatprep.subr.bf16.mxu0 %v7711
    %8455 = vmatpush1.bf16.msra.mxu0 %v7710
    %8456 = vmatprep.mubr.bf16.mxu0 %v6541
    %8457 = vmatmul.mubr.bf16.gmra.mrb[0].mxu0 %v6540
    %v8458 = vpop.f32.mrb[0].mxu0
    %v8459 = vadd.f32 %v8406, %v8458
    %v8460 = vpop.f32.mrb[0].mxu0
    %v8461 = vadd.f32 %v8408, %v8460
    %v8462 = vpop.f32.mrb[0].mxu0
    %v8463 = vadd.f32 %v8410, %v8462
    %v8464 = vpop.f32.mrb[0].mxu0
    %v8465 = vadd.f32 %v8412, %v8464
    %8466 = vmatprep.mubr.bf16.mxu0 %v6559
    %8467 = vmatmul.mubr.bf16.gmra.mrb[0].mxu0 %v6558
    %v8468 = vpop.f32.mrb[0].mxu0
    %v8469 = vadd.f32 %v8416, %v8468
    %v8470 = vpop.f32.mrb[0].mxu0
    %v8471 = vadd.f32 %v8418, %v8470
    %v8472 = vpop.f32.mrb[0].mxu0
    %v8473 = vadd.f32 %v8420, %v8472
    %v8474 = vpop.f32.mrb[0].mxu0
    %v8475 = vadd.f32 %v8422, %v8474
    %8476 = vdwg.mxu0
    %v8477 = vmax.f32 %v8459, 0.0
    %v8478 = vmax.f32 %v8461, 0.0
    %v8479 = vmax.f32 %v8463, 0.0
    %v8480 = vmax.f32 %v8465, 0.0
    %v8481 = vmax.f32 %v8469, 0.0
    %v8482 = vmax.f32 %v8471, 0.0
    %v8483 = vmax.f32 %v8473, 0.0
    %v8484 = vmax.f32 %v8475, 0.0
    %v8485 = vpack.c.bf16 %v8479, %v8477
    %v8486 = vpack.c.bf16 %v8480, %v8478
    %v8487 = vpack.c.bf16 %v8483, %v8481
    %v8488 = vpack.c.bf16 %v8484, %v8482
    %s8489 = scalar_lea.vmem [#allocation15], 256
    %v8490 = vld [vmem:[%s8489] sm:$0xff]
    %v8491 = vld [vmem:[%s8489 + $0x8] sm:$0xff]
    %v8492 = vld [vmem:[%s8489 + $0x10] sm:$0xff]
    %v8493 = vld [vmem:[%s8489 + $0x18] sm:$0xff]
    %v8494 = vld [vmem:[%s8489 + $0x20] sm:$0xff]
    %v8495 = vld [vmem:[%s8489 + $0x28] sm:$0xff]
    %v8496 = vld [vmem:[%s8489 + $0x30] sm:$0xff]
    %v8497 = vld [vmem:[%s8489 + $0x38] sm:$0xff]
    %v8498 = vld [vmem:[%s8489 + $0x40] sm:$0xff]
    %v8499 = vld [vmem:[%s8489 + $0x48] sm:$0xff]
    %v8500 = vld [vmem:[%s8489 + $0x50] sm:$0xff]
    %v8501 = vld [vmem:[%s8489 + $0x58] sm:$0xff]
    %v8502 = vld [vmem:[%s8489 + $0x60] sm:$0xff]
    %v8503 = vld [vmem:[%s8489 + $0x68] sm:$0xff]
    %v8504 = vld [vmem:[%s8489 + $0x70] sm:$0xff]
    %v8505 = vld [vmem:[%s8489 + $0x78] sm:$0xff]
    %v8506 = vld [vmem:[%s8489 + $0x80] sm:$0xff]
    %v8507 = vld [vmem:[%s8489 + $0x88] sm:$0xff]
    %v8508 = vld [vmem:[%s8489 + $0x90] sm:$0xff]
    %v8509 = vld [vmem:[%s8489 + $0x98] sm:$0xff]
    %v8510 = vld [vmem:[%s8489 + $0xa0] sm:$0xff]
    %v8511 = vld [vmem:[%s8489 + $0xa8] sm:$0xff]
    %v8512 = vld [vmem:[%s8489 + $0xb0] sm:$0xff]
    %v8513 = vld [vmem:[%s8489 + $0xb8] sm:$0xff]
    %v8514 = vld [vmem:[%s8489 + $0xc0] sm:$0xff]
    %v8515 = vld [vmem:[%s8489 + $0xc8] sm:$0xff]
    %v8516 = vld [vmem:[%s8489 + $0xd0] sm:$0xff]
    %v8517 = vld [vmem:[%s8489 + $0xd8] sm:$0xff]
    %v8518 = vld [vmem:[%s8489 + $0xe0] sm:$0xff]
    %v8519 = vld [vmem:[%s8489 + $0xe8] sm:$0xff]
    %v8520 = vld [vmem:[%s8489 + $0xf0] sm:$0xff]
    %v8521 = vld [vmem:[%s8489 + $0xf8] sm:$0xff]
    %v8554 = vunpack.c.l.b16 %v8490
    %v8555 = vunpack.c.h.b16 %v8490
    %v8556 = vunpack.c.l.b16 %v8491
    %v8557 = vunpack.c.h.b16 %v8491
    %v8558 = vunpack.c.l.b16 %v8492
    %v8559 = vunpack.c.h.b16 %v8492
    %v8560 = vunpack.c.l.b16 %v8493
    %v8561 = vunpack.c.h.b16 %v8493
    %v8562 = vunpack.c.l.b16 %v8494
    %v8563 = vunpack.c.h.b16 %v8494
    %v8564 = vunpack.c.l.b16 %v8495
    %v8565 = vunpack.c.h.b16 %v8495
    %v8566 = vunpack.c.l.b16 %v8496
    %v8567 = vunpack.c.h.b16 %v8496
    %v8568 = vunpack.c.l.b16 %v8497
    %v8569 = vunpack.c.h.b16 %v8497
    %v8570 = vunpack.c.l.b16 %v8498
    %v8571 = vunpack.c.h.b16 %v8498
    %v8572 = vunpack.c.l.b16 %v8499
    %v8573 = vunpack.c.h.b16 %v8499
    %v8574 = vunpack.c.l.b16 %v8500
    %v8575 = vunpack.c.h.b16 %v8500
    %v8576 = vunpack.c.l.b16 %v8501
    %v8577 = vunpack.c.h.b16 %v8501
    %v8578 = vunpack.c.l.b16 %v8502
    %v8579 = vunpack.c.h.b16 %v8502
    %v8580 = vunpack.c.l.b16 %v8503
    %v8581 = vunpack.c.h.b16 %v8503
    %v8582 = vunpack.c.l.b16 %v8504
    %v8583 = vunpack.c.h.b16 %v8504
    %v8584 = vunpack.c.l.b16 %v8505
    %v8585 = vunpack.c.h.b16 %v8505
    %v8586 = vunpack.c.l.b16 %v8506
    %v8587 = vunpack.c.h.b16 %v8506
    %v8588 = vunpack.c.l.b16 %v8507
    %v8589 = vunpack.c.h.b16 %v8507
    %v8590 = vunpack.c.l.b16 %v8508
    %v8591 = vunpack.c.h.b16 %v8508
    %v8592 = vunpack.c.l.b16 %v8509
    %v8593 = vunpack.c.h.b16 %v8509
    %v8594 = vunpack.c.l.b16 %v8510
    %v8595 = vunpack.c.h.b16 %v8510
    %v8596 = vunpack.c.l.b16 %v8511
    %v8597 = vunpack.c.h.b16 %v8511
    %v8598 = vunpack.c.l.b16 %v8512
    %v8599 = vunpack.c.h.b16 %v8512
    %v8600 = vunpack.c.l.b16 %v8513
    %v8601 = vunpack.c.h.b16 %v8513
    %v8602 = vunpack.c.l.b16 %v8514
    %v8603 = vunpack.c.h.b16 %v8514
    %v8604 = vunpack.c.l.b16 %v8515
    %v8605 = vunpack.c.h.b16 %v8515
    %v8606 = vunpack.c.l.b16 %v8516
    %v8607 = vunpack.c.h.b16 %v8516
    %v8608 = vunpack.c.l.b16 %v8517
    %v8609 = vunpack.c.h.b16 %v8517
    %v8610 = vunpack.c.l.b16 %v8518
    %v8611 = vunpack.c.h.b16 %v8518
    %v8612 = vunpack.c.l.b16 %v8519
    %v8613 = vunpack.c.h.b16 %v8519
    %v8614 = vunpack.c.l.b16 %v8520
    %v8615 = vunpack.c.h.b16 %v8520
    %v8616 = vunpack.c.l.b16 %v8521
    %v8617 = vunpack.c.h.b16 %v8521
    %v8618 = vpack.c.b16 %v8556, %v8554
    %v8619 = vpack.c.b16 %v8557, %v8555
    %v8620 = vpack.c.b16 %v8560, %v8558
    %v8621 = vpack.c.b16 %v8561, %v8559
    %v8622 = vpack.c.b16 %v8564, %v8562
    %v8623 = vpack.c.b16 %v8565, %v8563
    %v8624 = vpack.c.b16 %v8568, %v8566
    %v8625 = vpack.c.b16 %v8569, %v8567
    %v8626 = vpack.c.b16 %v8572, %v8570
    %v8627 = vpack.c.b16 %v8573, %v8571
    %v8628 = vpack.c.b16 %v8576, %v8574
    %v8629 = vpack.c.b16 %v8577, %v8575
    %v8630 = vpack.c.b16 %v8580, %v8578
    %v8631 = vpack.c.b16 %v8581, %v8579
    %v8632 = vpack.c.b16 %v8584, %v8582
    %v8633 = vpack.c.b16 %v8585, %v8583
    %v8634 = vpack.c.b16 %v8588, %v8586
    %v8635 = vpack.c.b16 %v8589, %v8587
    %v8636 = vpack.c.b16 %v8592, %v8590
    %v8637 = vpack.c.b16 %v8593, %v8591
    %v8638 = vpack.c.b16 %v8596, %v8594
    %v8639 = vpack.c.b16 %v8597, %v8595
    %v8640 = vpack.c.b16 %v8600, %v8598
    %v8641 = vpack.c.b16 %v8601, %v8599
    %v8642 = vpack.c.b16 %v8604, %v8602
    %v8643 = vpack.c.b16 %v8605, %v8603
    %v8644 = vpack.c.b16 %v8608, %v8606
    %v8645 = vpack.c.b16 %v8609, %v8607
    %v8646 = vpack.c.b16 %v8612, %v8610
    %v8647 = vpack.c.b16 %v8613, %v8611
    %v8648 = vpack.c.b16 %v8616, %v8614
    %v8649 = vpack.c.b16 %v8617, %v8615
    %8682 = vmatprep.subr.bf16.mxu0 %v8619
    %8683 = vmatpush1.bf16.msra.mxu0 %v8618
    %8684 = vmatprep.subr.bf16.mxu0 %v8621
    %8685 = vmatpush1.bf16.msra.mxu0 %v8620
    %8686 = vmatprep.subr.bf16.mxu0 %v8623
    %8687 = vmatpush1.bf16.msra.mxu0 %v8622
    %8688 = vmatprep.subr.bf16.mxu0 %v8625
    %8689 = vmatpush1.bf16.msra.mxu0 %v8624
    %8690 = vmatprep.subr.bf16.mxu0 %v8627
    %8691 = vmatpush1.bf16.msra.mxu0 %v8626
    %8692 = vmatprep.subr.bf16.mxu0 %v8629
    %8693 = vmatpush1.bf16.msra.mxu0 %v8628
    %8694 = vmatprep.subr.bf16.mxu0 %v8631
    %8695 = vmatpush1.bf16.msra.mxu0 %v8630
    %8696 = vmatprep.subr.bf16.mxu0 %v8633
    %8697 = vmatpush1.bf16.msra.mxu0 %v8632
    %8698 = vmatprep.subr.bf16.mxu0 %v8635
    %8699 = vmatpush1.bf16.msra.mxu0 %v8634
    %8700 = vmatprep.subr.bf16.mxu0 %v8637
    %8701 = vmatpush1.bf16.msra.mxu0 %v8636
    %8702 = vmatprep.subr.bf16.mxu0 %v8639
    %8703 = vmatpush1.bf16.msra.mxu0 %v8638
    %8704 = vmatprep.subr.bf16.mxu0 %v8641
    %8705 = vmatpush1.bf16.msra.mxu0 %v8640
    %8706 = vmatprep.subr.bf16.mxu0 %v8643
    %8707 = vmatpush1.bf16.msra.mxu0 %v8642
    %8708 = vmatprep.subr.bf16.mxu0 %v8645
    %8709 = vmatpush1.bf16.msra.mxu0 %v8644
    %8710 = vmatprep.subr.bf16.mxu0 %v8647
    %8711 = vmatpush1.bf16.msra.mxu0 %v8646
    %8712 = vmatprep.subr.bf16.mxu0 %v8649
    %8713 = vmatpush1.bf16.msra.mxu0 %v8648
    %8714 = vmatprep.mubr.bf16.mxu0 %v8486
    %8715 = vmatmul.mubr.bf16.gmra.mrb[0].mxu0 %v8485
    %v8716 = vpop.f32.mrb[0].mxu0
    %v8717 = vadd.f32 0.0, %v8716
    %v8718 = vpop.f32.mrb[0].mxu0
    %v8719 = vadd.f32 0.0, %v8718
    %v8720 = vpop.f32.mrb[0].mxu0
    %v8721 = vadd.f32 0.0, %v8720
    %v8722 = vpop.f32.mrb[0].mxu0
    %v8723 = vadd.f32 0.0, %v8722
    %8724 = vmatprep.mubr.bf16.mxu0 %v8488
    %8725 = vmatmul.mubr.bf16.gmra.mrb[0].mxu0 %v8487
    %v8726 = vpop.f32.mrb[0].mxu0
    %v8727 = vadd.f32 0.0, %v8726
    %v8728 = vpop.f32.mrb[0].mxu0
    %v8729 = vadd.f32 0.0, %v8728
    %v8730 = vpop.f32.mrb[0].mxu0
    %v8731 = vadd.f32 0.0, %v8730
    %v8732 = vpop.f32.mrb[0].mxu0
    %v8733 = vadd.f32 0.0, %v8732
    %8734 = vdwg.mxu0
    %v8735 = vadd.f32 %v6075, %v8717
    %v8736 = vadd.f32 %v6076, %v8719
    %v8737 = vadd.f32 %v6077, %v8721
    %v8738 = vadd.f32 %v6078, %v8723
    %v8739 = vadd.f32 %v6079, %v8727
    %v8740 = vadd.f32 %v6080, %v8729
    %v8741 = vadd.f32 %v6081, %v8731
    %v8742 = vadd.f32 %v6082, %v8733
    %v8743 = vmax.f32 %v8735, 0.0
    %v8744 = vmax.f32 %v8736, 0.0
    %v8745 = vmax.f32 %v8737, 0.0
    %v8746 = vmax.f32 %v8738, 0.0
    %v8747 = vmax.f32 %v8739, 0.0
    %v8748 = vmax.f32 %v8740, 0.0
    %v8749 = vmax.f32 %v8741, 0.0
    %v8750 = vmax.f32 %v8742, 0.0
    %s8751 = scalar_lea.vmem [#allocation13], 4608
    %v8752 = vld [vmem:[%s8751] sm:$0xff]
    %v8753 = vld [vmem:[%s8751 + $0x8] sm:$0xff]
    %v8754 = vld [vmem:[%s8751 + $0x10] sm:$0xff]
    %v8755 = vld [vmem:[%s8751 + $0x18] sm:$0xff]
    %v8756 = vld [vmem:[%s8751 + $0x20] sm:$0xff]
    %v8757 = vld [vmem:[%s8751 + $0x28] sm:$0xff]
    %v8758 = vld [vmem:[%s8751 + $0x30] sm:$0xff]
    %v8759 = vld [vmem:[%s8751 + $0x38] sm:$0xff]
    %v8760 = vld [vmem:[%s8751 + $0x40] sm:$0xff]
    %v8761 = vld [vmem:[%s8751 + $0x48] sm:$0xff]
    %v8762 = vld [vmem:[%s8751 + $0x50] sm:$0xff]
    %v8763 = vld [vmem:[%s8751 + $0x58] sm:$0xff]
    %v8764 = vld [vmem:[%s8751 + $0x60] sm:$0xff]
    %v8765 = vld [vmem:[%s8751 + $0x68] sm:$0xff]
    %v8766 = vld [vmem:[%s8751 + $0x70] sm:$0xff]
    %v8767 = vld [vmem:[%s8751 + $0x78] sm:$0xff]
    %v8768 = vld [vmem:[%s8751 + $0x80] sm:$0xff]
    %v8769 = vld [vmem:[%s8751 + $0x88] sm:$0xff]
    %v8770 = vld [vmem:[%s8751 + $0x90] sm:$0xff]
    %v8771 = vld [vmem:[%s8751 + $0x98] sm:$0xff]
    %v8772 = vld [vmem:[%s8751 + $0xa0] sm:$0xff]
    %v8773 = vld [vmem:[%s8751 + $0xa8] sm:$0xff]
    %v8774 = vld [vmem:[%s8751 + $0xb0] sm:$0xff]
    %v8775 = vld [vmem:[%s8751 + $0xb8] sm:$0xff]
    %v8776 = vld [vmem:[%s8751 + $0xc0] sm:$0xff]
    %v8777 = vld [vmem:[%s8751 + $0xc8] sm:$0xff]
    %v8778 = vld [vmem:[%s8751 + $0xd0] sm:$0xff]
    %v8779 = vld [vmem:[%s8751 + $0xd8] sm:$0xff]
    %v8780 = vld [vmem:[%s8751 + $0xe0] sm:$0xff]
    %v8781 = vld [vmem:[%s8751 + $0xe8] sm:$0xff]
    %v8782 = vld [vmem:[%s8751 + $0xf0] sm:$0xff]
    %v8783 = vld [vmem:[%s8751 + $0xf8] sm:$0xff]
    %v8784 = vld [vmem:[%s8751 + $0x100] sm:$0xff]
    %v8785 = vld [vmem:[%s8751 + $0x108] sm:$0xff]
    %v8786 = vld [vmem:[%s8751 + $0x110] sm:$0xff]
    %v8787 = vld [vmem:[%s8751 + $0x118] sm:$0xff]
    %v8788 = vld [vmem:[%s8751 + $0x120] sm:$0xff]
    %v8789 = vld [vmem:[%s8751 + $0x128] sm:$0xff]
    %v8790 = vld [vmem:[%s8751 + $0x130] sm:$0xff]
    %v8791 = vld [vmem:[%s8751 + $0x138] sm:$0xff]
    %v8792 = vld [vmem:[%s8751 + $0x140] sm:$0xff]
    %v8793 = vld [vmem:[%s8751 + $0x148] sm:$0xff]
    %v8794 = vld [vmem:[%s8751 + $0x150] sm:$0xff]
    %v8795 = vld [vmem:[%s8751 + $0x158] sm:$0xff]
    %v8796 = vld [vmem:[%s8751 + $0x160] sm:$0xff]
    %v8797 = vld [vmem:[%s8751 + $0x168] sm:$0xff]
    %v8798 = vld [vmem:[%s8751 + $0x170] sm:$0xff]
    %v8799 = vld [vmem:[%s8751 + $0x178] sm:$0xff]
    %v8800 = vld [vmem:[%s8751 + $0x180] sm:$0xff]
    %v8801 = vld [vmem:[%s8751 + $0x188] sm:$0xff]
    %v8802 = vld [vmem:[%s8751 + $0x190] sm:$0xff]
    %v8803 = vld [vmem:[%s8751 + $0x198] sm:$0xff]
    %v8804 = vld [vmem:[%s8751 + $0x1a0] sm:$0xff]
    %v8805 = vld [vmem:[%s8751 + $0x1a8] sm:$0xff]
    %v8806 = vld [vmem:[%s8751 + $0x1b0] sm:$0xff]
    %v8807 = vld [vmem:[%s8751 + $0x1b8] sm:$0xff]
    %v8808 = vld [vmem:[%s8751 + $0x1c0] sm:$0xff]
    %v8809 = vld [vmem:[%s8751 + $0x1c8] sm:$0xff]
    %v8810 = vld [vmem:[%s8751 + $0x1d0] sm:$0xff]
    %v8811 = vld [vmem:[%s8751 + $0x1d8] sm:$0xff]
    %v8812 = vld [vmem:[%s8751 + $0x1e0] sm:$0xff]
    %v8813 = vld [vmem:[%s8751 + $0x1e8] sm:$0xff]
    %v8814 = vld [vmem:[%s8751 + $0x1f0] sm:$0xff]
    %v8815 = vld [vmem:[%s8751 + $0x1f8] sm:$0xff]
    %v8816 = vld [vmem:[%s8751 + $0x200] sm:$0xff]
    %v8817 = vld [vmem:[%s8751 + $0x208] sm:$0xff]
    %v8818 = vld [vmem:[%s8751 + $0x210] sm:$0xff]
    %v8819 = vld [vmem:[%s8751 + $0x218] sm:$0xff]
    %v8820 = vld [vmem:[%s8751 + $0x220] sm:$0xff]
    %v8821 = vld [vmem:[%s8751 + $0x228] sm:$0xff]
    %v8822 = vld [vmem:[%s8751 + $0x230] sm:$0xff]
    %v8823 = vld [vmem:[%s8751 + $0x238] sm:$0xff]
    %v8824 = vld [vmem:[%s8751 + $0x240] sm:$0xff]
    %v8825 = vld [vmem:[%s8751 + $0x248] sm:$0xff]
    %v8826 = vld [vmem:[%s8751 + $0x250] sm:$0xff]
    %v8827 = vld [vmem:[%s8751 + $0x258] sm:$0xff]
    %v8828 = vld [vmem:[%s8751 + $0x260] sm:$0xff]
    %v8829 = vld [vmem:[%s8751 + $0x268] sm:$0xff]
    %v8830 = vld [vmem:[%s8751 + $0x270] sm:$0xff]
    %v8831 = vld [vmem:[%s8751 + $0x278] sm:$0xff]
    %v8832 = vld [vmem:[%s8751 + $0x280] sm:$0xff]
    %v8833 = vld [vmem:[%s8751 + $0x288] sm:$0xff]
    %v8834 = vld [vmem:[%s8751 + $0x290] sm:$0xff]
    %v8835 = vld [vmem:[%s8751 + $0x298] sm:$0xff]
    %v8836 = vld [vmem:[%s8751 + $0x2a0] sm:$0xff]
    %v8837 = vld [vmem:[%s8751 + $0x2a8] sm:$0xff]
    %v8838 = vld [vmem:[%s8751 + $0x2b0] sm:$0xff]
    %v8839 = vld [vmem:[%s8751 + $0x2b8] sm:$0xff]
    %v8840 = vld [vmem:[%s8751 + $0x2c0] sm:$0xff]
    %v8841 = vld [vmem:[%s8751 + $0x2c8] sm:$0xff]
    %v8842 = vld [vmem:[%s8751 + $0x2d0] sm:$0xff]
    %v8843 = vld [vmem:[%s8751 + $0x2d8] sm:$0xff]
    %v8844 = vld [vmem:[%s8751 + $0x2e0] sm:$0xff]
    %v8845 = vld [vmem:[%s8751 + $0x2e8] sm:$0xff]
    %v8846 = vld [vmem:[%s8751 + $0x2f0] sm:$0xff]
    %v8847 = vld [vmem:[%s8751 + $0x2f8] sm:$0xff]
    %v8848 = vld [vmem:[%s8751 + $0x300] sm:$0xff]
    %v8849 = vld [vmem:[%s8751 + $0x308] sm:$0xff]
    %v8850 = vld [vmem:[%s8751 + $0x310] sm:$0xff]
    %v8851 = vld [vmem:[%s8751 + $0x318] sm:$0xff]
    %v8852 = vld [vmem:[%s8751 + $0x320] sm:$0xff]
    %v8853 = vld [vmem:[%s8751 + $0x328] sm:$0xff]
    %v8854 = vld [vmem:[%s8751 + $0x330] sm:$0xff]
    %v8855 = vld [vmem:[%s8751 + $0x338] sm:$0xff]
    %v8856 = vld [vmem:[%s8751 + $0x340] sm:$0xff]
    %v8857 = vld [vmem:[%s8751 + $0x348] sm:$0xff]
    %v8858 = vld [vmem:[%s8751 + $0x350] sm:$0xff]
    %v8859 = vld [vmem:[%s8751 + $0x358] sm:$0xff]
    %v8860 = vld [vmem:[%s8751 + $0x360] sm:$0xff]
    %v8861 = vld [vmem:[%s8751 + $0x368] sm:$0xff]
    %v8862 = vld [vmem:[%s8751 + $0x370] sm:$0xff]
    %v8863 = vld [vmem:[%s8751 + $0x378] sm:$0xff]
    %v8864 = vld [vmem:[%s8751 + $0x380] sm:$0xff]
    %v8865 = vld [vmem:[%s8751 + $0x388] sm:$0xff]
    %v8866 = vld [vmem:[%s8751 + $0x390] sm:$0xff]
    %v8867 = vld [vmem:[%s8751 + $0x398] sm:$0xff]
    %v8868 = vld [vmem:[%s8751 + $0x3a0] sm:$0xff]
    %v8869 = vld [vmem:[%s8751 + $0x3a8] sm:$0xff]
    %v8870 = vld [vmem:[%s8751 + $0x3b0] sm:$0xff]
    %v8871 = vld [vmem:[%s8751 + $0x3b8] sm:$0xff]
    %v8872 = vld [vmem:[%s8751 + $0x3c0] sm:$0xff]
    %v8873 = vld [vmem:[%s8751 + $0x3c8] sm:$0xff]
    %v8874 = vld [vmem:[%s8751 + $0x3d0] sm:$0xff]
    %v8875 = vld [vmem:[%s8751 + $0x3d8] sm:$0xff]
    %v8876 = vld [vmem:[%s8751 + $0x3e0] sm:$0xff]
    %v8877 = vld [vmem:[%s8751 + $0x3e8] sm:$0xff]
    %v8878 = vld [vmem:[%s8751 + $0x3f0] sm:$0xff]
    %v8879 = vld [vmem:[%s8751 + $0x3f8] sm:$0xff]
    %v8880 = vld [vmem:[%s8751 + $0x400] sm:$0xff]
    %v8881 = vld [vmem:[%s8751 + $0x408] sm:$0xff]
    %v8882 = vld [vmem:[%s8751 + $0x410] sm:$0xff]
    %v8883 = vld [vmem:[%s8751 + $0x418] sm:$0xff]
    %v8884 = vld [vmem:[%s8751 + $0x420] sm:$0xff]
    %v8885 = vld [vmem:[%s8751 + $0x428] sm:$0xff]
    %v8886 = vld [vmem:[%s8751 + $0x430] sm:$0xff]
    %v8887 = vld [vmem:[%s8751 + $0x438] sm:$0xff]
    %v8888 = vld [vmem:[%s8751 + $0x440] sm:$0xff]
    %v8889 = vld [vmem:[%s8751 + $0x448] sm:$0xff]
    %v8890 = vld [vmem:[%s8751 + $0x450] sm:$0xff]
    %v8891 = vld [vmem:[%s8751 + $0x458] sm:$0xff]
    %v8892 = vld [vmem:[%s8751 + $0x460] sm:$0xff]
    %v8893 = vld [vmem:[%s8751 + $0x468] sm:$0xff]
    %v8894 = vld [vmem:[%s8751 + $0x470] sm:$0xff]
    %v8895 = vld [vmem:[%s8751 + $0x478] sm:$0xff]
    %v8896 = vld [vmem:[%s8751 + $0x480] sm:$0xff]
    %v8897 = vld [vmem:[%s8751 + $0x488] sm:$0xff]
    %v8898 = vld [vmem:[%s8751 + $0x490] sm:$0xff]
    %v8899 = vld [vmem:[%s8751 + $0x498] sm:$0xff]
    %v8900 = vld [vmem:[%s8751 + $0x4a0] sm:$0xff]
    %v8901 = vld [vmem:[%s8751 + $0x4a8] sm:$0xff]
    %v8902 = vld [vmem:[%s8751 + $0x4b0] sm:$0xff]
    %v8903 = vld [vmem:[%s8751 + $0x4b8] sm:$0xff]
    %v8904 = vld [vmem:[%s8751 + $0x4c0] sm:$0xff]
    %v8905 = vld [vmem:[%s8751 + $0x4c8] sm:$0xff]
    %v8906 = vld [vmem:[%s8751 + $0x4d0] sm:$0xff]
    %v8907 = vld [vmem:[%s8751 + $0x4d8] sm:$0xff]
    %v8908 = vld [vmem:[%s8751 + $0x4e0] sm:$0xff]
    %v8909 = vld [vmem:[%s8751 + $0x4e8] sm:$0xff]
    %v8910 = vld [vmem:[%s8751 + $0x4f0] sm:$0xff]
    %v8911 = vld [vmem:[%s8751 + $0x4f8] sm:$0xff]
    %v8912 = vld [vmem:[%s8751 + $0x500] sm:$0xff]
    %v8913 = vld [vmem:[%s8751 + $0x508] sm:$0xff]
    %v8914 = vld [vmem:[%s8751 + $0x510] sm:$0xff]
    %v8915 = vld [vmem:[%s8751 + $0x518] sm:$0xff]
    %v8916 = vld [vmem:[%s8751 + $0x520] sm:$0xff]
    %v8917 = vld [vmem:[%s8751 + $0x528] sm:$0xff]
    %v8918 = vld [vmem:[%s8751 + $0x530] sm:$0xff]
    %v8919 = vld [vmem:[%s8751 + $0x538] sm:$0xff]
    %v8920 = vld [vmem:[%s8751 + $0x540] sm:$0xff]
    %v8921 = vld [vmem:[%s8751 + $0x548] sm:$0xff]
    %v8922 = vld [vmem:[%s8751 + $0x550] sm:$0xff]
    %v8923 = vld [vmem:[%s8751 + $0x558] sm:$0xff]
    %v8924 = vld [vmem:[%s8751 + $0x560] sm:$0xff]
    %v8925 = vld [vmem:[%s8751 + $0x568] sm:$0xff]
    %v8926 = vld [vmem:[%s8751 + $0x570] sm:$0xff]
    %v8927 = vld [vmem:[%s8751 + $0x578] sm:$0xff]
    %v8928 = vld [vmem:[%s8751 + $0x580] sm:$0xff]
    %v8929 = vld [vmem:[%s8751 + $0x588] sm:$0xff]
    %v8930 = vld [vmem:[%s8751 + $0x590] sm:$0xff]
    %v8931 = vld [vmem:[%s8751 + $0x598] sm:$0xff]
    %v8932 = vld [vmem:[%s8751 + $0x5a0] sm:$0xff]
    %v8933 = vld [vmem:[%s8751 + $0x5a8] sm:$0xff]
    %v8934 = vld [vmem:[%s8751 + $0x5b0] sm:$0xff]
    %v8935 = vld [vmem:[%s8751 + $0x5b8] sm:$0xff]
    %v8936 = vld [vmem:[%s8751 + $0x5c0] sm:$0xff]
    %v8937 = vld [vmem:[%s8751 + $0x5c8] sm:$0xff]
    %v8938 = vld [vmem:[%s8751 + $0x5d0] sm:$0xff]
    %v8939 = vld [vmem:[%s8751 + $0x5d8] sm:$0xff]
    %v8940 = vld [vmem:[%s8751 + $0x5e0] sm:$0xff]
    %v8941 = vld [vmem:[%s8751 + $0x5e8] sm:$0xff]
    %v8942 = vld [vmem:[%s8751 + $0x5f0] sm:$0xff]
    %v8943 = vld [vmem:[%s8751 + $0x5f8] sm:$0xff]
    %v8944 = vld [vmem:[%s8751 + $0x600] sm:$0xff]
    %v8945 = vld [vmem:[%s8751 + $0x608] sm:$0xff]
    %v8946 = vld [vmem:[%s8751 + $0x610] sm:$0xff]
    %v8947 = vld [vmem:[%s8751 + $0x618] sm:$0xff]
    %v8948 = vld [vmem:[%s8751 + $0x620] sm:$0xff]
    %v8949 = vld [vmem:[%s8751 + $0x628] sm:$0xff]
    %v8950 = vld [vmem:[%s8751 + $0x630] sm:$0xff]
    %v8951 = vld [vmem:[%s8751 + $0x638] sm:$0xff]
    %v8952 = vld [vmem:[%s8751 + $0x640] sm:$0xff]
    %v8953 = vld [vmem:[%s8751 + $0x648] sm:$0xff]
    %v8954 = vld [vmem:[%s8751 + $0x650] sm:$0xff]
    %v8955 = vld [vmem:[%s8751 + $0x658] sm:$0xff]
    %v8956 = vld [vmem:[%s8751 + $0x660] sm:$0xff]
    %v8957 = vld [vmem:[%s8751 + $0x668] sm:$0xff]
    %v8958 = vld [vmem:[%s8751 + $0x670] sm:$0xff]
    %v8959 = vld [vmem:[%s8751 + $0x678] sm:$0xff]
    %v8960 = vld [vmem:[%s8751 + $0x680] sm:$0xff]
    %v8961 = vld [vmem:[%s8751 + $0x688] sm:$0xff]
    %v8962 = vld [vmem:[%s8751 + $0x690] sm:$0xff]
    %v8963 = vld [vmem:[%s8751 + $0x698] sm:$0xff]
    %v8964 = vld [vmem:[%s8751 + $0x6a0] sm:$0xff]
    %v8965 = vld [vmem:[%s8751 + $0x6a8] sm:$0xff]
    %v8966 = vld [vmem:[%s8751 + $0x6b0] sm:$0xff]
    %v8967 = vld [vmem:[%s8751 + $0x6b8] sm:$0xff]
    %v8968 = vld [vmem:[%s8751 + $0x6c0] sm:$0xff]
    %v8969 = vld [vmem:[%s8751 + $0x6c8] sm:$0xff]
    %v8970 = vld [vmem:[%s8751 + $0x6d0] sm:$0xff]
    %v8971 = vld [vmem:[%s8751 + $0x6d8] sm:$0xff]
    %v8972 = vld [vmem:[%s8751 + $0x6e0] sm:$0xff]
    %v8973 = vld [vmem:[%s8751 + $0x6e8] sm:$0xff]
    %v8974 = vld [vmem:[%s8751 + $0x6f0] sm:$0xff]
    %v8975 = vld [vmem:[%s8751 + $0x6f8] sm:$0xff]
    %v8976 = vld [vmem:[%s8751 + $0x700] sm:$0xff]
    %v8977 = vld [vmem:[%s8751 + $0x708] sm:$0xff]
    %v8978 = vld [vmem:[%s8751 + $0x710] sm:$0xff]
    %v8979 = vld [vmem:[%s8751 + $0x718] sm:$0xff]
    %v8980 = vld [vmem:[%s8751 + $0x720] sm:$0xff]
    %v8981 = vld [vmem:[%s8751 + $0x728] sm:$0xff]
    %v8982 = vld [vmem:[%s8751 + $0x730] sm:$0xff]
    %v8983 = vld [vmem:[%s8751 + $0x738] sm:$0xff]
    %v8984 = vld [vmem:[%s8751 + $0x740] sm:$0xff]
    %v8985 = vld [vmem:[%s8751 + $0x748] sm:$0xff]
    %v8986 = vld [vmem:[%s8751 + $0x750] sm:$0xff]
    %v8987 = vld [vmem:[%s8751 + $0x758] sm:$0xff]
    %v8988 = vld [vmem:[%s8751 + $0x760] sm:$0xff]
    %v8989 = vld [vmem:[%s8751 + $0x768] sm:$0xff]
    %v8990 = vld [vmem:[%s8751 + $0x770] sm:$0xff]
    %v8991 = vld [vmem:[%s8751 + $0x778] sm:$0xff]
    %v8992 = vld [vmem:[%s8751 + $0x780] sm:$0xff]
    %v8993 = vld [vmem:[%s8751 + $0x788] sm:$0xff]
    %v8994 = vld [vmem:[%s8751 + $0x790] sm:$0xff]
    %v8995 = vld [vmem:[%s8751 + $0x798] sm:$0xff]
    %v8996 = vld [vmem:[%s8751 + $0x7a0] sm:$0xff]
    %v8997 = vld [vmem:[%s8751 + $0x7a8] sm:$0xff]
    %v8998 = vld [vmem:[%s8751 + $0x7b0] sm:$0xff]
    %v8999 = vld [vmem:[%s8751 + $0x7b8] sm:$0xff]
    %v9000 = vld [vmem:[%s8751 + $0x7c0] sm:$0xff]
    %v9001 = vld [vmem:[%s8751 + $0x7c8] sm:$0xff]
    %v9002 = vld [vmem:[%s8751 + $0x7d0] sm:$0xff]
    %v9003 = vld [vmem:[%s8751 + $0x7d8] sm:$0xff]
    %v9004 = vld [vmem:[%s8751 + $0x7e0] sm:$0xff]
    %v9005 = vld [vmem:[%s8751 + $0x7e8] sm:$0xff]
    %v9006 = vld [vmem:[%s8751 + $0x7f0] sm:$0xff]
    %v9007 = vld [vmem:[%s8751 + $0x7f8] sm:$0xff]
    %v9008 = vld [vmem:[%s8751 + $0x800] sm:$0xff]
    %v9009 = vld [vmem:[%s8751 + $0x808] sm:$0xff]
    %v9010 = vld [vmem:[%s8751 + $0x810] sm:$0xff]
    %v9011 = vld [vmem:[%s8751 + $0x818] sm:$0xff]
    %v9012 = vld [vmem:[%s8751 + $0x820] sm:$0xff]
    %v9013 = vld [vmem:[%s8751 + $0x828] sm:$0xff]
    %v9014 = vld [vmem:[%s8751 + $0x830] sm:$0xff]
    %v9015 = vld [vmem:[%s8751 + $0x838] sm:$0xff]
    %v9016 = vld [vmem:[%s8751 + $0x840] sm:$0xff]
    %v9017 = vld [vmem:[%s8751 + $0x848] sm:$0xff]
    %v9018 = vld [vmem:[%s8751 + $0x850] sm:$0xff]
    %v9019 = vld [vmem:[%s8751 + $0x858] sm:$0xff]
    %v9020 = vld [vmem:[%s8751 + $0x860] sm:$0xff]
    %v9021 = vld [vmem:[%s8751 + $0x868] sm:$0xff]
    %v9022 = vld [vmem:[%s8751 + $0x870] sm:$0xff]
    %v9023 = vld [vmem:[%s8751 + $0x878] sm:$0xff]
    %v9024 = vld [vmem:[%s8751 + $0x880] sm:$0xff]
    %v9025 = vld [vmem:[%s8751 + $0x888] sm:$0xff]
    %v9026 = vld [vmem:[%s8751 + $0x890] sm:$0xff]
    %v9027 = vld [vmem:[%s8751 + $0x898] sm:$0xff]
    %v9028 = vld [vmem:[%s8751 + $0x8a0] sm:$0xff]
    %v9029 = vld [vmem:[%s8751 + $0x8a8] sm:$0xff]
    %v9030 = vld [vmem:[%s8751 + $0x8b0] sm:$0xff]
    %v9031 = vld [vmem:[%s8751 + $0x8b8] sm:$0xff]
    %v9032 = vld [vmem:[%s8751 + $0x8c0] sm:$0xff]
    %v9033 = vld [vmem:[%s8751 + $0x8c8] sm:$0xff]
    %v9034 = vld [vmem:[%s8751 + $0x8d0] sm:$0xff]
    %v9035 = vld [vmem:[%s8751 + $0x8d8] sm:$0xff]
    %v9036 = vld [vmem:[%s8751 + $0x8e0] sm:$0xff]
    %v9037 = vld [vmem:[%s8751 + $0x8e8] sm:$0xff]
    %v9038 = vld [vmem:[%s8751 + $0x8f0] sm:$0xff]
    %v9039 = vld [vmem:[%s8751 + $0x8f8] sm:$0xff]
    %v9040 = vrot.slane %v8743, 3
    %v9041 = vrot.slane %v8744, 3
    %v9042 = vrot.slane %v8745, 3
    %v9043 = vrot.slane %v8746, 3
    %v9044 = vrot.slane %v8747, 3
    %v9045 = vrot.slane %v8748, 3
    %v9046 = vrot.slane %v8749, 3
    %v9047 = vrot.slane %v8750, 3
    %v9048 = vsel %vm391, %v9044, %v9046
    %v9049 = vsel %vm391, %v9045, %v9047
    %v9050 = vsel %vm391, %v9042, %v9044
    %v9051 = vsel %vm391, %v9043, %v9045
    %v9052 = vsel %vm391, %v9040, %v9042
    %v9053 = vsel %vm391, %v9041, %v9043
    %v9054 = vsel %vm391, %v9046, %v9040
    %v9055 = vsel %vm391, %v9047, %v9041
    %v9056 = vmul.f32 %v9054, %v403
    %v9057 = vmul.f32 %v9055, %v403
    %v9058 = vmul.f32 %v9052, %v408
    %v9059 = vmul.f32 %v9053, %v408
    %v9060 = vmul.f32 %v9050, %v413
    %v9061 = vmul.f32 %v9051, %v413
    %v9062 = vmul.f32 %v9048, %v418
    %v9063 = vmul.f32 %v9049, %v418
    %v9064 = vrot.slane %v8743, 4
    %v9065 = vrot.slane %v8744, 4
    %v9066 = vrot.slane %v8745, 4
    %v9067 = vrot.slane %v8746, 4
    %v9068 = vrot.slane %v8747, 4
    %v9069 = vrot.slane %v8748, 4
    %v9070 = vrot.slane %v8749, 4
    %v9071 = vrot.slane %v8750, 4
    %v9072 = vsel %vm428, %v9068, %v9070
    %v9073 = vsel %vm428, %v9069, %v9071
    %v9074 = vsel %vm428, %v9066, %v9068
    %v9075 = vsel %vm428, %v9067, %v9069
    %v9076 = vsel %vm428, %v9064, %v9066
    %v9077 = vsel %vm428, %v9065, %v9067
    %v9078 = vsel %vm428, %v9070, %v9064
    %v9079 = vsel %vm428, %v9071, %v9065
    %v9080 = vmul.f32 %v9078, %v441
    %v9081 = vmul.f32 %v9079, %v441
    %v9082 = vmul.f32 %v9076, %v446
    %v9083 = vmul.f32 %v9077, %v446
    %v9084 = vmul.f32 %v9074, %v451
    %v9085 = vmul.f32 %v9075, %v451
    %v9086 = vmul.f32 %v9072, %v456
    %v9087 = vmul.f32 %v9073, %v456
    %v9088 = vrot.slane %v8743, 5
    %v9089 = vrot.slane %v8744, 5
    %v9090 = vrot.slane %v8745, 5
    %v9091 = vrot.slane %v8746, 5
    %v9092 = vrot.slane %v8747, 5
    %v9093 = vrot.slane %v8748, 5
    %v9094 = vrot.slane %v8749, 5
    %v9095 = vrot.slane %v8750, 5
    %v9096 = vsel %vm478, %v9092, %v9094
    %v9097 = vsel %vm478, %v9093, %v9095
    %v9098 = vsel %vm478, %v9090, %v9092
    %v9099 = vsel %vm478, %v9091, %v9093
    %v9100 = vsel %vm478, %v9088, %v9090
    %v9101 = vsel %vm478, %v9089, %v9091
    %v9102 = vsel %vm478, %v9094, %v9088
    %v9103 = vsel %vm478, %v9095, %v9089
    %v9104 = vmul.f32 %v9102, %v491
    %v9105 = vmul.f32 %v9103, %v491
    %v9106 = vmul.f32 %v9100, %v496
    %v9107 = vmul.f32 %v9101, %v496
    %v9108 = vmul.f32 %v9098, %v501
    %v9109 = vmul.f32 %v9099, %v501
    %v9110 = vmul.f32 %v9096, %v506
    %v9111 = vmul.f32 %v9097, %v506
    %v9112 = vrot.slane %v8743, 7
    %v9113 = vrot.slane %v8744, 7
    %v9114 = vrot.slane %v8745, 7
    %v9115 = vrot.slane %v8746, 7
    %v9116 = vrot.slane %v8747, 7
    %v9117 = vrot.slane %v8748, 7
    %v9118 = vrot.slane %v8749, 7
    %v9119 = vrot.slane %v8750, 7
    %v9120 = vsel %vm516, %v9116, %v9118
    %v9121 = vsel %vm516, %v9117, %v9119
    %v9122 = vsel %vm516, %v9114, %v9116
    %v9123 = vsel %vm516, %v9115, %v9117
    %v9124 = vsel %vm516, %v9112, %v9114
    %v9125 = vsel %vm516, %v9113, %v9115
    %v9126 = vsel %vm516, %v9118, %v9112
    %v9127 = vsel %vm516, %v9119, %v9113
    %v9128 = vmul.f32 %v9126, %v529
    %v9129 = vmul.f32 %v9127, %v529
    %v9130 = vmul.f32 %v9124, %v534
    %v9131 = vmul.f32 %v9125, %v534
    %v9132 = vmul.f32 %v9122, %v539
    %v9133 = vmul.f32 %v9123, %v539
    %v9134 = vmul.f32 %v9120, %v544
    %v9135 = vmul.f32 %v9121, %v544
    %v9136 = vrot.slane %v8743, 1
    %v9137 = vrot.slane %v8744, 1
    %v9138 = vrot.slane %v8745, 1
    %v9139 = vrot.slane %v8746, 1
    %v9140 = vrot.slane %v8747, 1
    %v9141 = vrot.slane %v8748, 1
    %v9142 = vrot.slane %v8749, 1
    %v9143 = vrot.slane %v8750, 1
    %v9144 = vsel %vm554, %v9140, %v9142
    %v9145 = vsel %vm554, %v9141, %v9143
    %v9146 = vsel %vm554, %v9138, %v9140
    %v9147 = vsel %vm554, %v9139, %v9141
    %v9148 = vsel %vm554, %v9136, %v9138
    %v9149 = vsel %vm554, %v9137, %v9139
    %v9150 = vsel %vm554, %v9142, %v9136
    %v9151 = vsel %vm554, %v9143, %v9137
    %v9152 = vmul.f32 %v9148, %v567
    %v9153 = vmul.f32 %v9149, %v567
    %v9154 = vmul.f32 %v9146, %v572
    %v9155 = vmul.f32 %v9147, %v572
    %v9156 = vmul.f32 %v9144, %v577
    %v9157 = vmul.f32 %v9145, %v577
    %v9158 = vmul.f32 %v9150, %v582
    %v9159 = vmul.f32 %v9151, %v582
    %v9160 = vmul.f32 %v9052, %v628
    %v9161 = vmul.f32 %v9053, %v628
    %v9162 = vmul.f32 %v9050, %v633
    %v9163 = vmul.f32 %v9051, %v633
    %v9164 = vmul.f32 %v9048, %v638
    %v9165 = vmul.f32 %v9049, %v638
    %v9166 = vmul.f32 %v9054, %v643
    %v9167 = vmul.f32 %v9055, %v643
    %v9168 = vmul.f32 %v9076, %v665
    %v9169 = vmul.f32 %v9077, %v665
    %v9170 = vmul.f32 %v9074, %v670
    %v9171 = vmul.f32 %v9075, %v670
    %v9172 = vmul.f32 %v9072, %v675
    %v9173 = vmul.f32 %v9073, %v675
    %v9174 = vmul.f32 %v9078, %v680
    %v9175 = vmul.f32 %v9079, %v680
    %v9176 = vmul.f32 %v9100, %v714
    %v9177 = vmul.f32 %v9101, %v714
    %v9178 = vmul.f32 %v9098, %v719
    %v9179 = vmul.f32 %v9099, %v719
    %v9180 = vmul.f32 %v9096, %v724
    %v9181 = vmul.f32 %v9097, %v724
    %v9182 = vmul.f32 %v9102, %v729
    %v9183 = vmul.f32 %v9103, %v729
    %v9184 = vpack.c.bf16 %v9058, %v9056
    %v9185 = vpack.c.bf16 %v9059, %v9057
    %v9186 = vpack.c.bf16 %v9082, %v9080
    %v9187 = vpack.c.bf16 %v9083, %v9081
    %v9188 = vpack.c.bf16 %v9106, %v9104
    %v9189 = vpack.c.bf16 %v9107, %v9105
    %v9190 = vpack.c.bf16 %v9130, %v9128
    %v9191 = vpack.c.bf16 %v9131, %v9129
    %v9192 = vpack.c.bf16 %v8745, %v8743
    %v9193 = vpack.c.bf16 %v8746, %v8744
    %v9194 = vpack.c.bf16 %v9154, %v9152
    %v9195 = vpack.c.bf16 %v9155, %v9153
    %v9196 = vpack.c.bf16 %v9162, %v9160
    %v9197 = vpack.c.bf16 %v9163, %v9161
    %v9198 = vpack.c.bf16 %v9170, %v9168
    %v9199 = vpack.c.bf16 %v9171, %v9169
    %v9200 = vpack.c.bf16 %v9178, %v9176
    %v9201 = vpack.c.bf16 %v9179, %v9177
    %v9202 = vpack.c.bf16 %v9062, %v9060
    %v9203 = vpack.c.bf16 %v9063, %v9061
    %v9204 = vpack.c.bf16 %v9086, %v9084
    %v9205 = vpack.c.bf16 %v9087, %v9085
    %v9206 = vpack.c.bf16 %v9110, %v9108
    %v9207 = vpack.c.bf16 %v9111, %v9109
    %v9208 = vpack.c.bf16 %v9134, %v9132
    %v9209 = vpack.c.bf16 %v9135, %v9133
    %v9210 = vpack.c.bf16 %v8749, %v8747
    %v9211 = vpack.c.bf16 %v8750, %v8748
    %v9212 = vpack.c.bf16 %v9158, %v9156
    %v9213 = vpack.c.bf16 %v9159, %v9157
    %v9214 = vpack.c.bf16 %v9166, %v9164
    %v9215 = vpack.c.bf16 %v9167, %v9165
    %v9216 = vpack.c.bf16 %v9174, %v9172
    %v9217 = vpack.c.bf16 %v9175, %v9173
    %v9218 = vpack.c.bf16 %v9182, %v9180
    %v9219 = vpack.c.bf16 %v9183, %v9181
    %v9508 = vunpack.c.l.b16 %v8752
    %v9509 = vunpack.c.h.b16 %v8752
    %v9510 = vunpack.c.l.b16 %v8753
    %v9511 = vunpack.c.h.b16 %v8753
    %v9512 = vunpack.c.l.b16 %v8754
    %v9513 = vunpack.c.h.b16 %v8754
    %v9514 = vunpack.c.l.b16 %v8755
    %v9515 = vunpack.c.h.b16 %v8755
    %v9516 = vunpack.c.l.b16 %v8756
    %v9517 = vunpack.c.h.b16 %v8756
    %v9518 = vunpack.c.l.b16 %v8757
    %v9519 = vunpack.c.h.b16 %v8757
    %v9520 = vunpack.c.l.b16 %v8758
    %v9521 = vunpack.c.h.b16 %v8758
    %v9522 = vunpack.c.l.b16 %v8759
    %v9523 = vunpack.c.h.b16 %v8759
    %v9524 = vunpack.c.l.b16 %v8760
    %v9525 = vunpack.c.h.b16 %v8760
    %v9526 = vunpack.c.l.b16 %v8761
    %v9527 = vunpack.c.h.b16 %v8761
    %v9528 = vunpack.c.l.b16 %v8762
    %v9529 = vunpack.c.h.b16 %v8762
    %v9530 = vunpack.c.l.b16 %v8763
    %v9531 = vunpack.c.h.b16 %v8763
    %v9532 = vunpack.c.l.b16 %v8764
    %v9533 = vunpack.c.h.b16 %v8764
    %v9534 = vunpack.c.l.b16 %v8765
    %v9535 = vunpack.c.h.b16 %v8765
    %v9536 = vunpack.c.l.b16 %v8766
    %v9537 = vunpack.c.h.b16 %v8766
    %v9538 = vunpack.c.l.b16 %v8767
    %v9539 = vunpack.c.h.b16 %v8767
    %v9540 = vunpack.c.l.b16 %v8768
    %v9541 = vunpack.c.h.b16 %v8768
    %v9542 = vunpack.c.l.b16 %v8769
    %v9543 = vunpack.c.h.b16 %v8769
    %v9544 = vunpack.c.l.b16 %v8770
    %v9545 = vunpack.c.h.b16 %v8770
    %v9546 = vunpack.c.l.b16 %v8771
    %v9547 = vunpack.c.h.b16 %v8771
    %v9548 = vunpack.c.l.b16 %v8772
    %v9549 = vunpack.c.h.b16 %v8772
    %v9550 = vunpack.c.l.b16 %v8773
    %v9551 = vunpack.c.h.b16 %v8773
    %v9552 = vunpack.c.l.b16 %v8774
    %v9553 = vunpack.c.h.b16 %v8774
    %v9554 = vunpack.c.l.b16 %v8775
    %v9555 = vunpack.c.h.b16 %v8775
    %v9556 = vunpack.c.l.b16 %v8776
    %v9557 = vunpack.c.h.b16 %v8776
    %v9558 = vunpack.c.l.b16 %v8777
    %v9559 = vunpack.c.h.b16 %v8777
    %v9560 = vunpack.c.l.b16 %v8778
    %v9561 = vunpack.c.h.b16 %v8778
    %v9562 = vunpack.c.l.b16 %v8779
    %v9563 = vunpack.c.h.b16 %v8779
    %v9564 = vunpack.c.l.b16 %v8780
    %v9565 = vunpack.c.h.b16 %v8780
    %v9566 = vunpack.c.l.b16 %v8781
    %v9567 = vunpack.c.h.b16 %v8781
    %v9568 = vunpack.c.l.b16 %v8782
    %v9569 = vunpack.c.h.b16 %v8782
    %v9570 = vunpack.c.l.b16 %v8783
    %v9571 = vunpack.c.h.b16 %v8783
    %v9572 = vunpack.c.l.b16 %v8784
    %v9573 = vunpack.c.h.b16 %v8784
    %v9574 = vunpack.c.l.b16 %v8785
    %v9575 = vunpack.c.h.b16 %v8785
    %v9576 = vunpack.c.l.b16 %v8786
    %v9577 = vunpack.c.h.b16 %v8786
    %v9578 = vunpack.c.l.b16 %v8787
    %v9579 = vunpack.c.h.b16 %v8787
    %v9580 = vunpack.c.l.b16 %v8788
    %v9581 = vunpack.c.h.b16 %v8788
    %v9582 = vunpack.c.l.b16 %v8789
    %v9583 = vunpack.c.h.b16 %v8789
    %v9584 = vunpack.c.l.b16 %v8790
    %v9585 = vunpack.c.h.b16 %v8790
    %v9586 = vunpack.c.l.b16 %v8791
    %v9587 = vunpack.c.h.b16 %v8791
    %v9588 = vunpack.c.l.b16 %v8792
    %v9589 = vunpack.c.h.b16 %v8792
    %v9590 = vunpack.c.l.b16 %v8793
    %v9591 = vunpack.c.h.b16 %v8793
    %v9592 = vunpack.c.l.b16 %v8794
    %v9593 = vunpack.c.h.b16 %v8794
    %v9594 = vunpack.c.l.b16 %v8795
    %v9595 = vunpack.c.h.b16 %v8795
    %v9596 = vunpack.c.l.b16 %v8796
    %v9597 = vunpack.c.h.b16 %v8796
    %v9598 = vunpack.c.l.b16 %v8797
    %v9599 = vunpack.c.h.b16 %v8797
    %v9600 = vunpack.c.l.b16 %v8798
    %v9601 = vunpack.c.h.b16 %v8798
    %v9602 = vunpack.c.l.b16 %v8799
    %v9603 = vunpack.c.h.b16 %v8799
    %v9604 = vunpack.c.l.b16 %v8800
    %v9605 = vunpack.c.h.b16 %v8800
    %v9606 = vunpack.c.l.b16 %v8801
    %v9607 = vunpack.c.h.b16 %v8801
    %v9608 = vunpack.c.l.b16 %v8802
    %v9609 = vunpack.c.h.b16 %v8802
    %v9610 = vunpack.c.l.b16 %v8803
    %v9611 = vunpack.c.h.b16 %v8803
    %v9612 = vunpack.c.l.b16 %v8804
    %v9613 = vunpack.c.h.b16 %v8804
    %v9614 = vunpack.c.l.b16 %v8805
    %v9615 = vunpack.c.h.b16 %v8805
    %v9616 = vunpack.c.l.b16 %v8806
    %v9617 = vunpack.c.h.b16 %v8806
    %v9618 = vunpack.c.l.b16 %v8807
    %v9619 = vunpack.c.h.b16 %v8807
    %v9620 = vunpack.c.l.b16 %v8808
    %v9621 = vunpack.c.h.b16 %v8808
    %v9622 = vunpack.c.l.b16 %v8809
    %v9623 = vunpack.c.h.b16 %v8809
    %v9624 = vunpack.c.l.b16 %v8810
    %v9625 = vunpack.c.h.b16 %v8810
    %v9626 = vunpack.c.l.b16 %v8811
    %v9627 = vunpack.c.h.b16 %v8811
    %v9628 = vunpack.c.l.b16 %v8812
    %v9629 = vunpack.c.h.b16 %v8812
    %v9630 = vunpack.c.l.b16 %v8813
    %v9631 = vunpack.c.h.b16 %v8813
    %v9632 = vunpack.c.l.b16 %v8814
    %v9633 = vunpack.c.h.b16 %v8814
    %v9634 = vunpack.c.l.b16 %v8815
    %v9635 = vunpack.c.h.b16 %v8815
    %v9636 = vunpack.c.l.b16 %v8816
    %v9637 = vunpack.c.h.b16 %v8816
    %v9638 = vunpack.c.l.b16 %v8817
    %v9639 = vunpack.c.h.b16 %v8817
    %v9640 = vunpack.c.l.b16 %v8818
    %v9641 = vunpack.c.h.b16 %v8818
    %v9642 = vunpack.c.l.b16 %v8819
    %v9643 = vunpack.c.h.b16 %v8819
    %v9644 = vunpack.c.l.b16 %v8820
    %v9645 = vunpack.c.h.b16 %v8820
    %v9646 = vunpack.c.l.b16 %v8821
    %v9647 = vunpack.c.h.b16 %v8821
    %v9648 = vunpack.c.l.b16 %v8822
    %v9649 = vunpack.c.h.b16 %v8822
    %v9650 = vunpack.c.l.b16 %v8823
    %v9651 = vunpack.c.h.b16 %v8823
    %v9652 = vunpack.c.l.b16 %v8824
    %v9653 = vunpack.c.h.b16 %v8824
    %v9654 = vunpack.c.l.b16 %v8825
    %v9655 = vunpack.c.h.b16 %v8825
    %v9656 = vunpack.c.l.b16 %v8826
    %v9657 = vunpack.c.h.b16 %v8826
    %v9658 = vunpack.c.l.b16 %v8827
    %v9659 = vunpack.c.h.b16 %v8827
    %v9660 = vunpack.c.l.b16 %v8828
    %v9661 = vunpack.c.h.b16 %v8828
    %v9662 = vunpack.c.l.b16 %v8829
    %v9663 = vunpack.c.h.b16 %v8829
    %v9664 = vunpack.c.l.b16 %v8830
    %v9665 = vunpack.c.h.b16 %v8830
    %v9666 = vunpack.c.l.b16 %v8831
    %v9667 = vunpack.c.h.b16 %v8831
    %v9668 = vunpack.c.l.b16 %v8832
    %v9669 = vunpack.c.h.b16 %v8832
    %v9670 = vunpack.c.l.b16 %v8833
    %v9671 = vunpack.c.h.b16 %v8833
    %v9672 = vunpack.c.l.b16 %v8834
    %v9673 = vunpack.c.h.b16 %v8834
    %v9674 = vunpack.c.l.b16 %v8835
    %v9675 = vunpack.c.h.b16 %v8835
    %v9676 = vunpack.c.l.b16 %v8836
    %v9677 = vunpack.c.h.b16 %v8836
    %v9678 = vunpack.c.l.b16 %v8837
    %v9679 = vunpack.c.h.b16 %v8837
    %v9680 = vunpack.c.l.b16 %v8838
    %v9681 = vunpack.c.h.b16 %v8838
    %v9682 = vunpack.c.l.b16 %v8839
    %v9683 = vunpack.c.h.b16 %v8839
    %v9684 = vunpack.c.l.b16 %v8840
    %v9685 = vunpack.c.h.b16 %v8840
    %v9686 = vunpack.c.l.b16 %v8841
    %v9687 = vunpack.c.h.b16 %v8841
    %v9688 = vunpack.c.l.b16 %v8842
    %v9689 = vunpack.c.h.b16 %v8842
    %v9690 = vunpack.c.l.b16 %v8843
    %v9691 = vunpack.c.h.b16 %v8843
    %v9692 = vunpack.c.l.b16 %v8844
    %v9693 = vunpack.c.h.b16 %v8844
    %v9694 = vunpack.c.l.b16 %v8845
    %v9695 = vunpack.c.h.b16 %v8845
    %v9696 = vunpack.c.l.b16 %v8846
    %v9697 = vunpack.c.h.b16 %v8846
    %v9698 = vunpack.c.l.b16 %v8847
    %v9699 = vunpack.c.h.b16 %v8847
    %v9700 = vunpack.c.l.b16 %v8848
    %v9701 = vunpack.c.h.b16 %v8848
    %v9702 = vunpack.c.l.b16 %v8849
    %v9703 = vunpack.c.h.b16 %v8849
    %v9704 = vunpack.c.l.b16 %v8850
    %v9705 = vunpack.c.h.b16 %v8850
    %v9706 = vunpack.c.l.b16 %v8851
    %v9707 = vunpack.c.h.b16 %v8851
    %v9708 = vunpack.c.l.b16 %v8852
    %v9709 = vunpack.c.h.b16 %v8852
    %v9710 = vunpack.c.l.b16 %v8853
    %v9711 = vunpack.c.h.b16 %v8853
    %v9712 = vunpack.c.l.b16 %v8854
    %v9713 = vunpack.c.h.b16 %v8854
    %v9714 = vunpack.c.l.b16 %v8855
    %v9715 = vunpack.c.h.b16 %v8855
    %v9716 = vunpack.c.l.b16 %v8856
    %v9717 = vunpack.c.h.b16 %v8856
    %v9718 = vunpack.c.l.b16 %v8857
    %v9719 = vunpack.c.h.b16 %v8857
    %v9720 = vunpack.c.l.b16 %v8858
    %v9721 = vunpack.c.h.b16 %v8858
    %v9722 = vunpack.c.l.b16 %v8859
    %v9723 = vunpack.c.h.b16 %v8859
    %v9724 = vunpack.c.l.b16 %v8860
    %v9725 = vunpack.c.h.b16 %v8860
    %v9726 = vunpack.c.l.b16 %v8861
    %v9727 = vunpack.c.h.b16 %v8861
    %v9728 = vunpack.c.l.b16 %v8862
    %v9729 = vunpack.c.h.b16 %v8862
    %v9730 = vunpack.c.l.b16 %v8863
    %v9731 = vunpack.c.h.b16 %v8863
    %v9732 = vunpack.c.l.b16 %v8864
    %v9733 = vunpack.c.h.b16 %v8864
    %v9734 = vunpack.c.l.b16 %v8865
    %v9735 = vunpack.c.h.b16 %v8865
    %v9736 = vunpack.c.l.b16 %v8866
    %v9737 = vunpack.c.h.b16 %v8866
    %v9738 = vunpack.c.l.b16 %v8867
    %v9739 = vunpack.c.h.b16 %v8867
    %v9740 = vunpack.c.l.b16 %v8868
    %v9741 = vunpack.c.h.b16 %v8868
    %v9742 = vunpack.c.l.b16 %v8869
    %v9743 = vunpack.c.h.b16 %v8869
    %v9744 = vunpack.c.l.b16 %v8870
    %v9745 = vunpack.c.h.b16 %v8870
    %v9746 = vunpack.c.l.b16 %v8871
    %v9747 = vunpack.c.h.b16 %v8871
    %v9748 = vunpack.c.l.b16 %v8872
    %v9749 = vunpack.c.h.b16 %v8872
    %v9750 = vunpack.c.l.b16 %v8873
    %v9751 = vunpack.c.h.b16 %v8873
    %v9752 = vunpack.c.l.b16 %v8874
    %v9753 = vunpack.c.h.b16 %v8874
    %v9754 = vunpack.c.l.b16 %v8875
    %v9755 = vunpack.c.h.b16 %v8875
    %v9756 = vunpack.c.l.b16 %v8876
    %v9757 = vunpack.c.h.b16 %v8876
    %v9758 = vunpack.c.l.b16 %v8877
    %v9759 = vunpack.c.h.b16 %v8877
    %v9760 = vunpack.c.l.b16 %v8878
    %v9761 = vunpack.c.h.b16 %v8878
    %v9762 = vunpack.c.l.b16 %v8879
    %v9763 = vunpack.c.h.b16 %v8879
    %v9764 = vunpack.c.l.b16 %v8880
    %v9765 = vunpack.c.h.b16 %v8880
    %v9766 = vunpack.c.l.b16 %v8881
    %v9767 = vunpack.c.h.b16 %v8881
    %v9768 = vunpack.c.l.b16 %v8882
    %v9769 = vunpack.c.h.b16 %v8882
    %v9770 = vunpack.c.l.b16 %v8883
    %v9771 = vunpack.c.h.b16 %v8883
    %v9772 = vunpack.c.l.b16 %v8884
    %v9773 = vunpack.c.h.b16 %v8884
    %v9774 = vunpack.c.l.b16 %v8885
    %v9775 = vunpack.c.h.b16 %v8885
    %v9776 = vunpack.c.l.b16 %v8886
    %v9777 = vunpack.c.h.b16 %v8886
    %v9778 = vunpack.c.l.b16 %v8887
    %v9779 = vunpack.c.h.b16 %v8887
    %v9780 = vunpack.c.l.b16 %v8888
    %v9781 = vunpack.c.h.b16 %v8888
    %v9782 = vunpack.c.l.b16 %v8889
    %v9783 = vunpack.c.h.b16 %v8889
    %v9784 = vunpack.c.l.b16 %v8890
    %v9785 = vunpack.c.h.b16 %v8890
    %v9786 = vunpack.c.l.b16 %v8891
    %v9787 = vunpack.c.h.b16 %v8891
    %v9788 = vunpack.c.l.b16 %v8892
    %v9789 = vunpack.c.h.b16 %v8892
    %v9790 = vunpack.c.l.b16 %v8893
    %v9791 = vunpack.c.h.b16 %v8893
    %v9792 = vunpack.c.l.b16 %v8894
    %v9793 = vunpack.c.h.b16 %v8894
    %v9794 = vunpack.c.l.b16 %v8895
    %v9795 = vunpack.c.h.b16 %v8895
    %v9796 = vunpack.c.l.b16 %v8896
    %v9797 = vunpack.c.h.b16 %v8896
    %v9798 = vunpack.c.l.b16 %v8897
    %v9799 = vunpack.c.h.b16 %v8897
    %v9800 = vunpack.c.l.b16 %v8898
    %v9801 = vunpack.c.h.b16 %v8898
    %v9802 = vunpack.c.l.b16 %v8899
    %v9803 = vunpack.c.h.b16 %v8899
    %v9804 = vunpack.c.l.b16 %v8900
    %v9805 = vunpack.c.h.b16 %v8900
    %v9806 = vunpack.c.l.b16 %v8901
    %v9807 = vunpack.c.h.b16 %v8901
    %v9808 = vunpack.c.l.b16 %v8902
    %v9809 = vunpack.c.h.b16 %v8902
    %v9810 = vunpack.c.l.b16 %v8903
    %v9811 = vunpack.c.h.b16 %v8903
    %v9812 = vunpack.c.l.b16 %v8904
    %v9813 = vunpack.c.h.b16 %v8904
    %v9814 = vunpack.c.l.b16 %v8905
    %v9815 = vunpack.c.h.b16 %v8905
    %v9816 = vunpack.c.l.b16 %v8906
    %v9817 = vunpack.c.h.b16 %v8906
    %v9818 = vunpack.c.l.b16 %v8907
    %v9819 = vunpack.c.h.b16 %v8907
    %v9820 = vunpack.c.l.b16 %v8908
    %v9821 = vunpack.c.h.b16 %v8908
    %v9822 = vunpack.c.l.b16 %v8909
    %v9823 = vunpack.c.h.b16 %v8909
    %v9824 = vunpack.c.l.b16 %v8910
    %v9825 = vunpack.c.h.b16 %v8910
    %v9826 = vunpack.c.l.b16 %v8911
    %v9827 = vunpack.c.h.b16 %v8911
    %v9828 = vunpack.c.l.b16 %v8912
    %v9829 = vunpack.c.h.b16 %v8912
    %v9830 = vunpack.c.l.b16 %v8913
    %v9831 = vunpack.c.h.b16 %v8913
    %v9832 = vunpack.c.l.b16 %v8914
    %v9833 = vunpack.c.h.b16 %v8914
    %v9834 = vunpack.c.l.b16 %v8915
    %v9835 = vunpack.c.h.b16 %v8915
    %v9836 = vunpack.c.l.b16 %v8916
    %v9837 = vunpack.c.h.b16 %v8916
    %v9838 = vunpack.c.l.b16 %v8917
    %v9839 = vunpack.c.h.b16 %v8917
    %v9840 = vunpack.c.l.b16 %v8918
    %v9841 = vunpack.c.h.b16 %v8918
    %v9842 = vunpack.c.l.b16 %v8919
    %v9843 = vunpack.c.h.b16 %v8919
    %v9844 = vunpack.c.l.b16 %v8920
    %v9845 = vunpack.c.h.b16 %v8920
    %v9846 = vunpack.c.l.b16 %v8921
    %v9847 = vunpack.c.h.b16 %v8921
    %v9848 = vunpack.c.l.b16 %v8922
    %v9849 = vunpack.c.h.b16 %v8922
    %v9850 = vunpack.c.l.b16 %v8923
    %v9851 = vunpack.c.h.b16 %v8923
    %v9852 = vunpack.c.l.b16 %v8924
    %v9853 = vunpack.c.h.b16 %v8924
    %v9854 = vunpack.c.l.b16 %v8925
    %v9855 = vunpack.c.h.b16 %v8925
    %v9856 = vunpack.c.l.b16 %v8926
    %v9857 = vunpack.c.h.b16 %v8926
    %v9858 = vunpack.c.l.b16 %v8927
    %v9859 = vunpack.c.h.b16 %v8927
    %v9860 = vunpack.c.l.b16 %v8928
    %v9861 = vunpack.c.h.b16 %v8928
    %v9862 = vunpack.c.l.b16 %v8929
    %v9863 = vunpack.c.h.b16 %v8929
    %v9864 = vunpack.c.l.b16 %v8930
    %v9865 = vunpack.c.h.b16 %v8930
    %v9866 = vunpack.c.l.b16 %v8931
    %v9867 = vunpack.c.h.b16 %v8931
    %v9868 = vunpack.c.l.b16 %v8932
    %v9869 = vunpack.c.h.b16 %v8932
    %v9870 = vunpack.c.l.b16 %v8933
    %v9871 = vunpack.c.h.b16 %v8933
    %v9872 = vunpack.c.l.b16 %v8934
    %v9873 = vunpack.c.h.b16 %v8934
    %v9874 = vunpack.c.l.b16 %v8935
    %v9875 = vunpack.c.h.b16 %v8935
    %v9876 = vunpack.c.l.b16 %v8936
    %v9877 = vunpack.c.h.b16 %v8936
    %v9878 = vunpack.c.l.b16 %v8937
    %v9879 = vunpack.c.h.b16 %v8937
    %v9880 = vunpack.c.l.b16 %v8938
    %v9881 = vunpack.c.h.b16 %v8938
    %v9882 = vunpack.c.l.b16 %v8939
    %v9883 = vunpack.c.h.b16 %v8939
    %v9884 = vunpack.c.l.b16 %v8940
    %v9885 = vunpack.c.h.b16 %v8940
    %v9886 = vunpack.c.l.b16 %v8941
    %v9887 = vunpack.c.h.b16 %v8941
    %v9888 = vunpack.c.l.b16 %v8942
    %v9889 = vunpack.c.h.b16 %v8942
    %v9890 = vunpack.c.l.b16 %v8943
    %v9891 = vunpack.c.h.b16 %v8943
    %v9892 = vunpack.c.l.b16 %v8944
    %v9893 = vunpack.c.h.b16 %v8944
    %v9894 = vunpack.c.l.b16 %v8945
    %v9895 = vunpack.c.h.b16 %v8945
    %v9896 = vunpack.c.l.b16 %v8946
    %v9897 = vunpack.c.h.b16 %v8946
    %v9898 = vunpack.c.l.b16 %v8947
    %v9899 = vunpack.c.h.b16 %v8947
    %v9900 = vunpack.c.l.b16 %v8948
    %v9901 = vunpack.c.h.b16 %v8948
    %v9902 = vunpack.c.l.b16 %v8949
    %v9903 = vunpack.c.h.b16 %v8949
    %v9904 = vunpack.c.l.b16 %v8950
    %v9905 = vunpack.c.h.b16 %v8950
    %v9906 = vunpack.c.l.b16 %v8951
    %v9907 = vunpack.c.h.b16 %v8951
    %v9908 = vunpack.c.l.b16 %v8952
    %v9909 = vunpack.c.h.b16 %v8952
    %v9910 = vunpack.c.l.b16 %v8953
    %v9911 = vunpack.c.h.b16 %v8953
    %v9912 = vunpack.c.l.b16 %v8954
    %v9913 = vunpack.c.h.b16 %v8954
    %v9914 = vunpack.c.l.b16 %v8955
    %v9915 = vunpack.c.h.b16 %v8955
    %v9916 = vunpack.c.l.b16 %v8956
    %v9917 = vunpack.c.h.b16 %v8956
    %v9918 = vunpack.c.l.b16 %v8957
    %v9919 = vunpack.c.h.b16 %v8957
    %v9920 = vunpack.c.l.b16 %v8958
    %v9921 = vunpack.c.h.b16 %v8958
    %v9922 = vunpack.c.l.b16 %v8959
    %v9923 = vunpack.c.h.b16 %v8959
    %v9924 = vunpack.c.l.b16 %v8960
    %v9925 = vunpack.c.h.b16 %v8960
    %v9926 = vunpack.c.l.b16 %v8961
    %v9927 = vunpack.c.h.b16 %v8961
    %v9928 = vunpack.c.l.b16 %v8962
    %v9929 = vunpack.c.h.b16 %v8962
    %v9930 = vunpack.c.l.b16 %v8963
    %v9931 = vunpack.c.h.b16 %v8963
    %v9932 = vunpack.c.l.b16 %v8964
    %v9933 = vunpack.c.h.b16 %v8964
    %v9934 = vunpack.c.l.b16 %v8965
    %v9935 = vunpack.c.h.b16 %v8965
    %v9936 = vunpack.c.l.b16 %v8966
    %v9937 = vunpack.c.h.b16 %v8966
    %v9938 = vunpack.c.l.b16 %v8967
    %v9939 = vunpack.c.h.b16 %v8967
    %v9940 = vunpack.c.l.b16 %v8968
    %v9941 = vunpack.c.h.b16 %v8968
    %v9942 = vunpack.c.l.b16 %v8969
    %v9943 = vunpack.c.h.b16 %v8969
    %v9944 = vunpack.c.l.b16 %v8970
    %v9945 = vunpack.c.h.b16 %v8970
    %v9946 = vunpack.c.l.b16 %v8971
    %v9947 = vunpack.c.h.b16 %v8971
    %v9948 = vunpack.c.l.b16 %v8972
    %v9949 = vunpack.c.h.b16 %v8972
    %v9950 = vunpack.c.l.b16 %v8973
    %v9951 = vunpack.c.h.b16 %v8973
    %v9952 = vunpack.c.l.b16 %v8974
    %v9953 = vunpack.c.h.b16 %v8974
    %v9954 = vunpack.c.l.b16 %v8975
    %v9955 = vunpack.c.h.b16 %v8975
    %v9956 = vunpack.c.l.b16 %v8976
    %v9957 = vunpack.c.h.b16 %v8976
    %v9958 = vunpack.c.l.b16 %v8977
    %v9959 = vunpack.c.h.b16 %v8977
    %v9960 = vunpack.c.l.b16 %v8978
    %v9961 = vunpack.c.h.b16 %v8978
    %v9962 = vunpack.c.l.b16 %v8979
    %v9963 = vunpack.c.h.b16 %v8979
    %v9964 = vunpack.c.l.b16 %v8980
    %v9965 = vunpack.c.h.b16 %v8980
    %v9966 = vunpack.c.l.b16 %v8981
    %v9967 = vunpack.c.h.b16 %v8981
    %v9968 = vunpack.c.l.b16 %v8982
    %v9969 = vunpack.c.h.b16 %v8982
    %v9970 = vunpack.c.l.b16 %v8983
    %v9971 = vunpack.c.h.b16 %v8983
    %v9972 = vunpack.c.l.b16 %v8984
    %v9973 = vunpack.c.h.b16 %v8984
    %v9974 = vunpack.c.l.b16 %v8985
    %v9975 = vunpack.c.h.b16 %v8985
    %v9976 = vunpack.c.l.b16 %v8986
    %v9977 = vunpack.c.h.b16 %v8986
    %v9978 = vunpack.c.l.b16 %v8987
    %v9979 = vunpack.c.h.b16 %v8987
    %v9980 = vunpack.c.l.b16 %v8988
    %v9981 = vunpack.c.h.b16 %v8988
    %v9982 = vunpack.c.l.b16 %v8989
    %v9983 = vunpack.c.h.b16 %v8989
    %v9984 = vunpack.c.l.b16 %v8990
    %v9985 = vunpack.c.h.b16 %v8990
    %v9986 = vunpack.c.l.b16 %v8991
    %v9987 = vunpack.c.h.b16 %v8991
    %v9988 = vunpack.c.l.b16 %v8992
    %v9989 = vunpack.c.h.b16 %v8992
    %v9990 = vunpack.c.l.b16 %v8993
    %v9991 = vunpack.c.h.b16 %v8993
    %v9992 = vunpack.c.l.b16 %v8994
    %v9993 = vunpack.c.h.b16 %v8994
    %v9994 = vunpack.c.l.b16 %v8995
    %v9995 = vunpack.c.h.b16 %v8995
    %v9996 = vunpack.c.l.b16 %v8996
    %v9997 = vunpack.c.h.b16 %v8996
    %v9998 = vunpack.c.l.b16 %v8997
    %v9999 = vunpack.c.h.b16 %v8997
    %v10000 = vunpack.c.l.b16 %v8998
    %v10001 = vunpack.c.h.b16 %v8998
    %v10002 = vunpack.c.l.b16 %v8999
    %v10003 = vunpack.c.h.b16 %v8999
    %v10004 = vunpack.c.l.b16 %v9000
    %v10005 = vunpack.c.h.b16 %v9000
    %v10006 = vunpack.c.l.b16 %v9001
    %v10007 = vunpack.c.h.b16 %v9001
    %v10008 = vunpack.c.l.b16 %v9002
    %v10009 = vunpack.c.h.b16 %v9002
    %v10010 = vunpack.c.l.b16 %v9003
    %v10011 = vunpack.c.h.b16 %v9003
    %v10012 = vunpack.c.l.b16 %v9004
    %v10013 = vunpack.c.h.b16 %v9004
    %v10014 = vunpack.c.l.b16 %v9005
    %v10015 = vunpack.c.h.b16 %v9005
    %v10016 = vunpack.c.l.b16 %v9006
    %v10017 = vunpack.c.h.b16 %v9006
    %v10018 = vunpack.c.l.b16 %v9007
    %v10019 = vunpack.c.h.b16 %v9007
    %v10020 = vunpack.c.l.b16 %v9008
    %v10021 = vunpack.c.h.b16 %v9008
    %v10022 = vunpack.c.l.b16 %v9009
    %v10023 = vunpack.c.h.b16 %v9009
    %v10024 = vunpack.c.l.b16 %v9010
    %v10025 = vunpack.c.h.b16 %v9010
    %v10026 = vunpack.c.l.b16 %v9011
    %v10027 = vunpack.c.h.b16 %v9011
    %v10028 = vunpack.c.l.b16 %v9012
    %v10029 = vunpack.c.h.b16 %v9012
    %v10030 = vunpack.c.l.b16 %v9013
    %v10031 = vunpack.c.h.b16 %v9013
    %v10032 = vunpack.c.l.b16 %v9014
    %v10033 = vunpack.c.h.b16 %v9014
    %v10034 = vunpack.c.l.b16 %v9015
    %v10035 = vunpack.c.h.b16 %v9015
    %v10036 = vunpack.c.l.b16 %v9016
    %v10037 = vunpack.c.h.b16 %v9016
    %v10038 = vunpack.c.l.b16 %v9017
    %v10039 = vunpack.c.h.b16 %v9017
    %v10040 = vunpack.c.l.b16 %v9018
    %v10041 = vunpack.c.h.b16 %v9018
    %v10042 = vunpack.c.l.b16 %v9019
    %v10043 = vunpack.c.h.b16 %v9019
    %v10044 = vunpack.c.l.b16 %v9020
    %v10045 = vunpack.c.h.b16 %v9020
    %v10046 = vunpack.c.l.b16 %v9021
    %v10047 = vunpack.c.h.b16 %v9021
    %v10048 = vunpack.c.l.b16 %v9022
    %v10049 = vunpack.c.h.b16 %v9022
    %v10050 = vunpack.c.l.b16 %v9023
    %v10051 = vunpack.c.h.b16 %v9023
    %v10052 = vunpack.c.l.b16 %v9024
    %v10053 = vunpack.c.h.b16 %v9024
    %v10054 = vunpack.c.l.b16 %v9025
    %v10055 = vunpack.c.h.b16 %v9025
    %v10056 = vunpack.c.l.b16 %v9026
    %v10057 = vunpack.c.h.b16 %v9026
    %v10058 = vunpack.c.l.b16 %v9027
    %v10059 = vunpack.c.h.b16 %v9027
    %v10060 = vunpack.c.l.b16 %v9028
    %v10061 = vunpack.c.h.b16 %v9028
    %v10062 = vunpack.c.l.b16 %v9029
    %v10063 = vunpack.c.h.b16 %v9029
    %v10064 = vunpack.c.l.b16 %v9030
    %v10065 = vunpack.c.h.b16 %v9030
    %v10066 = vunpack.c.l.b16 %v9031
    %v10067 = vunpack.c.h.b16 %v9031
    %v10068 = vunpack.c.l.b16 %v9032
    %v10069 = vunpack.c.h.b16 %v9032
    %v10070 = vunpack.c.l.b16 %v9033
    %v10071 = vunpack.c.h.b16 %v9033
    %v10072 = vunpack.c.l.b16 %v9034
    %v10073 = vunpack.c.h.b16 %v9034
    %v10074 = vunpack.c.l.b16 %v9035
    %v10075 = vunpack.c.h.b16 %v9035
    %v10076 = vunpack.c.l.b16 %v9036
    %v10077 = vunpack.c.h.b16 %v9036
    %v10078 = vunpack.c.l.b16 %v9037
    %v10079 = vunpack.c.h.b16 %v9037
    %v10080 = vunpack.c.l.b16 %v9038
    %v10081 = vunpack.c.h.b16 %v9038
    %v10082 = vunpack.c.l.b16 %v9039
    %v10083 = vunpack.c.h.b16 %v9039
    %v10084 = vpack.c.b16 %v9510, %v9508
    %v10085 = vpack.c.b16 %v9511, %v9509
    %v10086 = vpack.c.b16 %v9514, %v9512
    %v10087 = vpack.c.b16 %v9515, %v9513
    %v10088 = vpack.c.b16 %v9518, %v9516
    %v10089 = vpack.c.b16 %v9519, %v9517
    %v10090 = vpack.c.b16 %v9522, %v9520
    %v10091 = vpack.c.b16 %v9523, %v9521
    %v10092 = vpack.c.b16 %v9526, %v9524
    %v10093 = vpack.c.b16 %v9527, %v9525
    %v10094 = vpack.c.b16 %v9530, %v9528
    %v10095 = vpack.c.b16 %v9531, %v9529
    %v10096 = vpack.c.b16 %v9534, %v9532
    %v10097 = vpack.c.b16 %v9535, %v9533
    %v10098 = vpack.c.b16 %v9538, %v9536
    %v10099 = vpack.c.b16 %v9539, %v9537
    %v10100 = vpack.c.b16 %v9542, %v9540
    %v10101 = vpack.c.b16 %v9543, %v9541
    %v10102 = vpack.c.b16 %v9546, %v9544
    %v10103 = vpack.c.b16 %v9547, %v9545
    %v10104 = vpack.c.b16 %v9550, %v9548
    %v10105 = vpack.c.b16 %v9551, %v9549
    %v10106 = vpack.c.b16 %v9554, %v9552
    %v10107 = vpack.c.b16 %v9555, %v9553
    %v10108 = vpack.c.b16 %v9558, %v9556
    %v10109 = vpack.c.b16 %v9559, %v9557
    %v10110 = vpack.c.b16 %v9562, %v9560
    %v10111 = vpack.c.b16 %v9563, %v9561
    %v10112 = vpack.c.b16 %v9566, %v9564
    %v10113 = vpack.c.b16 %v9567, %v9565
    %v10114 = vpack.c.b16 %v9570, %v9568
    %v10115 = vpack.c.b16 %v9571, %v9569
    %v10116 = vpack.c.b16 %v9574, %v9572
    %v10117 = vpack.c.b16 %v9575, %v9573
    %v10118 = vpack.c.b16 %v9578, %v9576
    %v10119 = vpack.c.b16 %v9579, %v9577
    %v10120 = vpack.c.b16 %v9582, %v9580
    %v10121 = vpack.c.b16 %v9583, %v9581
    %v10122 = vpack.c.b16 %v9586, %v9584
    %v10123 = vpack.c.b16 %v9587, %v9585
    %v10124 = vpack.c.b16 %v9590, %v9588
    %v10125 = vpack.c.b16 %v9591, %v9589
    %v10126 = vpack.c.b16 %v9594, %v9592
    %v10127 = vpack.c.b16 %v9595, %v9593
    %v10128 = vpack.c.b16 %v9598, %v9596
    %v10129 = vpack.c.b16 %v9599, %v9597
    %v10130 = vpack.c.b16 %v9602, %v9600
    %v10131 = vpack.c.b16 %v9603, %v9601
    %v10132 = vpack.c.b16 %v9606, %v9604
    %v10133 = vpack.c.b16 %v9607, %v9605
    %v10134 = vpack.c.b16 %v9610, %v9608
    %v10135 = vpack.c.b16 %v9611, %v9609
    %v10136 = vpack.c.b16 %v9614, %v9612
    %v10137 = vpack.c.b16 %v9615, %v9613
    %v10138 = vpack.c.b16 %v9618, %v9616
    %v10139 = vpack.c.b16 %v9619, %v9617
    %v10140 = vpack.c.b16 %v9622, %v9620
    %v10141 = vpack.c.b16 %v9623, %v9621
    %v10142 = vpack.c.b16 %v9626, %v9624
    %v10143 = vpack.c.b16 %v9627, %v9625
    %v10144 = vpack.c.b16 %v9630, %v9628
    %v10145 = vpack.c.b16 %v9631, %v9629
    %v10146 = vpack.c.b16 %v9634, %v9632
    %v10147 = vpack.c.b16 %v9635, %v9633
    %v10148 = vpack.c.b16 %v9638, %v9636
    %v10149 = vpack.c.b16 %v9639, %v9637
    %v10150 = vpack.c.b16 %v9642, %v9640
    %v10151 = vpack.c.b16 %v9643, %v9641
    %v10152 = vpack.c.b16 %v9646, %v9644
    %v10153 = vpack.c.b16 %v9647, %v9645
    %v10154 = vpack.c.b16 %v9650, %v9648
    %v10155 = vpack.c.b16 %v9651, %v9649
    %v10156 = vpack.c.b16 %v9654, %v9652
    %v10157 = vpack.c.b16 %v9655, %v9653
    %v10158 = vpack.c.b16 %v9658, %v9656
    %v10159 = vpack.c.b16 %v9659, %v9657
    %v10160 = vpack.c.b16 %v9662, %v9660
    %v10161 = vpack.c.b16 %v9663, %v9661
    %v10162 = vpack.c.b16 %v9666, %v9664
    %v10163 = vpack.c.b16 %v9667, %v9665
    %v10164 = vpack.c.b16 %v9670, %v9668
    %v10165 = vpack.c.b16 %v9671, %v9669
    %v10166 = vpack.c.b16 %v9674, %v9672
    %v10167 = vpack.c.b16 %v9675, %v9673
    %v10168 = vpack.c.b16 %v9678, %v9676
    %v10169 = vpack.c.b16 %v9679, %v9677
    %v10170 = vpack.c.b16 %v9682, %v9680
    %v10171 = vpack.c.b16 %v9683, %v9681
    %v10172 = vpack.c.b16 %v9686, %v9684
    %v10173 = vpack.c.b16 %v9687, %v9685
    %v10174 = vpack.c.b16 %v9690, %v9688
    %v10175 = vpack.c.b16 %v9691, %v9689
    %v10176 = vpack.c.b16 %v9694, %v9692
    %v10177 = vpack.c.b16 %v9695, %v9693
    %v10178 = vpack.c.b16 %v9698, %v9696
    %v10179 = vpack.c.b16 %v9699, %v9697
    %v10180 = vpack.c.b16 %v9702, %v9700
    %v10181 = vpack.c.b16 %v9703, %v9701
    %v10182 = vpack.c.b16 %v9706, %v9704
    %v10183 = vpack.c.b16 %v9707, %v9705
    %v10184 = vpack.c.b16 %v9710, %v9708
    %v10185 = vpack.c.b16 %v9711, %v9709
    %v10186 = vpack.c.b16 %v9714, %v9712
    %v10187 = vpack.c.b16 %v9715, %v9713
    %v10188 = vpack.c.b16 %v9718, %v9716
    %v10189 = vpack.c.b16 %v9719, %v9717
    %v10190 = vpack.c.b16 %v9722, %v9720
    %v10191 = vpack.c.b16 %v9723, %v9721
    %v10192 = vpack.c.b16 %v9726, %v9724
    %v10193 = vpack.c.b16 %v9727, %v9725
    %v10194 = vpack.c.b16 %v9730, %v9728
    %v10195 = vpack.c.b16 %v9731, %v9729
    %v10196 = vpack.c.b16 %v9734, %v9732
    %v10197 = vpack.c.b16 %v9735, %v9733
    %v10198 = vpack.c.b16 %v9738, %v9736
    %v10199 = vpack.c.b16 %v9739, %v9737
    %v10200 = vpack.c.b16 %v9742, %v9740
    %v10201 = vpack.c.b16 %v9743, %v9741
    %v10202 = vpack.c.b16 %v9746, %v9744
    %v10203 = vpack.c.b16 %v9747, %v9745
    %v10204 = vpack.c.b16 %v9750, %v9748
    %v10205 = vpack.c.b16 %v9751, %v9749
    %v10206 = vpack.c.b16 %v9754, %v9752
    %v10207 = vpack.c.b16 %v9755, %v9753
    %v10208 = vpack.c.b16 %v9758, %v9756
    %v10209 = vpack.c.b16 %v9759, %v9757
    %v10210 = vpack.c.b16 %v9762, %v9760
    %v10211 = vpack.c.b16 %v9763, %v9761
    %v10212 = vpack.c.b16 %v9766, %v9764
    %v10213 = vpack.c.b16 %v9767, %v9765
    %v10214 = vpack.c.b16 %v9770, %v9768
    %v10215 = vpack.c.b16 %v9771, %v9769
    %v10216 = vpack.c.b16 %v9774, %v9772
    %v10217 = vpack.c.b16 %v9775, %v9773
    %v10218 = vpack.c.b16 %v9778, %v9776
    %v10219 = vpack.c.b16 %v9779, %v9777
    %v10220 = vpack.c.b16 %v9782, %v9780
    %v10221 = vpack.c.b16 %v9783, %v9781
    %v10222 = vpack.c.b16 %v9786, %v9784
    %v10223 = vpack.c.b16 %v9787, %v9785
    %v10224 = vpack.c.b16 %v9790, %v9788
    %v10225 = vpack.c.b16 %v9791, %v9789
    %v10226 = vpack.c.b16 %v9794, %v9792
    %v10227 = vpack.c.b16 %v9795, %v9793
    %v10228 = vpack.c.b16 %v9798, %v9796
    %v10229 = vpack.c.b16 %v9799, %v9797
    %v10230 = vpack.c.b16 %v9802, %v9800
    %v10231 = vpack.c.b16 %v9803, %v9801
    %v10232 = vpack.c.b16 %v9806, %v9804
    %v10233 = vpack.c.b16 %v9807, %v9805
    %v10234 = vpack.c.b16 %v9810, %v9808
    %v10235 = vpack.c.b16 %v9811, %v9809
    %v10236 = vpack.c.b16 %v9814, %v9812
    %v10237 = vpack.c.b16 %v9815, %v9813
    %v10238 = vpack.c.b16 %v9818, %v9816
    %v10239 = vpack.c.b16 %v9819, %v9817
    %v10240 = vpack.c.b16 %v9822, %v9820
    %v10241 = vpack.c.b16 %v9823, %v9821
    %v10242 = vpack.c.b16 %v9826, %v9824
    %v10243 = vpack.c.b16 %v9827, %v9825
    %v10244 = vpack.c.b16 %v9830, %v9828
    %v10245 = vpack.c.b16 %v9831, %v9829
    %v10246 = vpack.c.b16 %v9834, %v9832
    %v10247 = vpack.c.b16 %v9835, %v9833
    %v10248 = vpack.c.b16 %v9838, %v9836
    %v10249 = vpack.c.b16 %v9839, %v9837
    %v10250 = vpack.c.b16 %v9842, %v9840
    %v10251 = vpack.c.b16 %v9843, %v9841
    %v10252 = vpack.c.b16 %v9846, %v9844
    %v10253 = vpack.c.b16 %v9847, %v9845
    %v10254 = vpack.c.b16 %v9850, %v9848
    %v10255 = vpack.c.b16 %v9851, %v9849
    %v10256 = vpack.c.b16 %v9854, %v9852
    %v10257 = vpack.c.b16 %v9855, %v9853
    %v10258 = vpack.c.b16 %v9858, %v9856
    %v10259 = vpack.c.b16 %v9859, %v9857
    %v10260 = vpack.c.b16 %v9862, %v9860
    %v10261 = vpack.c.b16 %v9863, %v9861
    %v10262 = vpack.c.b16 %v9866, %v9864
    %v10263 = vpack.c.b16 %v9867, %v9865
    %v10264 = vpack.c.b16 %v9870, %v9868
    %v10265 = vpack.c.b16 %v9871, %v9869
    %v10266 = vpack.c.b16 %v9874, %v9872
    %v10267 = vpack.c.b16 %v9875, %v9873
    %v10268 = vpack.c.b16 %v9878, %v9876
    %v10269 = vpack.c.b16 %v9879, %v9877
    %v10270 = vpack.c.b16 %v9882, %v9880
    %v10271 = vpack.c.b16 %v9883, %v9881
    %v10272 = vpack.c.b16 %v9886, %v9884
    %v10273 = vpack.c.b16 %v9887, %v9885
    %v10274 = vpack.c.b16 %v9890, %v9888
    %v10275 = vpack.c.b16 %v9891, %v9889
    %v10276 = vpack.c.b16 %v9894, %v9892
    %v10277 = vpack.c.b16 %v9895, %v9893
    %v10278 = vpack.c.b16 %v9898, %v9896
    %v10279 = vpack.c.b16 %v9899, %v9897
    %v10280 = vpack.c.b16 %v9902, %v9900
    %v10281 = vpack.c.b16 %v9903, %v9901
    %v10282 = vpack.c.b16 %v9906, %v9904
    %v10283 = vpack.c.b16 %v9907, %v9905
    %v10284 = vpack.c.b16 %v9910, %v9908
    %v10285 = vpack.c.b16 %v9911, %v9909
    %v10286 = vpack.c.b16 %v9914, %v9912
    %v10287 = vpack.c.b16 %v9915, %v9913
    %v10288 = vpack.c.b16 %v9918, %v9916
    %v10289 = vpack.c.b16 %v9919, %v9917
    %v10290 = vpack.c.b16 %v9922, %v9920
    %v10291 = vpack.c.b16 %v9923, %v9921
    %v10292 = vpack.c.b16 %v9926, %v9924
    %v10293 = vpack.c.b16 %v9927, %v9925
    %v10294 = vpack.c.b16 %v9930, %v9928
    %v10295 = vpack.c.b16 %v9931, %v9929
    %v10296 = vpack.c.b16 %v9934, %v9932
    %v10297 = vpack.c.b16 %v9935, %v9933
    %v10298 = vpack.c.b16 %v9938, %v9936
    %v10299 = vpack.c.b16 %v9939, %v9937
    %v10300 = vpack.c.b16 %v9942, %v9940
    %v10301 = vpack.c.b16 %v9943, %v9941
    %v10302 = vpack.c.b16 %v9946, %v9944
    %v10303 = vpack.c.b16 %v9947, %v9945
    %v10304 = vpack.c.b16 %v9950, %v9948
    %v10305 = vpack.c.b16 %v9951, %v9949
    %v10306 = vpack.c.b16 %v9954, %v9952
    %v10307 = vpack.c.b16 %v9955, %v9953
    %v10308 = vpack.c.b16 %v9958, %v9956
    %v10309 = vpack.c.b16 %v9959, %v9957
    %v10310 = vpack.c.b16 %v9962, %v9960
    %v10311 = vpack.c.b16 %v9963, %v9961
    %v10312 = vpack.c.b16 %v9966, %v9964
    %v10313 = vpack.c.b16 %v9967, %v9965
    %v10314 = vpack.c.b16 %v9970, %v9968
    %v10315 = vpack.c.b16 %v9971, %v9969
    %v10316 = vpack.c.b16 %v9974, %v9972
    %v10317 = vpack.c.b16 %v9975, %v9973
    %v10318 = vpack.c.b16 %v9978, %v9976
    %v10319 = vpack.c.b16 %v9979, %v9977
    %v10320 = vpack.c.b16 %v9982, %v9980
    %v10321 = vpack.c.b16 %v9983, %v9981
    %v10322 = vpack.c.b16 %v9986, %v9984
    %v10323 = vpack.c.b16 %v9987, %v9985
    %v10324 = vpack.c.b16 %v9990, %v9988
    %v10325 = vpack.c.b16 %v9991, %v9989
    %v10326 = vpack.c.b16 %v9994, %v9992
    %v10327 = vpack.c.b16 %v9995, %v9993
    %v10328 = vpack.c.b16 %v9998, %v9996
    %v10329 = vpack.c.b16 %v9999, %v9997
    %v10330 = vpack.c.b16 %v10002, %v10000
    %v10331 = vpack.c.b16 %v10003, %v10001
    %v10332 = vpack.c.b16 %v10006, %v10004
    %v10333 = vpack.c.b16 %v10007, %v10005
    %v10334 = vpack.c.b16 %v10010, %v10008
    %v10335 = vpack.c.b16 %v10011, %v10009
    %v10336 = vpack.c.b16 %v10014, %v10012
    %v10337 = vpack.c.b16 %v10015, %v10013
    %v10338 = vpack.c.b16 %v10018, %v10016
    %v10339 = vpack.c.b16 %v10019, %v10017
    %v10340 = vpack.c.b16 %v10022, %v10020
    %v10341 = vpack.c.b16 %v10023, %v10021
    %v10342 = vpack.c.b16 %v10026, %v10024
    %v10343 = vpack.c.b16 %v10027, %v10025
    %v10344 = vpack.c.b16 %v10030, %v10028
    %v10345 = vpack.c.b16 %v10031, %v10029
    %v10346 = vpack.c.b16 %v10034, %v10032
    %v10347 = vpack.c.b16 %v10035, %v10033
    %v10348 = vpack.c.b16 %v10038, %v10036
    %v10349 = vpack.c.b16 %v10039, %v10037
    %v10350 = vpack.c.b16 %v10042, %v10040
    %v10351 = vpack.c.b16 %v10043, %v10041
    %v10352 = vpack.c.b16 %v10046, %v10044
    %v10353 = vpack.c.b16 %v10047, %v10045
    %v10354 = vpack.c.b16 %v10050, %v10048
    %v10355 = vpack.c.b16 %v10051, %v10049
    %v10356 = vpack.c.b16 %v10054, %v10052
    %v10357 = vpack.c.b16 %v10055, %v10053
    %v10358 = vpack.c.b16 %v10058, %v10056
    %v10359 = vpack.c.b16 %v10059, %v10057
    %v10360 = vpack.c.b16 %v10062, %v10060
    %v10361 = vpack.c.b16 %v10063, %v10061
    %v10362 = vpack.c.b16 %v10066, %v10064
    %v10363 = vpack.c.b16 %v10067, %v10065
    %v10364 = vpack.c.b16 %v10070, %v10068
    %v10365 = vpack.c.b16 %v10071, %v10069
    %v10366 = vpack.c.b16 %v10074, %v10072
    %v10367 = vpack.c.b16 %v10075, %v10073
    %v10368 = vpack.c.b16 %v10078, %v10076
    %v10369 = vpack.c.b16 %v10079, %v10077
    %v10370 = vpack.c.b16 %v10082, %v10080
    %v10371 = vpack.c.b16 %v10083, %v10081
    %10660 = vmatprep.subr.bf16.mxu0 %v10085
    %10661 = vmatpush1.bf16.msra.mxu0 %v10084
    %10662 = vmatprep.subr.bf16.mxu0 %v10087
    %10663 = vmatpush1.bf16.msra.mxu0 %v10086
    %10664 = vmatprep.subr.bf16.mxu0 %v10089
    %10665 = vmatpush1.bf16.msra.mxu0 %v10088
    %10666 = vmatprep.subr.bf16.mxu0 %v10091
    %10667 = vmatpush1.bf16.msra.mxu0 %v10090
    %10668 = vmatprep.subr.bf16.mxu0 %v10093
    %10669 = vmatpush1.bf16.msra.mxu0 %v10092
    %10670 = vmatprep.subr.bf16.mxu0 %v10095
    %10671 = vmatpush1.bf16.msra.mxu0 %v10094
    %10672 = vmatprep.subr.bf16.mxu0 %v10097
    %10673 = vmatpush1.bf16.msra.mxu0 %v10096
    %10674 = vmatprep.subr.bf16.mxu0 %v10099
    %10675 = vmatpush1.bf16.msra.mxu0 %v10098
    %10676 = vmatprep.subr.bf16.mxu0 %v10101
    %10677 = vmatpush1.bf16.msra.mxu0 %v10100
    %10678 = vmatprep.subr.bf16.mxu0 %v10103
    %10679 = vmatpush1.bf16.msra.mxu0 %v10102
    %10680 = vmatprep.subr.bf16.mxu0 %v10105
    %10681 = vmatpush1.bf16.msra.mxu0 %v10104
    %10682 = vmatprep.subr.bf16.mxu0 %v10107
    %10683 = vmatpush1.bf16.msra.mxu0 %v10106
    %10684 = vmatprep.subr.bf16.mxu0 %v10109
    %10685 = vmatpush1.bf16.msra.mxu0 %v10108
    %10686 = vmatprep.subr.bf16.mxu0 %v10111
    %10687 = vmatpush1.bf16.msra.mxu0 %v10110
    %10688 = vmatprep.subr.bf16.mxu0 %v10113
    %10689 = vmatpush1.bf16.msra.mxu0 %v10112
    %10690 = vmatprep.subr.bf16.mxu0 %v10115
    %10691 = vmatpush1.bf16.msra.mxu0 %v10114
    %10692 = vmatprep.mubr.bf16.mxu0 %v9185
    %10693 = vmatmul.mubr.bf16.gmra.mrb[0].mxu0 %v9184
    %v10694 = vpop.f32.mrb[0].mxu0
    %v10695 = vadd.f32 0.0, %v10694
    %v10696 = vpop.f32.mrb[0].mxu0
    %v10697 = vadd.f32 0.0, %v10696
    %v10698 = vpop.f32.mrb[0].mxu0
    %v10699 = vadd.f32 0.0, %v10698
    %v10700 = vpop.f32.mrb[0].mxu0
    %v10701 = vadd.f32 0.0, %v10700
    %10702 = vmatprep.mubr.bf16.mxu0 %v9203
    %10703 = vmatmul.mubr.bf16.gmra.mrb[0].mxu0 %v9202
    %v10704 = vpop.f32.mrb[0].mxu0
    %v10705 = vadd.f32 0.0, %v10704
    %v10706 = vpop.f32.mrb[0].mxu0
    %v10707 = vadd.f32 0.0, %v10706
    %v10708 = vpop.f32.mrb[0].mxu0
    %v10709 = vadd.f32 0.0, %v10708
    %v10710 = vpop.f32.mrb[0].mxu0
    %v10711 = vadd.f32 0.0, %v10710
    %10712 = vdwg.mxu0
    %10713 = vmatprep.subr.bf16.mxu0 %v10117
    %10714 = vmatpush1.bf16.msra.mxu0 %v10116
    %10715 = vmatprep.subr.bf16.mxu0 %v10119
    %10716 = vmatpush1.bf16.msra.mxu0 %v10118
    %10717 = vmatprep.subr.bf16.mxu0 %v10121
    %10718 = vmatpush1.bf16.msra.mxu0 %v10120
    %10719 = vmatprep.subr.bf16.mxu0 %v10123
    %10720 = vmatpush1.bf16.msra.mxu0 %v10122
    %10721 = vmatprep.subr.bf16.mxu0 %v10125
    %10722 = vmatpush1.bf16.msra.mxu0 %v10124
    %10723 = vmatprep.subr.bf16.mxu0 %v10127
    %10724 = vmatpush1.bf16.msra.mxu0 %v10126
    %10725 = vmatprep.subr.bf16.mxu0 %v10129
    %10726 = vmatpush1.bf16.msra.mxu0 %v10128
    %10727 = vmatprep.subr.bf16.mxu0 %v10131
    %10728 = vmatpush1.bf16.msra.mxu0 %v10130
    %10729 = vmatprep.subr.bf16.mxu0 %v10133
    %10730 = vmatpush1.bf16.msra.mxu0 %v10132
    %10731 = vmatprep.subr.bf16.mxu0 %v10135
    %10732 = vmatpush1.bf16.msra.mxu0 %v10134
    %10733 = vmatprep.subr.bf16.mxu0 %v10137
    %10734 = vmatpush1.bf16.msra.mxu0 %v10136
    %10735 = vmatprep.subr.bf16.mxu0 %v10139
    %10736 = vmatpush1.bf16.msra.mxu0 %v10138
    %10737 = vmatprep.subr.bf16.mxu0 %v10141
    %10738 = vmatpush1.bf16.msra.mxu0 %v10140
    %10739 = vmatprep.subr.bf16.mxu0 %v10143
    %10740 = vmatpush1.bf16.msra.mxu0 %v10142
    %10741 = vmatprep.subr.bf16.mxu0 %v10145
    %10742 = vmatpush1.bf16.msra.mxu0 %v10144
    %10743 = vmatprep.subr.bf16.mxu0 %v10147
    %10744 = vmatpush1.bf16.msra.mxu0 %v10146
    %10745 = vmatprep.mubr.bf16.mxu0 %v9187
    %10746 = vmatmul.mubr.bf16.gmra.mrb[0].mxu0 %v9186
    %v10747 = vpop.f32.mrb[0].mxu0
    %v10748 = vadd.f32 %v10695, %v10747
    %v10749 = vpop.f32.mrb[0].mxu0
    %v10750 = vadd.f32 %v10697, %v10749
    %v10751 = vpop.f32.mrb[0].mxu0
    %v10752 = vadd.f32 %v10699, %v10751
    %v10753 = vpop.f32.mrb[0].mxu0
    %v10754 = vadd.f32 %v10701, %v10753
    %10755 = vmatprep.mubr.bf16.mxu0 %v9205
    %10756 = vmatmul.mubr.bf16.gmra.mrb[0].mxu0 %v9204
    %v10757 = vpop.f32.mrb[0].mxu0
    %v10758 = vadd.f32 %v10705, %v10757
    %v10759 = vpop.f32.mrb[0].mxu0
    %v10760 = vadd.f32 %v10707, %v10759
    %v10761 = vpop.f32.mrb[0].mxu0
    %v10762 = vadd.f32 %v10709, %v10761
    %v10763 = vpop.f32.mrb[0].mxu0
    %v10764 = vadd.f32 %v10711, %v10763
    %10765 = vdwg.mxu0
    %10766 = vmatprep.subr.bf16.mxu0 %v10149
    %10767 = vmatpush1.bf16.msra.mxu0 %v10148
    %10768 = vmatprep.subr.bf16.mxu0 %v10151
    %10769 = vmatpush1.bf16.msra.mxu0 %v10150
    %10770 = vmatprep.subr.bf16.mxu0 %v10153
    %10771 = vmatpush1.bf16.msra.mxu0 %v10152
    %10772 = vmatprep.subr.bf16.mxu0 %v10155
    %10773 = vmatpush1.bf16.msra.mxu0 %v10154
    %10774 = vmatprep.subr.bf16.mxu0 %v10157
    %10775 = vmatpush1.bf16.msra.mxu0 %v10156
    %10776 = vmatprep.subr.bf16.mxu0 %v10159
    %10777 = vmatpush1.bf16.msra.mxu0 %v10158
    %10778 = vmatprep.subr.bf16.mxu0 %v10161
    %10779 = vmatpush1.bf16.msra.mxu0 %v10160
    %10780 = vmatprep.subr.bf16.mxu0 %v10163
    %10781 = vmatpush1.bf16.msra.mxu0 %v10162
    %10782 = vmatprep.subr.bf16.mxu0 %v10165
    %10783 = vmatpush1.bf16.msra.mxu0 %v10164
    %10784 = vmatprep.subr.bf16.mxu0 %v10167
    %10785 = vmatpush1.bf16.msra.mxu0 %v10166
    %10786 = vmatprep.subr.bf16.mxu0 %v10169
    %10787 = vmatpush1.bf16.msra.mxu0 %v10168
    %10788 = vmatprep.subr.bf16.mxu0 %v10171
    %10789 = vmatpush1.bf16.msra.mxu0 %v10170
    %10790 = vmatprep.subr.bf16.mxu0 %v10173
    %10791 = vmatpush1.bf16.msra.mxu0 %v10172
    %10792 = vmatprep.subr.bf16.mxu0 %v10175
    %10793 = vmatpush1.bf16.msra.mxu0 %v10174
    %10794 = vmatprep.subr.bf16.mxu0 %v10177
    %10795 = vmatpush1.bf16.msra.mxu0 %v10176
    %10796 = vmatprep.subr.bf16.mxu0 %v10179
    %10797 = vmatpush1.bf16.msra.mxu0 %v10178
    %10798 = vmatprep.mubr.bf16.mxu0 %v9189
    %10799 = vmatmul.mubr.bf16.gmra.mrb[0].mxu0 %v9188
    %v10800 = vpop.f32.mrb[0].mxu0
    %v10801 = vadd.f32 %v10748, %v10800
    %v10802 = vpop.f32.mrb[0].mxu0
    %v10803 = vadd.f32 %v10750, %v10802
    %v10804 = vpop.f32.mrb[0].mxu0
    %v10805 = vadd.f32 %v10752, %v10804
    %v10806 = vpop.f32.mrb[0].mxu0
    %v10807 = vadd.f32 %v10754, %v10806
    %10808 = vmatprep.mubr.bf16.mxu0 %v9207
    %10809 = vmatmul.mubr.bf16.gmra.mrb[0].mxu0 %v9206
    %v10810 = vpop.f32.mrb[0].mxu0
    %v10811 = vadd.f32 %v10758, %v10810
    %v10812 = vpop.f32.mrb[0].mxu0
    %v10813 = vadd.f32 %v10760, %v10812
    %v10814 = vpop.f32.mrb[0].mxu0
    %v10815 = vadd.f32 %v10762, %v10814
    %v10816 = vpop.f32.mrb[0].mxu0
    %v10817 = vadd.f32 %v10764, %v10816
    %10818 = vdwg.mxu0
    %10819 = vmatprep.subr.bf16.mxu0 %v10181
    %10820 = vmatpush1.bf16.msra.mxu0 %v10180
    %10821 = vmatprep.subr.bf16.mxu0 %v10183
    %10822 = vmatpush1.bf16.msra.mxu0 %v10182
    %10823 = vmatprep.subr.bf16.mxu0 %v10185
    %10824 = vmatpush1.bf16.msra.mxu0 %v10184
    %10825 = vmatprep.subr.bf16.mxu0 %v10187
    %10826 = vmatpush1.bf16.msra.mxu0 %v10186
    %10827 = vmatprep.subr.bf16.mxu0 %v10189
    %10828 = vmatpush1.bf16.msra.mxu0 %v10188
    %10829 = vmatprep.subr.bf16.mxu0 %v10191
    %10830 = vmatpush1.bf16.msra.mxu0 %v10190
    %10831 = vmatprep.subr.bf16.mxu0 %v10193
    %10832 = vmatpush1.bf16.msra.mxu0 %v10192
    %10833 = vmatprep.subr.bf16.mxu0 %v10195
    %10834 = vmatpush1.bf16.msra.mxu0 %v10194
    %10835 = vmatprep.subr.bf16.mxu0 %v10197
    %10836 = vmatpush1.bf16.msra.mxu0 %v10196
    %10837 = vmatprep.subr.bf16.mxu0 %v10199
    %10838 = vmatpush1.bf16.msra.mxu0 %v10198
    %10839 = vmatprep.subr.bf16.mxu0 %v10201
    %10840 = vmatpush1.bf16.msra.mxu0 %v10200
    %10841 = vmatprep.subr.bf16.mxu0 %v10203
    %10842 = vmatpush1.bf16.msra.mxu0 %v10202
    %10843 = vmatprep.subr.bf16.mxu0 %v10205
    %10844 = vmatpush1.bf16.msra.mxu0 %v10204
    %10845 = vmatprep.subr.bf16.mxu0 %v10207
    %10846 = vmatpush1.bf16.msra.mxu0 %v10206
    %10847 = vmatprep.subr.bf16.mxu0 %v10209
    %10848 = vmatpush1.bf16.msra.mxu0 %v10208
    %10849 = vmatprep.subr.bf16.mxu0 %v10211
    %10850 = vmatpush1.bf16.msra.mxu0 %v10210
    %10851 = vmatprep.mubr.bf16.mxu0 %v9191
    %10852 = vmatmul.mubr.bf16.gmra.mrb[0].mxu0 %v9190
    %v10853 = vpop.f32.mrb[0].mxu0
    %v10854 = vadd.f32 %v10801, %v10853
    %v10855 = vpop.f32.mrb[0].mxu0
    %v10856 = vadd.f32 %v10803, %v10855
    %v10857 = vpop.f32.mrb[0].mxu0
    %v10858 = vadd.f32 %v10805, %v10857
    %v10859 = vpop.f32.mrb[0].mxu0
    %v10860 = vadd.f32 %v10807, %v10859
    %10861 = vmatprep.mubr.bf16.mxu0 %v9209
    %10862 = vmatmul.mubr.bf16.gmra.mrb[0].mxu0 %v9208
    %v10863 = vpop.f32.mrb[0].mxu0
    %v10864 = vadd.f32 %v10811, %v10863
    %v10865 = vpop.f32.mrb[0].mxu0
    %v10866 = vadd.f32 %v10813, %v10865
    %v10867 = vpop.f32.mrb[0].mxu0
    %v10868 = vadd.f32 %v10815, %v10867
    %v10869 = vpop.f32.mrb[0].mxu0
    %v10870 = vadd.f32 %v10817, %v10869
    %10871 = vdwg.mxu0
    %10872 = vmatprep.subr.bf16.mxu0 %v10213
    %10873 = vmatpush1.bf16.msra.mxu0 %v10212
    %10874 = vmatprep.subr.bf16.mxu0 %v10215
    %10875 = vmatpush1.bf16.msra.mxu0 %v10214
    %10876 = vmatprep.subr.bf16.mxu0 %v10217
    %10877 = vmatpush1.bf16.msra.mxu0 %v10216
    %10878 = vmatprep.subr.bf16.mxu0 %v10219
    %10879 = vmatpush1.bf16.msra.mxu0 %v10218
    %10880 = vmatprep.subr.bf16.mxu0 %v10221
    %10881 = vmatpush1.bf16.msra.mxu0 %v10220
    %10882 = vmatprep.subr.bf16.mxu0 %v10223
    %10883 = vmatpush1.bf16.msra.mxu0 %v10222
    %10884 = vmatprep.subr.bf16.mxu0 %v10225
    %10885 = vmatpush1.bf16.msra.mxu0 %v10224
    %10886 = vmatprep.subr.bf16.mxu0 %v10227
    %10887 = vmatpush1.bf16.msra.mxu0 %v10226
    %10888 = vmatprep.subr.bf16.mxu0 %v10229
    %10889 = vmatpush1.bf16.msra.mxu0 %v10228
    %10890 = vmatprep.subr.bf16.mxu0 %v10231
    %10891 = vmatpush1.bf16.msra.mxu0 %v10230
    %10892 = vmatprep.subr.bf16.mxu0 %v10233
    %10893 = vmatpush1.bf16.msra.mxu0 %v10232
    %10894 = vmatprep.subr.bf16.mxu0 %v10235
    %10895 = vmatpush1.bf16.msra.mxu0 %v10234
    %10896 = vmatprep.subr.bf16.mxu0 %v10237
    %10897 = vmatpush1.bf16.msra.mxu0 %v10236
    %10898 = vmatprep.subr.bf16.mxu0 %v10239
    %10899 = vmatpush1.bf16.msra.mxu0 %v10238
    %10900 = vmatprep.subr.bf16.mxu0 %v10241
    %10901 = vmatpush1.bf16.msra.mxu0 %v10240
    %10902 = vmatprep.subr.bf16.mxu0 %v10243
    %10903 = vmatpush1.bf16.msra.mxu0 %v10242
    %10904 = vmatprep.mubr.bf16.mxu0 %v9193
    %10905 = vmatmul.mubr.bf16.gmra.mrb[0].mxu0 %v9192
    %v10906 = vpop.f32.mrb[0].mxu0
    %v10907 = vadd.f32 %v10854, %v10906
    %v10908 = vpop.f32.mrb[0].mxu0
    %v10909 = vadd.f32 %v10856, %v10908
    %v10910 = vpop.f32.mrb[0].mxu0
    %v10911 = vadd.f32 %v10858, %v10910
    %v10912 = vpop.f32.mrb[0].mxu0
    %v10913 = vadd.f32 %v10860, %v10912
    %10914 = vmatprep.mubr.bf16.mxu0 %v9211
    %10915 = vmatmul.mubr.bf16.gmra.mrb[0].mxu0 %v9210
    %v10916 = vpop.f32.mrb[0].mxu0
    %v10917 = vadd.f32 %v10864, %v10916
    %v10918 = vpop.f32.mrb[0].mxu0
    %v10919 = vadd.f32 %v10866, %v10918
    %v10920 = vpop.f32.mrb[0].mxu0
    %v10921 = vadd.f32 %v10868, %v10920
    %v10922 = vpop.f32.mrb[0].mxu0
    %v10923 = vadd.f32 %v10870, %v10922
    %10924 = vdwg.mxu0
    %10925 = vmatprep.subr.bf16.mxu0 %v10245
    %10926 = vmatpush1.bf16.msra.mxu0 %v10244
    %10927 = vmatprep.subr.bf16.mxu0 %v10247
    %10928 = vmatpush1.bf16.msra.mxu0 %v10246
    %10929 = vmatprep.subr.bf16.mxu0 %v10249
    %10930 = vmatpush1.bf16.msra.mxu0 %v10248
    %10931 = vmatprep.subr.bf16.mxu0 %v10251
    %10932 = vmatpush1.bf16.msra.mxu0 %v10250
    %10933 = vmatprep.subr.bf16.mxu0 %v10253
    %10934 = vmatpush1.bf16.msra.mxu0 %v10252
    %10935 = vmatprep.subr.bf16.mxu0 %v10255
    %10936 = vmatpush1.bf16.msra.mxu0 %v10254
    %10937 = vmatprep.subr.bf16.mxu0 %v10257
    %10938 = vmatpush1.bf16.msra.mxu0 %v10256
    %10939 = vmatprep.subr.bf16.mxu0 %v10259
    %10940 = vmatpush1.bf16.msra.mxu0 %v10258
    %10941 = vmatprep.subr.bf16.mxu0 %v10261
    %10942 = vmatpush1.bf16.msra.mxu0 %v10260
    %10943 = vmatprep.subr.bf16.mxu0 %v10263
    %10944 = vmatpush1.bf16.msra.mxu0 %v10262
    %10945 = vmatprep.subr.bf16.mxu0 %v10265
    %10946 = vmatpush1.bf16.msra.mxu0 %v10264
    %10947 = vmatprep.subr.bf16.mxu0 %v10267
    %10948 = vmatpush1.bf16.msra.mxu0 %v10266
    %10949 = vmatprep.subr.bf16.mxu0 %v10269
    %10950 = vmatpush1.bf16.msra.mxu0 %v10268
    %10951 = vmatprep.subr.bf16.mxu0 %v10271
    %10952 = vmatpush1.bf16.msra.mxu0 %v10270
    %10953 = vmatprep.subr.bf16.mxu0 %v10273
    %10954 = vmatpush1.bf16.msra.mxu0 %v10272
    %10955 = vmatprep.subr.bf16.mxu0 %v10275
    %10956 = vmatpush1.bf16.msra.mxu0 %v10274
    %10957 = vmatprep.mubr.bf16.mxu0 %v9195
    %10958 = vmatmul.mubr.bf16.gmra.mrb[0].mxu0 %v9194
    %v10959 = vpop.f32.mrb[0].mxu0
    %v10960 = vadd.f32 %v10907, %v10959
    %v10961 = vpop.f32.mrb[0].mxu0
    %v10962 = vadd.f32 %v10909, %v10961
    %v10963 = vpop.f32.mrb[0].mxu0
    %v10964 = vadd.f32 %v10911, %v10963
    %v10965 = vpop.f32.mrb[0].mxu0
    %v10966 = vadd.f32 %v10913, %v10965
    %10967 = vmatprep.mubr.bf16.mxu0 %v9213
    %10968 = vmatmul.mubr.bf16.gmra.mrb[0].mxu0 %v9212
    %v10969 = vpop.f32.mrb[0].mxu0
    %v10970 = vadd.f32 %v10917, %v10969
    %v10971 = vpop.f32.mrb[0].mxu0
    %v10972 = vadd.f32 %v10919, %v10971
    %v10973 = vpop.f32.mrb[0].mxu0
    %v10974 = vadd.f32 %v10921, %v10973
    %v10975 = vpop.f32.mrb[0].mxu0
    %v10976 = vadd.f32 %v10923, %v10975
    %10977 = vdwg.mxu0
    %10978 = vmatprep.subr.bf16.mxu0 %v10277
    %10979 = vmatpush1.bf16.msra.mxu0 %v10276
    %10980 = vmatprep.subr.bf16.mxu0 %v10279
    %10981 = vmatpush1.bf16.msra.mxu0 %v10278
    %10982 = vmatprep.subr.bf16.mxu0 %v10281
    %10983 = vmatpush1.bf16.msra.mxu0 %v10280
    %10984 = vmatprep.subr.bf16.mxu0 %v10283
    %10985 = vmatpush1.bf16.msra.mxu0 %v10282
    %10986 = vmatprep.subr.bf16.mxu0 %v10285
    %10987 = vmatpush1.bf16.msra.mxu0 %v10284
    %10988 = vmatprep.subr.bf16.mxu0 %v10287
    %10989 = vmatpush1.bf16.msra.mxu0 %v10286
    %10990 = vmatprep.subr.bf16.mxu0 %v10289
    %10991 = vmatpush1.bf16.msra.mxu0 %v10288
    %10992 = vmatprep.subr.bf16.mxu0 %v10291
    %10993 = vmatpush1.bf16.msra.mxu0 %v10290
    %10994 = vmatprep.subr.bf16.mxu0 %v10293
    %10995 = vmatpush1.bf16.msra.mxu0 %v10292
    %10996 = vmatprep.subr.bf16.mxu0 %v10295
    %10997 = vmatpush1.bf16.msra.mxu0 %v10294
    %10998 = vmatprep.subr.bf16.mxu0 %v10297
    %10999 = vmatpush1.bf16.msra.mxu0 %v10296
    %11000 = vmatprep.subr.bf16.mxu0 %v10299
    %11001 = vmatpush1.bf16.msra.mxu0 %v10298
    %11002 = vmatprep.subr.bf16.mxu0 %v10301
    %11003 = vmatpush1.bf16.msra.mxu0 %v10300
    %11004 = vmatprep.subr.bf16.mxu0 %v10303
    %11005 = vmatpush1.bf16.msra.mxu0 %v10302
    %11006 = vmatprep.subr.bf16.mxu0 %v10305
    %11007 = vmatpush1.bf16.msra.mxu0 %v10304
    %11008 = vmatprep.subr.bf16.mxu0 %v10307
    %11009 = vmatpush1.bf16.msra.mxu0 %v10306
    %11010 = vmatprep.mubr.bf16.mxu0 %v9197
    %11011 = vmatmul.mubr.bf16.gmra.mrb[0].mxu0 %v9196
    %v11012 = vpop.f32.mrb[0].mxu0
    %v11013 = vadd.f32 %v10960, %v11012
    %v11014 = vpop.f32.mrb[0].mxu0
    %v11015 = vadd.f32 %v10962, %v11014
    %v11016 = vpop.f32.mrb[0].mxu0
    %v11017 = vadd.f32 %v10964, %v11016
    %v11018 = vpop.f32.mrb[0].mxu0
    %v11019 = vadd.f32 %v10966, %v11018
    %11020 = vmatprep.mubr.bf16.mxu0 %v9215
    %11021 = vmatmul.mubr.bf16.gmra.mrb[0].mxu0 %v9214
    %v11022 = vpop.f32.mrb[0].mxu0
    %v11023 = vadd.f32 %v10970, %v11022
    %v11024 = vpop.f32.mrb[0].mxu0
    %v11025 = vadd.f32 %v10972, %v11024
    %v11026 = vpop.f32.mrb[0].mxu0
    %v11027 = vadd.f32 %v10974, %v11026
    %v11028 = vpop.f32.mrb[0].mxu0
    %v11029 = vadd.f32 %v10976, %v11028
    %11030 = vdwg.mxu0
    %11031 = vmatprep.subr.bf16.mxu0 %v10309
    %11032 = vmatpush1.bf16.msra.mxu0 %v10308
    %11033 = vmatprep.subr.bf16.mxu0 %v10311
    %11034 = vmatpush1.bf16.msra.mxu0 %v10310
    %11035 = vmatprep.subr.bf16.mxu0 %v10313
    %11036 = vmatpush1.bf16.msra.mxu0 %v10312
    %11037 = vmatprep.subr.bf16.mxu0 %v10315
    %11038 = vmatpush1.bf16.msra.mxu0 %v10314
    %11039 = vmatprep.subr.bf16.mxu0 %v10317
    %11040 = vmatpush1.bf16.msra.mxu0 %v10316
    %11041 = vmatprep.subr.bf16.mxu0 %v10319
    %11042 = vmatpush1.bf16.msra.mxu0 %v10318
    %11043 = vmatprep.subr.bf16.mxu0 %v10321
    %11044 = vmatpush1.bf16.msra.mxu0 %v10320
    %11045 = vmatprep.subr.bf16.mxu0 %v10323
    %11046 = vmatpush1.bf16.msra.mxu0 %v10322
    %11047 = vmatprep.subr.bf16.mxu0 %v10325
    %11048 = vmatpush1.bf16.msra.mxu0 %v10324
    %11049 = vmatprep.subr.bf16.mxu0 %v10327
    %11050 = vmatpush1.bf16.msra.mxu0 %v10326
    %11051 = vmatprep.subr.bf16.mxu0 %v10329
    %11052 = vmatpush1.bf16.msra.mxu0 %v10328
    %11053 = vmatprep.subr.bf16.mxu0 %v10331
    %11054 = vmatpush1.bf16.msra.mxu0 %v10330
    %11055 = vmatprep.subr.bf16.mxu0 %v10333
    %11056 = vmatpush1.bf16.msra.mxu0 %v10332
    %11057 = vmatprep.subr.bf16.mxu0 %v10335
    %11058 = vmatpush1.bf16.msra.mxu0 %v10334
    %11059 = vmatprep.subr.bf16.mxu0 %v10337
    %11060 = vmatpush1.bf16.msra.mxu0 %v10336
    %11061 = vmatprep.subr.bf16.mxu0 %v10339
    %11062 = vmatpush1.bf16.msra.mxu0 %v10338
    %11063 = vmatprep.mubr.bf16.mxu0 %v9199
    %11064 = vmatmul.mubr.bf16.gmra.mrb[0].mxu0 %v9198
    %v11065 = vpop.f32.mrb[0].mxu0
    %v11066 = vadd.f32 %v11013, %v11065
    %v11067 = vpop.f32.mrb[0].mxu0
    %v11068 = vadd.f32 %v11015, %v11067
    %v11069 = vpop.f32.mrb[0].mxu0
    %v11070 = vadd.f32 %v11017, %v11069
    %v11071 = vpop.f32.mrb[0].mxu0
    %v11072 = vadd.f32 %v11019, %v11071
    %11073 = vmatprep.mubr.bf16.mxu0 %v9217
    %11074 = vmatmul.mubr.bf16.gmra.mrb[0].mxu0 %v9216
    %v11075 = vpop.f32.mrb[0].mxu0
    %v11076 = vadd.f32 %v11023, %v11075
    %v11077 = vpop.f32.mrb[0].mxu0
    %v11078 = vadd.f32 %v11025, %v11077
    %v11079 = vpop.f32.mrb[0].mxu0
    %v11080 = vadd.f32 %v11027, %v11079
    %v11081 = vpop.f32.mrb[0].mxu0
    %v11082 = vadd.f32 %v11029, %v11081
    %11083 = vdwg.mxu0
    %11084 = vmatprep.subr.bf16.mxu0 %v10341
    %11085 = vmatpush1.bf16.msra.mxu0 %v10340
    %11086 = vmatprep.subr.bf16.mxu0 %v10343
    %11087 = vmatpush1.bf16.msra.mxu0 %v10342
    %11088 = vmatprep.subr.bf16.mxu0 %v10345
    %11089 = vmatpush1.bf16.msra.mxu0 %v10344
    %11090 = vmatprep.subr.bf16.mxu0 %v10347
    %11091 = vmatpush1.bf16.msra.mxu0 %v10346
    %11092 = vmatprep.subr.bf16.mxu0 %v10349
    %11093 = vmatpush1.bf16.msra.mxu0 %v10348
    %11094 = vmatprep.subr.bf16.mxu0 %v10351
    %11095 = vmatpush1.bf16.msra.mxu0 %v10350
    %11096 = vmatprep.subr.bf16.mxu0 %v10353
    %11097 = vmatpush1.bf16.msra.mxu0 %v10352
    %11098 = vmatprep.subr.bf16.mxu0 %v10355
    %11099 = vmatpush1.bf16.msra.mxu0 %v10354
    %11100 = vmatprep.subr.bf16.mxu0 %v10357
    %11101 = vmatpush1.bf16.msra.mxu0 %v10356
    %11102 = vmatprep.subr.bf16.mxu0 %v10359
    %11103 = vmatpush1.bf16.msra.mxu0 %v10358
    %11104 = vmatprep.subr.bf16.mxu0 %v10361
    %11105 = vmatpush1.bf16.msra.mxu0 %v10360
    %11106 = vmatprep.subr.bf16.mxu0 %v10363
    %11107 = vmatpush1.bf16.msra.mxu0 %v10362
    %11108 = vmatprep.subr.bf16.mxu0 %v10365
    %11109 = vmatpush1.bf16.msra.mxu0 %v10364
    %11110 = vmatprep.subr.bf16.mxu0 %v10367
    %11111 = vmatpush1.bf16.msra.mxu0 %v10366
    %11112 = vmatprep.subr.bf16.mxu0 %v10369
    %11113 = vmatpush1.bf16.msra.mxu0 %v10368
    %11114 = vmatprep.subr.bf16.mxu0 %v10371
    %11115 = vmatpush1.bf16.msra.mxu0 %v10370
    %11116 = vmatprep.mubr.bf16.mxu0 %v9201
    %11117 = vmatmul.mubr.bf16.gmra.mrb[0].mxu0 %v9200
    %v11118 = vpop.f32.mrb[0].mxu0
    %v11119 = vadd.f32 %v11066, %v11118
    %v11120 = vpop.f32.mrb[0].mxu0
    %v11121 = vadd.f32 %v11068, %v11120
    %v11122 = vpop.f32.mrb[0].mxu0
    %v11123 = vadd.f32 %v11070, %v11122
    %v11124 = vpop.f32.mrb[0].mxu0
    %v11125 = vadd.f32 %v11072, %v11124
    %11126 = vmatprep.mubr.bf16.mxu0 %v9219
    %11127 = vmatmul.mubr.bf16.gmra.mrb[0].mxu0 %v9218
    %v11128 = vpop.f32.mrb[0].mxu0
    %v11129 = vadd.f32 %v11076, %v11128
    %v11130 = vpop.f32.mrb[0].mxu0
    %v11131 = vadd.f32 %v11078, %v11130
    %v11132 = vpop.f32.mrb[0].mxu0
    %v11133 = vadd.f32 %v11080, %v11132
    %v11134 = vpop.f32.mrb[0].mxu0
    %v11135 = vadd.f32 %v11082, %v11134
    %11136 = vdwg.mxu0
    %v11137 = vmax.f32 %v11119, 0.0
    %v11138 = vmax.f32 %v11121, 0.0
    %v11139 = vmax.f32 %v11123, 0.0
    %v11140 = vmax.f32 %v11125, 0.0
    %v11141 = vmax.f32 %v11129, 0.0
    %v11142 = vmax.f32 %v11131, 0.0
    %v11143 = vmax.f32 %v11133, 0.0
    %v11144 = vmax.f32 %v11135, 0.0
    %v11145 = vpack.c.bf16 %v11139, %v11137
    %v11146 = vpack.c.bf16 %v11140, %v11138
    %v11147 = vpack.c.bf16 %v11143, %v11141
    %v11148 = vpack.c.bf16 %v11144, %v11142
    %s11149 = scalar_lea.vmem [#allocation15], 512
    %v11150 = vld [vmem:[%s11149] sm:$0xff]
    %v11151 = vld [vmem:[%s11149 + $0x8] sm:$0xff]
    %v11152 = vld [vmem:[%s11149 + $0x10] sm:$0xff]
    %v11153 = vld [vmem:[%s11149 + $0x18] sm:$0xff]
    %v11154 = vld [vmem:[%s11149 + $0x20] sm:$0xff]
    %v11155 = vld [vmem:[%s11149 + $0x28] sm:$0xff]
    %v11156 = vld [vmem:[%s11149 + $0x30] sm:$0xff]
    %v11157 = vld [vmem:[%s11149 + $0x38] sm:$0xff]
    %v11158 = vld [vmem:[%s11149 + $0x40] sm:$0xff]
    %v11159 = vld [vmem:[%s11149 + $0x48] sm:$0xff]
    %v11160 = vld [vmem:[%s11149 + $0x50] sm:$0xff]
    %v11161 = vld [vmem:[%s11149 + $0x58] sm:$0xff]
    %v11162 = vld [vmem:[%s11149 + $0x60] sm:$0xff]
    %v11163 = vld [vmem:[%s11149 + $0x68] sm:$0xff]
    %v11164 = vld [vmem:[%s11149 + $0x70] sm:$0xff]
    %v11165 = vld [vmem:[%s11149 + $0x78] sm:$0xff]
    %v11166 = vld [vmem:[%s11149 + $0x80] sm:$0xff]
    %v11167 = vld [vmem:[%s11149 + $0x88] sm:$0xff]
    %v11168 = vld [vmem:[%s11149 + $0x90] sm:$0xff]
    %v11169 = vld [vmem:[%s11149 + $0x98] sm:$0xff]
    %v11170 = vld [vmem:[%s11149 + $0xa0] sm:$0xff]
    %v11171 = vld [vmem:[%s11149 + $0xa8] sm:$0xff]
    %v11172 = vld [vmem:[%s11149 + $0xb0] sm:$0xff]
    %v11173 = vld [vmem:[%s11149 + $0xb8] sm:$0xff]
    %v11174 = vld [vmem:[%s11149 + $0xc0] sm:$0xff]
    %v11175 = vld [vmem:[%s11149 + $0xc8] sm:$0xff]
    %v11176 = vld [vmem:[%s11149 + $0xd0] sm:$0xff]
    %v11177 = vld [vmem:[%s11149 + $0xd8] sm:$0xff]
    %v11178 = vld [vmem:[%s11149 + $0xe0] sm:$0xff]
    %v11179 = vld [vmem:[%s11149 + $0xe8] sm:$0xff]
    %v11180 = vld [vmem:[%s11149 + $0xf0] sm:$0xff]
    %v11181 = vld [vmem:[%s11149 + $0xf8] sm:$0xff]
    %v11214 = vunpack.c.l.b16 %v11150
    %v11215 = vunpack.c.h.b16 %v11150
    %v11216 = vunpack.c.l.b16 %v11151
    %v11217 = vunpack.c.h.b16 %v11151
    %v11218 = vunpack.c.l.b16 %v11152
    %v11219 = vunpack.c.h.b16 %v11152
    %v11220 = vunpack.c.l.b16 %v11153
    %v11221 = vunpack.c.h.b16 %v11153
    %v11222 = vunpack.c.l.b16 %v11154
    %v11223 = vunpack.c.h.b16 %v11154
    %v11224 = vunpack.c.l.b16 %v11155
    %v11225 = vunpack.c.h.b16 %v11155
    %v11226 = vunpack.c.l.b16 %v11156
    %v11227 = vunpack.c.h.b16 %v11156
    %v11228 = vunpack.c.l.b16 %v11157
    %v11229 = vunpack.c.h.b16 %v11157
    %v11230 = vunpack.c.l.b16 %v11158
    %v11231 = vunpack.c.h.b16 %v11158
    %v11232 = vunpack.c.l.b16 %v11159
    %v11233 = vunpack.c.h.b16 %v11159
    %v11234 = vunpack.c.l.b16 %v11160
    %v11235 = vunpack.c.h.b16 %v11160
    %v11236 = vunpack.c.l.b16 %v11161
    %v11237 = vunpack.c.h.b16 %v11161
    %v11238 = vunpack.c.l.b16 %v11162
    %v11239 = vunpack.c.h.b16 %v11162
    %v11240 = vunpack.c.l.b16 %v11163
    %v11241 = vunpack.c.h.b16 %v11163
    %v11242 = vunpack.c.l.b16 %v11164
    %v11243 = vunpack.c.h.b16 %v11164
    %v11244 = vunpack.c.l.b16 %v11165
    %v11245 = vunpack.c.h.b16 %v11165
    %v11246 = vunpack.c.l.b16 %v11166
    %v11247 = vunpack.c.h.b16 %v11166
    %v11248 = vunpack.c.l.b16 %v11167
    %v11249 = vunpack.c.h.b16 %v11167
    %v11250 = vunpack.c.l.b16 %v11168
    %v11251 = vunpack.c.h.b16 %v11168
    %v11252 = vunpack.c.l.b16 %v11169
    %v11253 = vunpack.c.h.b16 %v11169
    %v11254 = vunpack.c.l.b16 %v11170
    %v11255 = vunpack.c.h.b16 %v11170
    %v11256 = vunpack.c.l.b16 %v11171
    %v11257 = vunpack.c.h.b16 %v11171
    %v11258 = vunpack.c.l.b16 %v11172
    %v11259 = vunpack.c.h.b16 %v11172
    %v11260 = vunpack.c.l.b16 %v11173
    %v11261 = vunpack.c.h.b16 %v11173
    %v11262 = vunpack.c.l.b16 %v11174
    %v11263 = vunpack.c.h.b16 %v11174
    %v11264 = vunpack.c.l.b16 %v11175
    %v11265 = vunpack.c.h.b16 %v11175
    %v11266 = vunpack.c.l.b16 %v11176
    %v11267 = vunpack.c.h.b16 %v11176
    %v11268 = vunpack.c.l.b16 %v11177
    %v11269 = vunpack.c.h.b16 %v11177
    %v11270 = vunpack.c.l.b16 %v11178
    %v11271 = vunpack.c.h.b16 %v11178
    %v11272 = vunpack.c.l.b16 %v11179
    %v11273 = vunpack.c.h.b16 %v11179
    %v11274 = vunpack.c.l.b16 %v11180
    %v11275 = vunpack.c.h.b16 %v11180
    %v11276 = vunpack.c.l.b16 %v11181
    %v11277 = vunpack.c.h.b16 %v11181
    %v11278 = vpack.c.b16 %v11216, %v11214
    %v11279 = vpack.c.b16 %v11217, %v11215
    %v11280 = vpack.c.b16 %v11220, %v11218
    %v11281 = vpack.c.b16 %v11221, %v11219
    %v11282 = vpack.c.b16 %v11224, %v11222
    %v11283 = vpack.c.b16 %v11225, %v11223
    %v11284 = vpack.c.b16 %v11228, %v11226
    %v11285 = vpack.c.b16 %v11229, %v11227
    %v11286 = vpack.c.b16 %v11232, %v11230
    %v11287 = vpack.c.b16 %v11233, %v11231
    %v11288 = vpack.c.b16 %v11236, %v11234
    %v11289 = vpack.c.b16 %v11237, %v11235
    %v11290 = vpack.c.b16 %v11240, %v11238
    %v11291 = vpack.c.b16 %v11241, %v11239
    %v11292 = vpack.c.b16 %v11244, %v11242
    %v11293 = vpack.c.b16 %v11245, %v11243
    %v11294 = vpack.c.b16 %v11248, %v11246
    %v11295 = vpack.c.b16 %v11249, %v11247
    %v11296 = vpack.c.b16 %v11252, %v11250
    %v11297 = vpack.c.b16 %v11253, %v11251
    %v11298 = vpack.c.b16 %v11256, %v11254
    %v11299 = vpack.c.b16 %v11257, %v11255
    %v11300 = vpack.c.b16 %v11260, %v11258
    %v11301 = vpack.c.b16 %v11261, %v11259
    %v11302 = vpack.c.b16 %v11264, %v11262
    %v11303 = vpack.c.b16 %v11265, %v11263
    %v11304 = vpack.c.b16 %v11268, %v11266
    %v11305 = vpack.c.b16 %v11269, %v11267
    %v11306 = vpack.c.b16 %v11272, %v11270
    %v11307 = vpack.c.b16 %v11273, %v11271
    %v11308 = vpack.c.b16 %v11276, %v11274
    %v11309 = vpack.c.b16 %v11277, %v11275
    %11342 = vmatprep.subr.bf16.mxu0 %v11279
    %11343 = vmatpush1.bf16.msra.mxu0 %v11278
    %11344 = vmatprep.subr.bf16.mxu0 %v11281
    %11345 = vmatpush1.bf16.msra.mxu0 %v11280
    %11346 = vmatprep.subr.bf16.mxu0 %v11283
    %11347 = vmatpush1.bf16.msra.mxu0 %v11282
    %11348 = vmatprep.subr.bf16.mxu0 %v11285
    %11349 = vmatpush1.bf16.msra.mxu0 %v11284
    %11350 = vmatprep.subr.bf16.mxu0 %v11287
    %11351 = vmatpush1.bf16.msra.mxu0 %v11286
    %11352 = vmatprep.subr.bf16.mxu0 %v11289
    %11353 = vmatpush1.bf16.msra.mxu0 %v11288
    %11354 = vmatprep.subr.bf16.mxu0 %v11291
    %11355 = vmatpush1.bf16.msra.mxu0 %v11290
    %11356 = vmatprep.subr.bf16.mxu0 %v11293
    %11357 = vmatpush1.bf16.msra.mxu0 %v11292
    %11358 = vmatprep.subr.bf16.mxu0 %v11295
    %11359 = vmatpush1.bf16.msra.mxu0 %v11294
    %11360 = vmatprep.subr.bf16.mxu0 %v11297
    %11361 = vmatpush1.bf16.msra.mxu0 %v11296
    %11362 = vmatprep.subr.bf16.mxu0 %v11299
    %11363 = vmatpush1.bf16.msra.mxu0 %v11298
    %11364 = vmatprep.subr.bf16.mxu0 %v11301
    %11365 = vmatpush1.bf16.msra.mxu0 %v11300
    %11366 = vmatprep.subr.bf16.mxu0 %v11303
    %11367 = vmatpush1.bf16.msra.mxu0 %v11302
    %11368 = vmatprep.subr.bf16.mxu0 %v11305
    %11369 = vmatpush1.bf16.msra.mxu0 %v11304
    %11370 = vmatprep.subr.bf16.mxu0 %v11307
    %11371 = vmatpush1.bf16.msra.mxu0 %v11306
    %11372 = vmatprep.subr.bf16.mxu0 %v11309
    %11373 = vmatpush1.bf16.msra.mxu0 %v11308
    %11374 = vmatprep.mubr.bf16.mxu0 %v11146
    %11375 = vmatmul.mubr.bf16.gmra.mrb[0].mxu0 %v11145
    %v11376 = vpop.f32.mrb[0].mxu0
    %v11377 = vadd.f32 0.0, %v11376
    %v11378 = vpop.f32.mrb[0].mxu0
    %v11379 = vadd.f32 0.0, %v11378
    %v11380 = vpop.f32.mrb[0].mxu0
    %v11381 = vadd.f32 0.0, %v11380
    %v11382 = vpop.f32.mrb[0].mxu0
    %v11383 = vadd.f32 0.0, %v11382
    %11384 = vmatprep.mubr.bf16.mxu0 %v11148
    %11385 = vmatmul.mubr.bf16.gmra.mrb[0].mxu0 %v11147
    %v11386 = vpop.f32.mrb[0].mxu0
    %v11387 = vadd.f32 0.0, %v11386
    %v11388 = vpop.f32.mrb[0].mxu0
    %v11389 = vadd.f32 0.0, %v11388
    %v11390 = vpop.f32.mrb[0].mxu0
    %v11391 = vadd.f32 0.0, %v11390
    %v11392 = vpop.f32.mrb[0].mxu0
    %v11393 = vadd.f32 0.0, %v11392
    %11394 = vdwg.mxu0
    %v11395 = vadd.f32 %v8735, %v11377
    %v11396 = vadd.f32 %v8736, %v11379
    %v11397 = vadd.f32 %v8737, %v11381
    %v11398 = vadd.f32 %v8738, %v11383
    %v11399 = vadd.f32 %v8739, %v11387
    %v11400 = vadd.f32 %v8740, %v11389
    %v11401 = vadd.f32 %v8741, %v11391
    %v11402 = vadd.f32 %v8742, %v11393
    %v11403 = vmax.f32 %v11395, 0.0
    %v11404 = vmax.f32 %v11396, 0.0
    %v11405 = vmax.f32 %v11397, 0.0
    %v11406 = vmax.f32 %v11398, 0.0
    %v11407 = vmax.f32 %v11399, 0.0
    %v11408 = vmax.f32 %v11400, 0.0
    %v11409 = vmax.f32 %v11401, 0.0
    %v11410 = vmax.f32 %v11402, 0.0
    %11411 = vst [vmem:[%s10] sm:$0xff] %v11403
    %11412 = vst [vmem:[%s10 + $0x8] sm:$0xff] %v11404
    %11413 = vst [vmem:[%s10 + $0x10] sm:$0xff] %v11405
    %11414 = vst [vmem:[%s10 + $0x18] sm:$0xff] %v11406
    %11415 = vst [vmem:[%s10 + $0x20] sm:$0xff] %v11407
    %11416 = vst [vmem:[%s10 + $0x28] sm:$0xff] %v11408
    %11417 = vst [vmem:[%s10 + $0x30] sm:$0xff] %v11409
    %11418 = vst [vmem:[%s10 + $0x38] sm:$0xff] %v11410
    // Predicated region
    $region78: #{simpler_encoder.1} parent=1 // pred_check
      _
    $region79: #{simpler_encoder.1} parent=1 // pred_check_branch
      %11420 = sbr.rel (0) target = $region81
    $region80: #{simpler_encoder.1} parent=1 // pred_region
      _
    $region81: #{simpler_encoder.1} parent=1 // pred_fallthru
      _
    // Predicated region
    $region82: #{simpler_encoder.1} parent=1 // pred_check
      _
    $region83: #{simpler_encoder.1} parent=1 // pred_check_branch
      %11422 = sbr.rel (0) target = $region85
    $region84: #{simpler_encoder.1} parent=1 // pred_region
      _
    $region85: #{simpler_encoder.1} parent=1 // pred_fallthru
      _
    %11423 = vsyncpa [#allocation3], 1
    %11424 = vsyncpa [#allocation5], 1
    %11425 = vsyncpa [#allocation8], 1
    %11426 = vsyncpa [#allocation11], 1
    %11427 = vsyncpa [#allocation14], 1

</llo_original>
